<compile_context>
chip_gen: v6e
topology: v6e:2x2x1
jax: 0.10.0
libtpu: 0.0.40
codegen_flags: <defaults>
</compile_context>

<pallas_src>
import jax
import jax.numpy as jnp
from jax import lax
from jax.experimental import pallas as pl
from jax.experimental.pallas import tpu as pltpu

# ----------------------------- configuration --------------------------------
IMG_SIZE = 16
PATCH_SIZE = 4
IN_CHANS = 3
EMBED_DIM = 32
DEPTH = 2
NUM_HEADS = 4
HEAD_DIM = EMBED_DIM // NUM_HEADS            # 8
ATTN_SCALE = HEAD_DIM ** (-0.5)
MLP_HIDDEN = int(EMBED_DIM * 4.0)            # 128
NUM_CLASSES = 10
STEM_CH = 64                                 # PatchEmbed4_2 fixed filter count
NUM_PATCHES = (IMG_SIZE // PATCH_SIZE) ** 2  # 16
SEQ_LEN = NUM_PATCHES + 1                    # 17 (cls token + patches)
SEQ_PAD = 24                                 # 17 padded to a multiple of 8
HEAD_PAD = 128                               # lane-dense head output width
LN_EPS = 1e-5
BN_EPS = 1e-5


# ----------------------------- in-kernel helpers -----------------------------
def _erf_f32(x):
  # Abramowitz & Stegun 7.1.26 erf approximation (|err| < 1.5e-7); only uses
  # ops that lower on Mosaic (exp / mul / add / abs / where).
  sgn = jnp.where(x >= 0.0, 1.0, -1.0)
  ax = jnp.abs(x)
  t = 1.0 / (1.0 + 0.3275911 * ax)
  poly = ((((1.061405429 * t - 1.453152027) * t + 1.421413741) * t
           - 0.284496736) * t + 0.254829592) * t
  return sgn * (1.0 - poly * jnp.exp(-ax * ax))


def _gelu(x):
  # exact (erf) GELU, matching torch.nn.GELU default
  return 0.5 * x * (1.0 + _erf_f32(x * 0.7071067811865476))


def _layernorm(x, g, b):
  mean = jnp.mean(x, axis=-1, keepdims=True)
  var = jnp.mean((x - mean) ** 2, axis=-1, keepdims=True)
  return (x - mean) * lax.rsqrt(var + LN_EPS) * g + b


def _mm(a, w):
  # bf16 MXU operands, f32 accumulation; elementwise math stays f32 (v5e VPU).
  return jnp.dot(a.astype(jnp.bfloat16), w.astype(jnp.bfloat16),
                 preferred_element_type=jnp.float32)


def _rep_spec(shape):
  """BlockSpec for a small weight that is fully resident every grid step."""
  nd = len(shape)
  def idx(b):
    del b
    return (0,) * nd
  return pl.BlockSpec(shape, idx)


# ----------------------------- stem kernels ----------------------------------
def _conv_bn_relu_kernel(p_ref, w_ref, g_ref, b_ref, o_ref):
  """Fused conv-as-matmul + BatchNorm(batch statistics) + ReLU epilogue."""
  acc = _mm(p_ref[...], w_ref[...])                      # (M, out_c) f32
  # TODO(synk): PyTorch eval() mode would use BN running statistics; batch
  # statistics (training mode, biased variance) are used here.
  mean = jnp.mean(acc, axis=0, keepdims=True)
  var = jnp.mean((acc - mean) ** 2, axis=0, keepdims=True)
  y = (acc - mean) * lax.rsqrt(var + BN_EPS) * g_ref[...] + b_ref[...]
  o_ref[...] = jnp.maximum(y, 0.0).astype(o_ref.dtype)


def _conv3_proj_kernel(rows_ref, w3_ref, g3_ref, b3_ref, wp_ref, pb_ref, o_ref):
  """conv3 (matmul) + BatchNorm + ReLU + proj (2x2/s2 conv as 4 group matmuls).

  rows_ref is (4, B*num_patches, K): group g = proj-kernel position (dh, dw),
  rows within a group ordered (b, ph, pw) so the accumulated output rows are
  already in token order.
  """
  n_groups = rows_ref.shape[0]
  rows_per_group = rows_ref.shape[1]
  ys = [_mm(rows_ref[g], w3_ref[...]) for g in range(n_groups)]   # (R, 64) f32
  # BatchNorm batch statistics over ALL conv3 output positions (= all groups).
  total = float(n_groups * rows_per_group)
  s1 = ys[0].sum(axis=0, keepdims=True)
  s2 = (ys[0] * ys[0]).sum(axis=0, keepdims=True)
  for g in range(1, n_groups):
    s1 = s1 + ys[g].sum(axis=0, keepdims=True)
    s2 = s2 + (ys[g] * ys[g]).sum(axis=0, keepdims=True)
  mean = s1 / total
  var = s2 / total - mean * mean
  inv = lax.rsqrt(var + BN_EPS)
  acc = pb_ref[...]                                     # proj bias, broadcasts
  for g in range(n_groups):
    z = jnp.maximum((ys[g] - mean) * inv * g3_ref[...] + b3_ref[...], 0.0)
    acc = acc + _mm(z, wp_ref[g])
  o_ref[...] = acc.astype(o_ref.dtype)


def _extract_patches(x_img, kh, kw, stride, pad, lhs_layout):
  """im2col via one XLA op; output NHWC with features ordered (c, kh, kw)."""
  return lax.conv_general_dilated_patches(
      x_img, (kh, kw), (stride, stride), ((pad, pad), (pad, pad)),
      dimension_numbers=(lhs_layout, "OIHW", "NHWC"))


# ----------------------------- fused transformer network ---------------------
def _network_kernel(tok_ref, clspos_ref, ppos_ref,
                    n1g_ref, n1b_ref, qkv_ref, pw_ref, pb_ref,
                    n2g_ref, n2b_ref, f1w_ref, f1b_ref, f2w_ref, f2b_ref,
                    fng_ref, fnb_ref, hw_ref, hb_ref,
                    o_ref, xs_ref):
  C = EMBED_DIM
  # ---- assemble padded token sequence in VMEM (cls+pos fused in) ----
  xs_ref[0:1, :] = clspos_ref[...]                                  # cls + pos0
  xs_ref[1:SEQ_LEN, :] = tok_ref[0].astype(jnp.float32) + ppos_ref[...]
  xs_ref[SEQ_LEN:SEQ_PAD, :] = jnp.zeros((SEQ_PAD - SEQ_LEN, C), jnp.float32)
  x = xs_ref[...]                                                   # (24, 32)

  # additive key mask: padded keys contribute exactly 0 after exp()
  key_ids = lax.broadcasted_iota(jnp.int32, (1, SEQ_PAD), 1)
  key_mask = jnp.where(key_ids < SEQ_LEN, 0.0, -1e30).astype(jnp.float32)

  # ---- DEPTH pre-LN blocks (skip_lam=1, dropout/drop-path identity) ----
  for d in range(DEPTH):
    h = _layernorm(x, n1g_ref[d], n1b_ref[d])
    qkv = _mm(h, qkv_ref[d])                          # (24, 3C); Q pre-scaled
    heads = []
    for hd in range(NUM_HEADS):
      lo = hd * HEAD_DIM
      q = qkv[:, lo:lo + HEAD_DIM]
      k = qkv[:, C + lo:C + lo + HEAD_DIM]
      v = qkv[:, 2 * C + lo:2 * C + lo + HEAD_DIM]
      s = lax.dot_general(q.astype(jnp.bfloat16), k.astype(jnp.bfloat16),
                          (((1,), (1,)), ((), ())),
                          preferred_element_type=jnp.float32)       # (24, 24)
      s = s + key_mask
      s = s - jnp.max(s, axis=-1, keepdims=True)
      p = jnp.exp(s)
      p = p * pl.reciprocal(jnp.sum(p, axis=-1, keepdims=True), approx=True)
      heads.append(jnp.dot(p.astype(jnp.bfloat16), v.astype(jnp.bfloat16),
                           preferred_element_type=jnp.float32))     # (24, Dh)
    attn = jnp.concatenate(heads, axis=-1)                          # (24, C)
    x = x + _mm(attn, pw_ref[d]) + pb_ref[d]          # single output proj

    h2 = _layernorm(x, n2g_ref[d], n2b_ref[d])
    m = _gelu(_mm(h2, f1w_ref[d]) + f1b_ref[d])
    x = x + _mm(m, f2w_ref[d]) + f2b_ref[d]

  # ---- final norm + fused (head | aux_head) matmul, lane-dense 128 output ----
  xn = _layernorm(x, fng_ref[...], fnb_ref[...])
  o_ref[0] = (_mm(xn, hw_ref[...]) + hb_ref[...]).astype(o_ref.dtype)


def transformer_network(tokens, prep):
  B = tokens.shape[0]
  C = EMBED_DIM
  in_specs = [
      pl.BlockSpec((1, NUM_PATCHES, C), lambda b: (b, 0, 0)),   # patch tokens
      _rep_spec((1, C)), _rep_spec((NUM_PATCHES, C)),           # cls+pos0, pos
      _rep_spec((DEPTH, 1, C)), _rep_spec((DEPTH, 1, C)),       # norm1
      _rep_spec((DEPTH, C, 3 * C)),                             # qkv (scaled q)
      _rep_spec((DEPTH, C, C)), _rep_spec((DEPTH, 1, C)),       # attn proj
      _rep_spec((DEPTH, 1, C)), _rep_spec((DEPTH, 1, C)),       # norm2
      _rep_spec((DEPTH, C, MLP_HIDDEN)), _rep_spec((DEPTH, 1, MLP_HIDDEN)),
      _rep_spec((DEPTH, MLP_HIDDEN, C)), _rep_spec((DEPTH, 1, C)),
      _rep_spec((1, C)), _rep_spec((1, C)),                     # final norm
      _rep_spec((C, HEAD_PAD)), _rep_spec((1, HEAD_PAD)),       # fused heads
  ]
  return pl.pallas_call(
      _network_kernel,
      grid=(B,),
      in_specs=in_specs,
      out_specs=pl.BlockSpec((1, SEQ_PAD, HEAD_PAD), lambda b: (b, 0, 0)),
      out_shape=jax.ShapeDtypeStruct((B, SEQ_PAD, HEAD_PAD), jnp.float32),
      scratch_shapes=[pltpu.VMEM((SEQ_PAD, C), jnp.float32)],
      compiler_params=pltpu.CompilerParams(
          dimension_semantics=("parallel",)),     # 2-way grid -> both v7x TCs
  )(tokens, prep["cls_pos"], prep["patch_pos"],
    prep["n1g"], prep["n1b"], prep["qkvw"], prep["pw"], prep["pb"],
    prep["n2g"], prep["n2b"], prep["f1w"], prep["f1b"], prep["f2w"], prep["f2b"],
    prep["fng"], prep["fnb"], prep["hw"], prep["hb"])


# ----------------------------- full forward -----------------------------------
def lvvit_teacher_forward(prep, x):
  B = x.shape[0]
  # conv1: 7x7 s2 p3 (im2col in XLA, fused matmul+BN+ReLU kernel)
  p1 = _extract_patches(x, 7, 7, 2, 3, "NCHW")
  _, oh, ow, k1 = p1.shape
  y1 = pl.pallas_call(
      _conv_bn_relu_kernel,
      out_shape=jax.ShapeDtypeStruct((B * oh * ow, STEM_CH), jnp.float32),
  )(p1.reshape(B * oh * ow, k1), prep["c1w"], prep["bn1g"], prep["bn1b"])
  y1 = y1.reshape(B, oh, ow, STEM_CH)

  # conv2: 3x3 s1 p1
  p2 = _extract_patches(y1, 3, 3, 1, 1, "NHWC")
  _, oh, ow, k2 = p2.shape
  y2 = pl.pallas_call(
      _conv_bn_relu_kernel,
      out_shape=jax.ShapeDtypeStruct((B * oh * ow, STEM_CH), jnp.float32),
  )(p2.reshape(B * oh * ow, k2), prep["c2w"], prep["bn2g"], prep["bn2b"])
  y2 = y2.reshape(B, oh, ow, STEM_CH)

  # conv3 + BN + ReLU + proj fused in one kernel: conv3 rows are pre-ordered
  # by proj-kernel position (dh, dw) so proj is 4 accumulating group matmuls.
  p3 = _extract_patches(y2, 3, 3, 1, 1, "NHWC")                  # (B, 8, 8, K)
  k3 = p3.shape[-1]
  groups = [p3[:, dh::2, dw::2, :].reshape(B * NUM_PATCHES, k3)
            for dh in (0, 1) for dw in (0, 1)]
  rows3 = jnp.stack(groups, axis=0)                              # (4, B*16, K)
  tokens = pl.pallas_call(
      _conv3_proj_kernel,
      out_shape=jax.ShapeDtypeStruct((B * NUM_PATCHES, EMBED_DIM), jnp.float32),
  )(rows3, prep["c3w"], prep["bn3g"], prep["bn3b"],
    prep["projw"], prep["projb"])
  tokens = tokens.reshape(B, NUM_PATCHES, EMBED_DIM)

  # whole transformer (pos-embed + blocks + final norm + heads) in one launch
  logits = transformer_network(tokens, prep)                     # (B, 24, 128)
  x_cls = logits[:, 0, :NUM_CLASSES]                             # head(x[:,0])
  x_aux = logits[:, 1:SEQ_LEN, NUM_CLASSES:2 * NUM_CLASSES]      # aux(x[:,1:])
  return x_cls, x_aux


# ----------------------------- one-time parameter prep ------------------------
def prepare_params(p):
  """Hoist all weight reshapes/stacks/padding out of the per-forward path."""
  C, HID = EMBED_DIM, MLP_HIDDEN

  def stack(fn):
    return jnp.stack([fn(bp) for bp in p["blocks"]], axis=0)

  # ATTN_SCALE folded into the Q columns of the fused QKV weight.
  qkvw = stack(lambda bp: jnp.concatenate(
      [bp["qkv_w"][:, :C] * ATTN_SCALE, bp["qkv_w"][:, C:]], axis=1))

  # head_w | aux_w concatenated and zero-padded to 128 lanes (lane-dense store)
  hw = jnp.zeros((C, HEAD_PAD), jnp.float32)
  hw = hw.at[:, :NUM_CLASSES].set(p["head_w"])
  hw = hw.at[:, NUM_CLASSES:2 * NUM_CLASSES].set(p["aux_w"])
  hb = jnp.zeros((1, HEAD_PAD), jnp.float32)
  hb = hb.at[0, :NUM_CLASSES].set(p["head_b"])
  hb = hb.at[0, NUM_CLASSES:2 * NUM_CLASSES].set(p["aux_b"])

  return {
      # conv stem (PyTorch OIHW -> (K, out_c) matmul layout)
      "c1w": p["conv1_w"].reshape(STEM_CH, -1).T,
      "bn1g": p["bn1_g"].reshape(1, STEM_CH), "bn1b": p["bn1_b"].reshape(1, STEM_CH),
      "c2w": p["conv2_w"].reshape(STEM_CH, -1).T,
      "bn2g": p["bn2_g"].reshape(1, STEM_CH), "bn2b": p["bn2_b"].reshape(1, STEM_CH),
      "c3w": p["conv3_w"].reshape(STEM_CH, -1).T,
      "bn3g": p["bn3_g"].reshape(1, STEM_CH), "bn3b": p["bn3_b"].reshape(1, STEM_CH),
      "projw": jnp.stack([p["proj_w"][:, :, dh, dw].T
                          for dh in (0, 1) for dw in (0, 1)], axis=0),  # (4,64,32)
      "projb": p["proj_b"].reshape(1, EMBED_DIM),
      # token assembly (cls token + pos-embed fused)
      "cls_pos": p["cls_token"].reshape(1, C) + p["pos_embed"][0, 0:1, :],
      "patch_pos": p["pos_embed"][0, 1:, :],
      # per-block weight slabs (DEPTH-stacked)
      "n1g": stack(lambda bp: bp["norm1_g"].reshape(1, C)),
      "n1b": stack(lambda bp: bp["norm1_b"].reshape(1, C)),
      "qkvw": qkvw,
      "pw": stack(lambda bp: bp["attn_proj_w"]),
      "pb": stack(lambda bp: bp["attn_proj_b"].reshape(1, C)),
      "n2g": stack(lambda bp: bp["norm2_g"].reshape(1, C)),
      "n2b": stack(lambda bp: bp["norm2_b"].reshape(1, C)),
      "f1w": stack(lambda bp: bp["fc1_w"]),
      "f1b": stack(lambda bp: bp["fc1_b"].reshape(1, HID)),
      "f2w": stack(lambda bp: bp["fc2_w"]),
      "f2b": stack(lambda bp: bp["fc2_b"].reshape(1, C)),
      # final norm + fused heads
      "fng": p["norm_g"].reshape(1, C), "fnb": p["norm_b"].reshape(1, C),
      "hw": hw, "hb": hb,
  }


# ----------------------------- parameter init ---------------------------------
def init_params(key):
  keys = iter(jax.random.split(key, 256))

  def nrm(shape, std=0.02):
    return jax.random.normal(next(keys), shape, dtype=jnp.float32) * std

  ones = lambda n: jnp.ones((n,), jnp.float32)
  zeros = lambda n: jnp.zeros((n,), jnp.float32)

  p = {
      # PatchEmbed4_2 (conv stem, PyTorch OIHW weight layout, conv bias=False)
      "conv1_w": nrm((STEM_CH, IN_CHANS, 7, 7), 0.05),
      "bn1_g": ones(STEM_CH), "bn1_b": zeros(STEM_CH),
      "conv2_w": nrm((STEM_CH, STEM_CH, 3, 3), 0.05),
      "bn2_g": ones(STEM_CH), "bn2_b": zeros(STEM_CH),
      "conv3_w": nrm((STEM_CH, STEM_CH, 3, 3), 0.05),
      "bn3_g": ones(STEM_CH), "bn3_b": zeros(STEM_CH),
      "proj_w": nrm((EMBED_DIM, STEM_CH, PATCH_SIZE // 2, PATCH_SIZE // 2), 0.05),
      "proj_b": zeros(EMBED_DIM),
      # tokens
      "cls_token": nrm((1, 1, EMBED_DIM)),
      "pos_embed": nrm((1, NUM_PATCHES + 1, EMBED_DIM)),
      # final norm / heads (Linear biases zero per _init_weights)
      "norm_g": ones(EMBED_DIM), "norm_b": zeros(EMBED_DIM),
      "head_w": nrm((EMBED_DIM, NUM_CLASSES)), "head_b": zeros(NUM_CLASSES),
      "aux_w": nrm((EMBED_DIM, NUM_CLASSES)), "aux_b": zeros(NUM_CLASSES),
  }
  blocks = []
  for _ in range(DEPTH):
    blocks.append({
        "norm1_g": ones(EMBED_DIM), "norm1_b": zeros(EMBED_DIM),
        "qkv_w": nrm((EMBED_DIM, 3 * NUM_HEADS * HEAD_DIM)),   # qkv_bias=False
        "attn_proj_w": nrm((NUM_HEADS * HEAD_DIM, EMBED_DIM)),
        "attn_proj_b": zeros(EMBED_DIM),
        "norm2_g": ones(EMBED_DIM), "norm2_b": zeros(EMBED_DIM),
        "fc1_w": nrm((EMBED_DIM, MLP_HIDDEN)), "fc1_b": zeros(MLP_HIDDEN),
        "fc2_w": nrm((MLP_HIDDEN, EMBED_DIM)), "fc2_b": zeros(EMBED_DIM),
    })
  p["blocks"] = blocks
  return p


# ----------------------------- main -------------------------------------------
if __name__ == "__main__":
  key = jax.random.PRNGKey(0)
  pkey, xkey = jax.random.split(key)
  params = init_params(pkey)
  prep = prepare_params(params)          # one-time weight preprocessing
  x = jax.random.normal(xkey, (2, IN_CHANS, IMG_SIZE, IMG_SIZE), jnp.float32)

  fwd = jax.jit(lvvit_teacher_forward)
  x_cls, x_aux = fwd(prep, x)
  jax.block_until_ready((x_cls, x_aux))

  assert x_cls.shape == (2, NUM_CLASSES)
  assert x_aux.shape == (2, NUM_PATCHES, NUM_CLASSES)
  assert bool(jnp.all(jnp.isfinite(x_cls))) and bool(jnp.all(jnp.isfinite(x_aux)))
  print("KERNEL_OK")
</pallas_src>

<mosaic_0001>
module attributes {stable_mosaic.version = 11 : i64} {
  func.func @_conv_bn_relu_kernel(%arg0: memref<128x147xf32, #tpu.memory_space<vmem>>, %arg1: memref<147x64xf32, #tpu.memory_space<vmem>>, %arg2: memref<1x64xf32, #tpu.memory_space<vmem>>, %arg3: memref<1x64xf32, #tpu.memory_space<vmem>>, %arg4: memref<128x64xf32, #tpu.memory_space<vmem>>) attributes {dimension_semantics = [], scalar_prefetch = 0 : i64, scratch_operands = 0 : i64, tpu.core_type = #tpu.core_type<tc>} {
    %c0 = arith.constant 0 : index
    %c0_0 = arith.constant 0 : index
    %0 = vector.load %arg0[%c0, %c0_0] : memref<128x147xf32, #tpu.memory_space<vmem>>, vector<128x147xf32>
    %c0_1 = arith.constant 0 : index
    %c0_2 = arith.constant 0 : index
    %1 = vector.load %arg1[%c0_1, %c0_2] : memref<147x64xf32, #tpu.memory_space<vmem>>, vector<147x64xf32>
    %2 = arith.truncf %0 : vector<128x147xf32> to vector<128x147xbf16>
    %3 = arith.truncf %1 : vector<147x64xf32> to vector<147x64xbf16>
    %cst = arith.constant dense<0.000000e+00> : vector<128x64xf32>
    %4 = tpu.matmul %2, %3, %cst {dimension_numbers = #tpu.dot_dimension_numbers<[1], [0], [0], [1], [0, 0, 1, 1], [], []>} : vector<128x147xbf16>, vector<147x64xbf16>, vector<128x64xf32> -> vector<128x64xf32>
    %cst_3 = arith.constant dense<0.000000e+00> : vector<64xf32>
    %5 = vector.multi_reduction <add>, %4, %cst_3 [0] : vector<128x64xf32> to vector<64xf32>
    %6 = vector.shape_cast %5 : vector<64xf32> to vector<1x64xf32>
    %cst_4 = arith.constant 1.280000e+02 : f32
    %7 = vector.broadcast %cst_4 : f32 to vector<1x64xf32>
    %8 = arith.divf %6, %7 : vector<1x64xf32>
    %9 = vector.broadcast %8 : vector<1x64xf32> to vector<128x64xf32>
    %10 = arith.subf %4, %9 : vector<128x64xf32>
    %11 = arith.mulf %10, %10 : vector<128x64xf32>
    %cst_5 = arith.constant dense<0.000000e+00> : vector<64xf32>
    %12 = vector.multi_reduction <add>, %11, %cst_5 [0] : vector<128x64xf32> to vector<64xf32>
    %13 = vector.shape_cast %12 : vector<64xf32> to vector<1x64xf32>
    %cst_6 = arith.constant 1.280000e+02 : f32
    %14 = vector.broadcast %cst_6 : f32 to vector<1x64xf32>
    %15 = arith.divf %13, %14 : vector<1x64xf32>
    %16 = vector.broadcast %8 : vector<1x64xf32> to vector<128x64xf32>
    %17 = arith.subf %4, %16 : vector<128x64xf32>
    %cst_7 = arith.constant 9.99999974E-6 : f32
    %18 = vector.broadcast %cst_7 : f32 to vector<1x64xf32>
    %19 = arith.addf %15, %18 : vector<1x64xf32>
    %20 = math.rsqrt %19 : vector<1x64xf32>
    %21 = vector.broadcast %20 : vector<1x64xf32> to vector<128x64xf32>
    %22 = arith.mulf %17, %21 : vector<128x64xf32>
    %c0_8 = arith.constant 0 : index
    %c0_9 = arith.constant 0 : index
    %23 = vector.load %arg2[%c0_8, %c0_9] : memref<1x64xf32, #tpu.memory_space<vmem>>, vector<1x64xf32>
    %24 = vector.broadcast %23 : vector<1x64xf32> to vector<128x64xf32>
    %25 = arith.mulf %22, %24 : vector<128x64xf32>
    %c0_10 = arith.constant 0 : index
    %c0_11 = arith.constant 0 : index
    %26 = vector.load %arg3[%c0_10, %c0_11] : memref<1x64xf32, #tpu.memory_space<vmem>>, vector<1x64xf32>
    %27 = vector.broadcast %26 : vector<1x64xf32> to vector<128x64xf32>
    %28 = arith.addf %25, %27 : vector<128x64xf32>
    %cst_12 = arith.constant 0.000000e+00 : f32
    %29 = vector.broadcast %cst_12 : f32 to vector<128x64xf32>
    %30 = arith.maximumf %28, %29 : vector<128x64xf32>
    %c0_13 = arith.constant 0 : index
    %c0_14 = arith.constant 0 : index
    %31 = vector.load %arg4[%c0_13, %c0_14] : memref<128x64xf32, #tpu.memory_space<vmem>>, vector<128x64xf32>
    tpu.vector_store %arg4[%c0_13, %c0_14], %30 {strides = array<i32>} : memref<128x64xf32, #tpu.memory_space<vmem>>, vector<128x64xf32>,
    return
  }
}

module attributes {stable_mosaic.version = 11 : i64} {
  func.func @_conv_bn_relu_kernel(%arg0: memref<128x576xf32, #tpu.memory_space<vmem>>, %arg1: memref<576x64xf32, #tpu.memory_space<vmem>>, %arg2: memref<1x64xf32, #tpu.memory_space<vmem>>, %arg3: memref<1x64xf32, #tpu.memory_space<vmem>>, %arg4: memref<128x64xf32, #tpu.memory_space<vmem>>) attributes {dimension_semantics = [], scalar_prefetch = 0 : i64, scratch_operands = 0 : i64, tpu.core_type = #tpu.core_type<tc>} {
    %c0 = arith.constant 0 : index
    %c0_0 = arith.constant 0 : index
    %0 = vector.load %arg0[%c0, %c0_0] : memref<128x576xf32, #tpu.memory_space<vmem>>, vector<128x576xf32>
    %c0_1 = arith.constant 0 : index
    %c0_2 = arith.constant 0 : index
    %1 = vector.load %arg1[%c0_1, %c0_2] : memref<576x64xf32, #tpu.memory_space<vmem>>, vector<576x64xf32>
    %2 = arith.truncf %0 : vector<128x576xf32> to vector<128x576xbf16>
    %3 = arith.truncf %1 : vector<576x64xf32> to vector<576x64xbf16>
    %cst = arith.constant dense<0.000000e+00> : vector<128x64xf32>
    %4 = tpu.matmul %2, %3, %cst {dimension_numbers = #tpu.dot_dimension_numbers<[1], [0], [0], [1], [0, 0, 1, 1], [], []>} : vector<128x576xbf16>, vector<576x64xbf16>, vector<128x64xf32> -> vector<128x64xf32>
    %cst_3 = arith.constant dense<0.000000e+00> : vector<64xf32>
    %5 = vector.multi_reduction <add>, %4, %cst_3 [0] : vector<128x64xf32> to vector<64xf32>
    %6 = vector.shape_cast %5 : vector<64xf32> to vector<1x64xf32>
    %cst_4 = arith.constant 1.280000e+02 : f32
    %7 = vector.broadcast %cst_4 : f32 to vector<1x64xf32>
    %8 = arith.divf %6, %7 : vector<1x64xf32>
    %9 = vector.broadcast %8 : vector<1x64xf32> to vector<128x64xf32>
    %10 = arith.subf %4, %9 : vector<128x64xf32>
    %11 = arith.mulf %10, %10 : vector<128x64xf32>
    %cst_5 = arith.constant dense<0.000000e+00> : vector<64xf32>
    %12 = vector.multi_reduction <add>, %11, %cst_5 [0] : vector<128x64xf32> to vector<64xf32>
    %13 = vector.shape_cast %12 : vector<64xf32> to vector<1x64xf32>
    %cst_6 = arith.constant 1.280000e+02 : f32
    %14 = vector.broadcast %cst_6 : f32 to vector<1x64xf32>
    %15 = arith.divf %13, %14 : vector<1x64xf32>
    %16 = vector.broadcast %8 : vector<1x64xf32> to vector<128x64xf32>
    %17 = arith.subf %4, %16 : vector<128x64xf32>
    %cst_7 = arith.constant 9.99999974E-6 : f32
    %18 = vector.broadcast %cst_7 : f32 to vector<1x64xf32>
    %19 = arith.addf %15, %18 : vector<1x64xf32>
    %20 = math.rsqrt %19 : vector<1x64xf32>
    %21 = vector.broadcast %20 : vector<1x64xf32> to vector<128x64xf32>
    %22 = arith.mulf %17, %21 : vector<128x64xf32>
    %c0_8 = arith.constant 0 : index
    %c0_9 = arith.constant 0 : index
    %23 = vector.load %arg2[%c0_8, %c0_9] : memref<1x64xf32, #tpu.memory_space<vmem>>, vector<1x64xf32>
    %24 = vector.broadcast %23 : vector<1x64xf32> to vector<128x64xf32>
    %25 = arith.mulf %22, %24 : vector<128x64xf32>
    %c0_10 = arith.constant 0 : index
    %c0_11 = arith.constant 0 : index
    %26 = vector.load %arg3[%c0_10, %c0_11] : memref<1x64xf32, #tpu.memory_space<vmem>>, vector<1x64xf32>
    %27 = vector.broadcast %26 : vector<1x64xf32> to vector<128x64xf32>
    %28 = arith.addf %25, %27 : vector<128x64xf32>
    %cst_12 = arith.constant 0.000000e+00 : f32
    %29 = vector.broadcast %cst_12 : f32 to vector<128x64xf32>
    %30 = arith.maximumf %28, %29 : vector<128x64xf32>
    %c0_13 = arith.constant 0 : index
    %c0_14 = arith.constant 0 : index
    %31 = vector.load %arg4[%c0_13, %c0_14] : memref<128x64xf32, #tpu.memory_space<vmem>>, vector<128x64xf32>
    tpu.vector_store %arg4[%c0_13, %c0_14], %30 {strides = array<i32>} : memref<128x64xf32, #tpu.memory_space<vmem>>, vector<128x64xf32>,
    return
  }
}

module attributes {stable_mosaic.version = 11 : i64} {
  func.func @_conv3_proj_kernel(%arg0: memref<4x32x576xf32, #tpu.memory_space<vmem>>, %arg1: memref<576x64xf32, #tpu.memory_space<vmem>>, %arg2: memref<1x64xf32, #tpu.memory_space<vmem>>, %arg3: memref<1x64xf32, #tpu.memory_space<vmem>>, %arg4: memref<4x64x32xf32, #tpu.memory_space<vmem>>, %arg5: memref<1x32xf32, #tpu.memory_space<vmem>>, %arg6: memref<32x32xf32, #tpu.memory_space<vmem>>) attributes {dimension_semantics = [], scalar_prefetch = 0 : i64, scratch_operands = 0 : i64, tpu.core_type = #tpu.core_type<tc>} {
    %c0 = arith.constant 0 : index
    %c0_0 = arith.constant 0 : index
    %c0_1 = arith.constant 0 : index
    %0 = vector.load %arg0[%c0, %c0_0, %c0_1] : memref<4x32x576xf32, #tpu.memory_space<vmem>>, vector<1x32x576xf32>
    %1 = vector.shape_cast %0 : vector<1x32x576xf32> to vector<32x576xf32>
    %c0_2 = arith.constant 0 : index
    %c0_3 = arith.constant 0 : index
    %2 = vector.load %arg1[%c0_2, %c0_3] : memref<576x64xf32, #tpu.memory_space<vmem>>, vector<576x64xf32>
    %3 = arith.truncf %1 : vector<32x576xf32> to vector<32x576xbf16>
    %4 = arith.truncf %2 : vector<576x64xf32> to vector<576x64xbf16>
    %cst = arith.constant dense<0.000000e+00> : vector<32x64xf32>
    %5 = tpu.matmul %3, %4, %cst {dimension_numbers = #tpu.dot_dimension_numbers<[1], [0], [0], [1], [0, 0, 1, 1], [], []>} : vector<32x576xbf16>, vector<576x64xbf16>, vector<32x64xf32> -> vector<32x64xf32>
    %c1 = arith.constant 1 : index
    %c0_4 = arith.constant 0 : index
    %c0_5 = arith.constant 0 : index
    %6 = vector.load %arg0[%c1, %c0_4, %c0_5] : memref<4x32x576xf32, #tpu.memory_space<vmem>>, vector<1x32x576xf32>
    %7 = vector.shape_cast %6 : vector<1x32x576xf32> to vector<32x576xf32>
    %c0_6 = arith.constant 0 : index
    %c0_7 = arith.constant 0 : index
    %8 = vector.load %arg1[%c0_6, %c0_7] : memref<576x64xf32, #tpu.memory_space<vmem>>, vector<576x64xf32>
    %9 = arith.truncf %7 : vector<32x576xf32> to vector<32x576xbf16>
    %10 = arith.truncf %8 : vector<576x64xf32> to vector<576x64xbf16>
    %cst_8 = arith.constant dense<0.000000e+00> : vector<32x64xf32>
    %11 = tpu.matmul %9, %10, %cst_8 {dimension_numbers = #tpu.dot_dimension_numbers<[1], [0], [0], [1], [0, 0, 1, 1], [], []>} : vector<32x576xbf16>, vector<576x64xbf16>, vector<32x64xf32> -> vector<32x64xf32>
    %c2 = arith.constant 2 : index
    %c0_9 = arith.constant 0 : index
    %c0_10 = arith.constant 0 : index
    %12 = vector.load %arg0[%c2, %c0_9, %c0_10] : memref<4x32x576xf32, #tpu.memory_space<vmem>>, vector<1x32x576xf32>
    %13 = vector.shape_cast %12 : vector<1x32x576xf32> to vector<32x576xf32>
    %c0_11 = arith.constant 0 : index
    %c0_12 = arith.constant 0 : index
    %14 = vector.load %arg1[%c0_11, %c0_12] : memref<576x64xf32, #tpu.memory_space<vmem>>, vector<576x64xf32>
    %15 = arith.truncf %13 : vector<32x576xf32> to vector<32x576xbf16>
    %16 = arith.truncf %14 : vector<576x64xf32> to vector<576x64xbf16>
    %cst_13 = arith.constant dense<0.000000e+00> : vector<32x64xf32>
    %17 = tpu.matmul %15, %16, %cst_13 {dimension_numbers = #tpu.dot_dimension_numbers<[1], [0], [0], [1], [0, 0, 1, 1], [], []>} : vector<32x576xbf16>, vector<576x64xbf16>, vector<32x64xf32> -> vector<32x64xf32>
    %c3 = arith.constant 3 : index
    %c0_14 = arith.constant 0 : index
    %c0_15 = arith.constant 0 : index
    %18 = vector.load %arg0[%c3, %c0_14, %c0_15] : memref<4x32x576xf32, #tpu.memory_space<vmem>>, vector<1x32x576xf32>
    %19 = vector.shape_cast %18 : vector<1x32x576xf32> to vector<32x576xf32>
    %c0_16 = arith.constant 0 : index
    %c0_17 = arith.constant 0 : index
    %20 = vector.load %arg1[%c0_16, %c0_17] : memref<576x64xf32, #tpu.memory_space<vmem>>, vector<576x64xf32>
    %21 = arith.truncf %19 : vector<32x576xf32> to vector<32x576xbf16>
    %22 = arith.truncf %20 : vector<576x64xf32> to vector<576x64xbf16>
    %cst_18 = arith.constant dense<0.000000e+00> : vector<32x64xf32>
    %23 = tpu.matmul %21, %22, %cst_18 {dimension_numbers = #tpu.dot_dimension_numbers<[1], [0], [0], [1], [0, 0, 1, 1], [], []>} : vector<32x576xbf16>, vector<576x64xbf16>, vector<32x64xf32> -> vector<32x64xf32>
    %cst_19 = arith.constant dense<0.000000e+00> : vector<64xf32>
    %24 = vector.multi_reduction <add>, %5, %cst_19 [0] : vector<32x64xf32> to vector<64xf32>
    %25 = vector.shape_cast %24 : vector<64xf32> to vector<1x64xf32>
    %26 = arith.mulf %5, %5 : vector<32x64xf32>
    %cst_20 = arith.constant dense<0.000000e+00> : vector<64xf32>
    %27 = vector.multi_reduction <add>, %26, %cst_20 [0] : vector<32x64xf32> to vector<64xf32>
    %28 = vector.shape_cast %27 : vector<64xf32> to vector<1x64xf32>
    %cst_21 = arith.constant dense<0.000000e+00> : vector<64xf32>
    %29 = vector.multi_reduction <add>, %11, %cst_21 [0] : vector<32x64xf32> to vector<64xf32>
    %30 = vector.shape_cast %29 : vector<64xf32> to vector<1x64xf32>
    %31 = arith.addf %25, %30 : vector<1x64xf32>
    %32 = arith.mulf %11, %11 : vector<32x64xf32>
    %cst_22 = arith.constant dense<0.000000e+00> : vector<64xf32>
    %33 = vector.multi_reduction <add>, %32, %cst_22 [0] : vector<32x64xf32> to vector<64xf32>
    %34 = vector.shape_cast %33 : vector<64xf32> to vector<1x64xf32>
    %35 = arith.addf %28, %34 : vector<1x64xf32>
    %cst_23 = arith.constant dense<0.000000e+00> : vector<64xf32>
    %36 = vector.multi_reduction <add>, %17, %cst_23 [0] : vector<32x64xf32> to vector<64xf32>
    %37 = vector.shape_cast %36 : vector<64xf32> to vector<1x64xf32>
    %38 = arith.addf %31, %37 : vector<1x64xf32>
    %39 = arith.mulf %17, %17 : vector<32x64xf32>
    %cst_24 = arith.constant dense<0.000000e+00> : vector<64xf32>
    %40 = vector.multi_reduction <add>, %39, %cst_24 [0] : vector<32x64xf32> to vector<64xf32>
    %41 = vector.shape_cast %40 : vector<64xf32> to vector<1x64xf32>
    %42 = arith.addf %35, %41 : vector<1x64xf32>
    %cst_25 = arith.constant dense<0.000000e+00> : vector<64xf32>
    %43 = vector.multi_reduction <add>, %23, %cst_25 [0] : vector<32x64xf32> to vector<64xf32>
    %44 = vector.shape_cast %43 : vector<64xf32> to vector<1x64xf32>
    %45 = arith.addf %38, %44 : vector<1x64xf32>
    %46 = arith.mulf %23, %23 : vector<32x64xf32>
    %cst_26 = arith.constant dense<0.000000e+00> : vector<64xf32>
    %47 = vector.multi_reduction <add>, %46, %cst_26 [0] : vector<32x64xf32> to vector<64xf32>
    %48 = vector.shape_cast %47 : vector<64xf32> to vector<1x64xf32>
    %49 = arith.addf %42, %48 : vector<1x64xf32>
    %cst_27 = arith.constant 1.280000e+02 : f32
    %50 = vector.broadcast %cst_27 : f32 to vector<1x64xf32>
    %51 = arith.divf %45, %50 : vector<1x64xf32>
    %cst_28 = arith.constant 1.280000e+02 : f32
    %52 = vector.broadcast %cst_28 : f32 to vector<1x64xf32>
    %53 = arith.divf %49, %52 : vector<1x64xf32>
    %54 = arith.mulf %51, %51 : vector<1x64xf32>
    %55 = arith.subf %53, %54 : vector<1x64xf32>
    %cst_29 = arith.constant 9.99999974E-6 : f32
    %56 = vector.broadcast %cst_29 : f32 to vector<1x64xf32>
    %57 = arith.addf %55, %56 : vector<1x64xf32>
    %58 = math.rsqrt %57 : vector<1x64xf32>
    %c0_30 = arith.constant 0 : index
    %c0_31 = arith.constant 0 : index
    %59 = vector.load %arg5[%c0_30, %c0_31] : memref<1x32xf32, #tpu.memory_space<vmem>>, vector<1x32xf32>
    %60 = vector.broadcast %51 : vector<1x64xf32> to vector<32x64xf32>
    %61 = arith.subf %5, %60 : vector<32x64xf32>
    %62 = vector.broadcast %58 : vector<1x64xf32> to vector<32x64xf32>
    %63 = arith.mulf %61, %62 : vector<32x64xf32>
    %c0_32 = arith.constant 0 : index
    %c0_33 = arith.constant 0 : index
    %64 = vector.load %arg2[%c0_32, %c0_33] : memref<1x64xf32, #tpu.memory_space<vmem>>, vector<1x64xf32>
    %65 = vector.broadcast %64 : vector<1x64xf32> to vector<32x64xf32>
    %66 = arith.mulf %63, %65 : vector<32x64xf32>
    %c0_34 = arith.constant 0 : index
    %c0_35 = arith.constant 0 : index
    %67 = vector.load %arg3[%c0_34, %c0_35] : memref<1x64xf32, #tpu.memory_space<vmem>>, vector<1x64xf32>
    %68 = vector.broadcast %67 : vector<1x64xf32> to vector<32x64xf32>
    %69 = arith.addf %66, %68 : vector<32x64xf32>
    %cst_36 = arith.constant 0.000000e+00 : f32
    %70 = vector.broadcast %cst_36 : f32 to vector<32x64xf32>
    %71 = arith.maximumf %69, %70 : vector<32x64xf32>
    %c0_37 = arith.constant 0 : index
    %c0_38 = arith.constant 0 : index
    %c0_39 = arith.constant 0 : index
    %72 = vector.load %arg4[%c0_37, %c0_38, %c0_39] : memref<4x64x32xf32, #tpu.memory_space<vmem>>, vector<1x64x32xf32>
    %73 = vector.shape_cast %72 : vector<1x64x32xf32> to vector<64x32xf32>
    %74 = arith.truncf %71 : vector<32x64xf32> to vector<32x64xbf16>
    %75 = arith.truncf %73 : vector<64x32xf32> to vector<64x32xbf16>
    %cst_40 = arith.constant dense<0.000000e+00> : vector<32x32xf32>
    %76 = tpu.matmul %74, %75, %cst_40 {dimension_numbers = #tpu.dot_dimension_numbers<[1], [0], [0], [1], [0, 0, 1, 1], [], []>} : vector<32x64xbf16>, vector<64x32xbf16>, vector<32x32xf32> -> vector<32x32xf32>
    %77 = vector.broadcast %59 : vector<1x32xf32> to vector<32x32xf32>
    %78 = arith.addf %77, %76 : vector<32x32xf32>
    %79 = vector.broadcast %51 : vector<1x64xf32> to vector<32x64xf32>
    %80 = arith.subf %11, %79 : vector<32x64xf32>
    %81 = vector.broadcast %58 : vector<1x64xf32> to vector<32x64xf32>
    %82 = arith.mulf %80, %81 : vector<32x64xf32>
    %c0_41 = arith.constant 0 : index
    %c0_42 = arith.constant 0 : index
    %83 = vector.load %arg2[%c0_41, %c0_42] : memref<1x64xf32, #tpu.memory_space<vmem>>, vector<1x64xf32>
    %84 = vector.broadcast %83 : vector<1x64xf32> to vector<32x64xf32>
    %85 = arith.mulf %82, %84 : vector<32x64xf32>
    %c0_43 = arith.constant 0 : index
    %c0_44 = arith.constant 0 : index
    %86 = vector.load %arg3[%c0_43, %c0_44] : memref<1x64xf32, #tpu.memory_space<vmem>>, vector<1x64xf32>
    %87 = vector.broadcast %86 : vector<1x64xf32> to vector<32x64xf32>
    %88 = arith.addf %85, %87 : vector<32x64xf32>
    %cst_45 = arith.constant 0.000000e+00 : f32
    %89 = vector.broadcast %cst_45 : f32 to vector<32x64xf32>
    %90 = arith.maximumf %88, %89 : vector<32x64xf32>
    %c1_46 = arith.constant 1 : index
    %c0_47 = arith.constant 0 : index
    %c0_48 = arith.constant 0 : index
    %91 = vector.load %arg4[%c1_46, %c0_47, %c0_48] : memref<4x64x32xf32, #tpu.memory_space<vmem>>, vector<1x64x32xf32>
    %92 = vector.shape_cast %91 : vector<1x64x32xf32> to vector<64x32xf32>
    %93 = arith.truncf %90 : vector<32x64xf32> to vector<32x64xbf16>
    %94 = arith.truncf %92 : vector<64x32xf32> to vector<64x32xbf16>
    %cst_49 = arith.constant dense<0.000000e+00> : vector<32x32xf32>
    %95 = tpu.matmul %93, %94, %cst_49 {dimension_numbers = #tpu.dot_dimension_numbers<[1], [0], [0], [1], [0, 0, 1, 1], [], []>} : vector<32x64xbf16>, vector<64x32xbf16>, vector<32x32xf32> -> vector<32x32xf32>
    %96 = arith.addf %78, %95 : vector<32x32xf32>
    %97 = vector.broadcast %51 : vector<1x64xf32> to vector<32x64xf32>
    %98 = arith.subf %17, %97 : vector<32x64xf32>
    %99 = vector.broadcast %58 : vector<1x64xf32> to vector<32x64xf32>
    %100 = arith.mulf %98, %99 : vector<32x64xf32>
    %c0_50 = arith.constant 0 : index
    %c0_51 = arith.constant 0 : index
    %101 = vector.load %arg2[%c0_50, %c0_51] : memref<1x64xf32, #tpu.memory_space<vmem>>, vector<1x64xf32>
    %102 = vector.broadcast %101 : vector<1x64xf32> to vector<32x64xf32>
    %103 = arith.mulf %100, %102 : vector<32x64xf32>
    %c0_52 = arith.constant 0 : index
    %c0_53 = arith.constant 0 : index
    %104 = vector.load %arg3[%c0_52, %c0_53] : memref<1x64xf32, #tpu.memory_space<vmem>>, vector<1x64xf32>
    %105 = vector.broadcast %104 : vector<1x64xf32> to vector<32x64xf32>
    %106 = arith.addf %103, %105 : vector<32x64xf32>
    %cst_54 = arith.constant 0.000000e+00 : f32
    %107 = vector.broadcast %cst_54 : f32 to vector<32x64xf32>
    %108 = arith.maximumf %106, %107 : vector<32x64xf32>
    %c2_55 = arith.constant 2 : index
    %c0_56 = arith.constant 0 : index
    %c0_57 = arith.constant 0 : index
    %109 = vector.load %arg4[%c2_55, %c0_56, %c0_57] : memref<4x64x32xf32, #tpu.memory_space<vmem>>, vector<1x64x32xf32>
    %110 = vector.shape_cast %109 : vector<1x64x32xf32> to vector<64x32xf32>
    %111 = arith.truncf %108 : vector<32x64xf32> to vector<32x64xbf16>
    %112 = arith.truncf %110 : vector<64x32xf32> to vector<64x32xbf16>
    %cst_58 = arith.constant dense<0.000000e+00> : vector<32x32xf32>
    %113 = tpu.matmul %111, %112, %cst_58 {dimension_numbers = #tpu.dot_dimension_numbers<[1], [0], [0], [1], [0, 0, 1, 1], [], []>} : vector<32x64xbf16>, vector<64x32xbf16>, vector<32x32xf32> -> vector<32x32xf32>
    %114 = arith.addf %96, %113 : vector<32x32xf32>
    %115 = vector.broadcast %51 : vector<1x64xf32> to vector<32x64xf32>
    %116 = arith.subf %23, %115 : vector<32x64xf32>
    %117 = vector.broadcast %58 : vector<1x64xf32> to vector<32x64xf32>
    %118 = arith.mulf %116, %117 : vector<32x64xf32>
    %c0_59 = arith.constant 0 : index
    %c0_60 = arith.constant 0 : index
    %119 = vector.load %arg2[%c0_59, %c0_60] : memref<1x64xf32, #tpu.memory_space<vmem>>, vector<1x64xf32>
    %120 = vector.broadcast %119 : vector<1x64xf32> to vector<32x64xf32>
    %121 = arith.mulf %118, %120 : vector<32x64xf32>
    %c0_61 = arith.constant 0 : index
    %c0_62 = arith.constant 0 : index
    %122 = vector.load %arg3[%c0_61, %c0_62] : memref<1x64xf32, #tpu.memory_space<vmem>>, vector<1x64xf32>
    %123 = vector.broadcast %122 : vector<1x64xf32> to vector<32x64xf32>
    %124 = arith.addf %121, %123 : vector<32x64xf32>
    %cst_63 = arith.constant 0.000000e+00 : f32
    %125 = vector.broadcast %cst_63 : f32 to vector<32x64xf32>
    %126 = arith.maximumf %124, %125 : vector<32x64xf32>
    %c3_64 = arith.constant 3 : index
    %c0_65 = arith.constant 0 : index
    %c0_66 = arith.constant 0 : index
    %127 = vector.load %arg4[%c3_64, %c0_65, %c0_66] : memref<4x64x32xf32, #tpu.memory_space<vmem>>, vector<1x64x32xf32>
    %128 = vector.shape_cast %127 : vector<1x64x32xf32> to vector<64x32xf32>
    %129 = arith.truncf %126 : vector<32x64xf32> to vector<32x64xbf16>
    %130 = arith.truncf %128 : vector<64x32xf32> to vector<64x32xbf16>
    %cst_67 = arith.constant dense<0.000000e+00> : vector<32x32xf32>
    %131 = tpu.matmul %129, %130, %cst_67 {dimension_numbers = #tpu.dot_dimension_numbers<[1], [0], [0], [1], [0, 0, 1, 1], [], []>} : vector<32x64xbf16>, vector<64x32xbf16>, vector<32x32xf32> -> vector<32x32xf32>
    %132 = arith.addf %114, %131 : vector<32x32xf32>
    %c0_68 = arith.constant 0 : index
    %c0_69 = arith.constant 0 : index
    %133 = vector.load %arg6[%c0_68, %c0_69] : memref<32x32xf32, #tpu.memory_space<vmem>>, vector<32x32xf32>
    tpu.vector_store %arg6[%c0_68, %c0_69], %132 {strides = array<i32>} : memref<32x32xf32, #tpu.memory_space<vmem>>, vector<32x32xf32>,
    return
  }
}

module attributes {stable_mosaic.version = 11 : i64} {
  func.func @_network_kernel(%arg0: i32, %arg1: memref<1x16x32xf32, #tpu.memory_space<vmem>>, %arg2: memref<1x32xf32, #tpu.memory_space<vmem>>, %arg3: memref<16x32xf32, #tpu.memory_space<vmem>>, %arg4: memref<2x1x32xf32, #tpu.memory_space<vmem>>, %arg5: memref<2x1x32xf32, #tpu.memory_space<vmem>>, %arg6: memref<2x32x96xf32, #tpu.memory_space<vmem>>, %arg7: memref<2x32x32xf32, #tpu.memory_space<vmem>>, %arg8: memref<2x1x32xf32, #tpu.memory_space<vmem>>, %arg9: memref<2x1x32xf32, #tpu.memory_space<vmem>>, %arg10: memref<2x1x32xf32, #tpu.memory_space<vmem>>, %arg11: memref<2x32x128xf32, #tpu.memory_space<vmem>>, %arg12: memref<2x1x128xf32, #tpu.memory_space<vmem>>, %arg13: memref<2x128x32xf32, #tpu.memory_space<vmem>>, %arg14: memref<2x1x32xf32, #tpu.memory_space<vmem>>, %arg15: memref<1x32xf32, #tpu.memory_space<vmem>>, %arg16: memref<1x32xf32, #tpu.memory_space<vmem>>, %arg17: memref<32x128xf32, #tpu.memory_space<vmem>>, %arg18: memref<1x128xf32, #tpu.memory_space<vmem>>, %arg19: memref<1x24x128xf32, #tpu.memory_space<vmem>>, %arg20: memref<24x32xf32, #tpu.memory_space<vmem>>) attributes {dimension_semantics = [#tpu.dimension_semantics<parallel>], iteration_bounds = array<i64: 2>, scalar_prefetch = 0 : i64, scratch_operands = 1 : i64, tpu.core_type = #tpu.core_type<tc>, window_params = [{transform_indices = @transform_0, window_bounds = array<i64: 1, 16, 32>}, {pipeline_mode = #tpu.pipeline_mode<synchronous>, transform_indices = @transform_1, window_bounds = array<i64: 1, 32>}, {pipeline_mode = #tpu.pipeline_mode<synchronous>, transform_indices = @transform_2, window_bounds = array<i64: 16, 32>}, {pipeline_mode = #tpu.pipeline_mode<synchronous>, transform_indices = @transform_3, window_bounds = array<i64: 2, 1, 32>}, {pipeline_mode = #tpu.pipeline_mode<synchronous>, transform_indices = @transform_4, window_bounds = array<i64: 2, 1, 32>}, {pipeline_mode = #tpu.pipeline_mode<synchronous>, transform_indices = @transform_5, window_bounds = array<i64: 2, 32, 96>}, {pipeline_mode = #tpu.pipeline_mode<synchronous>, transform_indices = @transform_6, window_bounds = array<i64: 2, 32, 32>}, {pipeline_mode = #tpu.pipeline_mode<synchronous>, transform_indices = @transform_7, window_bounds = array<i64: 2, 1, 32>}, {pipeline_mode = #tpu.pipeline_mode<synchronous>, transform_indices = @transform_8, window_bounds = array<i64: 2, 1, 32>}, {pipeline_mode = #tpu.pipeline_mode<synchronous>, transform_indices = @transform_9, window_bounds = array<i64: 2, 1, 32>}, {pipeline_mode = #tpu.pipeline_mode<synchronous>, transform_indices = @transform_10, window_bounds = array<i64: 2, 32, 128>}, {pipeline_mode = #tpu.pipeline_mode<synchronous>, transform_indices = @transform_11, window_bounds = array<i64: 2, 1, 128>}, {pipeline_mode = #tpu.pipeline_mode<synchronous>, transform_indices = @transform_12, window_bounds = array<i64: 2, 128, 32>}, {pipeline_mode = #tpu.pipeline_mode<synchronous>, transform_indices = @transform_13, window_bounds = array<i64: 2, 1, 32>}, {pipeline_mode = #tpu.pipeline_mode<synchronous>, transform_indices = @transform_14, window_bounds = array<i64: 1, 32>}, {pipeline_mode = #tpu.pipeline_mode<synchronous>, transform_indices = @transform_15, window_bounds = array<i64: 1, 32>}, {pipeline_mode = #tpu.pipeline_mode<synchronous>, transform_indices = @transform_16, window_bounds = array<i64: 32, 128>}, {pipeline_mode = #tpu.pipeline_mode<synchronous>, transform_indices = @transform_17, window_bounds = array<i64: 1, 128>}, {transform_indices = @transform_18, window_bounds = array<i64: 1, 24, 128>}]} {
    %c0 = arith.constant 0 : index
    %c0_0 = arith.constant 0 : index
    %0 = vector.load %arg2[%c0, %c0_0] : memref<1x32xf32, #tpu.memory_space<vmem>>, vector<1x32xf32>
    %c0_1 = arith.constant 0 : index
    %c0_2 = arith.constant 0 : index
    %1 = vector.load %arg20[%c0_1, %c0_2] : memref<24x32xf32, #tpu.memory_space<vmem>>, vector<1x32xf32>
    tpu.vector_store %arg20[%c0_1, %c0_2], %0 {strides = array<i32>} : memref<24x32xf32, #tpu.memory_space<vmem>>, vector<1x32xf32>,
    %c0_3 = arith.constant 0 : index
    %c0_4 = arith.constant 0 : index
    %c0_5 = arith.constant 0 : index
    %2 = vector.load %arg1[%c0_3, %c0_4, %c0_5] : memref<1x16x32xf32, #tpu.memory_space<vmem>>, vector<1x16x32xf32>
    %3 = vector.shape_cast %2 : vector<1x16x32xf32> to vector<16x32xf32>
    %c0_6 = arith.constant 0 : index
    %c0_7 = arith.constant 0 : index
    %4 = vector.load %arg3[%c0_6, %c0_7] : memref<16x32xf32, #tpu.memory_space<vmem>>, vector<16x32xf32>
    %5 = arith.addf %3, %4 : vector<16x32xf32>
    %c1 = arith.constant 1 : index
    %c0_8 = arith.constant 0 : index
    %6 = vector.load %arg20[%c1, %c0_8] : memref<24x32xf32, #tpu.memory_space<vmem>>, vector<16x32xf32>
    tpu.vector_store %arg20[%c1, %c0_8], %5 {strides = array<i32>} : memref<24x32xf32, #tpu.memory_space<vmem>>, vector<16x32xf32>,
    %cst = arith.constant 0.000000e+00 : f32
    %7 = vector.broadcast %cst : f32 to vector<7x32xf32>
    %c17 = arith.constant 17 : index
    %c0_9 = arith.constant 0 : index
    %8 = vector.load %arg20[%c17, %c0_9] : memref<24x32xf32, #tpu.memory_space<vmem>>, vector<7x32xf32>
    tpu.vector_store %arg20[%c17, %c0_9], %7 {strides = array<i32>} : memref<24x32xf32, #tpu.memory_space<vmem>>, vector<7x32xf32>,
    %c0_10 = arith.constant 0 : index
    %c0_11 = arith.constant 0 : index
    %9 = vector.load %arg20[%c0_10, %c0_11] : memref<24x32xf32, #tpu.memory_space<vmem>>, vector<24x32xf32>
    %10 = tpu.iota {dimensions = array<i32: 1>} : vector<1x24xi32>
    %c17_i32 = arith.constant 17 : i32
    %11 = vector.broadcast %c17_i32 : i32 to vector<1x24xi32>
    %12 = arith.cmpi slt, %10, %11 : vector<1x24xi32>
    %cst_12 = arith.constant 0.000000e+00 : f32
    %cst_13 = arith.constant -1.000000e+30 : f32
    %13 = vector.broadcast %cst_12 : f32 to vector<1x24xf32>
    %14 = vector.broadcast %cst_13 : f32 to vector<1x24xf32>
    %15 = arith.select %12, %13, %14 : vector<1x24xi1>, vector<1x24xf32>
    %c0_14 = arith.constant 0 : index
    %c0_15 = arith.constant 0 : index
    %c0_16 = arith.constant 0 : index
    %16 = vector.load %arg4[%c0_14, %c0_15, %c0_16] : memref<2x1x32xf32, #tpu.memory_space<vmem>>, vector<1x1x32xf32>
    %17 = vector.shape_cast %16 : vector<1x1x32xf32> to vector<1x32xf32>
    %c0_17 = arith.constant 0 : index
    %c0_18 = arith.constant 0 : index
    %c0_19 = arith.constant 0 : index
    %18 = vector.load %arg5[%c0_17, %c0_18, %c0_19] : memref<2x1x32xf32, #tpu.memory_space<vmem>>, vector<1x1x32xf32>
    %19 = vector.shape_cast %18 : vector<1x1x32xf32> to vector<1x32xf32>
    %cst_20 = arith.constant dense<0.000000e+00> : vector<24xf32>
    %20 = vector.multi_reduction <add>, %9, %cst_20 [1] : vector<24x32xf32> to vector<24xf32>
    %21 = vector.shape_cast %20 : vector<24xf32> to vector<24x1xf32>
    %cst_21 = arith.constant 3.200000e+01 : f32
    %22 = vector.broadcast %cst_21 : f32 to vector<24x1xf32>
    %23 = arith.divf %21, %22 : vector<24x1xf32>
    %24 = vector.broadcast %23 : vector<24x1xf32> to vector<24x32xf32>
    %25 = arith.subf %9, %24 : vector<24x32xf32>
    %26 = arith.mulf %25, %25 : vector<24x32xf32>
    %cst_22 = arith.constant dense<0.000000e+00> : vector<24xf32>
    %27 = vector.multi_reduction <add>, %26, %cst_22 [1] : vector<24x32xf32> to vector<24xf32>
    %28 = vector.shape_cast %27 : vector<24xf32> to vector<24x1xf32>
    %cst_23 = arith.constant 3.200000e+01 : f32
    %29 = vector.broadcast %cst_23 : f32 to vector<24x1xf32>
    %30 = arith.divf %28, %29 : vector<24x1xf32>
    %31 = vector.broadcast %23 : vector<24x1xf32> to vector<24x32xf32>
    %32 = arith.subf %9, %31 : vector<24x32xf32>
    %cst_24 = arith.constant 9.99999974E-6 : f32
    %33 = vector.broadcast %cst_24 : f32 to vector<24x1xf32>
    %34 = arith.addf %30, %33 : vector<24x1xf32>
    %35 = math.rsqrt %34 : vector<24x1xf32>
    %36 = vector.broadcast %35 : vector<24x1xf32> to vector<24x32xf32>
    %37 = arith.mulf %32, %36 : vector<24x32xf32>
    %38 = vector.broadcast %17 : vector<1x32xf32> to vector<24x32xf32>
    %39 = arith.mulf %37, %38 : vector<24x32xf32>
    %40 = vector.broadcast %19 : vector<1x32xf32> to vector<24x32xf32>
    %41 = arith.addf %39, %40 : vector<24x32xf32>
    %c0_25 = arith.constant 0 : index
    %c0_26 = arith.constant 0 : index
    %c0_27 = arith.constant 0 : index
    %42 = vector.load %arg6[%c0_25, %c0_26, %c0_27] : memref<2x32x96xf32, #tpu.memory_space<vmem>>, vector<1x32x96xf32>
    %43 = vector.shape_cast %42 : vector<1x32x96xf32> to vector<32x96xf32>
    %44 = arith.truncf %41 : vector<24x32xf32> to vector<24x32xbf16>
    %45 = arith.truncf %43 : vector<32x96xf32> to vector<32x96xbf16>
    %cst_28 = arith.constant dense<0.000000e+00> : vector<24x96xf32>
    %46 = tpu.matmul %44, %45, %cst_28 {dimension_numbers = #tpu.dot_dimension_numbers<[1], [0], [0], [1], [0, 0, 1, 1], [], []>} : vector<24x32xbf16>, vector<32x96xbf16>, vector<24x96xf32> -> vector<24x96xf32>
    %47 = vector.extract_strided_slice %46 {offsets = [0, 0], sizes = [24, 8], strides = [1, 1]} : vector<24x96xf32> to vector<24x8xf32>
    %48 = vector.extract_strided_slice %46 {offsets = [0, 32], sizes = [24, 8], strides = [1, 1]} : vector<24x96xf32> to vector<24x8xf32>
    %49 = vector.extract_strided_slice %46 {offsets = [0, 64], sizes = [24, 8], strides = [1, 1]} : vector<24x96xf32> to vector<24x8xf32>
    %50 = arith.truncf %47 : vector<24x8xf32> to vector<24x8xbf16>
    %51 = arith.truncf %48 : vector<24x8xf32> to vector<24x8xbf16>
    %cst_29 = arith.constant dense<0.000000e+00> : vector<24x24xf32>
    %52 = tpu.matmul %50, %51, %cst_29 {dimension_numbers = #tpu.dot_dimension_numbers<[1], [1], [0], [0], [0, 0, 1, 0], [], []>} : vector<24x8xbf16>, vector<24x8xbf16>, vector<24x24xf32> -> vector<24x24xf32>
    %53 = vector.broadcast %15 : vector<1x24xf32> to vector<24x24xf32>
    %54 = arith.addf %52, %53 : vector<24x24xf32>
    %cst_30 = arith.constant dense<0xFF800000> : vector<24xf32>
    %55 = vector.multi_reduction <maximumf>, %54, %cst_30 [1] : vector<24x24xf32> to vector<24xf32>
    %56 = vector.shape_cast %55 : vector<24xf32> to vector<24x1xf32>
    %57 = vector.broadcast %56 : vector<24x1xf32> to vector<24x24xf32>
    %58 = arith.subf %54, %57 : vector<24x24xf32>
    %59 = math.exp %58 : vector<24x24xf32>
    %cst_31 = arith.constant dense<0.000000e+00> : vector<24xf32>
    %60 = vector.multi_reduction <add>, %59, %cst_31 [1] : vector<24x24xf32> to vector<24xf32>
    %61 = vector.shape_cast %60 : vector<24xf32> to vector<24x1xf32>
    %62 = tpu.reciprocal %61 {approx = true} : vector<24x1xf32> -> vector<24x1xf32>
    %63 = vector.broadcast %62 : vector<24x1xf32> to vector<24x24xf32>
    %64 = arith.mulf %59, %63 : vector<24x24xf32>
    %65 = arith.truncf %64 : vector<24x24xf32> to vector<24x24xbf16>
    %66 = arith.truncf %49 : vector<24x8xf32> to vector<24x8xbf16>
    %cst_32 = arith.constant dense<0.000000e+00> : vector<24x8xf32>
    %67 = tpu.matmul %65, %66, %cst_32 {dimension_numbers = #tpu.dot_dimension_numbers<[1], [0], [0], [1], [0, 0, 1, 1], [], []>} : vector<24x24xbf16>, vector<24x8xbf16>, vector<24x8xf32> -> vector<24x8xf32>
    %68 = vector.extract_strided_slice %46 {offsets = [0, 8], sizes = [24, 8], strides = [1, 1]} : vector<24x96xf32> to vector<24x8xf32>
    %69 = vector.extract_strided_slice %46 {offsets = [0, 40], sizes = [24, 8], strides = [1, 1]} : vector<24x96xf32> to vector<24x8xf32>
    %70 = vector.extract_strided_slice %46 {offsets = [0, 72], sizes = [24, 8], strides = [1, 1]} : vector<24x96xf32> to vector<24x8xf32>
    %71 = arith.truncf %68 : vector<24x8xf32> to vector<24x8xbf16>
    %72 = arith.truncf %69 : vector<24x8xf32> to vector<24x8xbf16>
    %cst_33 = arith.constant dense<0.000000e+00> : vector<24x24xf32>
    %73 = tpu.matmul %71, %72, %cst_33 {dimension_numbers = #tpu.dot_dimension_numbers<[1], [1], [0], [0], [0, 0, 1, 0], [], []>} : vector<24x8xbf16>, vector<24x8xbf16>, vector<24x24xf32> -> vector<24x24xf32>
    %74 = vector.broadcast %15 : vector<1x24xf32> to vector<24x24xf32>
    %75 = arith.addf %73, %74 : vector<24x24xf32>
    %cst_34 = arith.constant dense<0xFF800000> : vector<24xf32>
    %76 = vector.multi_reduction <maximumf>, %75, %cst_34 [1] : vector<24x24xf32> to vector<24xf32>
    %77 = vector.shape_cast %76 : vector<24xf32> to vector<24x1xf32>
    %78 = vector.broadcast %77 : vector<24x1xf32> to vector<24x24xf32>
    %79 = arith.subf %75, %78 : vector<24x24xf32>
    %80 = math.exp %79 : vector<24x24xf32>
    %cst_35 = arith.constant dense<0.000000e+00> : vector<24xf32>
    %81 = vector.multi_reduction <add>, %80, %cst_35 [1] : vector<24x24xf32> to vector<24xf32>
    %82 = vector.shape_cast %81 : vector<24xf32> to vector<24x1xf32>
    %83 = tpu.reciprocal %82 {approx = true} : vector<24x1xf32> -> vector<24x1xf32>
    %84 = vector.broadcast %83 : vector<24x1xf32> to vector<24x24xf32>
    %85 = arith.mulf %80, %84 : vector<24x24xf32>
    %86 = arith.truncf %85 : vector<24x24xf32> to vector<24x24xbf16>
    %87 = arith.truncf %70 : vector<24x8xf32> to vector<24x8xbf16>
    %cst_36 = arith.constant dense<0.000000e+00> : vector<24x8xf32>
    %88 = tpu.matmul %86, %87, %cst_36 {dimension_numbers = #tpu.dot_dimension_numbers<[1], [0], [0], [1], [0, 0, 1, 1], [], []>} : vector<24x24xbf16>, vector<24x8xbf16>, vector<24x8xf32> -> vector<24x8xf32>
    %89 = vector.extract_strided_slice %46 {offsets = [0, 16], sizes = [24, 8], strides = [1, 1]} : vector<24x96xf32> to vector<24x8xf32>
    %90 = vector.extract_strided_slice %46 {offsets = [0, 48], sizes = [24, 8], strides = [1, 1]} : vector<24x96xf32> to vector<24x8xf32>
    %91 = vector.extract_strided_slice %46 {offsets = [0, 80], sizes = [24, 8], strides = [1, 1]} : vector<24x96xf32> to vector<24x8xf32>
    %92 = arith.truncf %89 : vector<24x8xf32> to vector<24x8xbf16>
    %93 = arith.truncf %90 : vector<24x8xf32> to vector<24x8xbf16>
    %cst_37 = arith.constant dense<0.000000e+00> : vector<24x24xf32>
    %94 = tpu.matmul %92, %93, %cst_37 {dimension_numbers = #tpu.dot_dimension_numbers<[1], [1], [0], [0], [0, 0, 1, 0], [], []>} : vector<24x8xbf16>, vector<24x8xbf16>, vector<24x24xf32> -> vector<24x24xf32>
    %95 = vector.broadcast %15 : vector<1x24xf32> to vector<24x24xf32>
    %96 = arith.addf %94, %95 : vector<24x24xf32>
    %cst_38 = arith.constant dense<0xFF800000> : vector<24xf32>
    %97 = vector.multi_reduction <maximumf>, %96, %cst_38 [1] : vector<24x24xf32> to vector<24xf32>
    %98 = vector.shape_cast %97 : vector<24xf32> to vector<24x1xf32>
    %99 = vector.broadcast %98 : vector<24x1xf32> to vector<24x24xf32>
    %100 = arith.subf %96, %99 : vector<24x24xf32>
    %101 = math.exp %100 : vector<24x24xf32>
    %cst_39 = arith.constant dense<0.000000e+00> : vector<24xf32>
    %102 = vector.multi_reduction <add>, %101, %cst_39 [1] : vector<24x24xf32> to vector<24xf32>
    %103 = vector.shape_cast %102 : vector<24xf32> to vector<24x1xf32>
    %104 = tpu.reciprocal %103 {approx = true} : vector<24x1xf32> -> vector<24x1xf32>
    %105 = vector.broadcast %104 : vector<24x1xf32> to vector<24x24xf32>
    %106 = arith.mulf %101, %105 : vector<24x24xf32>
    %107 = arith.truncf %106 : vector<24x24xf32> to vector<24x24xbf16>
    %108 = arith.truncf %91 : vector<24x8xf32> to vector<24x8xbf16>
    %cst_40 = arith.constant dense<0.000000e+00> : vector<24x8xf32>
    %109 = tpu.matmul %107, %108, %cst_40 {dimension_numbers = #tpu.dot_dimension_numbers<[1], [0], [0], [1], [0, 0, 1, 1], [], []>} : vector<24x24xbf16>, vector<24x8xbf16>, vector<24x8xf32> -> vector<24x8xf32>
    %110 = vector.extract_strided_slice %46 {offsets = [0, 24], sizes = [24, 8], strides = [1, 1]} : vector<24x96xf32> to vector<24x8xf32>
    %111 = vector.extract_strided_slice %46 {offsets = [0, 56], sizes = [24, 8], strides = [1, 1]} : vector<24x96xf32> to vector<24x8xf32>
    %112 = vector.extract_strided_slice %46 {offsets = [0, 88], sizes = [24, 8], strides = [1, 1]} : vector<24x96xf32> to vector<24x8xf32>
    %113 = arith.truncf %110 : vector<24x8xf32> to vector<24x8xbf16>
    %114 = arith.truncf %111 : vector<24x8xf32> to vector<24x8xbf16>
    %cst_41 = arith.constant dense<0.000000e+00> : vector<24x24xf32>
    %115 = tpu.matmul %113, %114, %cst_41 {dimension_numbers = #tpu.dot_dimension_numbers<[1], [1], [0], [0], [0, 0, 1, 0], [], []>} : vector<24x8xbf16>, vector<24x8xbf16>, vector<24x24xf32> -> vector<24x24xf32>
    %116 = vector.broadcast %15 : vector<1x24xf32> to vector<24x24xf32>
    %117 = arith.addf %115, %116 : vector<24x24xf32>
    %cst_42 = arith.constant dense<0xFF800000> : vector<24xf32>
    %118 = vector.multi_reduction <maximumf>, %117, %cst_42 [1] : vector<24x24xf32> to vector<24xf32>
    %119 = vector.shape_cast %118 : vector<24xf32> to vector<24x1xf32>
    %120 = vector.broadcast %119 : vector<24x1xf32> to vector<24x24xf32>
    %121 = arith.subf %117, %120 : vector<24x24xf32>
    %122 = math.exp %121 : vector<24x24xf32>
    %cst_43 = arith.constant dense<0.000000e+00> : vector<24xf32>
    %123 = vector.multi_reduction <add>, %122, %cst_43 [1] : vector<24x24xf32> to vector<24xf32>
    %124 = vector.shape_cast %123 : vector<24xf32> to vector<24x1xf32>
    %125 = tpu.reciprocal %124 {approx = true} : vector<24x1xf32> -> vector<24x1xf32>
    %126 = vector.broadcast %125 : vector<24x1xf32> to vector<24x24xf32>
    %127 = arith.mulf %122, %126 : vector<24x24xf32>
    %128 = arith.truncf %127 : vector<24x24xf32> to vector<24x24xbf16>
    %129 = arith.truncf %112 : vector<24x8xf32> to vector<24x8xbf16>
    %cst_44 = arith.constant dense<0.000000e+00> : vector<24x8xf32>
    %130 = tpu.matmul %128, %129, %cst_44 {dimension_numbers = #tpu.dot_dimension_numbers<[1], [0], [0], [1], [0, 0, 1, 1], [], []>} : vector<24x24xbf16>, vector<24x8xbf16>, vector<24x8xf32> -> vector<24x8xf32>
    %131 = tpu.concatenate %67, %88, %109, %130 in 1 : vector<24x8xf32>, vector<24x8xf32>, vector<24x8xf32>, vector<24x8xf32> -> vector<24x32xf32>
    %c0_45 = arith.constant 0 : index
    %c0_46 = arith.constant 0 : index
    %c0_47 = arith.constant 0 : index
    %132 = vector.load %arg7[%c0_45, %c0_46, %c0_47] : memref<2x32x32xf32, #tpu.memory_space<vmem>>, vector<1x32x32xf32>
    %133 = vector.shape_cast %132 : vector<1x32x32xf32> to vector<32x32xf32>
    %134 = arith.truncf %131 : vector<24x32xf32> to vector<24x32xbf16>
    %135 = arith.truncf %133 : vector<32x32xf32> to vector<32x32xbf16>
    %cst_48 = arith.constant dense<0.000000e+00> : vector<24x32xf32>
    %136 = tpu.matmul %134, %135, %cst_48 {dimension_numbers = #tpu.dot_dimension_numbers<[1], [0], [0], [1], [0, 0, 1, 1], [], []>} : vector<24x32xbf16>, vector<32x32xbf16>, vector<24x32xf32> -> vector<24x32xf32>
    %137 = arith.addf %9, %136 : vector<24x32xf32>
    %c0_49 = arith.constant 0 : index
    %c0_50 = arith.constant 0 : index
    %c0_51 = arith.constant 0 : index
    %138 = vector.load %arg8[%c0_49, %c0_50, %c0_51] : memref<2x1x32xf32, #tpu.memory_space<vmem>>, vector<1x1x32xf32>
    %139 = vector.shape_cast %138 : vector<1x1x32xf32> to vector<1x32xf32>
    %140 = vector.broadcast %139 : vector<1x32xf32> to vector<24x32xf32>
    %141 = arith.addf %137, %140 : vector<24x32xf32>
    %c0_52 = arith.constant 0 : index
    %c0_53 = arith.constant 0 : index
    %c0_54 = arith.constant 0 : index
    %142 = vector.load %arg9[%c0_52, %c0_53, %c0_54] : memref<2x1x32xf32, #tpu.memory_space<vmem>>, vector<1x1x32xf32>
    %143 = vector.shape_cast %142 : vector<1x1x32xf32> to vector<1x32xf32>
    %c0_55 = arith.constant 0 : index
    %c0_56 = arith.constant 0 : index
    %c0_57 = arith.constant 0 : index
    %144 = vector.load %arg10[%c0_55, %c0_56, %c0_57] : memref<2x1x32xf32, #tpu.memory_space<vmem>>, vector<1x1x32xf32>
    %145 = vector.shape_cast %144 : vector<1x1x32xf32> to vector<1x32xf32>
    %cst_58 = arith.constant dense<0.000000e+00> : vector<24xf32>
    %146 = vector.multi_reduction <add>, %141, %cst_58 [1] : vector<24x32xf32> to vector<24xf32>
    %147 = vector.shape_cast %146 : vector<24xf32> to vector<24x1xf32>
    %cst_59 = arith.constant 3.200000e+01 : f32
    %148 = vector.broadcast %cst_59 : f32 to vector<24x1xf32>
    %149 = arith.divf %147, %148 : vector<24x1xf32>
    %150 = vector.broadcast %149 : vector<24x1xf32> to vector<24x32xf32>
    %151 = arith.subf %141, %150 : vector<24x32xf32>
    %152 = arith.mulf %151, %151 : vector<24x32xf32>
    %cst_60 = arith.constant dense<0.000000e+00> : vector<24xf32>
    %153 = vector.multi_reduction <add>, %152, %cst_60 [1] : vector<24x32xf32> to vector<24xf32>
    %154 = vector.shape_cast %153 : vector<24xf32> to vector<24x1xf32>
    %cst_61 = arith.constant 3.200000e+01 : f32
    %155 = vector.broadcast %cst_61 : f32 to vector<24x1xf32>
    %156 = arith.divf %154, %155 : vector<24x1xf32>
    %157 = vector.broadcast %149 : vector<24x1xf32> to vector<24x32xf32>
    %158 = arith.subf %141, %157 : vector<24x32xf32>
    %cst_62 = arith.constant 9.99999974E-6 : f32
    %159 = vector.broadcast %cst_62 : f32 to vector<24x1xf32>
    %160 = arith.addf %156, %159 : vector<24x1xf32>
    %161 = math.rsqrt %160 : vector<24x1xf32>
    %162 = vector.broadcast %161 : vector<24x1xf32> to vector<24x32xf32>
    %163 = arith.mulf %158, %162 : vector<24x32xf32>
    %164 = vector.broadcast %143 : vector<1x32xf32> to vector<24x32xf32>
    %165 = arith.mulf %163, %164 : vector<24x32xf32>
    %166 = vector.broadcast %145 : vector<1x32xf32> to vector<24x32xf32>
    %167 = arith.addf %165, %166 : vector<24x32xf32>
    %c0_63 = arith.constant 0 : index
    %c0_64 = arith.constant 0 : index
    %c0_65 = arith.constant 0 : index
    %168 = vector.load %arg11[%c0_63, %c0_64, %c0_65] : memref<2x32x128xf32, #tpu.memory_space<vmem>>, vector<1x32x128xf32>
    %169 = vector.shape_cast %168 : vector<1x32x128xf32> to vector<32x128xf32>
    %170 = arith.truncf %167 : vector<24x32xf32> to vector<24x32xbf16>
    %171 = arith.truncf %169 : vector<32x128xf32> to vector<32x128xbf16>
    %cst_66 = arith.constant dense<0.000000e+00> : vector<24x128xf32>
    %172 = tpu.matmul %170, %171, %cst_66 {dimension_numbers = #tpu.dot_dimension_numbers<[1], [0], [0], [1], [0, 0, 1, 1], [], []>} : vector<24x32xbf16>, vector<32x128xbf16>, vector<24x128xf32> -> vector<24x128xf32>
    %c0_67 = arith.constant 0 : index
    %c0_68 = arith.constant 0 : index
    %c0_69 = arith.constant 0 : index
    %173 = vector.load %arg12[%c0_67, %c0_68, %c0_69] : memref<2x1x128xf32, #tpu.memory_space<vmem>>, vector<1x1x128xf32>
    %174 = vector.shape_cast %173 : vector<1x1x128xf32> to vector<1x128xf32>
    %175 = vector.broadcast %174 : vector<1x128xf32> to vector<24x128xf32>
    %176 = arith.addf %172, %175 : vector<24x128xf32>
    %cst_70 = arith.constant 5.000000e-01 : f32
    %177 = vector.broadcast %cst_70 : f32 to vector<24x128xf32>
    %178 = arith.mulf %177, %176 : vector<24x128xf32>
    %cst_71 = arith.constant 0.707106769 : f32
    %179 = vector.broadcast %cst_71 : f32 to vector<24x128xf32>
    %180 = arith.mulf %176, %179 : vector<24x128xf32>
    %cst_72 = arith.constant 0.000000e+00 : f32
    %181 = vector.broadcast %cst_72 : f32 to vector<24x128xf32>
    %182 = arith.cmpf oge, %180, %181 : vector<24x128xf32>
    %cst_73 = arith.constant 1.000000e+00 : f32
    %cst_74 = arith.constant -1.000000e+00 : f32
    %183 = vector.broadcast %cst_73 : f32 to vector<24x128xf32>
    %184 = vector.broadcast %cst_74 : f32 to vector<24x128xf32>
    %185 = arith.select %182, %183, %184 : vector<24x128xi1>, vector<24x128xf32>
    %186 = math.absf %180 : vector<24x128xf32>
    %cst_75 = arith.constant 0.327591091 : f32
    %187 = vector.broadcast %cst_75 : f32 to vector<24x128xf32>
    %188 = arith.mulf %187, %186 : vector<24x128xf32>
    %cst_76 = arith.constant 1.000000e+00 : f32
    %189 = vector.broadcast %cst_76 : f32 to vector<24x128xf32>
    %190 = arith.addf %189, %188 : vector<24x128xf32>
    %cst_77 = arith.constant 1.000000e+00 : f32
    %191 = vector.broadcast %cst_77 : f32 to vector<24x128xf32>
    %192 = arith.divf %191, %190 : vector<24x128xf32>
    %cst_78 = arith.constant 1.06140542 : f32
    %193 = vector.broadcast %cst_78 : f32 to vector<24x128xf32>
    %194 = arith.mulf %193, %192 : vector<24x128xf32>
    %cst_79 = arith.constant 1.45315206 : f32
    %195 = vector.broadcast %cst_79 : f32 to vector<24x128xf32>
    %196 = arith.subf %194, %195 : vector<24x128xf32>
    %197 = arith.mulf %196, %192 : vector<24x128xf32>
    %cst_80 = arith.constant 1.42141378 : f32
    %198 = vector.broadcast %cst_80 : f32 to vector<24x128xf32>
    %199 = arith.addf %197, %198 : vector<24x128xf32>
    %200 = arith.mulf %199, %192 : vector<24x128xf32>
    %cst_81 = arith.constant 0.284496725 : f32
    %201 = vector.broadcast %cst_81 : f32 to vector<24x128xf32>
    %202 = arith.subf %200, %201 : vector<24x128xf32>
    %203 = arith.mulf %202, %192 : vector<24x128xf32>
    %cst_82 = arith.constant 0.254829586 : f32
    %204 = vector.broadcast %cst_82 : f32 to vector<24x128xf32>
    %205 = arith.addf %203, %204 : vector<24x128xf32>
    %206 = arith.mulf %205, %192 : vector<24x128xf32>
    %cst_83 = arith.constant 0.000000e+00 : f32
    %207 = vector.broadcast %cst_83 : f32 to vector<24x128xf32>
    %208 = arith.subf %207, %186 : vector<24x128xf32>
    %209 = arith.mulf %208, %186 : vector<24x128xf32>
    %210 = math.exp %209 : vector<24x128xf32>
    %211 = arith.mulf %206, %210 : vector<24x128xf32>
    %cst_84 = arith.constant 1.000000e+00 : f32
    %212 = vector.broadcast %cst_84 : f32 to vector<24x128xf32>
    %213 = arith.subf %212, %211 : vector<24x128xf32>
    %214 = arith.mulf %185, %213 : vector<24x128xf32>
    %cst_85 = arith.constant 1.000000e+00 : f32
    %215 = vector.broadcast %cst_85 : f32 to vector<24x128xf32>
    %216 = arith.addf %215, %214 : vector<24x128xf32>
    %217 = arith.mulf %178, %216 : vector<24x128xf32>
    %c0_86 = arith.constant 0 : index
    %c0_87 = arith.constant 0 : index
    %c0_88 = arith.constant 0 : index
    %218 = vector.load %arg13[%c0_86, %c0_87, %c0_88] : memref<2x128x32xf32, #tpu.memory_space<vmem>>, vector<1x128x32xf32>
    %219 = vector.shape_cast %218 : vector<1x128x32xf32> to vector<128x32xf32>
    %220 = arith.truncf %217 : vector<24x128xf32> to vector<24x128xbf16>
    %221 = arith.truncf %219 : vector<128x32xf32> to vector<128x32xbf16>
    %cst_89 = arith.constant dense<0.000000e+00> : vector<24x32xf32>
    %222 = tpu.matmul %220, %221, %cst_89 {dimension_numbers = #tpu.dot_dimension_numbers<[1], [0], [0], [1], [0, 0, 1, 1], [], []>} : vector<24x128xbf16>, vector<128x32xbf16>, vector<24x32xf32> -> vector<24x32xf32>
    %223 = arith.addf %141, %222 : vector<24x32xf32>
    %c0_90 = arith.constant 0 : index
    %c0_91 = arith.constant 0 : index
    %c0_92 = arith.constant 0 : index
    %224 = vector.load %arg14[%c0_90, %c0_91, %c0_92] : memref<2x1x32xf32, #tpu.memory_space<vmem>>, vector<1x1x32xf32>
    %225 = vector.shape_cast %224 : vector<1x1x32xf32> to vector<1x32xf32>
    %226 = vector.broadcast %225 : vector<1x32xf32> to vector<24x32xf32>
    %227 = arith.addf %223, %226 : vector<24x32xf32>
    %c1_93 = arith.constant 1 : index
    %c0_94 = arith.constant 0 : index
    %c0_95 = arith.constant 0 : index
    %228 = vector.load %arg4[%c1_93, %c0_94, %c0_95] : memref<2x1x32xf32, #tpu.memory_space<vmem>>, vector<1x1x32xf32>
    %229 = vector.shape_cast %228 : vector<1x1x32xf32> to vector<1x32xf32>
    %c1_96 = arith.constant 1 : index
    %c0_97 = arith.constant 0 : index
    %c0_98 = arith.constant 0 : index
    %230 = vector.load %arg5[%c1_96, %c0_97, %c0_98] : memref<2x1x32xf32, #tpu.memory_space<vmem>>, vector<1x1x32xf32>
    %231 = vector.shape_cast %230 : vector<1x1x32xf32> to vector<1x32xf32>
    %cst_99 = arith.constant dense<0.000000e+00> : vector<24xf32>
    %232 = vector.multi_reduction <add>, %227, %cst_99 [1] : vector<24x32xf32> to vector<24xf32>
    %233 = vector.shape_cast %232 : vector<24xf32> to vector<24x1xf32>
    %cst_100 = arith.constant 3.200000e+01 : f32
    %234 = vector.broadcast %cst_100 : f32 to vector<24x1xf32>
    %235 = arith.divf %233, %234 : vector<24x1xf32>
    %236 = vector.broadcast %235 : vector<24x1xf32> to vector<24x32xf32>
    %237 = arith.subf %227, %236 : vector<24x32xf32>
    %238 = arith.mulf %237, %237 : vector<24x32xf32>
    %cst_101 = arith.constant dense<0.000000e+00> : vector<24xf32>
    %239 = vector.multi_reduction <add>, %238, %cst_101 [1] : vector<24x32xf32> to vector<24xf32>
    %240 = vector.shape_cast %239 : vector<24xf32> to vector<24x1xf32>
    %cst_102 = arith.constant 3.200000e+01 : f32
    %241 = vector.broadcast %cst_102 : f32 to vector<24x1xf32>
    %242 = arith.divf %240, %241 : vector<24x1xf32>
    %243 = vector.broadcast %235 : vector<24x1xf32> to vector<24x32xf32>
    %244 = arith.subf %227, %243 : vector<24x32xf32>
    %cst_103 = arith.constant 9.99999974E-6 : f32
    %245 = vector.broadcast %cst_103 : f32 to vector<24x1xf32>
    %246 = arith.addf %242, %245 : vector<24x1xf32>
    %247 = math.rsqrt %246 : vector<24x1xf32>
    %248 = vector.broadcast %247 : vector<24x1xf32> to vector<24x32xf32>
    %249 = arith.mulf %244, %248 : vector<24x32xf32>
    %250 = vector.broadcast %229 : vector<1x32xf32> to vector<24x32xf32>
    %251 = arith.mulf %249, %250 : vector<24x32xf32>
    %252 = vector.broadcast %231 : vector<1x32xf32> to vector<24x32xf32>
    %253 = arith.addf %251, %252 : vector<24x32xf32>
    %c1_104 = arith.constant 1 : index
    %c0_105 = arith.constant 0 : index
    %c0_106 = arith.constant 0 : index
    %254 = vector.load %arg6[%c1_104, %c0_105, %c0_106] : memref<2x32x96xf32, #tpu.memory_space<vmem>>, vector<1x32x96xf32>
    %255 = vector.shape_cast %254 : vector<1x32x96xf32> to vector<32x96xf32>
    %256 = arith.truncf %253 : vector<24x32xf32> to vector<24x32xbf16>
    %257 = arith.truncf %255 : vector<32x96xf32> to vector<32x96xbf16>
    %cst_107 = arith.constant dense<0.000000e+00> : vector<24x96xf32>
    %258 = tpu.matmul %256, %257, %cst_107 {dimension_numbers = #tpu.dot_dimension_numbers<[1], [0], [0], [1], [0, 0, 1, 1], [], []>} : vector<24x32xbf16>, vector<32x96xbf16>, vector<24x96xf32> -> vector<24x96xf32>
    %259 = vector.extract_strided_slice %258 {offsets = [0, 0], sizes = [24, 8], strides = [1, 1]} : vector<24x96xf32> to vector<24x8xf32>
    %260 = vector.extract_strided_slice %258 {offsets = [0, 32], sizes = [24, 8], strides = [1, 1]} : vector<24x96xf32> to vector<24x8xf32>
    %261 = vector.extract_strided_slice %258 {offsets = [0, 64], sizes = [24, 8], strides = [1, 1]} : vector<24x96xf32> to vector<24x8xf32>
    %262 = arith.truncf %259 : vector<24x8xf32> to vector<24x8xbf16>
    %263 = arith.truncf %260 : vector<24x8xf32> to vector<24x8xbf16>
    %cst_108 = arith.constant dense<0.000000e+00> : vector<24x24xf32>
    %264 = tpu.matmul %262, %263, %cst_108 {dimension_numbers = #tpu.dot_dimension_numbers<[1], [1], [0], [0], [0, 0, 1, 0], [], []>} : vector<24x8xbf16>, vector<24x8xbf16>, vector<24x24xf32> -> vector<24x24xf32>
    %265 = vector.broadcast %15 : vector<1x24xf32> to vector<24x24xf32>
    %266 = arith.addf %264, %265 : vector<24x24xf32>
    %cst_109 = arith.constant dense<0xFF800000> : vector<24xf32>
    %267 = vector.multi_reduction <maximumf>, %266, %cst_109 [1] : vector<24x24xf32> to vector<24xf32>
    %268 = vector.shape_cast %267 : vector<24xf32> to vector<24x1xf32>
    %269 = vector.broadcast %268 : vector<24x1xf32> to vector<24x24xf32>
    %270 = arith.subf %266, %269 : vector<24x24xf32>
    %271 = math.exp %270 : vector<24x24xf32>
    %cst_110 = arith.constant dense<0.000000e+00> : vector<24xf32>
    %272 = vector.multi_reduction <add>, %271, %cst_110 [1] : vector<24x24xf32> to vector<24xf32>
    %273 = vector.shape_cast %272 : vector<24xf32> to vector<24x1xf32>
    %274 = tpu.reciprocal %273 {approx = true} : vector<24x1xf32> -> vector<24x1xf32>
    %275 = vector.broadcast %274 : vector<24x1xf32> to vector<24x24xf32>
    %276 = arith.mulf %271, %275 : vector<24x24xf32>
    %277 = arith.truncf %276 : vector<24x24xf32> to vector<24x24xbf16>
    %278 = arith.truncf %261 : vector<24x8xf32> to vector<24x8xbf16>
    %cst_111 = arith.constant dense<0.000000e+00> : vector<24x8xf32>
    %279 = tpu.matmul %277, %278, %cst_111 {dimension_numbers = #tpu.dot_dimension_numbers<[1], [0], [0], [1], [0, 0, 1, 1], [], []>} : vector<24x24xbf16>, vector<24x8xbf16>, vector<24x8xf32> -> vector<24x8xf32>
    %280 = vector.extract_strided_slice %258 {offsets = [0, 8], sizes = [24, 8], strides = [1, 1]} : vector<24x96xf32> to vector<24x8xf32>
    %281 = vector.extract_strided_slice %258 {offsets = [0, 40], sizes = [24, 8], strides = [1, 1]} : vector<24x96xf32> to vector<24x8xf32>
    %282 = vector.extract_strided_slice %258 {offsets = [0, 72], sizes = [24, 8], strides = [1, 1]} : vector<24x96xf32> to vector<24x8xf32>
    %283 = arith.truncf %280 : vector<24x8xf32> to vector<24x8xbf16>
    %284 = arith.truncf %281 : vector<24x8xf32> to vector<24x8xbf16>
    %cst_112 = arith.constant dense<0.000000e+00> : vector<24x24xf32>
    %285 = tpu.matmul %283, %284, %cst_112 {dimension_numbers = #tpu.dot_dimension_numbers<[1], [1], [0], [0], [0, 0, 1, 0], [], []>} : vector<24x8xbf16>, vector<24x8xbf16>, vector<24x24xf32> -> vector<24x24xf32>
    %286 = vector.broadcast %15 : vector<1x24xf32> to vector<24x24xf32>
    %287 = arith.addf %285, %286 : vector<24x24xf32>
    %cst_113 = arith.constant dense<0xFF800000> : vector<24xf32>
    %288 = vector.multi_reduction <maximumf>, %287, %cst_113 [1] : vector<24x24xf32> to vector<24xf32>
    %289 = vector.shape_cast %288 : vector<24xf32> to vector<24x1xf32>
    %290 = vector.broadcast %289 : vector<24x1xf32> to vector<24x24xf32>
    %291 = arith.subf %287, %290 : vector<24x24xf32>
    %292 = math.exp %291 : vector<24x24xf32>
    %cst_114 = arith.constant dense<0.000000e+00> : vector<24xf32>
    %293 = vector.multi_reduction <add>, %292, %cst_114 [1] : vector<24x24xf32> to vector<24xf32>
    %294 = vector.shape_cast %293 : vector<24xf32> to vector<24x1xf32>
    %295 = tpu.reciprocal %294 {approx = true} : vector<24x1xf32> -> vector<24x1xf32>
    %296 = vector.broadcast %295 : vector<24x1xf32> to vector<24x24xf32>
    %297 = arith.mulf %292, %296 : vector<24x24xf32>
    %298 = arith.truncf %297 : vector<24x24xf32> to vector<24x24xbf16>
    %299 = arith.truncf %282 : vector<24x8xf32> to vector<24x8xbf16>
    %cst_115 = arith.constant dense<0.000000e+00> : vector<24x8xf32>
    %300 = tpu.matmul %298, %299, %cst_115 {dimension_numbers = #tpu.dot_dimension_numbers<[1], [0], [0], [1], [0, 0, 1, 1], [], []>} : vector<24x24xbf16>, vector<24x8xbf16>, vector<24x8xf32> -> vector<24x8xf32>
    %301 = vector.extract_strided_slice %258 {offsets = [0, 16], sizes = [24, 8], strides = [1, 1]} : vector<24x96xf32> to vector<24x8xf32>
    %302 = vector.extract_strided_slice %258 {offsets = [0, 48], sizes = [24, 8], strides = [1, 1]} : vector<24x96xf32> to vector<24x8xf32>
    %303 = vector.extract_strided_slice %258 {offsets = [0, 80], sizes = [24, 8], strides = [1, 1]} : vector<24x96xf32> to vector<24x8xf32>
    %304 = arith.truncf %301 : vector<24x8xf32> to vector<24x8xbf16>
    %305 = arith.truncf %302 : vector<24x8xf32> to vector<24x8xbf16>
    %cst_116 = arith.constant dense<0.000000e+00> : vector<24x24xf32>
    %306 = tpu.matmul %304, %305, %cst_116 {dimension_numbers = #tpu.dot_dimension_numbers<[1], [1], [0], [0], [0, 0, 1, 0], [], []>} : vector<24x8xbf16>, vector<24x8xbf16>, vector<24x24xf32> -> vector<24x24xf32>
    %307 = vector.broadcast %15 : vector<1x24xf32> to vector<24x24xf32>
    %308 = arith.addf %306, %307 : vector<24x24xf32>
    %cst_117 = arith.constant dense<0xFF800000> : vector<24xf32>
    %309 = vector.multi_reduction <maximumf>, %308, %cst_117 [1] : vector<24x24xf32> to vector<24xf32>
    %310 = vector.shape_cast %309 : vector<24xf32> to vector<24x1xf32>
    %311 = vector.broadcast %310 : vector<24x1xf32> to vector<24x24xf32>
    %312 = arith.subf %308, %311 : vector<24x24xf32>
    %313 = math.exp %312 : vector<24x24xf32>
    %cst_118 = arith.constant dense<0.000000e+00> : vector<24xf32>
    %314 = vector.multi_reduction <add>, %313, %cst_118 [1] : vector<24x24xf32> to vector<24xf32>
    %315 = vector.shape_cast %314 : vector<24xf32> to vector<24x1xf32>
    %316 = tpu.reciprocal %315 {approx = true} : vector<24x1xf32> -> vector<24x1xf32>
    %317 = vector.broadcast %316 : vector<24x1xf32> to vector<24x24xf32>
    %318 = arith.mulf %313, %317 : vector<24x24xf32>
    %319 = arith.truncf %318 : vector<24x24xf32> to vector<24x24xbf16>
    %320 = arith.truncf %303 : vector<24x8xf32> to vector<24x8xbf16>
    %cst_119 = arith.constant dense<0.000000e+00> : vector<24x8xf32>
    %321 = tpu.matmul %319, %320, %cst_119 {dimension_numbers = #tpu.dot_dimension_numbers<[1], [0], [0], [1], [0, 0, 1, 1], [], []>} : vector<24x24xbf16>, vector<24x8xbf16>, vector<24x8xf32> -> vector<24x8xf32>
    %322 = vector.extract_strided_slice %258 {offsets = [0, 24], sizes = [24, 8], strides = [1, 1]} : vector<24x96xf32> to vector<24x8xf32>
    %323 = vector.extract_strided_slice %258 {offsets = [0, 56], sizes = [24, 8], strides = [1, 1]} : vector<24x96xf32> to vector<24x8xf32>
    %324 = vector.extract_strided_slice %258 {offsets = [0, 88], sizes = [24, 8], strides = [1, 1]} : vector<24x96xf32> to vector<24x8xf32>
    %325 = arith.truncf %322 : vector<24x8xf32> to vector<24x8xbf16>
    %326 = arith.truncf %323 : vector<24x8xf32> to vector<24x8xbf16>
    %cst_120 = arith.constant dense<0.000000e+00> : vector<24x24xf32>
    %327 = tpu.matmul %325, %326, %cst_120 {dimension_numbers = #tpu.dot_dimension_numbers<[1], [1], [0], [0], [0, 0, 1, 0], [], []>} : vector<24x8xbf16>, vector<24x8xbf16>, vector<24x24xf32> -> vector<24x24xf32>
    %328 = vector.broadcast %15 : vector<1x24xf32> to vector<24x24xf32>
    %329 = arith.addf %327, %328 : vector<24x24xf32>
    %cst_121 = arith.constant dense<0xFF800000> : vector<24xf32>
    %330 = vector.multi_reduction <maximumf>, %329, %cst_121 [1] : vector<24x24xf32> to vector<24xf32>
    %331 = vector.shape_cast %330 : vector<24xf32> to vector<24x1xf32>
    %332 = vector.broadcast %331 : vector<24x1xf32> to vector<24x24xf32>
    %333 = arith.subf %329, %332 : vector<24x24xf32>
    %334 = math.exp %333 : vector<24x24xf32>
    %cst_122 = arith.constant dense<0.000000e+00> : vector<24xf32>
    %335 = vector.multi_reduction <add>, %334, %cst_122 [1] : vector<24x24xf32> to vector<24xf32>
    %336 = vector.shape_cast %335 : vector<24xf32> to vector<24x1xf32>
    %337 = tpu.reciprocal %336 {approx = true} : vector<24x1xf32> -> vector<24x1xf32>
    %338 = vector.broadcast %337 : vector<24x1xf32> to vector<24x24xf32>
    %339 = arith.mulf %334, %338 : vector<24x24xf32>
    %340 = arith.truncf %339 : vector<24x24xf32> to vector<24x24xbf16>
    %341 = arith.truncf %324 : vector<24x8xf32> to vector<24x8xbf16>
    %cst_123 = arith.constant dense<0.000000e+00> : vector<24x8xf32>
    %342 = tpu.matmul %340, %341, %cst_123 {dimension_numbers = #tpu.dot_dimension_numbers<[1], [0], [0], [1], [0, 0, 1, 1], [], []>} : vector<24x24xbf16>, vector<24x8xbf16>, vector<24x8xf32> -> vector<24x8xf32>
    %343 = tpu.concatenate %279, %300, %321, %342 in 1 : vector<24x8xf32>, vector<24x8xf32>, vector<24x8xf32>, vector<24x8xf32> -> vector<24x32xf32>
    %c1_124 = arith.constant 1 : index
    %c0_125 = arith.constant 0 : index
    %c0_126 = arith.constant 0 : index
    %344 = vector.load %arg7[%c1_124, %c0_125, %c0_126] : memref<2x32x32xf32, #tpu.memory_space<vmem>>, vector<1x32x32xf32>
    %345 = vector.shape_cast %344 : vector<1x32x32xf32> to vector<32x32xf32>
    %346 = arith.truncf %343 : vector<24x32xf32> to vector<24x32xbf16>
    %347 = arith.truncf %345 : vector<32x32xf32> to vector<32x32xbf16>
    %cst_127 = arith.constant dense<0.000000e+00> : vector<24x32xf32>
    %348 = tpu.matmul %346, %347, %cst_127 {dimension_numbers = #tpu.dot_dimension_numbers<[1], [0], [0], [1], [0, 0, 1, 1], [], []>} : vector<24x32xbf16>, vector<32x32xbf16>, vector<24x32xf32> -> vector<24x32xf32>
    %349 = arith.addf %227, %348 : vector<24x32xf32>
    %c1_128 = arith.constant 1 : index
    %c0_129 = arith.constant 0 : index
    %c0_130 = arith.constant 0 : index
    %350 = vector.load %arg8[%c1_128, %c0_129, %c0_130] : memref<2x1x32xf32, #tpu.memory_space<vmem>>, vector<1x1x32xf32>
    %351 = vector.shape_cast %350 : vector<1x1x32xf32> to vector<1x32xf32>
    %352 = vector.broadcast %351 : vector<1x32xf32> to vector<24x32xf32>
    %353 = arith.addf %349, %352 : vector<24x32xf32>
    %c1_131 = arith.constant 1 : index
    %c0_132 = arith.constant 0 : index
    %c0_133 = arith.constant 0 : index
    %354 = vector.load %arg9[%c1_131, %c0_132, %c0_133] : memref<2x1x32xf32, #tpu.memory_space<vmem>>, vector<1x1x32xf32>
    %355 = vector.shape_cast %354 : vector<1x1x32xf32> to vector<1x32xf32>
    %c1_134 = arith.constant 1 : index
    %c0_135 = arith.constant 0 : index
    %c0_136 = arith.constant 0 : index
    %356 = vector.load %arg10[%c1_134, %c0_135, %c0_136] : memref<2x1x32xf32, #tpu.memory_space<vmem>>, vector<1x1x32xf32>
    %357 = vector.shape_cast %356 : vector<1x1x32xf32> to vector<1x32xf32>
    %cst_137 = arith.constant dense<0.000000e+00> : vector<24xf32>
    %358 = vector.multi_reduction <add>, %353, %cst_137 [1] : vector<24x32xf32> to vector<24xf32>
    %359 = vector.shape_cast %358 : vector<24xf32> to vector<24x1xf32>
    %cst_138 = arith.constant 3.200000e+01 : f32
    %360 = vector.broadcast %cst_138 : f32 to vector<24x1xf32>
    %361 = arith.divf %359, %360 : vector<24x1xf32>
    %362 = vector.broadcast %361 : vector<24x1xf32> to vector<24x32xf32>
    %363 = arith.subf %353, %362 : vector<24x32xf32>
    %364 = arith.mulf %363, %363 : vector<24x32xf32>
    %cst_139 = arith.constant dense<0.000000e+00> : vector<24xf32>
    %365 = vector.multi_reduction <add>, %364, %cst_139 [1] : vector<24x32xf32> to vector<24xf32>
    %366 = vector.shape_cast %365 : vector<24xf32> to vector<24x1xf32>
    %cst_140 = arith.constant 3.200000e+01 : f32
    %367 = vector.broadcast %cst_140 : f32 to vector<24x1xf32>
    %368 = arith.divf %366, %367 : vector<24x1xf32>
    %369 = vector.broadcast %361 : vector<24x1xf32> to vector<24x32xf32>
    %370 = arith.subf %353, %369 : vector<24x32xf32>
    %cst_141 = arith.constant 9.99999974E-6 : f32
    %371 = vector.broadcast %cst_141 : f32 to vector<24x1xf32>
    %372 = arith.addf %368, %371 : vector<24x1xf32>
    %373 = math.rsqrt %372 : vector<24x1xf32>
    %374 = vector.broadcast %373 : vector<24x1xf32> to vector<24x32xf32>
    %375 = arith.mulf %370, %374 : vector<24x32xf32>
    %376 = vector.broadcast %355 : vector<1x32xf32> to vector<24x32xf32>
    %377 = arith.mulf %375, %376 : vector<24x32xf32>
    %378 = vector.broadcast %357 : vector<1x32xf32> to vector<24x32xf32>
    %379 = arith.addf %377, %378 : vector<24x32xf32>
    %c1_142 = arith.constant 1 : index
    %c0_143 = arith.constant 0 : index
    %c0_144 = arith.constant 0 : index
    %380 = vector.load %arg11[%c1_142, %c0_143, %c0_144] : memref<2x32x128xf32, #tpu.memory_space<vmem>>, vector<1x32x128xf32>
    %381 = vector.shape_cast %380 : vector<1x32x128xf32> to vector<32x128xf32>
    %382 = arith.truncf %379 : vector<24x32xf32> to vector<24x32xbf16>
    %383 = arith.truncf %381 : vector<32x128xf32> to vector<32x128xbf16>
    %cst_145 = arith.constant dense<0.000000e+00> : vector<24x128xf32>
    %384 = tpu.matmul %382, %383, %cst_145 {dimension_numbers = #tpu.dot_dimension_numbers<[1], [0], [0], [1], [0, 0, 1, 1], [], []>} : vector<24x32xbf16>, vector<32x128xbf16>, vector<24x128xf32> -> vector<24x128xf32>
    %c1_146 = arith.constant 1 : index
    %c0_147 = arith.constant 0 : index
    %c0_148 = arith.constant 0 : index
    %385 = vector.load %arg12[%c1_146, %c0_147, %c0_148] : memref<2x1x128xf32, #tpu.memory_space<vmem>>, vector<1x1x128xf32>
    %386 = vector.shape_cast %385 : vector<1x1x128xf32> to vector<1x128xf32>
    %387 = vector.broadcast %386 : vector<1x128xf32> to vector<24x128xf32>
    %388 = arith.addf %384, %387 : vector<24x128xf32>
    %cst_149 = arith.constant 5.000000e-01 : f32
    %389 = vector.broadcast %cst_149 : f32 to vector<24x128xf32>
    %390 = arith.mulf %389, %388 : vector<24x128xf32>
    %cst_150 = arith.constant 0.707106769 : f32
    %391 = vector.broadcast %cst_150 : f32 to vector<24x128xf32>
    %392 = arith.mulf %388, %391 : vector<24x128xf32>
    %cst_151 = arith.constant 0.000000e+00 : f32
    %393 = vector.broadcast %cst_151 : f32 to vector<24x128xf32>
    %394 = arith.cmpf oge, %392, %393 : vector<24x128xf32>
    %cst_152 = arith.constant 1.000000e+00 : f32
    %cst_153 = arith.constant -1.000000e+00 : f32
    %395 = vector.broadcast %cst_152 : f32 to vector<24x128xf32>
    %396 = vector.broadcast %cst_153 : f32 to vector<24x128xf32>
    %397 = arith.select %394, %395, %396 : vector<24x128xi1>, vector<24x128xf32>
    %398 = math.absf %392 : vector<24x128xf32>
    %cst_154 = arith.constant 0.327591091 : f32
    %399 = vector.broadcast %cst_154 : f32 to vector<24x128xf32>
    %400 = arith.mulf %399, %398 : vector<24x128xf32>
    %cst_155 = arith.constant 1.000000e+00 : f32
    %401 = vector.broadcast %cst_155 : f32 to vector<24x128xf32>
    %402 = arith.addf %401, %400 : vector<24x128xf32>
    %cst_156 = arith.constant 1.000000e+00 : f32
    %403 = vector.broadcast %cst_156 : f32 to vector<24x128xf32>
    %404 = arith.divf %403, %402 : vector<24x128xf32>
    %cst_157 = arith.constant 1.06140542 : f32
    %405 = vector.broadcast %cst_157 : f32 to vector<24x128xf32>
    %406 = arith.mulf %405, %404 : vector<24x128xf32>
    %cst_158 = arith.constant 1.45315206 : f32
    %407 = vector.broadcast %cst_158 : f32 to vector<24x128xf32>
    %408 = arith.subf %406, %407 : vector<24x128xf32>
    %409 = arith.mulf %408, %404 : vector<24x128xf32>
    %cst_159 = arith.constant 1.42141378 : f32
    %410 = vector.broadcast %cst_159 : f32 to vector<24x128xf32>
    %411 = arith.addf %409, %410 : vector<24x128xf32>
    %412 = arith.mulf %411, %404 : vector<24x128xf32>
    %cst_160 = arith.constant 0.284496725 : f32
    %413 = vector.broadcast %cst_160 : f32 to vector<24x128xf32>
    %414 = arith.subf %412, %413 : vector<24x128xf32>
    %415 = arith.mulf %414, %404 : vector<24x128xf32>
    %cst_161 = arith.constant 0.254829586 : f32
    %416 = vector.broadcast %cst_161 : f32 to vector<24x128xf32>
    %417 = arith.addf %415, %416 : vector<24x128xf32>
    %418 = arith.mulf %417, %404 : vector<24x128xf32>
    %cst_162 = arith.constant 0.000000e+00 : f32
    %419 = vector.broadcast %cst_162 : f32 to vector<24x128xf32>
    %420 = arith.subf %419, %398 : vector<24x128xf32>
    %421 = arith.mulf %420, %398 : vector<24x128xf32>
    %422 = math.exp %421 : vector<24x128xf32>
    %423 = arith.mulf %418, %422 : vector<24x128xf32>
    %cst_163 = arith.constant 1.000000e+00 : f32
    %424 = vector.broadcast %cst_163 : f32 to vector<24x128xf32>
    %425 = arith.subf %424, %423 : vector<24x128xf32>
    %426 = arith.mulf %397, %425 : vector<24x128xf32>
    %cst_164 = arith.constant 1.000000e+00 : f32
    %427 = vector.broadcast %cst_164 : f32 to vector<24x128xf32>
    %428 = arith.addf %427, %426 : vector<24x128xf32>
    %429 = arith.mulf %390, %428 : vector<24x128xf32>
    %c1_165 = arith.constant 1 : index
    %c0_166 = arith.constant 0 : index
    %c0_167 = arith.constant 0 : index
    %430 = vector.load %arg13[%c1_165, %c0_166, %c0_167] : memref<2x128x32xf32, #tpu.memory_space<vmem>>, vector<1x128x32xf32>
    %431 = vector.shape_cast %430 : vector<1x128x32xf32> to vector<128x32xf32>
    %432 = arith.truncf %429 : vector<24x128xf32> to vector<24x128xbf16>
    %433 = arith.truncf %431 : vector<128x32xf32> to vector<128x32xbf16>
    %cst_168 = arith.constant dense<0.000000e+00> : vector<24x32xf32>
    %434 = tpu.matmul %432, %433, %cst_168 {dimension_numbers = #tpu.dot_dimension_numbers<[1], [0], [0], [1], [0, 0, 1, 1], [], []>} : vector<24x128xbf16>, vector<128x32xbf16>, vector<24x32xf32> -> vector<24x32xf32>
    %435 = arith.addf %353, %434 : vector<24x32xf32>
    %c1_169 = arith.constant 1 : index
    %c0_170 = arith.constant 0 : index
    %c0_171 = arith.constant 0 : index
    %436 = vector.load %arg14[%c1_169, %c0_170, %c0_171] : memref<2x1x32xf32, #tpu.memory_space<vmem>>, vector<1x1x32xf32>
    %437 = vector.shape_cast %436 : vector<1x1x32xf32> to vector<1x32xf32>
    %438 = vector.broadcast %437 : vector<1x32xf32> to vector<24x32xf32>
    %439 = arith.addf %435, %438 : vector<24x32xf32>
    %c0_172 = arith.constant 0 : index
    %c0_173 = arith.constant 0 : index
    %440 = vector.load %arg15[%c0_172, %c0_173] : memref<1x32xf32, #tpu.memory_space<vmem>>, vector<1x32xf32>
    %c0_174 = arith.constant 0 : index
    %c0_175 = arith.constant 0 : index
    %441 = vector.load %arg16[%c0_174, %c0_175] : memref<1x32xf32, #tpu.memory_space<vmem>>, vector<1x32xf32>
    %cst_176 = arith.constant dense<0.000000e+00> : vector<24xf32>
    %442 = vector.multi_reduction <add>, %439, %cst_176 [1] : vector<24x32xf32> to vector<24xf32>
    %443 = vector.shape_cast %442 : vector<24xf32> to vector<24x1xf32>
    %cst_177 = arith.constant 3.200000e+01 : f32
    %444 = vector.broadcast %cst_177 : f32 to vector<24x1xf32>
    %445 = arith.divf %443, %444 : vector<24x1xf32>
    %446 = vector.broadcast %445 : vector<24x1xf32> to vector<24x32xf32>
    %447 = arith.subf %439, %446 : vector<24x32xf32>
    %448 = arith.mulf %447, %447 : vector<24x32xf32>
    %cst_178 = arith.constant dense<0.000000e+00> : vector<24xf32>
    %449 = vector.multi_reduction <add>, %448, %cst_178 [1] : vector<24x32xf32> to vector<24xf32>
    %450 = vector.shape_cast %449 : vector<24xf32> to vector<24x1xf32>
    %cst_179 = arith.constant 3.200000e+01 : f32
    %451 = vector.broadcast %cst_179 : f32 to vector<24x1xf32>
    %452 = arith.divf %450, %451 : vector<24x1xf32>
    %453 = vector.broadcast %445 : vector<24x1xf32> to vector<24x32xf32>
    %454 = arith.subf %439, %453 : vector<24x32xf32>
    %cst_180 = arith.constant 9.99999974E-6 : f32
    %455 = vector.broadcast %cst_180 : f32 to vector<24x1xf32>
    %456 = arith.addf %452, %455 : vector<24x1xf32>
    %457 = math.rsqrt %456 : vector<24x1xf32>
    %458 = vector.broadcast %457 : vector<24x1xf32> to vector<24x32xf32>
    %459 = arith.mulf %454, %458 : vector<24x32xf32>
    %460 = vector.broadcast %440 : vector<1x32xf32> to vector<24x32xf32>
    %461 = arith.mulf %459, %460 : vector<24x32xf32>
    %462 = vector.broadcast %441 : vector<1x32xf32> to vector<24x32xf32>
    %463 = arith.addf %461, %462 : vector<24x32xf32>
    %c0_181 = arith.constant 0 : index
    %c0_182 = arith.constant 0 : index
    %464 = vector.load %arg17[%c0_181, %c0_182] : memref<32x128xf32, #tpu.memory_space<vmem>>, vector<32x128xf32>
    %465 = arith.truncf %463 : vector<24x32xf32> to vector<24x32xbf16>
    %466 = arith.truncf %464 : vector<32x128xf32> to vector<32x128xbf16>
    %cst_183 = arith.constant dense<0.000000e+00> : vector<24x128xf32>
    %467 = tpu.matmul %465, %466, %cst_183 {dimension_numbers = #tpu.dot_dimension_numbers<[1], [0], [0], [1], [0, 0, 1, 1], [], []>} : vector<24x32xbf16>, vector<32x128xbf16>, vector<24x128xf32> -> vector<24x128xf32>
    %c0_184 = arith.constant 0 : index
    %c0_185 = arith.constant 0 : index
    %468 = vector.load %arg18[%c0_184, %c0_185] : memref<1x128xf32, #tpu.memory_space<vmem>>, vector<1x128xf32>
    %469 = vector.broadcast %468 : vector<1x128xf32> to vector<24x128xf32>
    %470 = arith.addf %467, %469 : vector<24x128xf32>
    %c0_186 = arith.constant 0 : index
    %c0_187 = arith.constant 0 : index
    %c0_188 = arith.constant 0 : index
    %471 = vector.load %arg19[%c0_186, %c0_187, %c0_188] : memref<1x24x128xf32, #tpu.memory_space<vmem>>, vector<1x24x128xf32>
    %472 = vector.shape_cast %471 : vector<1x24x128xf32> to vector<24x128xf32>
    %473 = vector.shape_cast %470 : vector<24x128xf32> to vector<1x24x128xf32>
    tpu.vector_store %arg19[%c0_186, %c0_187, %c0_188], %473 {strides = array<i32>} : memref<1x24x128xf32, #tpu.memory_space<vmem>>, vector<1x24x128xf32>,
    return
  }
  func.func @transform_0(%arg0: i32) -> (i32, i32, i32) {
    %c0_i32 = arith.constant 0 : i32
    %c0_i32_0 = arith.constant 0 : i32
    %c0_i32_1 = arith.constant 0 : i32
    return %arg0, %c0_i32, %c0_i32_0 : i32, i32, i32
  }
  func.func @transform_1(%arg0: i32) -> (i32, i32) {
    %c0_i32 = arith.constant 0 : i32
    %c0_i32_0 = arith.constant 0 : i32
    %c0_i32_1 = arith.constant 0 : i32
    return %c0_i32, %c0_i32_0 : i32, i32
  }
  func.func @transform_2(%arg0: i32) -> (i32, i32) {
    %c0_i32 = arith.constant 0 : i32
    %c0_i32_0 = arith.constant 0 : i32
    %c0_i32_1 = arith.constant 0 : i32
    return %c0_i32, %c0_i32_0 : i32, i32
  }
  func.func @transform_3(%arg0: i32) -> (i32, i32, i32) {
    %c0_i32 = arith.constant 0 : i32
    %c0_i32_0 = arith.constant 0 : i32
    %c0_i32_1 = arith.constant 0 : i32
    %c0_i32_2 = arith.constant 0 : i32
    return %c0_i32, %c0_i32_0, %c0_i32_1 : i32, i32, i32
  }
  func.func @transform_4(%arg0: i32) -> (i32, i32, i32) {
    %c0_i32 = arith.constant 0 : i32
    %c0_i32_0 = arith.constant 0 : i32
    %c0_i32_1 = arith.constant 0 : i32
    %c0_i32_2 = arith.constant 0 : i32
    return %c0_i32, %c0_i32_0, %c0_i32_1 : i32, i32, i32
  }
  func.func @transform_5(%arg0: i32) -> (i32, i32, i32) {
    %c0_i32 = arith.constant 0 : i32
    %c0_i32_0 = arith.constant 0 : i32
    %c0_i32_1 = arith.constant 0 : i32
    %c0_i32_2 = arith.constant 0 : i32
    return %c0_i32, %c0_i32_0, %c0_i32_1 : i32, i32, i32
  }
  func.func @transform_6(%arg0: i32) -> (i32, i32, i32) {
    %c0_i32 = arith.constant 0 : i32
    %c0_i32_0 = arith.constant 0 : i32
    %c0_i32_1 = arith.constant 0 : i32
    %c0_i32_2 = arith.constant 0 : i32
    return %c0_i32, %c0_i32_0, %c0_i32_1 : i32, i32, i32
  }
  func.func @transform_7(%arg0: i32) -> (i32, i32, i32) {
    %c0_i32 = arith.constant 0 : i32
    %c0_i32_0 = arith.constant 0 : i32
    %c0_i32_1 = arith.constant 0 : i32
    %c0_i32_2 = arith.constant 0 : i32
    return %c0_i32, %c0_i32_0, %c0_i32_1 : i32, i32, i32
  }
  func.func @transform_8(%arg0: i32) -> (i32, i32, i32) {
    %c0_i32 = arith.constant 0 : i32
    %c0_i32_0 = arith.constant 0 : i32
    %c0_i32_1 = arith.constant 0 : i32
    %c0_i32_2 = arith.constant 0 : i32
    return %c0_i32, %c0_i32_0, %c0_i32_1 : i32, i32, i32
  }
  func.func @transform_9(%arg0: i32) -> (i32, i32, i32) {
    %c0_i32 = arith.constant 0 : i32
    %c0_i32_0 = arith.constant 0 : i32
    %c0_i32_1 = arith.constant 0 : i32
    %c0_i32_2 = arith.constant 0 : i32
    return %c0_i32, %c0_i32_0, %c0_i32_1 : i32, i32, i32
  }
  func.func @transform_10(%arg0: i32) -> (i32, i32, i32) {
    %c0_i32 = arith.constant 0 : i32
    %c0_i32_0 = arith.constant 0 : i32
    %c0_i32_1 = arith.constant 0 : i32
    %c0_i32_2 = arith.constant 0 : i32
    return %c0_i32, %c0_i32_0, %c0_i32_1 : i32, i32, i32
  }
  func.func @transform_11(%arg0: i32) -> (i32, i32, i32) {
    %c0_i32 = arith.constant 0 : i32
    %c0_i32_0 = arith.constant 0 : i32
    %c0_i32_1 = arith.constant 0 : i32
    %c0_i32_2 = arith.constant 0 : i32
    return %c0_i32, %c0_i32_0, %c0_i32_1 : i32, i32, i32
  }
  func.func @transform_12(%arg0: i32) -> (i32, i32, i32) {
    %c0_i32 = arith.constant 0 : i32
    %c0_i32_0 = arith.constant 0 : i32
    %c0_i32_1 = arith.constant 0 : i32
    %c0_i32_2 = arith.constant 0 : i32
    return %c0_i32, %c0_i32_0, %c0_i32_1 : i32, i32, i32
  }
  func.func @transform_13(%arg0: i32) -> (i32, i32, i32) {
    %c0_i32 = arith.constant 0 : i32
    %c0_i32_0 = arith.constant 0 : i32
    %c0_i32_1 = arith.constant 0 : i32
    %c0_i32_2 = arith.constant 0 : i32
    return %c0_i32, %c0_i32_0, %c0_i32_1 : i32, i32, i32
  }
  func.func @transform_14(%arg0: i32) -> (i32, i32) {
    %c0_i32 = arith.constant 0 : i32
    %c0_i32_0 = arith.constant 0 : i32
    %c0_i32_1 = arith.constant 0 : i32
    return %c0_i32, %c0_i32_0 : i32, i32
  }
  func.func @transform_15(%arg0: i32) -> (i32, i32) {
    %c0_i32 = arith.constant 0 : i32
    %c0_i32_0 = arith.constant 0 : i32
    %c0_i32_1 = arith.constant 0 : i32
    return %c0_i32, %c0_i32_0 : i32, i32
  }
  func.func @transform_16(%arg0: i32) -> (i32, i32) {
    %c0_i32 = arith.constant 0 : i32
    %c0_i32_0 = arith.constant 0 : i32
    %c0_i32_1 = arith.constant 0 : i32
    return %c0_i32, %c0_i32_0 : i32, i32
  }
  func.func @transform_17(%arg0: i32) -> (i32, i32) {
    %c0_i32 = arith.constant 0 : i32
    %c0_i32_0 = arith.constant 0 : i32
    %c0_i32_1 = arith.constant 0 : i32
    return %c0_i32, %c0_i32_0 : i32, i32
  }
  func.func @transform_18(%arg0: i32) -> (i32, i32, i32) {
    %c0_i32 = arith.constant 0 : i32
    %c0_i32_0 = arith.constant 0 : i32
    %c0_i32_1 = arith.constant 0 : i32
    return %arg0, %c0_i32, %c0_i32_0 : i32, i32, i32
  }
}

</mosaic_0001>

<llo_original>
// kernel: lvvit_teacher_forward.4
$region0: #{lvvit_teacher_forward.4}
  #allocation0 [shape = 'u32[]', space=smem, size = 0x4, offset = 0x4, fixed_abs, tag = 'smem constant byte address 0x4 - core index']
  #allocation1 [shape = 'u32[144,128]{1,0:T(1,128)}', space=vmem, size = 0x12000, scoped, tag = 'internal scratch']
  %s0 = inlined_call_operand.vmem [shape: f32[128,147], index: 0, kind: input, shape index: {}]
  %s1 = inlined_call_operand.vmem [shape: f32[147,64], index: 1, kind: input, shape index: {}]
  %s2 = inlined_call_operand.vmem [shape: f32[1,64], index: 2, kind: input, shape index: {}]
  %s3 = inlined_call_operand.vmem [shape: f32[1,64], index: 3, kind: input, shape index: {}]
  %s4 = inlined_call_operand.vmem [shape: f32[128,64], index: 4, kind: output, shape index: {}]
  %s5 = sld [smem:[#allocation0]]
  $region26: #{lvvit_teacher_forward.4} parent=0
    _
  %s7 = ssub.s32 1, %s5
  %s8 = scalar_select 0, %s7, %s5
  // Predicated region
  $region2: #{lvvit_teacher_forward.4} parent=0 // pred_check
    _
  $region3: #{lvvit_teacher_forward.4} parent=0 // pred_check_branch
    %10 = sbr.rel (0) target = $region5
  $region4: #{lvvit_teacher_forward.4} parent=0 // pred_region
    _
  $region5: #{lvvit_teacher_forward.4} parent=0 // pred_fallthru
    _
  // Predicated region
  $region6: #{lvvit_teacher_forward.4} parent=0 // pred_check
    _
  $region7: #{lvvit_teacher_forward.4} parent=0 // pred_check_branch
    %12 = sbr.rel (0) target = $region9
  $region8: #{lvvit_teacher_forward.4} parent=0 // pred_region
    _
  $region9: #{lvvit_teacher_forward.4} parent=0 // pred_fallthru
    _
  // Predicated region
  $region10: #{lvvit_teacher_forward.4} parent=0 // pred_check
    _
  $region11: #{lvvit_teacher_forward.4} parent=0 // pred_check_branch
    %14 = sbr.rel (0) target = $region13
  $region12: #{lvvit_teacher_forward.4} parent=0 // pred_region
    _
  $region13: #{lvvit_teacher_forward.4} parent=0 // pred_fallthru
    _
  // Predicated region
  $region14: #{lvvit_teacher_forward.4} parent=0 // pred_check
    _
  $region15: #{lvvit_teacher_forward.4} parent=0 // pred_check_branch
    %16 = sbr.rel (0) target = $region17
  $region16: #{lvvit_teacher_forward.4} parent=0 // pred_region
    _
  $region17: #{lvvit_teacher_forward.4} parent=0 // pred_fallthru
    _
  %v18 = vld [vmem:[%s0] sm:$0xff]
  %v19 = vld [vmem:[%s0 + $0x8] sm:$0xff]
  %v20 = vld [vmem:[%s0 + $0x10] sm:$0xff]
  %v21 = vld [vmem:[%s0 + $0x18] sm:$0xff]
  %v22 = vld [vmem:[%s0 + $0x20] sm:$0xff]
  %v23 = vld [vmem:[%s0 + $0x28] sm:$0xff]
  %v24 = vld [vmem:[%s0 + $0x30] sm:$0xff]
  %v25 = vld [vmem:[%s0 + $0x38] sm:$0xff]
  %v26 = vld [vmem:[%s0 + $0x40] sm:$0xff]
  %v27 = vld [vmem:[%s0 + $0x48] sm:$0xff]
  %v28 = vld [vmem:[%s0 + $0x50] sm:$0xff]
  %v29 = vld [vmem:[%s0 + $0x58] sm:$0xff]
  %v30 = vld [vmem:[%s0 + $0x60] sm:$0xff]
  %v31 = vld [vmem:[%s0 + $0x68] sm:$0xff]
  %v32 = vld [vmem:[%s0 + $0x70] sm:$0xff]
  %v33 = vld [vmem:[%s0 + $0x78] sm:$0xff]
  %v34 = vld [vmem:[%s0 + $0x80] sm:$0xff]
  %v35 = vld [vmem:[%s0 + $0x88] sm:$0xff]
  %v36 = vld [vmem:[%s0 + $0x90] sm:$0xff]
  %v37 = vld [vmem:[%s0 + $0x98] sm:$0xff]
  %v38 = vld [vmem:[%s0 + $0xa0] sm:$0xff]
  %v39 = vld [vmem:[%s0 + $0xa8] sm:$0xff]
  %v40 = vld [vmem:[%s0 + $0xb0] sm:$0xff]
  %v41 = vld [vmem:[%s0 + $0xb8] sm:$0xff]
  %v42 = vld [vmem:[%s0 + $0xc0] sm:$0xff]
  %v43 = vld [vmem:[%s0 + $0xc8] sm:$0xff]
  %v44 = vld [vmem:[%s0 + $0xd0] sm:$0xff]
  %v45 = vld [vmem:[%s0 + $0xd8] sm:$0xff]
  %v46 = vld [vmem:[%s0 + $0xe0] sm:$0xff]
  %v47 = vld [vmem:[%s0 + $0xe8] sm:$0xff]
  %v48 = vld [vmem:[%s0 + $0xf0] sm:$0xff]
  %v49 = vld [vmem:[%s0 + $0xf8] sm:$0xff]
  %v50 = vld [vmem:[%s1] sm:$0xff]
  %v51 = vld [vmem:[%s1 + $0x8] sm:$0xff]
  %v52 = vld [vmem:[%s1 + $0x10] sm:$0xff]
  %v53 = vld [vmem:[%s1 + $0x18] sm:$0xff]
  %v54 = vld [vmem:[%s1 + $0x20] sm:$0xff]
  %v55 = vld [vmem:[%s1 + $0x28] sm:$0xff]
  %v56 = vld [vmem:[%s1 + $0x30] sm:$0xff]
  %v57 = vld [vmem:[%s1 + $0x38] sm:$0xff]
  %v58 = vld [vmem:[%s1 + $0x40] sm:$0xff]
  %v59 = vld [vmem:[%s1 + $0x48] sm:$0xff]
  %v60 = vld [vmem:[%s1 + $0x50] sm:$0xff]
  %v61 = vld [vmem:[%s1 + $0x58] sm:$0xff]
  %v62 = vld [vmem:[%s1 + $0x60] sm:$0xff]
  %v63 = vld [vmem:[%s1 + $0x68] sm:$0xff]
  %v64 = vld [vmem:[%s1 + $0x70] sm:$0xff]
  %v65 = vld [vmem:[%s1 + $0x78] sm:$0xff]
  %v66 = vld [vmem:[%s1 + $0x80] sm:$0xff]
  %v67 = vld [vmem:[%s1 + $0x88] sm:$0xff]
  %v68 = vld [vmem:[%s1 + $0x90] sm:$0x7]
  %v69 = vpack.c.bf16 %v20, %v18
  %v70 = vpack.c.bf16 %v21, %v19
  %v71 = vpack.c.bf16 %v24, %v22
  %v72 = vpack.c.bf16 %v25, %v23
  %v73 = vpack.c.bf16 %v28, %v26
  %v74 = vpack.c.bf16 %v29, %v27
  %v75 = vpack.c.bf16 %v32, %v30
  %v76 = vpack.c.bf16 %v33, %v31
  %v77 = vpack.c.bf16 %v36, %v34
  %v78 = vpack.c.bf16 %v37, %v35
  %v79 = vpack.c.bf16 %v40, %v38
  %v80 = vpack.c.bf16 %v41, %v39
  %v81 = vpack.c.bf16 %v44, %v42
  %v82 = vpack.c.bf16 %v45, %v43
  %v83 = vpack.c.bf16 %v48, %v46
  %v84 = vpack.c.bf16 %v49, %v47
  %v85 = vpack.c.bf16 %v51, %v50
  %v86 = vpack.c.bf16 %v53, %v52
  %v87 = vpack.c.bf16 %v55, %v54
  %v88 = vpack.c.bf16 %v57, %v56
  %v89 = vpack.c.bf16 %v59, %v58
  %v90 = vpack.c.bf16 %v61, %v60
  %v91 = vpack.c.bf16 %v63, %v62
  %v92 = vpack.c.bf16 %v65, %v64
  %v93 = vpack.c.bf16 %v67, %v66
  %v94 = vpack.c.bf16 %v68, %v68
  %vm95 = vcmask 154624
  %v97 = vsel %vm95, %v70, 0
  %v100 = vsel %vm95, %v72, 0
  %v103 = vsel %vm95, %v74, 0
  %v106 = vsel %vm95, %v76, 0
  %v109 = vsel %vm95, %v78, 0
  %v112 = vsel %vm95, %v80, 0
  %v115 = vsel %vm95, %v82, 0
  %v118 = vsel %vm95, %v84, 0
  %vm120 = vcmask 1040384
  %vm121 = vcmask 1041408
  %v122 = vsel %vm120, 4294967295, 65535
  %v123 = vsel %vm121, %v122, 0
  %v125 = vand.u32 %v94, %v123
  %127 = vmatprep.subr.bf16.mxu0 0
  %128 = vmatpush1.bf16.msra.mxu0 %v92
  %129 = vmatprep.subr.bf16.mxu0 0
  %130 = vmatpush1.bf16.msra.mxu0 %v91
  %131 = vmatprep.subr.bf16.mxu0 0
  %132 = vmatpush1.bf16.msra.mxu0 %v90
  %133 = vmatprep.subr.bf16.mxu0 0
  %134 = vmatpush1.bf16.msra.mxu0 %v89
  %135 = vmatprep.subr.bf16.mxu0 0
  %136 = vmatpush1.bf16.msra.mxu0 %v88
  %137 = vmatprep.subr.bf16.mxu0 0
  %138 = vmatpush1.bf16.msra.mxu0 %v87
  %139 = vmatprep.subr.bf16.mxu0 0
  %140 = vmatpush1.bf16.msra.mxu0 %v86
  %141 = vmatprep.subr.bf16.mxu0 0
  %142 = vmatpush1.bf16.msra.mxu0 %v85
  %143 = vmatprep.subr.bf16.mxu0 0
  %144 = vmatpush2.bf16.msra.mxu0 0
  %145 = vmatprep.subr.bf16.mxu0 0
  %146 = vmatpush2.bf16.msra.mxu0 0
  %147 = vmatprep.subr.bf16.mxu0 0
  %148 = vmatpush2.bf16.msra.mxu0 0
  %149 = vmatprep.subr.bf16.mxu0 0
  %150 = vmatpush2.bf16.msra.mxu0 0
  %151 = vmatprep.subr.bf16.mxu0 0
  %152 = vmatpush2.bf16.msra.mxu0 0
  %153 = vmatprep.subr.bf16.mxu0 0
  %154 = vmatpush2.bf16.msra.mxu0 0
  %155 = vmatprep.subr.bf16.mxu0 0
  %156 = vmatpush2.bf16.msra.mxu0 %v125
  %157 = vmatprep.subr.bf16.mxu0 0
  %158 = vmatpush2.bf16.msra.mxu0 %v93
  %159 = vmatprep.mubr.bf16.mxu0 %v97
  %160 = vmatmul.mubr.bf16.gmra.mxu0 %v69
  %v161 = vpop.f32.mrf.mxu0
  %v162 = vadd.f32 0.0, %v161
  %v163 = vpop.f32.mrf.mxu0
  %v164 = vpop.f32.mrf.mxu0
  %v165 = vadd.f32 0.0, %v164
  %v166 = vpop.f32.mrf.mxu0
  %167 = vmatprep.mubr.bf16.mxu0 %v100
  %168 = vmatmul.mubr.bf16.gmra.mxu0 %v71
  %v169 = vpop.f32.mrf.mxu0
  %v170 = vadd.f32 0.0, %v169
  %v171 = vpop.f32.mrf.mxu0
  %v172 = vpop.f32.mrf.mxu0
  %v173 = vadd.f32 0.0, %v172
  %v174 = vpop.f32.mrf.mxu0
  %175 = vmatprep.mubr.bf16.mxu0 %v103
  %176 = vmatmul.mubr.bf16.gmra.mxu0 %v73
  %v177 = vpop.f32.mrf.mxu0
  %v178 = vadd.f32 0.0, %v177
  %v179 = vpop.f32.mrf.mxu0
  %v180 = vpop.f32.mrf.mxu0
  %v181 = vadd.f32 0.0, %v180
  %v182 = vpop.f32.mrf.mxu0
  %183 = vmatprep.mubr.bf16.mxu0 %v106
  %184 = vmatmul.mubr.bf16.gmra.mxu0 %v75
  %v185 = vpop.f32.mrf.mxu0
  %v186 = vadd.f32 0.0, %v185
  %v187 = vpop.f32.mrf.mxu0
  %v188 = vpop.f32.mrf.mxu0
  %v189 = vadd.f32 0.0, %v188
  %v190 = vpop.f32.mrf.mxu0
  %191 = vmatprep.mubr.bf16.mxu0 %v109
  %192 = vmatmul.mubr.bf16.gmra.mxu0 %v77
  %v193 = vpop.f32.mrf.mxu0
  %v194 = vadd.f32 0.0, %v193
  %v195 = vpop.f32.mrf.mxu0
  %v196 = vpop.f32.mrf.mxu0
  %v197 = vadd.f32 0.0, %v196
  %v198 = vpop.f32.mrf.mxu0
  %199 = vmatprep.mubr.bf16.mxu0 %v112
  %200 = vmatmul.mubr.bf16.gmra.mxu0 %v79
  %v201 = vpop.f32.mrf.mxu0
  %v202 = vadd.f32 0.0, %v201
  %v203 = vpop.f32.mrf.mxu0
  %v204 = vpop.f32.mrf.mxu0
  %v205 = vadd.f32 0.0, %v204
  %v206 = vpop.f32.mrf.mxu0
  %207 = vmatprep.mubr.bf16.mxu0 %v115
  %208 = vmatmul.mubr.bf16.gmra.mxu0 %v81
  %v209 = vpop.f32.mrf.mxu0
  %v210 = vadd.f32 0.0, %v209
  %v211 = vpop.f32.mrf.mxu0
  %v212 = vpop.f32.mrf.mxu0
  %v213 = vadd.f32 0.0, %v212
  %v214 = vpop.f32.mrf.mxu0
  %215 = vmatprep.mubr.bf16.mxu0 %v118
  %216 = vmatmul.mubr.bf16.gmra.mxu0 %v83
  %v217 = vpop.f32.mrf.mxu0
  %v218 = vadd.f32 0.0, %v217
  %v219 = vpop.f32.mrf.mxu0
  %v220 = vpop.f32.mrf.mxu0
  %v221 = vadd.f32 0.0, %v220
  %v222 = vpop.f32.mrf.mxu0
  %223 = vdwg.mxu0
  %vm224 = vcmask 523264
  %v225 = vsel %vm224, %v162, 0.0
  %v226 = vsel %vm224, %v165, 0.0
  %v227 = vadd.f32 %v225, %v226
  %v228 = vsel %vm224, %v170, 0.0
  %v229 = vadd.f32 %v227, %v228
  %v230 = vsel %vm224, %v173, 0.0
  %v231 = vadd.f32 %v229, %v230
  %v232 = vsel %vm224, %v178, 0.0
  %v233 = vadd.f32 %v231, %v232
  %v234 = vsel %vm224, %v181, 0.0
  %v235 = vadd.f32 %v233, %v234
  %v236 = vsel %vm224, %v186, 0.0
  %v237 = vadd.f32 %v235, %v236
  %v238 = vsel %vm224, %v189, 0.0
  %v239 = vadd.f32 %v237, %v238
  %v240 = vsel %vm224, %v194, 0.0
  %v241 = vadd.f32 %v239, %v240
  %v242 = vsel %vm224, %v197, 0.0
  %v243 = vadd.f32 %v241, %v242
  %v244 = vsel %vm224, %v202, 0.0
  %v245 = vadd.f32 %v243, %v244
  %v246 = vsel %vm224, %v205, 0.0
  %v247 = vadd.f32 %v245, %v246
  %v248 = vsel %vm224, %v210, 0.0
  %v249 = vadd.f32 %v247, %v248
  %v250 = vsel %vm224, %v213, 0.0
  %v251 = vadd.f32 %v249, %v250
  %v252 = vsel %vm224, %v218, 0.0
  %v253 = vadd.f32 %v251, %v252
  %v254 = vsel %vm224, %v221, 0.0
  %v255 = vadd.f32 %v253, %v254
  %v256 = vrot.slane %v255, 4
  %v257 = vadd.f32 %v255, %v256
  %v258 = vrot.slane %v257, 2
  %v259 = vadd.f32 %v257, %v258
  %v260 = vrot.slane %v259, 1
  %v261 = vadd.f32 %v259, %v260
  %v262 = vrcp.pop 128.0
  %v263 = vmul.f32 %v261, %v262
  %v264 = vsub.f32 %v162, %v263
  %v265 = vsub.f32 %v165, %v263
  %v266 = vsub.f32 %v170, %v263
  %v267 = vsub.f32 %v173, %v263
  %v268 = vsub.f32 %v178, %v263
  %v269 = vsub.f32 %v181, %v263
  %v270 = vsub.f32 %v186, %v263
  %v271 = vsub.f32 %v189, %v263
  %v272 = vsub.f32 %v194, %v263
  %v273 = vsub.f32 %v197, %v263
  %v274 = vsub.f32 %v202, %v263
  %v275 = vsub.f32 %v205, %v263
  %v276 = vsub.f32 %v210, %v263
  %v277 = vsub.f32 %v213, %v263
  %v278 = vsub.f32 %v218, %v263
  %v279 = vsub.f32 %v221, %v263
  %v280 = vmul.f32 %v264, %v264
  %v281 = vmul.f32 %v265, %v265
  %v282 = vmul.f32 %v266, %v266
  %v283 = vmul.f32 %v267, %v267
  %v284 = vmul.f32 %v268, %v268
  %v285 = vmul.f32 %v269, %v269
  %v286 = vmul.f32 %v270, %v270
  %v287 = vmul.f32 %v271, %v271
  %v288 = vmul.f32 %v272, %v272
  %v289 = vmul.f32 %v273, %v273
  %v290 = vmul.f32 %v274, %v274
  %v291 = vmul.f32 %v275, %v275
  %v292 = vmul.f32 %v276, %v276
  %v293 = vmul.f32 %v277, %v277
  %v294 = vmul.f32 %v278, %v278
  %v295 = vmul.f32 %v279, %v279
  %v296 = vsel %vm224, %v280, 0.0
  %v297 = vsel %vm224, %v281, 0.0
  %v298 = vadd.f32 %v296, %v297
  %v299 = vsel %vm224, %v282, 0.0
  %v300 = vadd.f32 %v298, %v299
  %v301 = vsel %vm224, %v283, 0.0
  %v302 = vadd.f32 %v300, %v301
  %v303 = vsel %vm224, %v284, 0.0
  %v304 = vadd.f32 %v302, %v303
  %v305 = vsel %vm224, %v285, 0.0
  %v306 = vadd.f32 %v304, %v305
  %v307 = vsel %vm224, %v286, 0.0
  %v308 = vadd.f32 %v306, %v307
  %v309 = vsel %vm224, %v287, 0.0
  %v310 = vadd.f32 %v308, %v309
  %v311 = vsel %vm224, %v288, 0.0
  %v312 = vadd.f32 %v310, %v311
  %v313 = vsel %vm224, %v289, 0.0
  %v314 = vadd.f32 %v312, %v313
  %v315 = vsel %vm224, %v290, 0.0
  %v316 = vadd.f32 %v314, %v315
  %v317 = vsel %vm224, %v291, 0.0
  %v318 = vadd.f32 %v316, %v317
  %v319 = vsel %vm224, %v292, 0.0
  %v320 = vadd.f32 %v318, %v319
  %v321 = vsel %vm224, %v293, 0.0
  %v322 = vadd.f32 %v320, %v321
  %v323 = vsel %vm224, %v294, 0.0
  %v324 = vadd.f32 %v322, %v323
  %v325 = vsel %vm224, %v295, 0.0
  %v326 = vadd.f32 %v324, %v325
  %v327 = vrot.slane %v326, 4
  %v328 = vadd.f32 %v326, %v327
  %v329 = vrot.slane %v328, 2
  %v330 = vadd.f32 %v328, %v329
  %v331 = vrot.slane %v330, 1
  %v332 = vadd.f32 %v330, %v331
  %v333 = vmul.f32 %v332, %v262
  %v334 = vadd.f32 %v333, 1e-05
  %v335 = vrsqrt.pop %v334
  %v336 = vmul.f32 %v264, %v335
  %v337 = vmul.f32 %v265, %v335
  %v338 = vmul.f32 %v266, %v335
  %v339 = vmul.f32 %v267, %v335
  %v340 = vmul.f32 %v268, %v335
  %v341 = vmul.f32 %v269, %v335
  %v342 = vmul.f32 %v270, %v335
  %v343 = vmul.f32 %v271, %v335
  %v344 = vmul.f32 %v272, %v335
  %v345 = vmul.f32 %v273, %v335
  %v346 = vmul.f32 %v274, %v335
  %v347 = vmul.f32 %v275, %v335
  %v348 = vmul.f32 %v276, %v335
  %v349 = vmul.f32 %v277, %v335
  %v350 = vmul.f32 %v278, %v335
  %v351 = vmul.f32 %v279, %v335
  %v352 = vld [vmem:[%s2] sm:$0x1]
  %v354 = vlaneseq
  %v355 = vshrl.u32 %v354, 7
  %v356 = vsub.s32 0, %v355
  %v357 = vrot.slane %v352, %v356
  %v359 = vmul.f32 %v336, %v357
  %v360 = vmul.f32 %v337, %v357
  %v361 = vmul.f32 %v338, %v357
  %v362 = vmul.f32 %v339, %v357
  %v363 = vmul.f32 %v340, %v357
  %v364 = vmul.f32 %v341, %v357
  %v365 = vmul.f32 %v342, %v357
  %v366 = vmul.f32 %v343, %v357
  %v367 = vmul.f32 %v344, %v357
  %v368 = vmul.f32 %v345, %v357
  %v369 = vmul.f32 %v346, %v357
  %v370 = vmul.f32 %v347, %v357
  %v371 = vmul.f32 %v348, %v357
  %v372 = vmul.f32 %v349, %v357
  %v373 = vmul.f32 %v350, %v357
  %v374 = vmul.f32 %v351, %v357
  %v375 = vld [vmem:[%s3] sm:$0x1]
  %v377 = vlaneseq
  %v378 = vshrl.u32 %v377, 7
  %v379 = vsub.s32 0, %v378
  %v380 = vrot.slane %v375, %v379
  %v382 = vadd.f32 %v359, %v380
  %v383 = vadd.f32 %v360, %v380
  %v384 = vadd.f32 %v361, %v380
  %v385 = vadd.f32 %v362, %v380
  %v386 = vadd.f32 %v363, %v380
  %v387 = vadd.f32 %v364, %v380
  %v388 = vadd.f32 %v365, %v380
  %v389 = vadd.f32 %v366, %v380
  %v390 = vadd.f32 %v367, %v380
  %v391 = vadd.f32 %v368, %v380
  %v392 = vadd.f32 %v369, %v380
  %v393 = vadd.f32 %v370, %v380
  %v394 = vadd.f32 %v371, %v380
  %v395 = vadd.f32 %v372, %v380
  %v396 = vadd.f32 %v373, %v380
  %v397 = vadd.f32 %v374, %v380
  %v398 = vmax.f32 %v382, 0.0
  %v399 = vmax.f32 %v383, 0.0
  %v400 = vmax.f32 %v384, 0.0
  %v401 = vmax.f32 %v385, 0.0
  %v402 = vmax.f32 %v386, 0.0
  %v403 = vmax.f32 %v387, 0.0
  %v404 = vmax.f32 %v388, 0.0
  %v405 = vmax.f32 %v389, 0.0
  %v406 = vmax.f32 %v390, 0.0
  %v407 = vmax.f32 %v391, 0.0
  %v408 = vmax.f32 %v392, 0.0
  %v409 = vmax.f32 %v393, 0.0
  %v410 = vmax.f32 %v394, 0.0
  %v411 = vmax.f32 %v395, 0.0
  %v412 = vmax.f32 %v396, 0.0
  %v413 = vmax.f32 %v397, 0.0
  %414 = vst.msk [vmem:[%s4] sm:$0xff] %vm224, %v398
  %415 = vst.msk [vmem:[%s4 + $0x8] sm:$0xff] %vm224, %v399
  %416 = vst.msk [vmem:[%s4 + $0x10] sm:$0xff] %vm224, %v400
  %417 = vst.msk [vmem:[%s4 + $0x18] sm:$0xff] %vm224, %v401
  %418 = vst.msk [vmem:[%s4 + $0x20] sm:$0xff] %vm224, %v402
  %419 = vst.msk [vmem:[%s4 + $0x28] sm:$0xff] %vm224, %v403
  %420 = vst.msk [vmem:[%s4 + $0x30] sm:$0xff] %vm224, %v404
  %421 = vst.msk [vmem:[%s4 + $0x38] sm:$0xff] %vm224, %v405
  %422 = vst.msk [vmem:[%s4 + $0x40] sm:$0xff] %vm224, %v406
  %423 = vst.msk [vmem:[%s4 + $0x48] sm:$0xff] %vm224, %v407
  %424 = vst.msk [vmem:[%s4 + $0x50] sm:$0xff] %vm224, %v408
  %425 = vst.msk [vmem:[%s4 + $0x58] sm:$0xff] %vm224, %v409
  %426 = vst.msk [vmem:[%s4 + $0x60] sm:$0xff] %vm224, %v410
  %427 = vst.msk [vmem:[%s4 + $0x68] sm:$0xff] %vm224, %v411
  %428 = vst.msk [vmem:[%s4 + $0x70] sm:$0xff] %vm224, %v412
  %429 = vst.msk [vmem:[%s4 + $0x78] sm:$0xff] %vm224, %v413
  // Predicated region
  $region18: #{lvvit_teacher_forward.4} parent=0 // pred_check
    _
  $region19: #{lvvit_teacher_forward.4} parent=0 // pred_check_branch
    %431 = sbr.rel (0) target = $region21
  $region20: #{lvvit_teacher_forward.4} parent=0 // pred_region
    _
  $region21: #{lvvit_teacher_forward.4} parent=0 // pred_fallthru
    _
  // Predicated region
  $region22: #{lvvit_teacher_forward.4} parent=0 // pred_check
    _
  $region23: #{lvvit_teacher_forward.4} parent=0 // pred_check_branch
    %433 = sbr.rel (0) target = $region25
  $region24: #{lvvit_teacher_forward.4} parent=0 // pred_region
    _
  $region25: #{lvvit_teacher_forward.4} parent=0 // pred_fallthru
    _

// kernel: lvvit_teacher_forward.5
$region0: #{lvvit_teacher_forward.5}
  #allocation0 [shape = 'u32[]', space=smem, size = 0x4, offset = 0x4, fixed_abs, tag = 'smem constant byte address 0x4 - core index']
  #allocation1 [shape = 'u32[144,128]{1,0:T(1,128)}', space=vmem, size = 0x12000, scoped, tag = 'internal scratch']
  %s0 = inlined_call_operand.vmem [shape: f32[128,576], index: 0, kind: input, shape index: {}]
  %s1 = inlined_call_operand.vmem [shape: f32[576,64], index: 1, kind: input, shape index: {}]
  %s2 = inlined_call_operand.vmem [shape: f32[1,64], index: 2, kind: input, shape index: {}]
  %s3 = inlined_call_operand.vmem [shape: f32[1,64], index: 3, kind: input, shape index: {}]
  %s4 = inlined_call_operand.vmem [shape: f32[128,64], index: 4, kind: output, shape index: {}]
  %s5 = sld [smem:[#allocation0]]
  $region26: #{lvvit_teacher_forward.5} parent=0
    _
  %s7 = ssub.s32 1, %s5
  %s8 = scalar_select 0, %s7, %s5
  // Predicated region
  $region2: #{lvvit_teacher_forward.5} parent=0 // pred_check
    _
  $region3: #{lvvit_teacher_forward.5} parent=0 // pred_check_branch
    %10 = sbr.rel (0) target = $region5
  $region4: #{lvvit_teacher_forward.5} parent=0 // pred_region
    _
  $region5: #{lvvit_teacher_forward.5} parent=0 // pred_fallthru
    _
  // Predicated region
  $region6: #{lvvit_teacher_forward.5} parent=0 // pred_check
    _
  $region7: #{lvvit_teacher_forward.5} parent=0 // pred_check_branch
    %12 = sbr.rel (0) target = $region9
  $region8: #{lvvit_teacher_forward.5} parent=0 // pred_region
    _
  $region9: #{lvvit_teacher_forward.5} parent=0 // pred_fallthru
    _
  // Predicated region
  $region10: #{lvvit_teacher_forward.5} parent=0 // pred_check
    _
  $region11: #{lvvit_teacher_forward.5} parent=0 // pred_check_branch
    %14 = sbr.rel (0) target = $region13
  $region12: #{lvvit_teacher_forward.5} parent=0 // pred_region
    _
  $region13: #{lvvit_teacher_forward.5} parent=0 // pred_fallthru
    _
  // Predicated region
  $region14: #{lvvit_teacher_forward.5} parent=0 // pred_check
    _
  $region15: #{lvvit_teacher_forward.5} parent=0 // pred_check_branch
    %16 = sbr.rel (0) target = $region17
  $region16: #{lvvit_teacher_forward.5} parent=0 // pred_region
    _
  $region17: #{lvvit_teacher_forward.5} parent=0 // pred_fallthru
    _
  %v18 = vld [vmem:[%s0] sm:$0xff]
  %v19 = vld [vmem:[%s0 + $0x8] sm:$0xff]
  %v20 = vld [vmem:[%s0 + $0x10] sm:$0xff]
  %v21 = vld [vmem:[%s0 + $0x18] sm:$0xff]
  %v22 = vld [vmem:[%s0 + $0x20] sm:$0xff]
  %v23 = vld [vmem:[%s0 + $0x28] sm:$0xff]
  %v24 = vld [vmem:[%s0 + $0x30] sm:$0xff]
  %v25 = vld [vmem:[%s0 + $0x38] sm:$0xff]
  %v26 = vld [vmem:[%s0 + $0x40] sm:$0xff]
  %v27 = vld [vmem:[%s0 + $0x48] sm:$0xff]
  %v28 = vld [vmem:[%s0 + $0x50] sm:$0xff]
  %v29 = vld [vmem:[%s0 + $0x58] sm:$0xff]
  %v30 = vld [vmem:[%s0 + $0x60] sm:$0xff]
  %v31 = vld [vmem:[%s0 + $0x68] sm:$0xff]
  %v32 = vld [vmem:[%s0 + $0x70] sm:$0xff]
  %v33 = vld [vmem:[%s0 + $0x78] sm:$0xff]
  %v34 = vld [vmem:[%s0 + $0x80] sm:$0xff]
  %v35 = vld [vmem:[%s0 + $0x88] sm:$0xff]
  %v36 = vld [vmem:[%s0 + $0x90] sm:$0xff]
  %v37 = vld [vmem:[%s0 + $0x98] sm:$0xff]
  %v38 = vld [vmem:[%s0 + $0xa0] sm:$0xff]
  %v39 = vld [vmem:[%s0 + $0xa8] sm:$0xff]
  %v40 = vld [vmem:[%s0 + $0xb0] sm:$0xff]
  %v41 = vld [vmem:[%s0 + $0xb8] sm:$0xff]
  %v42 = vld [vmem:[%s0 + $0xc0] sm:$0xff]
  %v43 = vld [vmem:[%s0 + $0xc8] sm:$0xff]
  %v44 = vld [vmem:[%s0 + $0xd0] sm:$0xff]
  %v45 = vld [vmem:[%s0 + $0xd8] sm:$0xff]
  %v46 = vld [vmem:[%s0 + $0xe0] sm:$0xff]
  %v47 = vld [vmem:[%s0 + $0xe8] sm:$0xff]
  %v48 = vld [vmem:[%s0 + $0xf0] sm:$0xff]
  %v49 = vld [vmem:[%s0 + $0xf8] sm:$0xff]
  %v50 = vld [vmem:[%s0 + $0x100] sm:$0xff]
  %v51 = vld [vmem:[%s0 + $0x108] sm:$0xff]
  %v52 = vld [vmem:[%s0 + $0x110] sm:$0xff]
  %v53 = vld [vmem:[%s0 + $0x118] sm:$0xff]
  %v54 = vld [vmem:[%s0 + $0x120] sm:$0xff]
  %v55 = vld [vmem:[%s0 + $0x128] sm:$0xff]
  %v56 = vld [vmem:[%s0 + $0x130] sm:$0xff]
  %v57 = vld [vmem:[%s0 + $0x138] sm:$0xff]
  %v58 = vld [vmem:[%s0 + $0x140] sm:$0xff]
  %v59 = vld [vmem:[%s0 + $0x148] sm:$0xff]
  %v60 = vld [vmem:[%s0 + $0x150] sm:$0xff]
  %v61 = vld [vmem:[%s0 + $0x158] sm:$0xff]
  %v62 = vld [vmem:[%s0 + $0x160] sm:$0xff]
  %v63 = vld [vmem:[%s0 + $0x168] sm:$0xff]
  %v64 = vld [vmem:[%s0 + $0x170] sm:$0xff]
  %v65 = vld [vmem:[%s0 + $0x178] sm:$0xff]
  %v66 = vld [vmem:[%s0 + $0x180] sm:$0xff]
  %v67 = vld [vmem:[%s0 + $0x188] sm:$0xff]
  %v68 = vld [vmem:[%s0 + $0x190] sm:$0xff]
  %v69 = vld [vmem:[%s0 + $0x198] sm:$0xff]
  %v70 = vld [vmem:[%s0 + $0x1a0] sm:$0xff]
  %v71 = vld [vmem:[%s0 + $0x1a8] sm:$0xff]
  %v72 = vld [vmem:[%s0 + $0x1b0] sm:$0xff]
  %v73 = vld [vmem:[%s0 + $0x1b8] sm:$0xff]
  %v74 = vld [vmem:[%s0 + $0x1c0] sm:$0xff]
  %v75 = vld [vmem:[%s0 + $0x1c8] sm:$0xff]
  %v76 = vld [vmem:[%s0 + $0x1d0] sm:$0xff]
  %v77 = vld [vmem:[%s0 + $0x1d8] sm:$0xff]
  %v78 = vld [vmem:[%s0 + $0x1e0] sm:$0xff]
  %v79 = vld [vmem:[%s0 + $0x1e8] sm:$0xff]
  %v80 = vld [vmem:[%s0 + $0x1f0] sm:$0xff]
  %v81 = vld [vmem:[%s0 + $0x1f8] sm:$0xff]
  %v82 = vld [vmem:[%s0 + $0x200] sm:$0xff]
  %v83 = vld [vmem:[%s0 + $0x208] sm:$0xff]
  %v84 = vld [vmem:[%s0 + $0x210] sm:$0xff]
  %v85 = vld [vmem:[%s0 + $0x218] sm:$0xff]
  %v86 = vld [vmem:[%s0 + $0x220] sm:$0xff]
  %v87 = vld [vmem:[%s0 + $0x228] sm:$0xff]
  %v88 = vld [vmem:[%s0 + $0x230] sm:$0xff]
  %v89 = vld [vmem:[%s0 + $0x238] sm:$0xff]
  %v90 = vld [vmem:[%s0 + $0x240] sm:$0xff]
  %v91 = vld [vmem:[%s0 + $0x248] sm:$0xff]
  %v92 = vld [vmem:[%s0 + $0x250] sm:$0xff]
  %v93 = vld [vmem:[%s0 + $0x258] sm:$0xff]
  %v94 = vld [vmem:[%s0 + $0x260] sm:$0xff]
  %v95 = vld [vmem:[%s0 + $0x268] sm:$0xff]
  %v96 = vld [vmem:[%s0 + $0x270] sm:$0xff]
  %v97 = vld [vmem:[%s0 + $0x278] sm:$0xff]
  %v98 = vld [vmem:[%s1] sm:$0xff]
  %v99 = vld [vmem:[%s1 + $0x8] sm:$0xff]
  %v100 = vld [vmem:[%s1 + $0x10] sm:$0xff]
  %v101 = vld [vmem:[%s1 + $0x18] sm:$0xff]
  %v102 = vld [vmem:[%s1 + $0x20] sm:$0xff]
  %v103 = vld [vmem:[%s1 + $0x28] sm:$0xff]
  %v104 = vld [vmem:[%s1 + $0x30] sm:$0xff]
  %v105 = vld [vmem:[%s1 + $0x38] sm:$0xff]
  %v106 = vld [vmem:[%s1 + $0x40] sm:$0xff]
  %v107 = vld [vmem:[%s1 + $0x48] sm:$0xff]
  %v108 = vld [vmem:[%s1 + $0x50] sm:$0xff]
  %v109 = vld [vmem:[%s1 + $0x58] sm:$0xff]
  %v110 = vld [vmem:[%s1 + $0x60] sm:$0xff]
  %v111 = vld [vmem:[%s1 + $0x68] sm:$0xff]
  %v112 = vld [vmem:[%s1 + $0x70] sm:$0xff]
  %v113 = vld [vmem:[%s1 + $0x78] sm:$0xff]
  %v114 = vld [vmem:[%s1 + $0x80] sm:$0xff]
  %v115 = vld [vmem:[%s1 + $0x88] sm:$0xff]
  %v116 = vld [vmem:[%s1 + $0x90] sm:$0xff]
  %v117 = vld [vmem:[%s1 + $0x98] sm:$0xff]
  %v118 = vld [vmem:[%s1 + $0xa0] sm:$0xff]
  %v119 = vld [vmem:[%s1 + $0xa8] sm:$0xff]
  %v120 = vld [vmem:[%s1 + $0xb0] sm:$0xff]
  %v121 = vld [vmem:[%s1 + $0xb8] sm:$0xff]
  %v122 = vld [vmem:[%s1 + $0xc0] sm:$0xff]
  %v123 = vld [vmem:[%s1 + $0xc8] sm:$0xff]
  %v124 = vld [vmem:[%s1 + $0xd0] sm:$0xff]
  %v125 = vld [vmem:[%s1 + $0xd8] sm:$0xff]
  %v126 = vld [vmem:[%s1 + $0xe0] sm:$0xff]
  %v127 = vld [vmem:[%s1 + $0xe8] sm:$0xff]
  %v128 = vld [vmem:[%s1 + $0xf0] sm:$0xff]
  %v129 = vld [vmem:[%s1 + $0xf8] sm:$0xff]
  %v130 = vld [vmem:[%s1 + $0x100] sm:$0xff]
  %v131 = vld [vmem:[%s1 + $0x108] sm:$0xff]
  %v132 = vld [vmem:[%s1 + $0x110] sm:$0xff]
  %v133 = vld [vmem:[%s1 + $0x118] sm:$0xff]
  %v134 = vld [vmem:[%s1 + $0x120] sm:$0xff]
  %v135 = vld [vmem:[%s1 + $0x128] sm:$0xff]
  %v136 = vld [vmem:[%s1 + $0x130] sm:$0xff]
  %v137 = vld [vmem:[%s1 + $0x138] sm:$0xff]
  %v138 = vld [vmem:[%s1 + $0x140] sm:$0xff]
  %v139 = vld [vmem:[%s1 + $0x148] sm:$0xff]
  %v140 = vld [vmem:[%s1 + $0x150] sm:$0xff]
  %v141 = vld [vmem:[%s1 + $0x158] sm:$0xff]
  %v142 = vld [vmem:[%s1 + $0x160] sm:$0xff]
  %v143 = vld [vmem:[%s1 + $0x168] sm:$0xff]
  %v144 = vld [vmem:[%s1 + $0x170] sm:$0xff]
  %v145 = vld [vmem:[%s1 + $0x178] sm:$0xff]
  %v146 = vld [vmem:[%s1 + $0x180] sm:$0xff]
  %v147 = vld [vmem:[%s1 + $0x188] sm:$0xff]
  %v148 = vld [vmem:[%s1 + $0x190] sm:$0xff]
  %v149 = vld [vmem:[%s1 + $0x198] sm:$0xff]
  %v150 = vld [vmem:[%s1 + $0x1a0] sm:$0xff]
  %v151 = vld [vmem:[%s1 + $0x1a8] sm:$0xff]
  %v152 = vld [vmem:[%s1 + $0x1b0] sm:$0xff]
  %v153 = vld [vmem:[%s1 + $0x1b8] sm:$0xff]
  %v154 = vld [vmem:[%s1 + $0x1c0] sm:$0xff]
  %v155 = vld [vmem:[%s1 + $0x1c8] sm:$0xff]
  %v156 = vld [vmem:[%s1 + $0x1d0] sm:$0xff]
  %v157 = vld [vmem:[%s1 + $0x1d8] sm:$0xff]
  %v158 = vld [vmem:[%s1 + $0x1e0] sm:$0xff]
  %v159 = vld [vmem:[%s1 + $0x1e8] sm:$0xff]
  %v160 = vld [vmem:[%s1 + $0x1f0] sm:$0xff]
  %v161 = vld [vmem:[%s1 + $0x1f8] sm:$0xff]
  %v162 = vld [vmem:[%s1 + $0x200] sm:$0xff]
  %v163 = vld [vmem:[%s1 + $0x208] sm:$0xff]
  %v164 = vld [vmem:[%s1 + $0x210] sm:$0xff]
  %v165 = vld [vmem:[%s1 + $0x218] sm:$0xff]
  %v166 = vld [vmem:[%s1 + $0x220] sm:$0xff]
  %v167 = vld [vmem:[%s1 + $0x228] sm:$0xff]
  %v168 = vld [vmem:[%s1 + $0x230] sm:$0xff]
  %v169 = vld [vmem:[%s1 + $0x238] sm:$0xff]
  %v170 = vpack.c.bf16 %v23, %v18
  %v171 = vpack.c.bf16 %v24, %v19
  %v172 = vpack.c.bf16 %v25, %v20
  %v173 = vpack.c.bf16 %v26, %v21
  %v174 = vpack.c.bf16 %v27, %v22
  %v175 = vpack.c.bf16 %v33, %v28
  %v176 = vpack.c.bf16 %v34, %v29
  %v177 = vpack.c.bf16 %v35, %v30
  %v178 = vpack.c.bf16 %v36, %v31
  %v179 = vpack.c.bf16 %v37, %v32
  %v180 = vpack.c.bf16 %v43, %v38
  %v181 = vpack.c.bf16 %v44, %v39
  %v182 = vpack.c.bf16 %v45, %v40
  %v183 = vpack.c.bf16 %v46, %v41
  %v184 = vpack.c.bf16 %v47, %v42
  %v185 = vpack.c.bf16 %v53, %v48
  %v186 = vpack.c.bf16 %v54, %v49
  %v187 = vpack.c.bf16 %v55, %v50
  %v188 = vpack.c.bf16 %v56, %v51
  %v189 = vpack.c.bf16 %v57, %v52
  %v190 = vpack.c.bf16 %v63, %v58
  %v191 = vpack.c.bf16 %v64, %v59
  %v192 = vpack.c.bf16 %v65, %v60
  %v193 = vpack.c.bf16 %v66, %v61
  %v194 = vpack.c.bf16 %v67, %v62
  %v195 = vpack.c.bf16 %v73, %v68
  %v196 = vpack.c.bf16 %v74, %v69
  %v197 = vpack.c.bf16 %v75, %v70
  %v198 = vpack.c.bf16 %v76, %v71
  %v199 = vpack.c.bf16 %v77, %v72
  %v200 = vpack.c.bf16 %v83, %v78
  %v201 = vpack.c.bf16 %v84, %v79
  %v202 = vpack.c.bf16 %v85, %v80
  %v203 = vpack.c.bf16 %v86, %v81
  %v204 = vpack.c.bf16 %v87, %v82
  %v205 = vpack.c.bf16 %v93, %v88
  %v206 = vpack.c.bf16 %v94, %v89
  %v207 = vpack.c.bf16 %v95, %v90
  %v208 = vpack.c.bf16 %v96, %v91
  %v209 = vpack.c.bf16 %v97, %v92
  %v210 = vpack.c.bf16 %v99, %v98
  %v211 = vpack.c.bf16 %v101, %v100
  %v212 = vpack.c.bf16 %v103, %v102
  %v213 = vpack.c.bf16 %v105, %v104
  %v214 = vpack.c.bf16 %v107, %v106
  %v215 = vpack.c.bf16 %v109, %v108
  %v216 = vpack.c.bf16 %v111, %v110
  %v217 = vpack.c.bf16 %v113, %v112
  %v218 = vpack.c.bf16 %v115, %v114
  %v219 = vpack.c.bf16 %v117, %v116
  %v220 = vpack.c.bf16 %v119, %v118
  %v221 = vpack.c.bf16 %v121, %v120
  %v222 = vpack.c.bf16 %v123, %v122
  %v223 = vpack.c.bf16 %v125, %v124
  %v224 = vpack.c.bf16 %v127, %v126
  %v225 = vpack.c.bf16 %v129, %v128
  %v226 = vpack.c.bf16 %v131, %v130
  %v227 = vpack.c.bf16 %v133, %v132
  %v228 = vpack.c.bf16 %v135, %v134
  %v229 = vpack.c.bf16 %v137, %v136
  %v230 = vpack.c.bf16 %v139, %v138
  %v231 = vpack.c.bf16 %v141, %v140
  %v232 = vpack.c.bf16 %v143, %v142
  %v233 = vpack.c.bf16 %v145, %v144
  %v234 = vpack.c.bf16 %v147, %v146
  %v235 = vpack.c.bf16 %v149, %v148
  %v236 = vpack.c.bf16 %v151, %v150
  %v237 = vpack.c.bf16 %v153, %v152
  %v238 = vpack.c.bf16 %v155, %v154
  %v239 = vpack.c.bf16 %v157, %v156
  %v240 = vpack.c.bf16 %v159, %v158
  %v241 = vpack.c.bf16 %v161, %v160
  %v242 = vpack.c.bf16 %v163, %v162
  %v243 = vpack.c.bf16 %v165, %v164
  %v244 = vpack.c.bf16 %v167, %v166
  %v245 = vpack.c.bf16 %v169, %v168
  %vm246 = vcmask 523264
  %v248 = vsel %vm246, %v174, 0
  %v251 = vsel %vm246, %v179, 0
  %v254 = vsel %vm246, %v184, 0
  %v257 = vsel %vm246, %v189, 0
  %v260 = vsel %vm246, %v194, 0
  %v263 = vsel %vm246, %v199, 0
  %v266 = vsel %vm246, %v204, 0
  %v269 = vsel %vm246, %v209, 0
  %271 = vmatprep.subr.bf16.mxu0 0
  %272 = vmatpush1.bf16.msra.mxu0 %v217
  %273 = vmatprep.subr.bf16.mxu0 0
  %274 = vmatpush1.bf16.msra.mxu0 %v216
  %275 = vmatprep.subr.bf16.mxu0 0
  %276 = vmatpush1.bf16.msra.mxu0 %v215
  %277 = vmatprep.subr.bf16.mxu0 0
  %278 = vmatpush1.bf16.msra.mxu0 %v214
  %279 = vmatprep.subr.bf16.mxu0 0
  %280 = vmatpush1.bf16.msra.mxu0 %v213
  %281 = vmatprep.subr.bf16.mxu0 0
  %282 = vmatpush1.bf16.msra.mxu0 %v212
  %283 = vmatprep.subr.bf16.mxu0 0
  %284 = vmatpush1.bf16.msra.mxu0 %v211
  %285 = vmatprep.subr.bf16.mxu0 0
  %286 = vmatpush1.bf16.msra.mxu0 %v210
  %287 = vmatprep.subr.bf16.mxu0 0
  %288 = vmatpush2.bf16.msra.mxu0 %v225
  %289 = vmatprep.subr.bf16.mxu0 0
  %290 = vmatpush2.bf16.msra.mxu0 %v224
  %291 = vmatprep.subr.bf16.mxu0 0
  %292 = vmatpush2.bf16.msra.mxu0 %v223
  %293 = vmatprep.subr.bf16.mxu0 0
  %294 = vmatpush2.bf16.msra.mxu0 %v222
  %295 = vmatprep.subr.bf16.mxu0 0
  %296 = vmatpush2.bf16.msra.mxu0 %v221
  %297 = vmatprep.subr.bf16.mxu0 0
  %298 = vmatpush2.bf16.msra.mxu0 %v220
  %299 = vmatprep.subr.bf16.mxu0 0
  %300 = vmatpush2.bf16.msra.mxu0 %v219
  %301 = vmatprep.subr.bf16.mxu0 0
  %302 = vmatpush2.bf16.msra.mxu0 %v218
  %303 = vmatprep.mubr.bf16.mxu0 %v171
  %304 = vmatmul.mubr.bf16.gmra.mxu0 %v170
  %v305 = vpop.f32.mrf.mxu0
  %v306 = vadd.f32 0.0, %v305
  %v307 = vpop.f32.mrf.mxu0
  %v308 = vpop.f32.mrf.mxu0
  %v309 = vadd.f32 0.0, %v308
  %v310 = vpop.f32.mrf.mxu0
  %311 = vmatprep.mubr.bf16.mxu0 %v176
  %312 = vmatmul.mubr.bf16.gmra.mxu0 %v175
  %v313 = vpop.f32.mrf.mxu0
  %v314 = vadd.f32 0.0, %v313
  %v315 = vpop.f32.mrf.mxu0
  %v316 = vpop.f32.mrf.mxu0
  %v317 = vadd.f32 0.0, %v316
  %v318 = vpop.f32.mrf.mxu0
  %319 = vmatprep.mubr.bf16.mxu0 %v181
  %320 = vmatmul.mubr.bf16.gmra.mxu0 %v180
  %v321 = vpop.f32.mrf.mxu0
  %v322 = vadd.f32 0.0, %v321
  %v323 = vpop.f32.mrf.mxu0
  %v324 = vpop.f32.mrf.mxu0
  %v325 = vadd.f32 0.0, %v324
  %v326 = vpop.f32.mrf.mxu0
  %327 = vmatprep.mubr.bf16.mxu0 %v186
  %328 = vmatmul.mubr.bf16.gmra.mxu0 %v185
  %v329 = vpop.f32.mrf.mxu0
  %v330 = vadd.f32 0.0, %v329
  %v331 = vpop.f32.mrf.mxu0
  %v332 = vpop.f32.mrf.mxu0
  %v333 = vadd.f32 0.0, %v332
  %v334 = vpop.f32.mrf.mxu0
  %335 = vmatprep.mubr.bf16.mxu0 %v191
  %336 = vmatmul.mubr.bf16.gmra.mxu0 %v190
  %v337 = vpop.f32.mrf.mxu0
  %v338 = vadd.f32 0.0, %v337
  %v339 = vpop.f32.mrf.mxu0
  %v340 = vpop.f32.mrf.mxu0
  %v341 = vadd.f32 0.0, %v340
  %v342 = vpop.f32.mrf.mxu0
  %343 = vmatprep.mubr.bf16.mxu0 %v196
  %344 = vmatmul.mubr.bf16.gmra.mxu0 %v195
  %v345 = vpop.f32.mrf.mxu0
  %v346 = vadd.f32 0.0, %v345
  %v347 = vpop.f32.mrf.mxu0
  %v348 = vpop.f32.mrf.mxu0
  %v349 = vadd.f32 0.0, %v348
  %v350 = vpop.f32.mrf.mxu0
  %351 = vmatprep.mubr.bf16.mxu0 %v201
  %352 = vmatmul.mubr.bf16.gmra.mxu0 %v200
  %v353 = vpop.f32.mrf.mxu0
  %v354 = vadd.f32 0.0, %v353
  %v355 = vpop.f32.mrf.mxu0
  %v356 = vpop.f32.mrf.mxu0
  %v357 = vadd.f32 0.0, %v356
  %v358 = vpop.f32.mrf.mxu0
  %359 = vmatprep.mubr.bf16.mxu0 %v206
  %360 = vmatmul.mubr.bf16.gmra.mxu0 %v205
  %v361 = vpop.f32.mrf.mxu0
  %v362 = vadd.f32 0.0, %v361
  %v363 = vpop.f32.mrf.mxu0
  %v364 = vpop.f32.mrf.mxu0
  %v365 = vadd.f32 0.0, %v364
  %v366 = vpop.f32.mrf.mxu0
  %367 = vdwg.mxu0
  %368 = vmatprep.subr.bf16.mxu0 0
  %369 = vmatpush1.bf16.msra.mxu0 %v233
  %370 = vmatprep.subr.bf16.mxu0 0
  %371 = vmatpush1.bf16.msra.mxu0 %v232
  %372 = vmatprep.subr.bf16.mxu0 0
  %373 = vmatpush1.bf16.msra.mxu0 %v231
  %374 = vmatprep.subr.bf16.mxu0 0
  %375 = vmatpush1.bf16.msra.mxu0 %v230
  %376 = vmatprep.subr.bf16.mxu0 0
  %377 = vmatpush1.bf16.msra.mxu0 %v229
  %378 = vmatprep.subr.bf16.mxu0 0
  %379 = vmatpush1.bf16.msra.mxu0 %v228
  %380 = vmatprep.subr.bf16.mxu0 0
  %381 = vmatpush1.bf16.msra.mxu0 %v227
  %382 = vmatprep.subr.bf16.mxu0 0
  %383 = vmatpush1.bf16.msra.mxu0 %v226
  %384 = vmatprep.subr.bf16.mxu0 0
  %385 = vmatpush2.bf16.msra.mxu0 %v241
  %386 = vmatprep.subr.bf16.mxu0 0
  %387 = vmatpush2.bf16.msra.mxu0 %v240
  %388 = vmatprep.subr.bf16.mxu0 0
  %389 = vmatpush2.bf16.msra.mxu0 %v239
  %390 = vmatprep.subr.bf16.mxu0 0
  %391 = vmatpush2.bf16.msra.mxu0 %v238
  %392 = vmatprep.subr.bf16.mxu0 0
  %393 = vmatpush2.bf16.msra.mxu0 %v237
  %394 = vmatprep.subr.bf16.mxu0 0
  %395 = vmatpush2.bf16.msra.mxu0 %v236
  %396 = vmatprep.subr.bf16.mxu0 0
  %397 = vmatpush2.bf16.msra.mxu0 %v235
  %398 = vmatprep.subr.bf16.mxu0 0
  %399 = vmatpush2.bf16.msra.mxu0 %v234
  %400 = vmatprep.mubr.bf16.mxu0 %v173
  %401 = vmatmul.mubr.bf16.gmra.mxu0 %v172
  %v402 = vpop.f32.mrf.mxu0
  %v403 = vadd.f32 %v306, %v402
  %v404 = vpop.f32.mrf.mxu0
  %v405 = vpop.f32.mrf.mxu0
  %v406 = vadd.f32 %v309, %v405
  %v407 = vpop.f32.mrf.mxu0
  %408 = vmatprep.mubr.bf16.mxu0 %v178
  %409 = vmatmul.mubr.bf16.gmra.mxu0 %v177
  %v410 = vpop.f32.mrf.mxu0
  %v411 = vadd.f32 %v314, %v410
  %v412 = vpop.f32.mrf.mxu0
  %v413 = vpop.f32.mrf.mxu0
  %v414 = vadd.f32 %v317, %v413
  %v415 = vpop.f32.mrf.mxu0
  %416 = vmatprep.mubr.bf16.mxu0 %v183
  %417 = vmatmul.mubr.bf16.gmra.mxu0 %v182
  %v418 = vpop.f32.mrf.mxu0
  %v419 = vadd.f32 %v322, %v418
  %v420 = vpop.f32.mrf.mxu0
  %v421 = vpop.f32.mrf.mxu0
  %v422 = vadd.f32 %v325, %v421
  %v423 = vpop.f32.mrf.mxu0
  %424 = vmatprep.mubr.bf16.mxu0 %v188
  %425 = vmatmul.mubr.bf16.gmra.mxu0 %v187
  %v426 = vpop.f32.mrf.mxu0
  %v427 = vadd.f32 %v330, %v426
  %v428 = vpop.f32.mrf.mxu0
  %v429 = vpop.f32.mrf.mxu0
  %v430 = vadd.f32 %v333, %v429
  %v431 = vpop.f32.mrf.mxu0
  %432 = vmatprep.mubr.bf16.mxu0 %v193
  %433 = vmatmul.mubr.bf16.gmra.mxu0 %v192
  %v434 = vpop.f32.mrf.mxu0
  %v435 = vadd.f32 %v338, %v434
  %v436 = vpop.f32.mrf.mxu0
  %v437 = vpop.f32.mrf.mxu0
  %v438 = vadd.f32 %v341, %v437
  %v439 = vpop.f32.mrf.mxu0
  %440 = vmatprep.mubr.bf16.mxu0 %v198
  %441 = vmatmul.mubr.bf16.gmra.mxu0 %v197
  %v442 = vpop.f32.mrf.mxu0
  %v443 = vadd.f32 %v346, %v442
  %v444 = vpop.f32.mrf.mxu0
  %v445 = vpop.f32.mrf.mxu0
  %v446 = vadd.f32 %v349, %v445
  %v447 = vpop.f32.mrf.mxu0
  %448 = vmatprep.mubr.bf16.mxu0 %v203
  %449 = vmatmul.mubr.bf16.gmra.mxu0 %v202
  %v450 = vpop.f32.mrf.mxu0
  %v451 = vadd.f32 %v354, %v450
  %v452 = vpop.f32.mrf.mxu0
  %v453 = vpop.f32.mrf.mxu0
  %v454 = vadd.f32 %v357, %v453
  %v455 = vpop.f32.mrf.mxu0
  %456 = vmatprep.mubr.bf16.mxu0 %v208
  %457 = vmatmul.mubr.bf16.gmra.mxu0 %v207
  %v458 = vpop.f32.mrf.mxu0
  %v459 = vadd.f32 %v362, %v458
  %v460 = vpop.f32.mrf.mxu0
  %v461 = vpop.f32.mrf.mxu0
  %v462 = vadd.f32 %v365, %v461
  %v463 = vpop.f32.mrf.mxu0
  %464 = vdwg.mxu0
  %465 = vmatprep.subr.bf16.mxu0 0
  %466 = vmatpush1.bf16.msra.mxu0 0
  %467 = vmatprep.subr.bf16.mxu0 0
  %468 = vmatpush1.bf16.msra.mxu0 0
  %469 = vmatprep.subr.bf16.mxu0 0
  %470 = vmatpush1.bf16.msra.mxu0 0
  %471 = vmatprep.subr.bf16.mxu0 0
  %472 = vmatpush1.bf16.msra.mxu0 0
  %473 = vmatprep.subr.bf16.mxu0 0
  %474 = vmatpush1.bf16.msra.mxu0 %v245
  %475 = vmatprep.subr.bf16.mxu0 0
  %476 = vmatpush1.bf16.msra.mxu0 %v244
  %477 = vmatprep.subr.bf16.mxu0 0
  %478 = vmatpush1.bf16.msra.mxu0 %v243
  %479 = vmatprep.subr.bf16.mxu0 0
  %480 = vmatpush1.bf16.msra.mxu0 %v242
  %481 = vmatprep.subr.bf16.mxu0 0
  %482 = vmatpush2.bf16.msra.mxu0 0
  %483 = vmatprep.subr.bf16.mxu0 0
  %484 = vmatpush2.bf16.msra.mxu0 0
  %485 = vmatprep.subr.bf16.mxu0 0
  %486 = vmatpush2.bf16.msra.mxu0 0
  %487 = vmatprep.subr.bf16.mxu0 0
  %488 = vmatpush2.bf16.msra.mxu0 0
  %489 = vmatprep.subr.bf16.mxu0 0
  %490 = vmatpush2.bf16.msra.mxu0 0
  %491 = vmatprep.subr.bf16.mxu0 0
  %492 = vmatpush2.bf16.msra.mxu0 0
  %493 = vmatprep.subr.bf16.mxu0 0
  %494 = vmatpush2.bf16.msra.mxu0 0
  %495 = vmatprep.subr.bf16.mxu0 0
  %496 = vmatpush2.bf16.msra.mxu0 0
  %497 = vmatprep.mubr.bf16.mxu0 0
  %498 = vmatmul.mubr.bf16.gmra.mxu0 %v248
  %v499 = vpop.f32.mrf.mxu0
  %v500 = vadd.f32 %v403, %v499
  %v501 = vpop.f32.mrf.mxu0
  %v502 = vpop.f32.mrf.mxu0
  %v503 = vadd.f32 %v406, %v502
  %v504 = vpop.f32.mrf.mxu0
  %505 = vmatprep.mubr.bf16.mxu0 0
  %506 = vmatmul.mubr.bf16.gmra.mxu0 %v251
  %v507 = vpop.f32.mrf.mxu0
  %v508 = vadd.f32 %v411, %v507
  %v509 = vpop.f32.mrf.mxu0
  %v510 = vpop.f32.mrf.mxu0
  %v511 = vadd.f32 %v414, %v510
  %v512 = vpop.f32.mrf.mxu0
  %513 = vmatprep.mubr.bf16.mxu0 0
  %514 = vmatmul.mubr.bf16.gmra.mxu0 %v254
  %v515 = vpop.f32.mrf.mxu0
  %v516 = vadd.f32 %v419, %v515
  %v517 = vpop.f32.mrf.mxu0
  %v518 = vpop.f32.mrf.mxu0
  %v519 = vadd.f32 %v422, %v518
  %v520 = vpop.f32.mrf.mxu0
  %521 = vmatprep.mubr.bf16.mxu0 0
  %522 = vmatmul.mubr.bf16.gmra.mxu0 %v257
  %v523 = vpop.f32.mrf.mxu0
  %v524 = vadd.f32 %v427, %v523
  %v525 = vpop.f32.mrf.mxu0
  %v526 = vpop.f32.mrf.mxu0
  %v527 = vadd.f32 %v430, %v526
  %v528 = vpop.f32.mrf.mxu0
  %529 = vmatprep.mubr.bf16.mxu0 0
  %530 = vmatmul.mubr.bf16.gmra.mxu0 %v260
  %v531 = vpop.f32.mrf.mxu0
  %v532 = vadd.f32 %v435, %v531
  %v533 = vpop.f32.mrf.mxu0
  %v534 = vpop.f32.mrf.mxu0
  %v535 = vadd.f32 %v438, %v534
  %v536 = vpop.f32.mrf.mxu0
  %537 = vmatprep.mubr.bf16.mxu0 0
  %538 = vmatmul.mubr.bf16.gmra.mxu0 %v263
  %v539 = vpop.f32.mrf.mxu0
  %v540 = vadd.f32 %v443, %v539
  %v541 = vpop.f32.mrf.mxu0
  %v542 = vpop.f32.mrf.mxu0
  %v543 = vadd.f32 %v446, %v542
  %v544 = vpop.f32.mrf.mxu0
  %545 = vmatprep.mubr.bf16.mxu0 0
  %546 = vmatmul.mubr.bf16.gmra.mxu0 %v266
  %v547 = vpop.f32.mrf.mxu0
  %v548 = vadd.f32 %v451, %v547
  %v549 = vpop.f32.mrf.mxu0
  %v550 = vpop.f32.mrf.mxu0
  %v551 = vadd.f32 %v454, %v550
  %v552 = vpop.f32.mrf.mxu0
  %553 = vmatprep.mubr.bf16.mxu0 0
  %554 = vmatmul.mubr.bf16.gmra.mxu0 %v269
  %v555 = vpop.f32.mrf.mxu0
  %v556 = vadd.f32 %v459, %v555
  %v557 = vpop.f32.mrf.mxu0
  %v558 = vpop.f32.mrf.mxu0
  %v559 = vadd.f32 %v462, %v558
  %v560 = vpop.f32.mrf.mxu0
  %561 = vdwg.mxu0
  %v562 = vsel %vm246, %v500, 0.0
  %v563 = vsel %vm246, %v503, 0.0
  %v564 = vadd.f32 %v562, %v563
  %v565 = vsel %vm246, %v508, 0.0
  %v566 = vadd.f32 %v564, %v565
  %v567 = vsel %vm246, %v511, 0.0
  %v568 = vadd.f32 %v566, %v567
  %v569 = vsel %vm246, %v516, 0.0
  %v570 = vadd.f32 %v568, %v569
  %v571 = vsel %vm246, %v519, 0.0
  %v572 = vadd.f32 %v570, %v571
  %v573 = vsel %vm246, %v524, 0.0
  %v574 = vadd.f32 %v572, %v573
  %v575 = vsel %vm246, %v527, 0.0
  %v576 = vadd.f32 %v574, %v575
  %v577 = vsel %vm246, %v532, 0.0
  %v578 = vadd.f32 %v576, %v577
  %v579 = vsel %vm246, %v535, 0.0
  %v580 = vadd.f32 %v578, %v579
  %v581 = vsel %vm246, %v540, 0.0
  %v582 = vadd.f32 %v580, %v581
  %v583 = vsel %vm246, %v543, 0.0
  %v584 = vadd.f32 %v582, %v583
  %v585 = vsel %vm246, %v548, 0.0
  %v586 = vadd.f32 %v584, %v585
  %v587 = vsel %vm246, %v551, 0.0
  %v588 = vadd.f32 %v586, %v587
  %v589 = vsel %vm246, %v556, 0.0
  %v590 = vadd.f32 %v588, %v589
  %v591 = vsel %vm246, %v559, 0.0
  %v592 = vadd.f32 %v590, %v591
  %v593 = vrot.slane %v592, 4
  %v594 = vadd.f32 %v592, %v593
  %v595 = vrot.slane %v594, 2
  %v596 = vadd.f32 %v594, %v595
  %v597 = vrot.slane %v596, 1
  %v598 = vadd.f32 %v596, %v597
  %v599 = vrcp.pop 128.0
  %v600 = vmul.f32 %v598, %v599
  %v601 = vsub.f32 %v500, %v600
  %v602 = vsub.f32 %v503, %v600
  %v603 = vsub.f32 %v508, %v600
  %v604 = vsub.f32 %v511, %v600
  %v605 = vsub.f32 %v516, %v600
  %v606 = vsub.f32 %v519, %v600
  %v607 = vsub.f32 %v524, %v600
  %v608 = vsub.f32 %v527, %v600
  %v609 = vsub.f32 %v532, %v600
  %v610 = vsub.f32 %v535, %v600
  %v611 = vsub.f32 %v540, %v600
  %v612 = vsub.f32 %v543, %v600
  %v613 = vsub.f32 %v548, %v600
  %v614 = vsub.f32 %v551, %v600
  %v615 = vsub.f32 %v556, %v600
  %v616 = vsub.f32 %v559, %v600
  %v617 = vmul.f32 %v601, %v601
  %v618 = vmul.f32 %v602, %v602
  %v619 = vmul.f32 %v603, %v603
  %v620 = vmul.f32 %v604, %v604
  %v621 = vmul.f32 %v605, %v605
  %v622 = vmul.f32 %v606, %v606
  %v623 = vmul.f32 %v607, %v607
  %v624 = vmul.f32 %v608, %v608
  %v625 = vmul.f32 %v609, %v609
  %v626 = vmul.f32 %v610, %v610
  %v627 = vmul.f32 %v611, %v611
  %v628 = vmul.f32 %v612, %v612
  %v629 = vmul.f32 %v613, %v613
  %v630 = vmul.f32 %v614, %v614
  %v631 = vmul.f32 %v615, %v615
  %v632 = vmul.f32 %v616, %v616
  %v633 = vsel %vm246, %v617, 0.0
  %v634 = vsel %vm246, %v618, 0.0
  %v635 = vadd.f32 %v633, %v634
  %v636 = vsel %vm246, %v619, 0.0
  %v637 = vadd.f32 %v635, %v636
  %v638 = vsel %vm246, %v620, 0.0
  %v639 = vadd.f32 %v637, %v638
  %v640 = vsel %vm246, %v621, 0.0
  %v641 = vadd.f32 %v639, %v640
  %v642 = vsel %vm246, %v622, 0.0
  %v643 = vadd.f32 %v641, %v642
  %v644 = vsel %vm246, %v623, 0.0
  %v645 = vadd.f32 %v643, %v644
  %v646 = vsel %vm246, %v624, 0.0
  %v647 = vadd.f32 %v645, %v646
  %v648 = vsel %vm246, %v625, 0.0
  %v649 = vadd.f32 %v647, %v648
  %v650 = vsel %vm246, %v626, 0.0
  %v651 = vadd.f32 %v649, %v650
  %v652 = vsel %vm246, %v627, 0.0
  %v653 = vadd.f32 %v651, %v652
  %v654 = vsel %vm246, %v628, 0.0
  %v655 = vadd.f32 %v653, %v654
  %v656 = vsel %vm246, %v629, 0.0
  %v657 = vadd.f32 %v655, %v656
  %v658 = vsel %vm246, %v630, 0.0
  %v659 = vadd.f32 %v657, %v658
  %v660 = vsel %vm246, %v631, 0.0
  %v661 = vadd.f32 %v659, %v660
  %v662 = vsel %vm246, %v632, 0.0
  %v663 = vadd.f32 %v661, %v662
  %v664 = vrot.slane %v663, 4
  %v665 = vadd.f32 %v663, %v664
  %v666 = vrot.slane %v665, 2
  %v667 = vadd.f32 %v665, %v666
  %v668 = vrot.slane %v667, 1
  %v669 = vadd.f32 %v667, %v668
  %v670 = vmul.f32 %v669, %v599
  %v671 = vadd.f32 %v670, 1e-05
  %v672 = vrsqrt.pop %v671
  %v673 = vmul.f32 %v601, %v672
  %v674 = vmul.f32 %v602, %v672
  %v675 = vmul.f32 %v603, %v672
  %v676 = vmul.f32 %v604, %v672
  %v677 = vmul.f32 %v605, %v672
  %v678 = vmul.f32 %v606, %v672
  %v679 = vmul.f32 %v607, %v672
  %v680 = vmul.f32 %v608, %v672
  %v681 = vmul.f32 %v609, %v672
  %v682 = vmul.f32 %v610, %v672
  %v683 = vmul.f32 %v611, %v672
  %v684 = vmul.f32 %v612, %v672
  %v685 = vmul.f32 %v613, %v672
  %v686 = vmul.f32 %v614, %v672
  %v687 = vmul.f32 %v615, %v672
  %v688 = vmul.f32 %v616, %v672
  %v689 = vld [vmem:[%s2] sm:$0x1]
  %v691 = vlaneseq
  %v692 = vshrl.u32 %v691, 7
  %v693 = vsub.s32 0, %v692
  %v694 = vrot.slane %v689, %v693
  %v696 = vmul.f32 %v673, %v694
  %v697 = vmul.f32 %v674, %v694
  %v698 = vmul.f32 %v675, %v694
  %v699 = vmul.f32 %v676, %v694
  %v700 = vmul.f32 %v677, %v694
  %v701 = vmul.f32 %v678, %v694
  %v702 = vmul.f32 %v679, %v694
  %v703 = vmul.f32 %v680, %v694
  %v704 = vmul.f32 %v681, %v694
  %v705 = vmul.f32 %v682, %v694
  %v706 = vmul.f32 %v683, %v694
  %v707 = vmul.f32 %v684, %v694
  %v708 = vmul.f32 %v685, %v694
  %v709 = vmul.f32 %v686, %v694
  %v710 = vmul.f32 %v687, %v694
  %v711 = vmul.f32 %v688, %v694
  %v712 = vld [vmem:[%s3] sm:$0x1]
  %v714 = vlaneseq
  %v715 = vshrl.u32 %v714, 7
  %v716 = vsub.s32 0, %v715
  %v717 = vrot.slane %v712, %v716
  %v719 = vadd.f32 %v696, %v717
  %v720 = vadd.f32 %v697, %v717
  %v721 = vadd.f32 %v698, %v717
  %v722 = vadd.f32 %v699, %v717
  %v723 = vadd.f32 %v700, %v717
  %v724 = vadd.f32 %v701, %v717
  %v725 = vadd.f32 %v702, %v717
  %v726 = vadd.f32 %v703, %v717
  %v727 = vadd.f32 %v704, %v717
  %v728 = vadd.f32 %v705, %v717
  %v729 = vadd.f32 %v706, %v717
  %v730 = vadd.f32 %v707, %v717
  %v731 = vadd.f32 %v708, %v717
  %v732 = vadd.f32 %v709, %v717
  %v733 = vadd.f32 %v710, %v717
  %v734 = vadd.f32 %v711, %v717
  %v735 = vmax.f32 %v719, 0.0
  %v736 = vmax.f32 %v720, 0.0
  %v737 = vmax.f32 %v721, 0.0
  %v738 = vmax.f32 %v722, 0.0
  %v739 = vmax.f32 %v723, 0.0
  %v740 = vmax.f32 %v724, 0.0
  %v741 = vmax.f32 %v725, 0.0
  %v742 = vmax.f32 %v726, 0.0
  %v743 = vmax.f32 %v727, 0.0
  %v744 = vmax.f32 %v728, 0.0
  %v745 = vmax.f32 %v729, 0.0
  %v746 = vmax.f32 %v730, 0.0
  %v747 = vmax.f32 %v731, 0.0
  %v748 = vmax.f32 %v732, 0.0
  %v749 = vmax.f32 %v733, 0.0
  %v750 = vmax.f32 %v734, 0.0
  %751 = vst.msk [vmem:[%s4] sm:$0xff] %vm246, %v735
  %752 = vst.msk [vmem:[%s4 + $0x8] sm:$0xff] %vm246, %v736
  %753 = vst.msk [vmem:[%s4 + $0x10] sm:$0xff] %vm246, %v737
  %754 = vst.msk [vmem:[%s4 + $0x18] sm:$0xff] %vm246, %v738
  %755 = vst.msk [vmem:[%s4 + $0x20] sm:$0xff] %vm246, %v739
  %756 = vst.msk [vmem:[%s4 + $0x28] sm:$0xff] %vm246, %v740
  %757 = vst.msk [vmem:[%s4 + $0x30] sm:$0xff] %vm246, %v741
  %758 = vst.msk [vmem:[%s4 + $0x38] sm:$0xff] %vm246, %v742
  %759 = vst.msk [vmem:[%s4 + $0x40] sm:$0xff] %vm246, %v743
  %760 = vst.msk [vmem:[%s4 + $0x48] sm:$0xff] %vm246, %v744
  %761 = vst.msk [vmem:[%s4 + $0x50] sm:$0xff] %vm246, %v745
  %762 = vst.msk [vmem:[%s4 + $0x58] sm:$0xff] %vm246, %v746
  %763 = vst.msk [vmem:[%s4 + $0x60] sm:$0xff] %vm246, %v747
  %764 = vst.msk [vmem:[%s4 + $0x68] sm:$0xff] %vm246, %v748
  %765 = vst.msk [vmem:[%s4 + $0x70] sm:$0xff] %vm246, %v749
  %766 = vst.msk [vmem:[%s4 + $0x78] sm:$0xff] %vm246, %v750
  // Predicated region
  $region18: #{lvvit_teacher_forward.5} parent=0 // pred_check
    _
  $region19: #{lvvit_teacher_forward.5} parent=0 // pred_check_branch
    %768 = sbr.rel (0) target = $region21
  $region20: #{lvvit_teacher_forward.5} parent=0 // pred_region
    _
  $region21: #{lvvit_teacher_forward.5} parent=0 // pred_fallthru
    _
  // Predicated region
  $region22: #{lvvit_teacher_forward.5} parent=0 // pred_check
    _
  $region23: #{lvvit_teacher_forward.5} parent=0 // pred_check_branch
    %770 = sbr.rel (0) target = $region25
  $region24: #{lvvit_teacher_forward.5} parent=0 // pred_region
    _
  $region25: #{lvvit_teacher_forward.5} parent=0 // pred_fallthru
    _

// kernel: lvvit_teacher_forward.6
$region0: #{lvvit_teacher_forward.6}
  #allocation0 [shape = 'u32[]', space=smem, size = 0x4, offset = 0x4, fixed_abs, tag = 'smem constant byte address 0x4 - core index']
  #allocation1 [shape = 'u32[144,128]{1,0:T(1,128)}', space=vmem, size = 0x12000, scoped, tag = 'internal scratch']
  %s0 = inlined_call_operand.vmem [shape: f32[4,32,576], index: 0, kind: input, shape index: {}]
  %s1 = inlined_call_operand.vmem [shape: f32[576,64], index: 1, kind: input, shape index: {}]
  %s2 = inlined_call_operand.vmem [shape: f32[1,64], index: 2, kind: input, shape index: {}]
  %s3 = inlined_call_operand.vmem [shape: f32[1,64], index: 3, kind: input, shape index: {}]
  %s4 = inlined_call_operand.vmem [shape: f32[4,64,32], index: 4, kind: input, shape index: {}]
  %s5 = inlined_call_operand.vmem [shape: f32[1,32], index: 5, kind: input, shape index: {}]
  %s6 = inlined_call_operand.vmem [shape: f32[32,32], index: 6, kind: output, shape index: {}]
  %s7 = sld [smem:[#allocation0]]
  $region34: #{lvvit_teacher_forward.6} parent=0
    _
  %s9 = ssub.s32 1, %s7
  %s10 = scalar_select 0, %s9, %s7
  // Predicated region
  $region2: #{lvvit_teacher_forward.6} parent=0 // pred_check
    _
  $region3: #{lvvit_teacher_forward.6} parent=0 // pred_check_branch
    %12 = sbr.rel (0) target = $region5
  $region4: #{lvvit_teacher_forward.6} parent=0 // pred_region
    _
  $region5: #{lvvit_teacher_forward.6} parent=0 // pred_fallthru
    _
  // Predicated region
  $region6: #{lvvit_teacher_forward.6} parent=0 // pred_check
    _
  $region7: #{lvvit_teacher_forward.6} parent=0 // pred_check_branch
    %14 = sbr.rel (0) target = $region9
  $region8: #{lvvit_teacher_forward.6} parent=0 // pred_region
    _
  $region9: #{lvvit_teacher_forward.6} parent=0 // pred_fallthru
    _
  // Predicated region
  $region10: #{lvvit_teacher_forward.6} parent=0 // pred_check
    _
  $region11: #{lvvit_teacher_forward.6} parent=0 // pred_check_branch
    %16 = sbr.rel (0) target = $region13
  $region12: #{lvvit_teacher_forward.6} parent=0 // pred_region
    _
  $region13: #{lvvit_teacher_forward.6} parent=0 // pred_fallthru
    _
  // Predicated region
  $region14: #{lvvit_teacher_forward.6} parent=0 // pred_check
    _
  $region15: #{lvvit_teacher_forward.6} parent=0 // pred_check_branch
    %18 = sbr.rel (0) target = $region17
  $region16: #{lvvit_teacher_forward.6} parent=0 // pred_region
    _
  $region17: #{lvvit_teacher_forward.6} parent=0 // pred_fallthru
    _
  // Predicated region
  $region18: #{lvvit_teacher_forward.6} parent=0 // pred_check
    _
  $region19: #{lvvit_teacher_forward.6} parent=0 // pred_check_branch
    %20 = sbr.rel (0) target = $region21
  $region20: #{lvvit_teacher_forward.6} parent=0 // pred_region
    _
  $region21: #{lvvit_teacher_forward.6} parent=0 // pred_fallthru
    _
  // Predicated region
  $region22: #{lvvit_teacher_forward.6} parent=0 // pred_check
    _
  $region23: #{lvvit_teacher_forward.6} parent=0 // pred_check_branch
    %22 = sbr.rel (0) target = $region25
  $region24: #{lvvit_teacher_forward.6} parent=0 // pred_region
    _
  $region25: #{lvvit_teacher_forward.6} parent=0 // pred_fallthru
    _
  %v24 = vld [vmem:[%s0] sm:$0xff]
  %v25 = vld [vmem:[%s0 + $0x8] sm:$0xff]
  %v26 = vld [vmem:[%s0 + $0x10] sm:$0xff]
  %v27 = vld [vmem:[%s0 + $0x18] sm:$0xff]
  %v28 = vld [vmem:[%s0 + $0x20] sm:$0xff]
  %v29 = vld [vmem:[%s0 + $0x28] sm:$0xff]
  %v30 = vld [vmem:[%s0 + $0x30] sm:$0xff]
  %v31 = vld [vmem:[%s0 + $0x38] sm:$0xff]
  %v32 = vld [vmem:[%s0 + $0x40] sm:$0xff]
  %v33 = vld [vmem:[%s0 + $0x48] sm:$0xff]
  %v34 = vld [vmem:[%s0 + $0x50] sm:$0xff]
  %v35 = vld [vmem:[%s0 + $0x58] sm:$0xff]
  %v36 = vld [vmem:[%s0 + $0x60] sm:$0xff]
  %v37 = vld [vmem:[%s0 + $0x68] sm:$0xff]
  %v38 = vld [vmem:[%s0 + $0x70] sm:$0xff]
  %v39 = vld [vmem:[%s0 + $0x78] sm:$0xff]
  %v40 = vld [vmem:[%s0 + $0x80] sm:$0xff]
  %v41 = vld [vmem:[%s0 + $0x88] sm:$0xff]
  %v42 = vld [vmem:[%s0 + $0x90] sm:$0xff]
  %v43 = vld [vmem:[%s0 + $0x98] sm:$0xff]
  %v44 = vld [vmem:[%s1] sm:$0xff]
  %v45 = vld [vmem:[%s1 + $0x8] sm:$0xff]
  %v46 = vld [vmem:[%s1 + $0x10] sm:$0xff]
  %v47 = vld [vmem:[%s1 + $0x18] sm:$0xff]
  %v48 = vld [vmem:[%s1 + $0x20] sm:$0xff]
  %v49 = vld [vmem:[%s1 + $0x28] sm:$0xff]
  %v50 = vld [vmem:[%s1 + $0x30] sm:$0xff]
  %v51 = vld [vmem:[%s1 + $0x38] sm:$0xff]
  %v52 = vld [vmem:[%s1 + $0x40] sm:$0xff]
  %v53 = vld [vmem:[%s1 + $0x48] sm:$0xff]
  %v54 = vld [vmem:[%s1 + $0x50] sm:$0xff]
  %v55 = vld [vmem:[%s1 + $0x58] sm:$0xff]
  %v56 = vld [vmem:[%s1 + $0x60] sm:$0xff]
  %v57 = vld [vmem:[%s1 + $0x68] sm:$0xff]
  %v58 = vld [vmem:[%s1 + $0x70] sm:$0xff]
  %v59 = vld [vmem:[%s1 + $0x78] sm:$0xff]
  %v60 = vld [vmem:[%s1 + $0x80] sm:$0xff]
  %v61 = vld [vmem:[%s1 + $0x88] sm:$0xff]
  %v62 = vld [vmem:[%s1 + $0x90] sm:$0xff]
  %v63 = vld [vmem:[%s1 + $0x98] sm:$0xff]
  %v64 = vld [vmem:[%s1 + $0xa0] sm:$0xff]
  %v65 = vld [vmem:[%s1 + $0xa8] sm:$0xff]
  %v66 = vld [vmem:[%s1 + $0xb0] sm:$0xff]
  %v67 = vld [vmem:[%s1 + $0xb8] sm:$0xff]
  %v68 = vld [vmem:[%s1 + $0xc0] sm:$0xff]
  %v69 = vld [vmem:[%s1 + $0xc8] sm:$0xff]
  %v70 = vld [vmem:[%s1 + $0xd0] sm:$0xff]
  %v71 = vld [vmem:[%s1 + $0xd8] sm:$0xff]
  %v72 = vld [vmem:[%s1 + $0xe0] sm:$0xff]
  %v73 = vld [vmem:[%s1 + $0xe8] sm:$0xff]
  %v74 = vld [vmem:[%s1 + $0xf0] sm:$0xff]
  %v75 = vld [vmem:[%s1 + $0xf8] sm:$0xff]
  %v76 = vld [vmem:[%s1 + $0x100] sm:$0xff]
  %v77 = vld [vmem:[%s1 + $0x108] sm:$0xff]
  %v78 = vld [vmem:[%s1 + $0x110] sm:$0xff]
  %v79 = vld [vmem:[%s1 + $0x118] sm:$0xff]
  %v80 = vld [vmem:[%s1 + $0x120] sm:$0xff]
  %v81 = vld [vmem:[%s1 + $0x128] sm:$0xff]
  %v82 = vld [vmem:[%s1 + $0x130] sm:$0xff]
  %v83 = vld [vmem:[%s1 + $0x138] sm:$0xff]
  %v84 = vld [vmem:[%s1 + $0x140] sm:$0xff]
  %v85 = vld [vmem:[%s1 + $0x148] sm:$0xff]
  %v86 = vld [vmem:[%s1 + $0x150] sm:$0xff]
  %v87 = vld [vmem:[%s1 + $0x158] sm:$0xff]
  %v88 = vld [vmem:[%s1 + $0x160] sm:$0xff]
  %v89 = vld [vmem:[%s1 + $0x168] sm:$0xff]
  %v90 = vld [vmem:[%s1 + $0x170] sm:$0xff]
  %v91 = vld [vmem:[%s1 + $0x178] sm:$0xff]
  %v92 = vld [vmem:[%s1 + $0x180] sm:$0xff]
  %v93 = vld [vmem:[%s1 + $0x188] sm:$0xff]
  %v94 = vld [vmem:[%s1 + $0x190] sm:$0xff]
  %v95 = vld [vmem:[%s1 + $0x198] sm:$0xff]
  %v96 = vld [vmem:[%s1 + $0x1a0] sm:$0xff]
  %v97 = vld [vmem:[%s1 + $0x1a8] sm:$0xff]
  %v98 = vld [vmem:[%s1 + $0x1b0] sm:$0xff]
  %v99 = vld [vmem:[%s1 + $0x1b8] sm:$0xff]
  %v100 = vld [vmem:[%s1 + $0x1c0] sm:$0xff]
  %v101 = vld [vmem:[%s1 + $0x1c8] sm:$0xff]
  %v102 = vld [vmem:[%s1 + $0x1d0] sm:$0xff]
  %v103 = vld [vmem:[%s1 + $0x1d8] sm:$0xff]
  %v104 = vld [vmem:[%s1 + $0x1e0] sm:$0xff]
  %v105 = vld [vmem:[%s1 + $0x1e8] sm:$0xff]
  %v106 = vld [vmem:[%s1 + $0x1f0] sm:$0xff]
  %v107 = vld [vmem:[%s1 + $0x1f8] sm:$0xff]
  %v108 = vld [vmem:[%s1 + $0x200] sm:$0xff]
  %v109 = vld [vmem:[%s1 + $0x208] sm:$0xff]
  %v110 = vld [vmem:[%s1 + $0x210] sm:$0xff]
  %v111 = vld [vmem:[%s1 + $0x218] sm:$0xff]
  %v112 = vld [vmem:[%s1 + $0x220] sm:$0xff]
  %v113 = vld [vmem:[%s1 + $0x228] sm:$0xff]
  %v114 = vld [vmem:[%s1 + $0x230] sm:$0xff]
  %v115 = vld [vmem:[%s1 + $0x238] sm:$0xff]
  %v116 = vpack.c.bf16 %v29, %v24
  %v117 = vpack.c.bf16 %v30, %v25
  %v118 = vpack.c.bf16 %v31, %v26
  %v119 = vpack.c.bf16 %v32, %v27
  %v120 = vpack.c.bf16 %v33, %v28
  %v121 = vpack.c.bf16 %v39, %v34
  %v122 = vpack.c.bf16 %v40, %v35
  %v123 = vpack.c.bf16 %v41, %v36
  %v124 = vpack.c.bf16 %v42, %v37
  %v125 = vpack.c.bf16 %v43, %v38
  %v126 = vpack.c.bf16 %v45, %v44
  %v127 = vpack.c.bf16 %v47, %v46
  %v128 = vpack.c.bf16 %v49, %v48
  %v129 = vpack.c.bf16 %v51, %v50
  %v130 = vpack.c.bf16 %v53, %v52
  %v131 = vpack.c.bf16 %v55, %v54
  %v132 = vpack.c.bf16 %v57, %v56
  %v133 = vpack.c.bf16 %v59, %v58
  %v134 = vpack.c.bf16 %v61, %v60
  %v135 = vpack.c.bf16 %v63, %v62
  %v136 = vpack.c.bf16 %v65, %v64
  %v137 = vpack.c.bf16 %v67, %v66
  %v138 = vpack.c.bf16 %v69, %v68
  %v139 = vpack.c.bf16 %v71, %v70
  %v140 = vpack.c.bf16 %v73, %v72
  %v141 = vpack.c.bf16 %v75, %v74
  %v142 = vpack.c.bf16 %v77, %v76
  %v143 = vpack.c.bf16 %v79, %v78
  %v144 = vpack.c.bf16 %v81, %v80
  %v145 = vpack.c.bf16 %v83, %v82
  %v146 = vpack.c.bf16 %v85, %v84
  %v147 = vpack.c.bf16 %v87, %v86
  %v148 = vpack.c.bf16 %v89, %v88
  %v149 = vpack.c.bf16 %v91, %v90
  %v150 = vpack.c.bf16 %v93, %v92
  %v151 = vpack.c.bf16 %v95, %v94
  %v152 = vpack.c.bf16 %v97, %v96
  %v153 = vpack.c.bf16 %v99, %v98
  %v154 = vpack.c.bf16 %v101, %v100
  %v155 = vpack.c.bf16 %v103, %v102
  %v156 = vpack.c.bf16 %v105, %v104
  %v157 = vpack.c.bf16 %v107, %v106
  %v158 = vpack.c.bf16 %v109, %v108
  %v159 = vpack.c.bf16 %v111, %v110
  %v160 = vpack.c.bf16 %v113, %v112
  %v161 = vpack.c.bf16 %v115, %v114
  %vm162 = vcmask 523264
  %v164 = vsel %vm162, %v120, 0
  %v167 = vsel %vm162, %v125, 0
  %169 = vmatprep.subr.bf16.mxu0 0
  %170 = vmatpush1.bf16.msra.mxu0 %v133
  %171 = vmatprep.subr.bf16.mxu0 0
  %172 = vmatpush1.bf16.msra.mxu0 %v132
  %173 = vmatprep.subr.bf16.mxu0 0
  %174 = vmatpush1.bf16.msra.mxu0 %v131
  %175 = vmatprep.subr.bf16.mxu0 0
  %176 = vmatpush1.bf16.msra.mxu0 %v130
  %177 = vmatprep.subr.bf16.mxu0 0
  %178 = vmatpush1.bf16.msra.mxu0 %v129
  %179 = vmatprep.subr.bf16.mxu0 0
  %180 = vmatpush1.bf16.msra.mxu0 %v128
  %181 = vmatprep.subr.bf16.mxu0 0
  %182 = vmatpush1.bf16.msra.mxu0 %v127
  %183 = vmatprep.subr.bf16.mxu0 0
  %184 = vmatpush1.bf16.msra.mxu0 %v126
  %185 = vmatprep.subr.bf16.mxu0 0
  %186 = vmatpush2.bf16.msra.mxu0 %v141
  %187 = vmatprep.subr.bf16.mxu0 0
  %188 = vmatpush2.bf16.msra.mxu0 %v140
  %189 = vmatprep.subr.bf16.mxu0 0
  %190 = vmatpush2.bf16.msra.mxu0 %v139
  %191 = vmatprep.subr.bf16.mxu0 0
  %192 = vmatpush2.bf16.msra.mxu0 %v138
  %193 = vmatprep.subr.bf16.mxu0 0
  %194 = vmatpush2.bf16.msra.mxu0 %v137
  %195 = vmatprep.subr.bf16.mxu0 0
  %196 = vmatpush2.bf16.msra.mxu0 %v136
  %197 = vmatprep.subr.bf16.mxu0 0
  %198 = vmatpush2.bf16.msra.mxu0 %v135
  %199 = vmatprep.subr.bf16.mxu0 0
  %200 = vmatpush2.bf16.msra.mxu0 %v134
  %201 = vmatprep.mubr.bf16.mxu0 %v117
  %202 = vmatmul.mubr.bf16.gmra.mxu0 %v116
  %v203 = vpop.f32.mrf.mxu0
  %v204 = vadd.f32 0.0, %v203
  %v205 = vpop.f32.mrf.mxu0
  %v206 = vpop.f32.mrf.mxu0
  %v207 = vadd.f32 0.0, %v206
  %v208 = vpop.f32.mrf.mxu0
  %209 = vmatprep.mubr.bf16.mxu0 %v122
  %210 = vmatmul.mubr.bf16.gmra.mxu0 %v121
  %v211 = vpop.f32.mrf.mxu0
  %v212 = vadd.f32 0.0, %v211
  %v213 = vpop.f32.mrf.mxu0
  %v214 = vpop.f32.mrf.mxu0
  %v215 = vadd.f32 0.0, %v214
  %v216 = vpop.f32.mrf.mxu0
  %217 = vdwg.mxu0
  %218 = vmatprep.subr.bf16.mxu0 0
  %219 = vmatpush1.bf16.msra.mxu0 %v149
  %220 = vmatprep.subr.bf16.mxu0 0
  %221 = vmatpush1.bf16.msra.mxu0 %v148
  %222 = vmatprep.subr.bf16.mxu0 0
  %223 = vmatpush1.bf16.msra.mxu0 %v147
  %224 = vmatprep.subr.bf16.mxu0 0
  %225 = vmatpush1.bf16.msra.mxu0 %v146
  %226 = vmatprep.subr.bf16.mxu0 0
  %227 = vmatpush1.bf16.msra.mxu0 %v145
  %228 = vmatprep.subr.bf16.mxu0 0
  %229 = vmatpush1.bf16.msra.mxu0 %v144
  %230 = vmatprep.subr.bf16.mxu0 0
  %231 = vmatpush1.bf16.msra.mxu0 %v143
  %232 = vmatprep.subr.bf16.mxu0 0
  %233 = vmatpush1.bf16.msra.mxu0 %v142
  %234 = vmatprep.subr.bf16.mxu0 0
  %235 = vmatpush2.bf16.msra.mxu0 %v157
  %236 = vmatprep.subr.bf16.mxu0 0
  %237 = vmatpush2.bf16.msra.mxu0 %v156
  %238 = vmatprep.subr.bf16.mxu0 0
  %239 = vmatpush2.bf16.msra.mxu0 %v155
  %240 = vmatprep.subr.bf16.mxu0 0
  %241 = vmatpush2.bf16.msra.mxu0 %v154
  %242 = vmatprep.subr.bf16.mxu0 0
  %243 = vmatpush2.bf16.msra.mxu0 %v153
  %244 = vmatprep.subr.bf16.mxu0 0
  %245 = vmatpush2.bf16.msra.mxu0 %v152
  %246 = vmatprep.subr.bf16.mxu0 0
  %247 = vmatpush2.bf16.msra.mxu0 %v151
  %248 = vmatprep.subr.bf16.mxu0 0
  %249 = vmatpush2.bf16.msra.mxu0 %v150
  %250 = vmatprep.mubr.bf16.mxu0 %v119
  %251 = vmatmul.mubr.bf16.gmra.mxu0 %v118
  %v252 = vpop.f32.mrf.mxu0
  %v253 = vadd.f32 %v204, %v252
  %v254 = vpop.f32.mrf.mxu0
  %v255 = vpop.f32.mrf.mxu0
  %v256 = vadd.f32 %v207, %v255
  %v257 = vpop.f32.mrf.mxu0
  %258 = vmatprep.mubr.bf16.mxu0 %v124
  %259 = vmatmul.mubr.bf16.gmra.mxu0 %v123
  %v260 = vpop.f32.mrf.mxu0
  %v261 = vadd.f32 %v212, %v260
  %v262 = vpop.f32.mrf.mxu0
  %v263 = vpop.f32.mrf.mxu0
  %v264 = vadd.f32 %v215, %v263
  %v265 = vpop.f32.mrf.mxu0
  %266 = vdwg.mxu0
  %267 = vmatprep.subr.bf16.mxu0 0
  %268 = vmatpush1.bf16.msra.mxu0 0
  %269 = vmatprep.subr.bf16.mxu0 0
  %270 = vmatpush1.bf16.msra.mxu0 0
  %271 = vmatprep.subr.bf16.mxu0 0
  %272 = vmatpush1.bf16.msra.mxu0 0
  %273 = vmatprep.subr.bf16.mxu0 0
  %274 = vmatpush1.bf16.msra.mxu0 0
  %275 = vmatprep.subr.bf16.mxu0 0
  %276 = vmatpush1.bf16.msra.mxu0 %v161
  %277 = vmatprep.subr.bf16.mxu0 0
  %278 = vmatpush1.bf16.msra.mxu0 %v160
  %279 = vmatprep.subr.bf16.mxu0 0
  %280 = vmatpush1.bf16.msra.mxu0 %v159
  %281 = vmatprep.subr.bf16.mxu0 0
  %282 = vmatpush1.bf16.msra.mxu0 %v158
  %283 = vmatprep.subr.bf16.mxu0 0
  %284 = vmatpush2.bf16.msra.mxu0 0
  %285 = vmatprep.subr.bf16.mxu0 0
  %286 = vmatpush2.bf16.msra.mxu0 0
  %287 = vmatprep.subr.bf16.mxu0 0
  %288 = vmatpush2.bf16.msra.mxu0 0
  %289 = vmatprep.subr.bf16.mxu0 0
  %290 = vmatpush2.bf16.msra.mxu0 0
  %291 = vmatprep.subr.bf16.mxu0 0
  %292 = vmatpush2.bf16.msra.mxu0 0
  %293 = vmatprep.subr.bf16.mxu0 0
  %294 = vmatpush2.bf16.msra.mxu0 0
  %295 = vmatprep.subr.bf16.mxu0 0
  %296 = vmatpush2.bf16.msra.mxu0 0
  %297 = vmatprep.subr.bf16.mxu0 0
  %298 = vmatpush2.bf16.msra.mxu0 0
  %299 = vmatprep.mubr.bf16.mxu0 0
  %300 = vmatmul.mubr.bf16.gmra.mxu0 %v164
  %v301 = vpop.f32.mrf.mxu0
  %v302 = vadd.f32 %v253, %v301
  %v303 = vpop.f32.mrf.mxu0
  %v304 = vpop.f32.mrf.mxu0
  %v305 = vadd.f32 %v256, %v304
  %v306 = vpop.f32.mrf.mxu0
  %307 = vmatprep.mubr.bf16.mxu0 0
  %308 = vmatmul.mubr.bf16.gmra.mxu0 %v167
  %v309 = vpop.f32.mrf.mxu0
  %v310 = vadd.f32 %v261, %v309
  %v311 = vpop.f32.mrf.mxu0
  %v312 = vpop.f32.mrf.mxu0
  %v313 = vadd.f32 %v264, %v312
  %v314 = vpop.f32.mrf.mxu0
  %315 = vdwg.mxu0
  %s316 = scalar_lea.vmem %s0, 160
  %v317 = vld [vmem:[%s316] sm:$0xff]
  %v318 = vld [vmem:[%s316 + $0x8] sm:$0xff]
  %v319 = vld [vmem:[%s316 + $0x10] sm:$0xff]
  %v320 = vld [vmem:[%s316 + $0x18] sm:$0xff]
  %v321 = vld [vmem:[%s316 + $0x20] sm:$0xff]
  %v322 = vld [vmem:[%s316 + $0x28] sm:$0xff]
  %v323 = vld [vmem:[%s316 + $0x30] sm:$0xff]
  %v324 = vld [vmem:[%s316 + $0x38] sm:$0xff]
  %v325 = vld [vmem:[%s316 + $0x40] sm:$0xff]
  %v326 = vld [vmem:[%s316 + $0x48] sm:$0xff]
  %v327 = vld [vmem:[%s316 + $0x50] sm:$0xff]
  %v328 = vld [vmem:[%s316 + $0x58] sm:$0xff]
  %v329 = vld [vmem:[%s316 + $0x60] sm:$0xff]
  %v330 = vld [vmem:[%s316 + $0x68] sm:$0xff]
  %v331 = vld [vmem:[%s316 + $0x70] sm:$0xff]
  %v332 = vld [vmem:[%s316 + $0x78] sm:$0xff]
  %v333 = vld [vmem:[%s316 + $0x80] sm:$0xff]
  %v334 = vld [vmem:[%s316 + $0x88] sm:$0xff]
  %v335 = vld [vmem:[%s316 + $0x90] sm:$0xff]
  %v336 = vld [vmem:[%s316 + $0x98] sm:$0xff]
  %v337 = vpack.c.bf16 %v322, %v317
  %v338 = vpack.c.bf16 %v323, %v318
  %v339 = vpack.c.bf16 %v324, %v319
  %v340 = vpack.c.bf16 %v325, %v320
  %v341 = vpack.c.bf16 %v326, %v321
  %v342 = vpack.c.bf16 %v332, %v327
  %v343 = vpack.c.bf16 %v333, %v328
  %v344 = vpack.c.bf16 %v334, %v329
  %v345 = vpack.c.bf16 %v335, %v330
  %v346 = vpack.c.bf16 %v336, %v331
  %v348 = vsel %vm162, %v341, 0
  %v351 = vsel %vm162, %v346, 0
  %353 = vmatprep.subr.bf16.mxu0 0
  %354 = vmatpush1.bf16.msra.mxu0 %v133
  %355 = vmatprep.subr.bf16.mxu0 0
  %356 = vmatpush1.bf16.msra.mxu0 %v132
  %357 = vmatprep.subr.bf16.mxu0 0
  %358 = vmatpush1.bf16.msra.mxu0 %v131
  %359 = vmatprep.subr.bf16.mxu0 0
  %360 = vmatpush1.bf16.msra.mxu0 %v130
  %361 = vmatprep.subr.bf16.mxu0 0
  %362 = vmatpush1.bf16.msra.mxu0 %v129
  %363 = vmatprep.subr.bf16.mxu0 0
  %364 = vmatpush1.bf16.msra.mxu0 %v128
  %365 = vmatprep.subr.bf16.mxu0 0
  %366 = vmatpush1.bf16.msra.mxu0 %v127
  %367 = vmatprep.subr.bf16.mxu0 0
  %368 = vmatpush1.bf16.msra.mxu0 %v126
  %369 = vmatprep.subr.bf16.mxu0 0
  %370 = vmatpush2.bf16.msra.mxu0 %v141
  %371 = vmatprep.subr.bf16.mxu0 0
  %372 = vmatpush2.bf16.msra.mxu0 %v140
  %373 = vmatprep.subr.bf16.mxu0 0
  %374 = vmatpush2.bf16.msra.mxu0 %v139
  %375 = vmatprep.subr.bf16.mxu0 0
  %376 = vmatpush2.bf16.msra.mxu0 %v138
  %377 = vmatprep.subr.bf16.mxu0 0
  %378 = vmatpush2.bf16.msra.mxu0 %v137
  %379 = vmatprep.subr.bf16.mxu0 0
  %380 = vmatpush2.bf16.msra.mxu0 %v136
  %381 = vmatprep.subr.bf16.mxu0 0
  %382 = vmatpush2.bf16.msra.mxu0 %v135
  %383 = vmatprep.subr.bf16.mxu0 0
  %384 = vmatpush2.bf16.msra.mxu0 %v134
  %385 = vmatprep.mubr.bf16.mxu0 %v338
  %386 = vmatmul.mubr.bf16.gmra.mxu0 %v337
  %v387 = vpop.f32.mrf.mxu0
  %v388 = vadd.f32 0.0, %v387
  %v389 = vpop.f32.mrf.mxu0
  %v390 = vpop.f32.mrf.mxu0
  %v391 = vadd.f32 0.0, %v390
  %v392 = vpop.f32.mrf.mxu0
  %393 = vmatprep.mubr.bf16.mxu0 %v343
  %394 = vmatmul.mubr.bf16.gmra.mxu0 %v342
  %v395 = vpop.f32.mrf.mxu0
  %v396 = vadd.f32 0.0, %v395
  %v397 = vpop.f32.mrf.mxu0
  %v398 = vpop.f32.mrf.mxu0
  %v399 = vadd.f32 0.0, %v398
  %v400 = vpop.f32.mrf.mxu0
  %401 = vdwg.mxu0
  %402 = vmatprep.subr.bf16.mxu0 0
  %403 = vmatpush1.bf16.msra.mxu0 %v149
  %404 = vmatprep.subr.bf16.mxu0 0
  %405 = vmatpush1.bf16.msra.mxu0 %v148
  %406 = vmatprep.subr.bf16.mxu0 0
  %407 = vmatpush1.bf16.msra.mxu0 %v147
  %408 = vmatprep.subr.bf16.mxu0 0
  %409 = vmatpush1.bf16.msra.mxu0 %v146
  %410 = vmatprep.subr.bf16.mxu0 0
  %411 = vmatpush1.bf16.msra.mxu0 %v145
  %412 = vmatprep.subr.bf16.mxu0 0
  %413 = vmatpush1.bf16.msra.mxu0 %v144
  %414 = vmatprep.subr.bf16.mxu0 0
  %415 = vmatpush1.bf16.msra.mxu0 %v143
  %416 = vmatprep.subr.bf16.mxu0 0
  %417 = vmatpush1.bf16.msra.mxu0 %v142
  %418 = vmatprep.subr.bf16.mxu0 0
  %419 = vmatpush2.bf16.msra.mxu0 %v157
  %420 = vmatprep.subr.bf16.mxu0 0
  %421 = vmatpush2.bf16.msra.mxu0 %v156
  %422 = vmatprep.subr.bf16.mxu0 0
  %423 = vmatpush2.bf16.msra.mxu0 %v155
  %424 = vmatprep.subr.bf16.mxu0 0
  %425 = vmatpush2.bf16.msra.mxu0 %v154
  %426 = vmatprep.subr.bf16.mxu0 0
  %427 = vmatpush2.bf16.msra.mxu0 %v153
  %428 = vmatprep.subr.bf16.mxu0 0
  %429 = vmatpush2.bf16.msra.mxu0 %v152
  %430 = vmatprep.subr.bf16.mxu0 0
  %431 = vmatpush2.bf16.msra.mxu0 %v151
  %432 = vmatprep.subr.bf16.mxu0 0
  %433 = vmatpush2.bf16.msra.mxu0 %v150
  %434 = vmatprep.mubr.bf16.mxu0 %v340
  %435 = vmatmul.mubr.bf16.gmra.mxu0 %v339
  %v436 = vpop.f32.mrf.mxu0
  %v437 = vadd.f32 %v388, %v436
  %v438 = vpop.f32.mrf.mxu0
  %v439 = vpop.f32.mrf.mxu0
  %v440 = vadd.f32 %v391, %v439
  %v441 = vpop.f32.mrf.mxu0
  %442 = vmatprep.mubr.bf16.mxu0 %v345
  %443 = vmatmul.mubr.bf16.gmra.mxu0 %v344
  %v444 = vpop.f32.mrf.mxu0
  %v445 = vadd.f32 %v396, %v444
  %v446 = vpop.f32.mrf.mxu0
  %v447 = vpop.f32.mrf.mxu0
  %v448 = vadd.f32 %v399, %v447
  %v449 = vpop.f32.mrf.mxu0
  %450 = vdwg.mxu0
  %451 = vmatprep.subr.bf16.mxu0 0
  %452 = vmatpush1.bf16.msra.mxu0 0
  %453 = vmatprep.subr.bf16.mxu0 0
  %454 = vmatpush1.bf16.msra.mxu0 0
  %455 = vmatprep.subr.bf16.mxu0 0
  %456 = vmatpush1.bf16.msra.mxu0 0
  %457 = vmatprep.subr.bf16.mxu0 0
  %458 = vmatpush1.bf16.msra.mxu0 0
  %459 = vmatprep.subr.bf16.mxu0 0
  %460 = vmatpush1.bf16.msra.mxu0 %v161
  %461 = vmatprep.subr.bf16.mxu0 0
  %462 = vmatpush1.bf16.msra.mxu0 %v160
  %463 = vmatprep.subr.bf16.mxu0 0
  %464 = vmatpush1.bf16.msra.mxu0 %v159
  %465 = vmatprep.subr.bf16.mxu0 0
  %466 = vmatpush1.bf16.msra.mxu0 %v158
  %467 = vmatprep.subr.bf16.mxu0 0
  %468 = vmatpush2.bf16.msra.mxu0 0
  %469 = vmatprep.subr.bf16.mxu0 0
  %470 = vmatpush2.bf16.msra.mxu0 0
  %471 = vmatprep.subr.bf16.mxu0 0
  %472 = vmatpush2.bf16.msra.mxu0 0
  %473 = vmatprep.subr.bf16.mxu0 0
  %474 = vmatpush2.bf16.msra.mxu0 0
  %475 = vmatprep.subr.bf16.mxu0 0
  %476 = vmatpush2.bf16.msra.mxu0 0
  %477 = vmatprep.subr.bf16.mxu0 0
  %478 = vmatpush2.bf16.msra.mxu0 0
  %479 = vmatprep.subr.bf16.mxu0 0
  %480 = vmatpush2.bf16.msra.mxu0 0
  %481 = vmatprep.subr.bf16.mxu0 0
  %482 = vmatpush2.bf16.msra.mxu0 0
  %483 = vmatprep.mubr.bf16.mxu0 0
  %484 = vmatmul.mubr.bf16.gmra.mxu0 %v348
  %v485 = vpop.f32.mrf.mxu0
  %v486 = vadd.f32 %v437, %v485
  %v487 = vpop.f32.mrf.mxu0
  %v488 = vpop.f32.mrf.mxu0
  %v489 = vadd.f32 %v440, %v488
  %v490 = vpop.f32.mrf.mxu0
  %491 = vmatprep.mubr.bf16.mxu0 0
  %492 = vmatmul.mubr.bf16.gmra.mxu0 %v351
  %v493 = vpop.f32.mrf.mxu0
  %v494 = vadd.f32 %v445, %v493
  %v495 = vpop.f32.mrf.mxu0
  %v496 = vpop.f32.mrf.mxu0
  %v497 = vadd.f32 %v448, %v496
  %v498 = vpop.f32.mrf.mxu0
  %499 = vdwg.mxu0
  %s500 = scalar_lea.vmem %s0, 320
  %v501 = vld [vmem:[%s500] sm:$0xff]
  %v502 = vld [vmem:[%s500 + $0x8] sm:$0xff]
  %v503 = vld [vmem:[%s500 + $0x10] sm:$0xff]
  %v504 = vld [vmem:[%s500 + $0x18] sm:$0xff]
  %v505 = vld [vmem:[%s500 + $0x20] sm:$0xff]
  %v506 = vld [vmem:[%s500 + $0x28] sm:$0xff]
  %v507 = vld [vmem:[%s500 + $0x30] sm:$0xff]
  %v508 = vld [vmem:[%s500 + $0x38] sm:$0xff]
  %v509 = vld [vmem:[%s500 + $0x40] sm:$0xff]
  %v510 = vld [vmem:[%s500 + $0x48] sm:$0xff]
  %v511 = vld [vmem:[%s500 + $0x50] sm:$0xff]
  %v512 = vld [vmem:[%s500 + $0x58] sm:$0xff]
  %v513 = vld [vmem:[%s500 + $0x60] sm:$0xff]
  %v514 = vld [vmem:[%s500 + $0x68] sm:$0xff]
  %v515 = vld [vmem:[%s500 + $0x70] sm:$0xff]
  %v516 = vld [vmem:[%s500 + $0x78] sm:$0xff]
  %v517 = vld [vmem:[%s500 + $0x80] sm:$0xff]
  %v518 = vld [vmem:[%s500 + $0x88] sm:$0xff]
  %v519 = vld [vmem:[%s500 + $0x90] sm:$0xff]
  %v520 = vld [vmem:[%s500 + $0x98] sm:$0xff]
  %v521 = vpack.c.bf16 %v506, %v501
  %v522 = vpack.c.bf16 %v507, %v502
  %v523 = vpack.c.bf16 %v508, %v503
  %v524 = vpack.c.bf16 %v509, %v504
  %v525 = vpack.c.bf16 %v510, %v505
  %v526 = vpack.c.bf16 %v516, %v511
  %v527 = vpack.c.bf16 %v517, %v512
  %v528 = vpack.c.bf16 %v518, %v513
  %v529 = vpack.c.bf16 %v519, %v514
  %v530 = vpack.c.bf16 %v520, %v515
  %v532 = vsel %vm162, %v525, 0
  %v535 = vsel %vm162, %v530, 0
  %537 = vmatprep.subr.bf16.mxu0 0
  %538 = vmatpush1.bf16.msra.mxu0 %v133
  %539 = vmatprep.subr.bf16.mxu0 0
  %540 = vmatpush1.bf16.msra.mxu0 %v132
  %541 = vmatprep.subr.bf16.mxu0 0
  %542 = vmatpush1.bf16.msra.mxu0 %v131
  %543 = vmatprep.subr.bf16.mxu0 0
  %544 = vmatpush1.bf16.msra.mxu0 %v130
  %545 = vmatprep.subr.bf16.mxu0 0
  %546 = vmatpush1.bf16.msra.mxu0 %v129
  %547 = vmatprep.subr.bf16.mxu0 0
  %548 = vmatpush1.bf16.msra.mxu0 %v128
  %549 = vmatprep.subr.bf16.mxu0 0
  %550 = vmatpush1.bf16.msra.mxu0 %v127
  %551 = vmatprep.subr.bf16.mxu0 0
  %552 = vmatpush1.bf16.msra.mxu0 %v126
  %553 = vmatprep.subr.bf16.mxu0 0
  %554 = vmatpush2.bf16.msra.mxu0 %v141
  %555 = vmatprep.subr.bf16.mxu0 0
  %556 = vmatpush2.bf16.msra.mxu0 %v140
  %557 = vmatprep.subr.bf16.mxu0 0
  %558 = vmatpush2.bf16.msra.mxu0 %v139
  %559 = vmatprep.subr.bf16.mxu0 0
  %560 = vmatpush2.bf16.msra.mxu0 %v138
  %561 = vmatprep.subr.bf16.mxu0 0
  %562 = vmatpush2.bf16.msra.mxu0 %v137
  %563 = vmatprep.subr.bf16.mxu0 0
  %564 = vmatpush2.bf16.msra.mxu0 %v136
  %565 = vmatprep.subr.bf16.mxu0 0
  %566 = vmatpush2.bf16.msra.mxu0 %v135
  %567 = vmatprep.subr.bf16.mxu0 0
  %568 = vmatpush2.bf16.msra.mxu0 %v134
  %569 = vmatprep.mubr.bf16.mxu0 %v522
  %570 = vmatmul.mubr.bf16.gmra.mxu0 %v521
  %v571 = vpop.f32.mrf.mxu0
  %v572 = vadd.f32 0.0, %v571
  %v573 = vpop.f32.mrf.mxu0
  %v574 = vpop.f32.mrf.mxu0
  %v575 = vadd.f32 0.0, %v574
  %v576 = vpop.f32.mrf.mxu0
  %577 = vmatprep.mubr.bf16.mxu0 %v527
  %578 = vmatmul.mubr.bf16.gmra.mxu0 %v526
  %v579 = vpop.f32.mrf.mxu0
  %v580 = vadd.f32 0.0, %v579
  %v581 = vpop.f32.mrf.mxu0
  %v582 = vpop.f32.mrf.mxu0
  %v583 = vadd.f32 0.0, %v582
  %v584 = vpop.f32.mrf.mxu0
  %585 = vdwg.mxu0
  %586 = vmatprep.subr.bf16.mxu0 0
  %587 = vmatpush1.bf16.msra.mxu0 %v149
  %588 = vmatprep.subr.bf16.mxu0 0
  %589 = vmatpush1.bf16.msra.mxu0 %v148
  %590 = vmatprep.subr.bf16.mxu0 0
  %591 = vmatpush1.bf16.msra.mxu0 %v147
  %592 = vmatprep.subr.bf16.mxu0 0
  %593 = vmatpush1.bf16.msra.mxu0 %v146
  %594 = vmatprep.subr.bf16.mxu0 0
  %595 = vmatpush1.bf16.msra.mxu0 %v145
  %596 = vmatprep.subr.bf16.mxu0 0
  %597 = vmatpush1.bf16.msra.mxu0 %v144
  %598 = vmatprep.subr.bf16.mxu0 0
  %599 = vmatpush1.bf16.msra.mxu0 %v143
  %600 = vmatprep.subr.bf16.mxu0 0
  %601 = vmatpush1.bf16.msra.mxu0 %v142
  %602 = vmatprep.subr.bf16.mxu0 0
  %603 = vmatpush2.bf16.msra.mxu0 %v157
  %604 = vmatprep.subr.bf16.mxu0 0
  %605 = vmatpush2.bf16.msra.mxu0 %v156
  %606 = vmatprep.subr.bf16.mxu0 0
  %607 = vmatpush2.bf16.msra.mxu0 %v155
  %608 = vmatprep.subr.bf16.mxu0 0
  %609 = vmatpush2.bf16.msra.mxu0 %v154
  %610 = vmatprep.subr.bf16.mxu0 0
  %611 = vmatpush2.bf16.msra.mxu0 %v153
  %612 = vmatprep.subr.bf16.mxu0 0
  %613 = vmatpush2.bf16.msra.mxu0 %v152
  %614 = vmatprep.subr.bf16.mxu0 0
  %615 = vmatpush2.bf16.msra.mxu0 %v151
  %616 = vmatprep.subr.bf16.mxu0 0
  %617 = vmatpush2.bf16.msra.mxu0 %v150
  %618 = vmatprep.mubr.bf16.mxu0 %v524
  %619 = vmatmul.mubr.bf16.gmra.mxu0 %v523
  %v620 = vpop.f32.mrf.mxu0
  %v621 = vadd.f32 %v572, %v620
  %v622 = vpop.f32.mrf.mxu0
  %v623 = vpop.f32.mrf.mxu0
  %v624 = vadd.f32 %v575, %v623
  %v625 = vpop.f32.mrf.mxu0
  %626 = vmatprep.mubr.bf16.mxu0 %v529
  %627 = vmatmul.mubr.bf16.gmra.mxu0 %v528
  %v628 = vpop.f32.mrf.mxu0
  %v629 = vadd.f32 %v580, %v628
  %v630 = vpop.f32.mrf.mxu0
  %v631 = vpop.f32.mrf.mxu0
  %v632 = vadd.f32 %v583, %v631
  %v633 = vpop.f32.mrf.mxu0
  %634 = vdwg.mxu0
  %635 = vmatprep.subr.bf16.mxu0 0
  %636 = vmatpush1.bf16.msra.mxu0 0
  %637 = vmatprep.subr.bf16.mxu0 0
  %638 = vmatpush1.bf16.msra.mxu0 0
  %639 = vmatprep.subr.bf16.mxu0 0
  %640 = vmatpush1.bf16.msra.mxu0 0
  %641 = vmatprep.subr.bf16.mxu0 0
  %642 = vmatpush1.bf16.msra.mxu0 0
  %643 = vmatprep.subr.bf16.mxu0 0
  %644 = vmatpush1.bf16.msra.mxu0 %v161
  %645 = vmatprep.subr.bf16.mxu0 0
  %646 = vmatpush1.bf16.msra.mxu0 %v160
  %647 = vmatprep.subr.bf16.mxu0 0
  %648 = vmatpush1.bf16.msra.mxu0 %v159
  %649 = vmatprep.subr.bf16.mxu0 0
  %650 = vmatpush1.bf16.msra.mxu0 %v158
  %651 = vmatprep.subr.bf16.mxu0 0
  %652 = vmatpush2.bf16.msra.mxu0 0
  %653 = vmatprep.subr.bf16.mxu0 0
  %654 = vmatpush2.bf16.msra.mxu0 0
  %655 = vmatprep.subr.bf16.mxu0 0
  %656 = vmatpush2.bf16.msra.mxu0 0
  %657 = vmatprep.subr.bf16.mxu0 0
  %658 = vmatpush2.bf16.msra.mxu0 0
  %659 = vmatprep.subr.bf16.mxu0 0
  %660 = vmatpush2.bf16.msra.mxu0 0
  %661 = vmatprep.subr.bf16.mxu0 0
  %662 = vmatpush2.bf16.msra.mxu0 0
  %663 = vmatprep.subr.bf16.mxu0 0
  %664 = vmatpush2.bf16.msra.mxu0 0
  %665 = vmatprep.subr.bf16.mxu0 0
  %666 = vmatpush2.bf16.msra.mxu0 0
  %667 = vmatprep.mubr.bf16.mxu0 0
  %668 = vmatmul.mubr.bf16.gmra.mxu0 %v532
  %v669 = vpop.f32.mrf.mxu0
  %v670 = vadd.f32 %v621, %v669
  %v671 = vpop.f32.mrf.mxu0
  %v672 = vpop.f32.mrf.mxu0
  %v673 = vadd.f32 %v624, %v672
  %v674 = vpop.f32.mrf.mxu0
  %675 = vmatprep.mubr.bf16.mxu0 0
  %676 = vmatmul.mubr.bf16.gmra.mxu0 %v535
  %v677 = vpop.f32.mrf.mxu0
  %v678 = vadd.f32 %v629, %v677
  %v679 = vpop.f32.mrf.mxu0
  %v680 = vpop.f32.mrf.mxu0
  %v681 = vadd.f32 %v632, %v680
  %v682 = vpop.f32.mrf.mxu0
  %683 = vdwg.mxu0
  %s684 = scalar_lea.vmem %s0, 480
  %v685 = vld [vmem:[%s684] sm:$0xff]
  %v686 = vld [vmem:[%s684 + $0x8] sm:$0xff]
  %v687 = vld [vmem:[%s684 + $0x10] sm:$0xff]
  %v688 = vld [vmem:[%s684 + $0x18] sm:$0xff]
  %v689 = vld [vmem:[%s684 + $0x20] sm:$0xff]
  %v690 = vld [vmem:[%s684 + $0x28] sm:$0xff]
  %v691 = vld [vmem:[%s684 + $0x30] sm:$0xff]
  %v692 = vld [vmem:[%s684 + $0x38] sm:$0xff]
  %v693 = vld [vmem:[%s684 + $0x40] sm:$0xff]
  %v694 = vld [vmem:[%s684 + $0x48] sm:$0xff]
  %v695 = vld [vmem:[%s684 + $0x50] sm:$0xff]
  %v696 = vld [vmem:[%s684 + $0x58] sm:$0xff]
  %v697 = vld [vmem:[%s684 + $0x60] sm:$0xff]
  %v698 = vld [vmem:[%s684 + $0x68] sm:$0xff]
  %v699 = vld [vmem:[%s684 + $0x70] sm:$0xff]
  %v700 = vld [vmem:[%s684 + $0x78] sm:$0xff]
  %v701 = vld [vmem:[%s684 + $0x80] sm:$0xff]
  %v702 = vld [vmem:[%s684 + $0x88] sm:$0xff]
  %v703 = vld [vmem:[%s684 + $0x90] sm:$0xff]
  %v704 = vld [vmem:[%s684 + $0x98] sm:$0xff]
  %v705 = vpack.c.bf16 %v690, %v685
  %v706 = vpack.c.bf16 %v691, %v686
  %v707 = vpack.c.bf16 %v692, %v687
  %v708 = vpack.c.bf16 %v693, %v688
  %v709 = vpack.c.bf16 %v694, %v689
  %v710 = vpack.c.bf16 %v700, %v695
  %v711 = vpack.c.bf16 %v701, %v696
  %v712 = vpack.c.bf16 %v702, %v697
  %v713 = vpack.c.bf16 %v703, %v698
  %v714 = vpack.c.bf16 %v704, %v699
  %v716 = vsel %vm162, %v709, 0
  %v719 = vsel %vm162, %v714, 0
  %721 = vmatprep.subr.bf16.mxu0 0
  %722 = vmatpush1.bf16.msra.mxu0 %v133
  %723 = vmatprep.subr.bf16.mxu0 0
  %724 = vmatpush1.bf16.msra.mxu0 %v132
  %725 = vmatprep.subr.bf16.mxu0 0
  %726 = vmatpush1.bf16.msra.mxu0 %v131
  %727 = vmatprep.subr.bf16.mxu0 0
  %728 = vmatpush1.bf16.msra.mxu0 %v130
  %729 = vmatprep.subr.bf16.mxu0 0
  %730 = vmatpush1.bf16.msra.mxu0 %v129
  %731 = vmatprep.subr.bf16.mxu0 0
  %732 = vmatpush1.bf16.msra.mxu0 %v128
  %733 = vmatprep.subr.bf16.mxu0 0
  %734 = vmatpush1.bf16.msra.mxu0 %v127
  %735 = vmatprep.subr.bf16.mxu0 0
  %736 = vmatpush1.bf16.msra.mxu0 %v126
  %737 = vmatprep.subr.bf16.mxu0 0
  %738 = vmatpush2.bf16.msra.mxu0 %v141
  %739 = vmatprep.subr.bf16.mxu0 0
  %740 = vmatpush2.bf16.msra.mxu0 %v140
  %741 = vmatprep.subr.bf16.mxu0 0
  %742 = vmatpush2.bf16.msra.mxu0 %v139
  %743 = vmatprep.subr.bf16.mxu0 0
  %744 = vmatpush2.bf16.msra.mxu0 %v138
  %745 = vmatprep.subr.bf16.mxu0 0
  %746 = vmatpush2.bf16.msra.mxu0 %v137
  %747 = vmatprep.subr.bf16.mxu0 0
  %748 = vmatpush2.bf16.msra.mxu0 %v136
  %749 = vmatprep.subr.bf16.mxu0 0
  %750 = vmatpush2.bf16.msra.mxu0 %v135
  %751 = vmatprep.subr.bf16.mxu0 0
  %752 = vmatpush2.bf16.msra.mxu0 %v134
  %753 = vmatprep.mubr.bf16.mxu0 %v706
  %754 = vmatmul.mubr.bf16.gmra.mxu0 %v705
  %v755 = vpop.f32.mrf.mxu0
  %v756 = vadd.f32 0.0, %v755
  %v757 = vpop.f32.mrf.mxu0
  %v758 = vpop.f32.mrf.mxu0
  %v759 = vadd.f32 0.0, %v758
  %v760 = vpop.f32.mrf.mxu0
  %761 = vmatprep.mubr.bf16.mxu0 %v711
  %762 = vmatmul.mubr.bf16.gmra.mxu0 %v710
  %v763 = vpop.f32.mrf.mxu0
  %v764 = vadd.f32 0.0, %v763
  %v765 = vpop.f32.mrf.mxu0
  %v766 = vpop.f32.mrf.mxu0
  %v767 = vadd.f32 0.0, %v766
  %v768 = vpop.f32.mrf.mxu0
  %769 = vdwg.mxu0
  %770 = vmatprep.subr.bf16.mxu0 0
  %771 = vmatpush1.bf16.msra.mxu0 %v149
  %772 = vmatprep.subr.bf16.mxu0 0
  %773 = vmatpush1.bf16.msra.mxu0 %v148
  %774 = vmatprep.subr.bf16.mxu0 0
  %775 = vmatpush1.bf16.msra.mxu0 %v147
  %776 = vmatprep.subr.bf16.mxu0 0
  %777 = vmatpush1.bf16.msra.mxu0 %v146
  %778 = vmatprep.subr.bf16.mxu0 0
  %779 = vmatpush1.bf16.msra.mxu0 %v145
  %780 = vmatprep.subr.bf16.mxu0 0
  %781 = vmatpush1.bf16.msra.mxu0 %v144
  %782 = vmatprep.subr.bf16.mxu0 0
  %783 = vmatpush1.bf16.msra.mxu0 %v143
  %784 = vmatprep.subr.bf16.mxu0 0
  %785 = vmatpush1.bf16.msra.mxu0 %v142
  %786 = vmatprep.subr.bf16.mxu0 0
  %787 = vmatpush2.bf16.msra.mxu0 %v157
  %788 = vmatprep.subr.bf16.mxu0 0
  %789 = vmatpush2.bf16.msra.mxu0 %v156
  %790 = vmatprep.subr.bf16.mxu0 0
  %791 = vmatpush2.bf16.msra.mxu0 %v155
  %792 = vmatprep.subr.bf16.mxu0 0
  %793 = vmatpush2.bf16.msra.mxu0 %v154
  %794 = vmatprep.subr.bf16.mxu0 0
  %795 = vmatpush2.bf16.msra.mxu0 %v153
  %796 = vmatprep.subr.bf16.mxu0 0
  %797 = vmatpush2.bf16.msra.mxu0 %v152
  %798 = vmatprep.subr.bf16.mxu0 0
  %799 = vmatpush2.bf16.msra.mxu0 %v151
  %800 = vmatprep.subr.bf16.mxu0 0
  %801 = vmatpush2.bf16.msra.mxu0 %v150
  %802 = vmatprep.mubr.bf16.mxu0 %v708
  %803 = vmatmul.mubr.bf16.gmra.mxu0 %v707
  %v804 = vpop.f32.mrf.mxu0
  %v805 = vadd.f32 %v756, %v804
  %v806 = vpop.f32.mrf.mxu0
  %v807 = vpop.f32.mrf.mxu0
  %v808 = vadd.f32 %v759, %v807
  %v809 = vpop.f32.mrf.mxu0
  %810 = vmatprep.mubr.bf16.mxu0 %v713
  %811 = vmatmul.mubr.bf16.gmra.mxu0 %v712
  %v812 = vpop.f32.mrf.mxu0
  %v813 = vadd.f32 %v764, %v812
  %v814 = vpop.f32.mrf.mxu0
  %v815 = vpop.f32.mrf.mxu0
  %v816 = vadd.f32 %v767, %v815
  %v817 = vpop.f32.mrf.mxu0
  %818 = vdwg.mxu0
  %819 = vmatprep.subr.bf16.mxu0 0
  %820 = vmatpush1.bf16.msra.mxu0 0
  %821 = vmatprep.subr.bf16.mxu0 0
  %822 = vmatpush1.bf16.msra.mxu0 0
  %823 = vmatprep.subr.bf16.mxu0 0
  %824 = vmatpush1.bf16.msra.mxu0 0
  %825 = vmatprep.subr.bf16.mxu0 0
  %826 = vmatpush1.bf16.msra.mxu0 0
  %827 = vmatprep.subr.bf16.mxu0 0
  %828 = vmatpush1.bf16.msra.mxu0 %v161
  %829 = vmatprep.subr.bf16.mxu0 0
  %830 = vmatpush1.bf16.msra.mxu0 %v160
  %831 = vmatprep.subr.bf16.mxu0 0
  %832 = vmatpush1.bf16.msra.mxu0 %v159
  %833 = vmatprep.subr.bf16.mxu0 0
  %834 = vmatpush1.bf16.msra.mxu0 %v158
  %835 = vmatprep.subr.bf16.mxu0 0
  %836 = vmatpush2.bf16.msra.mxu0 0
  %837 = vmatprep.subr.bf16.mxu0 0
  %838 = vmatpush2.bf16.msra.mxu0 0
  %839 = vmatprep.subr.bf16.mxu0 0
  %840 = vmatpush2.bf16.msra.mxu0 0
  %841 = vmatprep.subr.bf16.mxu0 0
  %842 = vmatpush2.bf16.msra.mxu0 0
  %843 = vmatprep.subr.bf16.mxu0 0
  %844 = vmatpush2.bf16.msra.mxu0 0
  %845 = vmatprep.subr.bf16.mxu0 0
  %846 = vmatpush2.bf16.msra.mxu0 0
  %847 = vmatprep.subr.bf16.mxu0 0
  %848 = vmatpush2.bf16.msra.mxu0 0
  %849 = vmatprep.subr.bf16.mxu0 0
  %850 = vmatpush2.bf16.msra.mxu0 0
  %851 = vmatprep.mubr.bf16.mxu0 0
  %852 = vmatmul.mubr.bf16.gmra.mxu0 %v716
  %v853 = vpop.f32.mrf.mxu0
  %v854 = vadd.f32 %v805, %v853
  %v855 = vpop.f32.mrf.mxu0
  %v856 = vpop.f32.mrf.mxu0
  %v857 = vadd.f32 %v808, %v856
  %v858 = vpop.f32.mrf.mxu0
  %859 = vmatprep.mubr.bf16.mxu0 0
  %860 = vmatmul.mubr.bf16.gmra.mxu0 %v719
  %v861 = vpop.f32.mrf.mxu0
  %v862 = vadd.f32 %v813, %v861
  %v863 = vpop.f32.mrf.mxu0
  %v864 = vpop.f32.mrf.mxu0
  %v865 = vadd.f32 %v816, %v864
  %v866 = vpop.f32.mrf.mxu0
  %867 = vdwg.mxu0
  %v868 = vsel %vm162, %v302, 0.0
  %v869 = vsel %vm162, %v305, 0.0
  %v870 = vadd.f32 %v868, %v869
  %v871 = vsel %vm162, %v310, 0.0
  %v872 = vadd.f32 %v870, %v871
  %v873 = vsel %vm162, %v313, 0.0
  %v874 = vadd.f32 %v872, %v873
  %v875 = vrot.slane %v874, 4
  %v876 = vadd.f32 %v874, %v875
  %v877 = vrot.slane %v876, 2
  %v878 = vadd.f32 %v876, %v877
  %v879 = vrot.slane %v878, 1
  %v880 = vadd.f32 %v878, %v879
  %v881 = vmul.f32 %v302, %v302
  %v882 = vmul.f32 %v305, %v305
  %v883 = vmul.f32 %v310, %v310
  %v884 = vmul.f32 %v313, %v313
  %v885 = vsel %vm162, %v881, 0.0
  %v886 = vsel %vm162, %v882, 0.0
  %v887 = vadd.f32 %v885, %v886
  %v888 = vsel %vm162, %v883, 0.0
  %v889 = vadd.f32 %v887, %v888
  %v890 = vsel %vm162, %v884, 0.0
  %v891 = vadd.f32 %v889, %v890
  %v892 = vrot.slane %v891, 4
  %v893 = vadd.f32 %v891, %v892
  %v894 = vrot.slane %v893, 2
  %v895 = vadd.f32 %v893, %v894
  %v896 = vrot.slane %v895, 1
  %v897 = vadd.f32 %v895, %v896
  %v898 = vsel %vm162, %v486, 0.0
  %v899 = vsel %vm162, %v489, 0.0
  %v900 = vadd.f32 %v898, %v899
  %v901 = vsel %vm162, %v494, 0.0
  %v902 = vadd.f32 %v900, %v901
  %v903 = vsel %vm162, %v497, 0.0
  %v904 = vadd.f32 %v902, %v903
  %v905 = vrot.slane %v904, 4
  %v906 = vadd.f32 %v904, %v905
  %v907 = vrot.slane %v906, 2
  %v908 = vadd.f32 %v906, %v907
  %v909 = vrot.slane %v908, 1
  %v910 = vadd.f32 %v908, %v909
  %v911 = vadd.f32 %v880, %v910
  %v912 = vmul.f32 %v486, %v486
  %v913 = vmul.f32 %v489, %v489
  %v914 = vmul.f32 %v494, %v494
  %v915 = vmul.f32 %v497, %v497
  %v916 = vsel %vm162, %v912, 0.0
  %v917 = vsel %vm162, %v913, 0.0
  %v918 = vadd.f32 %v916, %v917
  %v919 = vsel %vm162, %v914, 0.0
  %v920 = vadd.f32 %v918, %v919
  %v921 = vsel %vm162, %v915, 0.0
  %v922 = vadd.f32 %v920, %v921
  %v923 = vrot.slane %v922, 4
  %v924 = vadd.f32 %v922, %v923
  %v925 = vrot.slane %v924, 2
  %v926 = vadd.f32 %v924, %v925
  %v927 = vrot.slane %v926, 1
  %v928 = vadd.f32 %v926, %v927
  %v929 = vadd.f32 %v897, %v928
  %v930 = vsel %vm162, %v670, 0.0
  %v931 = vsel %vm162, %v673, 0.0
  %v932 = vadd.f32 %v930, %v931
  %v933 = vsel %vm162, %v678, 0.0
  %v934 = vadd.f32 %v932, %v933
  %v935 = vsel %vm162, %v681, 0.0
  %v936 = vadd.f32 %v934, %v935
  %v937 = vrot.slane %v936, 4
  %v938 = vadd.f32 %v936, %v937
  %v939 = vrot.slane %v938, 2
  %v940 = vadd.f32 %v938, %v939
  %v941 = vrot.slane %v940, 1
  %v942 = vadd.f32 %v940, %v941
  %v943 = vadd.f32 %v911, %v942
  %v944 = vmul.f32 %v670, %v670
  %v945 = vmul.f32 %v673, %v673
  %v946 = vmul.f32 %v678, %v678
  %v947 = vmul.f32 %v681, %v681
  %v948 = vsel %vm162, %v944, 0.0
  %v949 = vsel %vm162, %v945, 0.0
  %v950 = vadd.f32 %v948, %v949
  %v951 = vsel %vm162, %v946, 0.0
  %v952 = vadd.f32 %v950, %v951
  %v953 = vsel %vm162, %v947, 0.0
  %v954 = vadd.f32 %v952, %v953
  %v955 = vrot.slane %v954, 4
  %v956 = vadd.f32 %v954, %v955
  %v957 = vrot.slane %v956, 2
  %v958 = vadd.f32 %v956, %v957
  %v959 = vrot.slane %v958, 1
  %v960 = vadd.f32 %v958, %v959
  %v961 = vadd.f32 %v929, %v960
  %v962 = vsel %vm162, %v854, 0.0
  %v963 = vsel %vm162, %v857, 0.0
  %v964 = vadd.f32 %v962, %v963
  %v965 = vsel %vm162, %v862, 0.0
  %v966 = vadd.f32 %v964, %v965
  %v967 = vsel %vm162, %v865, 0.0
  %v968 = vadd.f32 %v966, %v967
  %v969 = vrot.slane %v968, 4
  %v970 = vadd.f32 %v968, %v969
  %v971 = vrot.slane %v970, 2
  %v972 = vadd.f32 %v970, %v971
  %v973 = vrot.slane %v972, 1
  %v974 = vadd.f32 %v972, %v973
  %v975 = vadd.f32 %v943, %v974
  %v976 = vmul.f32 %v854, %v854
  %v977 = vmul.f32 %v857, %v857
  %v978 = vmul.f32 %v862, %v862
  %v979 = vmul.f32 %v865, %v865
  %v980 = vsel %vm162, %v976, 0.0
  %v981 = vsel %vm162, %v977, 0.0
  %v982 = vadd.f32 %v980, %v981
  %v983 = vsel %vm162, %v978, 0.0
  %v984 = vadd.f32 %v982, %v983
  %v985 = vsel %vm162, %v979, 0.0
  %v986 = vadd.f32 %v984, %v985
  %v987 = vrot.slane %v986, 4
  %v988 = vadd.f32 %v986, %v987
  %v989 = vrot.slane %v988, 2
  %v990 = vadd.f32 %v988, %v989
  %v991 = vrot.slane %v990, 1
  %v992 = vadd.f32 %v990, %v991
  %v993 = vadd.f32 %v961, %v992
  %v994 = vrcp.pop 128.0
  %v995 = vmul.f32 %v975, %v994
  %v996 = vmul.f32 %v993, %v994
  %v997 = vmul.f32 %v995, %v995
  %v998 = vsub.f32 %v996, %v997
  %v999 = vadd.f32 %v998, 1e-05
  %v1000 = vrsqrt.pop %v999
  %v1001 = vld [vmem:[%s5] sm:$0x1]
  %v1002 = vsub.f32 %v302, %v995
  %v1003 = vsub.f32 %v305, %v995
  %v1004 = vsub.f32 %v310, %v995
  %v1005 = vsub.f32 %v313, %v995
  %v1006 = vmul.f32 %v1002, %v1000
  %v1007 = vmul.f32 %v1003, %v1000
  %v1008 = vmul.f32 %v1004, %v1000
  %v1009 = vmul.f32 %v1005, %v1000
  %v1010 = vld [vmem:[%s2] sm:$0x1]
  %v1012 = vlaneseq
  %v1013 = vshrl.u32 %v1012, 7
  %v1014 = vsub.s32 0, %v1013
  %v1015 = vrot.slane %v1010, %v1014
  %v1017 = vmul.f32 %v1006, %v1015
  %v1018 = vmul.f32 %v1007, %v1015
  %v1019 = vmul.f32 %v1008, %v1015
  %v1020 = vmul.f32 %v1009, %v1015
  %v1021 = vld [vmem:[%s3] sm:$0x1]
  %v1023 = vlaneseq
  %v1024 = vshrl.u32 %v1023, 7
  %v1025 = vsub.s32 0, %v1024
  %v1026 = vrot.slane %v1021, %v1025
  %v1028 = vadd.f32 %v1017, %v1026
  %v1029 = vadd.f32 %v1018, %v1026
  %v1030 = vadd.f32 %v1019, %v1026
  %v1031 = vadd.f32 %v1020, %v1026
  %v1032 = vmax.f32 %v1028, 0.0
  %v1033 = vmax.f32 %v1029, 0.0
  %v1034 = vmax.f32 %v1030, 0.0
  %v1035 = vmax.f32 %v1031, 0.0
  %v1036 = vld [vmem:[%s4] sm:$0xff]
  %v1037 = vld [vmem:[%s4 + $0x8] sm:$0xff]
  %v1038 = vld [vmem:[%s4 + $0x10] sm:$0xff]
  %v1039 = vld [vmem:[%s4 + $0x18] sm:$0xff]
  %v1040 = vld [vmem:[%s4 + $0x20] sm:$0xff]
  %v1041 = vld [vmem:[%s4 + $0x28] sm:$0xff]
  %v1042 = vld [vmem:[%s4 + $0x30] sm:$0xff]
  %v1043 = vld [vmem:[%s4 + $0x38] sm:$0xff]
  %v1044 = vpack.c.bf16 %v1033, %v1032
  %v1045 = vpack.c.bf16 %v1035, %v1034
  %v1046 = vpack.c.bf16 %v1037, %v1036
  %v1047 = vpack.c.bf16 %v1039, %v1038
  %v1048 = vpack.c.bf16 %v1041, %v1040
  %v1049 = vpack.c.bf16 %v1043, %v1042
  %v1051 = vsel %vm162, %v1044, 0
  %v1054 = vsel %vm162, %v1045, 0
  %1056 = vmatprep.subr.bf16.mxu0 0
  %1057 = vmatpush1.bf16.msra.mxu0 0
  %1058 = vmatprep.subr.bf16.mxu0 0
  %1059 = vmatpush1.bf16.msra.mxu0 0
  %1060 = vmatprep.subr.bf16.mxu0 0
  %1061 = vmatpush1.bf16.msra.mxu0 0
  %1062 = vmatprep.subr.bf16.mxu0 0
  %1063 = vmatpush1.bf16.msra.mxu0 0
  %1064 = vmatprep.subr.bf16.mxu0 0
  %1065 = vmatpush1.bf16.msra.mxu0 %v1049
  %1066 = vmatprep.subr.bf16.mxu0 0
  %1067 = vmatpush1.bf16.msra.mxu0 %v1048
  %1068 = vmatprep.subr.bf16.mxu0 0
  %1069 = vmatpush1.bf16.msra.mxu0 %v1047
  %1070 = vmatprep.subr.bf16.mxu0 0
  %1071 = vmatpush1.bf16.msra.mxu0 %v1046
  %1072 = vmatprep.subr.bf16.mxu0 0
  %1073 = vmatpush2.bf16.msra.mxu0 0
  %1074 = vmatprep.subr.bf16.mxu0 0
  %1075 = vmatpush2.bf16.msra.mxu0 0
  %1076 = vmatprep.subr.bf16.mxu0 0
  %1077 = vmatpush2.bf16.msra.mxu0 0
  %1078 = vmatprep.subr.bf16.mxu0 0
  %1079 = vmatpush2.bf16.msra.mxu0 0
  %1080 = vmatprep.subr.bf16.mxu0 0
  %1081 = vmatpush2.bf16.msra.mxu0 0
  %1082 = vmatprep.subr.bf16.mxu0 0
  %1083 = vmatpush2.bf16.msra.mxu0 0
  %1084 = vmatprep.subr.bf16.mxu0 0
  %1085 = vmatpush2.bf16.msra.mxu0 0
  %1086 = vmatprep.subr.bf16.mxu0 0
  %1087 = vmatpush2.bf16.msra.mxu0 0
  %1088 = vmatprep.mubr.bf16.mxu0 0
  %1089 = vmatmul.mubr.bf16.gmra.mxu0 %v1051
  %v1090 = vpop.f32.mrf.mxu0
  %v1091 = vadd.f32 0.0, %v1090
  %v1092 = vpop.f32.mrf.mxu0
  %v1093 = vpop.f32.mrf.mxu0
  %v1094 = vadd.f32 0.0, %v1093
  %v1095 = vpop.f32.mrf.mxu0
  %1096 = vmatprep.mubr.bf16.mxu0 0
  %1097 = vmatmul.mubr.bf16.gmra.mxu0 %v1054
  %v1098 = vpop.f32.mrf.mxu0
  %v1099 = vadd.f32 0.0, %v1098
  %v1100 = vpop.f32.mrf.mxu0
  %v1101 = vpop.f32.mrf.mxu0
  %v1102 = vadd.f32 0.0, %v1101
  %v1103 = vpop.f32.mrf.mxu0
  %1104 = vdwg.mxu0
  %v1106 = vlaneseq
  %v1107 = vshrl.u32 %v1106, 7
  %v1108 = vsub.s32 0, %v1107
  %v1109 = vrot.slane %v1001, %v1108
  %v1111 = vadd.f32 %v1109, %v1091
  %v1112 = vadd.f32 %v1109, %v1094
  %v1113 = vadd.f32 %v1109, %v1099
  %v1114 = vadd.f32 %v1109, %v1102
  %v1115 = vsub.f32 %v486, %v995
  %v1116 = vsub.f32 %v489, %v995
  %v1117 = vsub.f32 %v494, %v995
  %v1118 = vsub.f32 %v497, %v995
  %v1119 = vmul.f32 %v1115, %v1000
  %v1120 = vmul.f32 %v1116, %v1000
  %v1121 = vmul.f32 %v1117, %v1000
  %v1122 = vmul.f32 %v1118, %v1000
  %v1123 = vmul.f32 %v1119, %v1015
  %v1124 = vmul.f32 %v1120, %v1015
  %v1125 = vmul.f32 %v1121, %v1015
  %v1126 = vmul.f32 %v1122, %v1015
  %v1127 = vadd.f32 %v1123, %v1026
  %v1128 = vadd.f32 %v1124, %v1026
  %v1129 = vadd.f32 %v1125, %v1026
  %v1130 = vadd.f32 %v1126, %v1026
  %v1131 = vmax.f32 %v1127, 0.0
  %v1132 = vmax.f32 %v1128, 0.0
  %v1133 = vmax.f32 %v1129, 0.0
  %v1134 = vmax.f32 %v1130, 0.0
  %s1135 = scalar_lea.vmem %s4, 64
  %v1136 = vld [vmem:[%s1135] sm:$0xff]
  %v1137 = vld [vmem:[%s1135 + $0x8] sm:$0xff]
  %v1138 = vld [vmem:[%s1135 + $0x10] sm:$0xff]
  %v1139 = vld [vmem:[%s1135 + $0x18] sm:$0xff]
  %v1140 = vld [vmem:[%s1135 + $0x20] sm:$0xff]
  %v1141 = vld [vmem:[%s1135 + $0x28] sm:$0xff]
  %v1142 = vld [vmem:[%s1135 + $0x30] sm:$0xff]
  %v1143 = vld [vmem:[%s1135 + $0x38] sm:$0xff]
  %v1144 = vpack.c.bf16 %v1132, %v1131
  %v1145 = vpack.c.bf16 %v1134, %v1133
  %v1146 = vpack.c.bf16 %v1137, %v1136
  %v1147 = vpack.c.bf16 %v1139, %v1138
  %v1148 = vpack.c.bf16 %v1141, %v1140
  %v1149 = vpack.c.bf16 %v1143, %v1142
  %v1151 = vsel %vm162, %v1144, 0
  %v1154 = vsel %vm162, %v1145, 0
  %1156 = vmatprep.subr.bf16.mxu0 0
  %1157 = vmatpush1.bf16.msra.mxu0 0
  %1158 = vmatprep.subr.bf16.mxu0 0
  %1159 = vmatpush1.bf16.msra.mxu0 0
  %1160 = vmatprep.subr.bf16.mxu0 0
  %1161 = vmatpush1.bf16.msra.mxu0 0
  %1162 = vmatprep.subr.bf16.mxu0 0
  %1163 = vmatpush1.bf16.msra.mxu0 0
  %1164 = vmatprep.subr.bf16.mxu0 0
  %1165 = vmatpush1.bf16.msra.mxu0 %v1149
  %1166 = vmatprep.subr.bf16.mxu0 0
  %1167 = vmatpush1.bf16.msra.mxu0 %v1148
  %1168 = vmatprep.subr.bf16.mxu0 0
  %1169 = vmatpush1.bf16.msra.mxu0 %v1147
  %1170 = vmatprep.subr.bf16.mxu0 0
  %1171 = vmatpush1.bf16.msra.mxu0 %v1146
  %1172 = vmatprep.subr.bf16.mxu0 0
  %1173 = vmatpush2.bf16.msra.mxu0 0
  %1174 = vmatprep.subr.bf16.mxu0 0
  %1175 = vmatpush2.bf16.msra.mxu0 0
  %1176 = vmatprep.subr.bf16.mxu0 0
  %1177 = vmatpush2.bf16.msra.mxu0 0
  %1178 = vmatprep.subr.bf16.mxu0 0
  %1179 = vmatpush2.bf16.msra.mxu0 0
  %1180 = vmatprep.subr.bf16.mxu0 0
  %1181 = vmatpush2.bf16.msra.mxu0 0
  %1182 = vmatprep.subr.bf16.mxu0 0
  %1183 = vmatpush2.bf16.msra.mxu0 0
  %1184 = vmatprep.subr.bf16.mxu0 0
  %1185 = vmatpush2.bf16.msra.mxu0 0
  %1186 = vmatprep.subr.bf16.mxu0 0
  %1187 = vmatpush2.bf16.msra.mxu0 0
  %1188 = vmatprep.mubr.bf16.mxu0 0
  %1189 = vmatmul.mubr.bf16.gmra.mxu0 %v1151
  %v1190 = vpop.f32.mrf.mxu0
  %v1191 = vadd.f32 0.0, %v1190
  %v1192 = vpop.f32.mrf.mxu0
  %v1193 = vpop.f32.mrf.mxu0
  %v1194 = vadd.f32 0.0, %v1193
  %v1195 = vpop.f32.mrf.mxu0
  %1196 = vmatprep.mubr.bf16.mxu0 0
  %1197 = vmatmul.mubr.bf16.gmra.mxu0 %v1154
  %v1198 = vpop.f32.mrf.mxu0
  %v1199 = vadd.f32 0.0, %v1198
  %v1200 = vpop.f32.mrf.mxu0
  %v1201 = vpop.f32.mrf.mxu0
  %v1202 = vadd.f32 0.0, %v1201
  %v1203 = vpop.f32.mrf.mxu0
  %1204 = vdwg.mxu0
  %v1205 = vadd.f32 %v1111, %v1191
  %v1206 = vadd.f32 %v1112, %v1194
  %v1207 = vadd.f32 %v1113, %v1199
  %v1208 = vadd.f32 %v1114, %v1202
  %v1209 = vsub.f32 %v670, %v995
  %v1210 = vsub.f32 %v673, %v995
  %v1211 = vsub.f32 %v678, %v995
  %v1212 = vsub.f32 %v681, %v995
  %v1213 = vmul.f32 %v1209, %v1000
  %v1214 = vmul.f32 %v1210, %v1000
  %v1215 = vmul.f32 %v1211, %v1000
  %v1216 = vmul.f32 %v1212, %v1000
  %v1217 = vmul.f32 %v1213, %v1015
  %v1218 = vmul.f32 %v1214, %v1015
  %v1219 = vmul.f32 %v1215, %v1015
  %v1220 = vmul.f32 %v1216, %v1015
  %v1221 = vadd.f32 %v1217, %v1026
  %v1222 = vadd.f32 %v1218, %v1026
  %v1223 = vadd.f32 %v1219, %v1026
  %v1224 = vadd.f32 %v1220, %v1026
  %v1225 = vmax.f32 %v1221, 0.0
  %v1226 = vmax.f32 %v1222, 0.0
  %v1227 = vmax.f32 %v1223, 0.0
  %v1228 = vmax.f32 %v1224, 0.0
  %s1229 = scalar_lea.vmem %s4, 128
  %v1230 = vld [vmem:[%s1229] sm:$0xff]
  %v1231 = vld [vmem:[%s1229 + $0x8] sm:$0xff]
  %v1232 = vld [vmem:[%s1229 + $0x10] sm:$0xff]
  %v1233 = vld [vmem:[%s1229 + $0x18] sm:$0xff]
  %v1234 = vld [vmem:[%s1229 + $0x20] sm:$0xff]
  %v1235 = vld [vmem:[%s1229 + $0x28] sm:$0xff]
  %v1236 = vld [vmem:[%s1229 + $0x30] sm:$0xff]
  %v1237 = vld [vmem:[%s1229 + $0x38] sm:$0xff]
  %v1238 = vpack.c.bf16 %v1226, %v1225
  %v1239 = vpack.c.bf16 %v1228, %v1227
  %v1240 = vpack.c.bf16 %v1231, %v1230
  %v1241 = vpack.c.bf16 %v1233, %v1232
  %v1242 = vpack.c.bf16 %v1235, %v1234
  %v1243 = vpack.c.bf16 %v1237, %v1236
  %v1245 = vsel %vm162, %v1238, 0
  %v1248 = vsel %vm162, %v1239, 0
  %1250 = vmatprep.subr.bf16.mxu0 0
  %1251 = vmatpush1.bf16.msra.mxu0 0
  %1252 = vmatprep.subr.bf16.mxu0 0
  %1253 = vmatpush1.bf16.msra.mxu0 0
  %1254 = vmatprep.subr.bf16.mxu0 0
  %1255 = vmatpush1.bf16.msra.mxu0 0
  %1256 = vmatprep.subr.bf16.mxu0 0
  %1257 = vmatpush1.bf16.msra.mxu0 0
  %1258 = vmatprep.subr.bf16.mxu0 0
  %1259 = vmatpush1.bf16.msra.mxu0 %v1243
  %1260 = vmatprep.subr.bf16.mxu0 0
  %1261 = vmatpush1.bf16.msra.mxu0 %v1242
  %1262 = vmatprep.subr.bf16.mxu0 0
  %1263 = vmatpush1.bf16.msra.mxu0 %v1241
  %1264 = vmatprep.subr.bf16.mxu0 0
  %1265 = vmatpush1.bf16.msra.mxu0 %v1240
  %1266 = vmatprep.subr.bf16.mxu0 0
  %1267 = vmatpush2.bf16.msra.mxu0 0
  %1268 = vmatprep.subr.bf16.mxu0 0
  %1269 = vmatpush2.bf16.msra.mxu0 0
  %1270 = vmatprep.subr.bf16.mxu0 0
  %1271 = vmatpush2.bf16.msra.mxu0 0
  %1272 = vmatprep.subr.bf16.mxu0 0
  %1273 = vmatpush2.bf16.msra.mxu0 0
  %1274 = vmatprep.subr.bf16.mxu0 0
  %1275 = vmatpush2.bf16.msra.mxu0 0
  %1276 = vmatprep.subr.bf16.mxu0 0
  %1277 = vmatpush2.bf16.msra.mxu0 0
  %1278 = vmatprep.subr.bf16.mxu0 0
  %1279 = vmatpush2.bf16.msra.mxu0 0
  %1280 = vmatprep.subr.bf16.mxu0 0
  %1281 = vmatpush2.bf16.msra.mxu0 0
  %1282 = vmatprep.mubr.bf16.mxu0 0
  %1283 = vmatmul.mubr.bf16.gmra.mxu0 %v1245
  %v1284 = vpop.f32.mrf.mxu0
  %v1285 = vadd.f32 0.0, %v1284
  %v1286 = vpop.f32.mrf.mxu0
  %v1287 = vpop.f32.mrf.mxu0
  %v1288 = vadd.f32 0.0, %v1287
  %v1289 = vpop.f32.mrf.mxu0
  %1290 = vmatprep.mubr.bf16.mxu0 0
  %1291 = vmatmul.mubr.bf16.gmra.mxu0 %v1248
  %v1292 = vpop.f32.mrf.mxu0
  %v1293 = vadd.f32 0.0, %v1292
  %v1294 = vpop.f32.mrf.mxu0
  %v1295 = vpop.f32.mrf.mxu0
  %v1296 = vadd.f32 0.0, %v1295
  %v1297 = vpop.f32.mrf.mxu0
  %1298 = vdwg.mxu0
  %v1299 = vadd.f32 %v1205, %v1285
  %v1300 = vadd.f32 %v1206, %v1288
  %v1301 = vadd.f32 %v1207, %v1293
  %v1302 = vadd.f32 %v1208, %v1296
  %v1303 = vsub.f32 %v854, %v995
  %v1304 = vsub.f32 %v857, %v995
  %v1305 = vsub.f32 %v862, %v995
  %v1306 = vsub.f32 %v865, %v995
  %v1307 = vmul.f32 %v1303, %v1000
  %v1308 = vmul.f32 %v1304, %v1000
  %v1309 = vmul.f32 %v1305, %v1000
  %v1310 = vmul.f32 %v1306, %v1000
  %v1311 = vmul.f32 %v1307, %v1015
  %v1312 = vmul.f32 %v1308, %v1015
  %v1313 = vmul.f32 %v1309, %v1015
  %v1314 = vmul.f32 %v1310, %v1015
  %v1315 = vadd.f32 %v1311, %v1026
  %v1316 = vadd.f32 %v1312, %v1026
  %v1317 = vadd.f32 %v1313, %v1026
  %v1318 = vadd.f32 %v1314, %v1026
  %v1319 = vmax.f32 %v1315, 0.0
  %v1320 = vmax.f32 %v1316, 0.0
  %v1321 = vmax.f32 %v1317, 0.0
  %v1322 = vmax.f32 %v1318, 0.0
  %s1323 = scalar_lea.vmem %s4, 192
  %v1324 = vld [vmem:[%s1323] sm:$0xff]
  %v1325 = vld [vmem:[%s1323 + $0x8] sm:$0xff]
  %v1326 = vld [vmem:[%s1323 + $0x10] sm:$0xff]
  %v1327 = vld [vmem:[%s1323 + $0x18] sm:$0xff]
  %v1328 = vld [vmem:[%s1323 + $0x20] sm:$0xff]
  %v1329 = vld [vmem:[%s1323 + $0x28] sm:$0xff]
  %v1330 = vld [vmem:[%s1323 + $0x30] sm:$0xff]
  %v1331 = vld [vmem:[%s1323 + $0x38] sm:$0xff]
  %v1332 = vpack.c.bf16 %v1320, %v1319
  %v1333 = vpack.c.bf16 %v1322, %v1321
  %v1334 = vpack.c.bf16 %v1325, %v1324
  %v1335 = vpack.c.bf16 %v1327, %v1326
  %v1336 = vpack.c.bf16 %v1329, %v1328
  %v1337 = vpack.c.bf16 %v1331, %v1330
  %v1339 = vsel %vm162, %v1332, 0
  %v1342 = vsel %vm162, %v1333, 0
  %1344 = vmatprep.subr.bf16.mxu0 0
  %1345 = vmatpush1.bf16.msra.mxu0 0
  %1346 = vmatprep.subr.bf16.mxu0 0
  %1347 = vmatpush1.bf16.msra.mxu0 0
  %1348 = vmatprep.subr.bf16.mxu0 0
  %1349 = vmatpush1.bf16.msra.mxu0 0
  %1350 = vmatprep.subr.bf16.mxu0 0
  %1351 = vmatpush1.bf16.msra.mxu0 0
  %1352 = vmatprep.subr.bf16.mxu0 0
  %1353 = vmatpush1.bf16.msra.mxu0 %v1337
  %1354 = vmatprep.subr.bf16.mxu0 0
  %1355 = vmatpush1.bf16.msra.mxu0 %v1336
  %1356 = vmatprep.subr.bf16.mxu0 0
  %1357 = vmatpush1.bf16.msra.mxu0 %v1335
  %1358 = vmatprep.subr.bf16.mxu0 0
  %1359 = vmatpush1.bf16.msra.mxu0 %v1334
  %1360 = vmatprep.subr.bf16.mxu0 0
  %1361 = vmatpush2.bf16.msra.mxu0 0
  %1362 = vmatprep.subr.bf16.mxu0 0
  %1363 = vmatpush2.bf16.msra.mxu0 0
  %1364 = vmatprep.subr.bf16.mxu0 0
  %1365 = vmatpush2.bf16.msra.mxu0 0
  %1366 = vmatprep.subr.bf16.mxu0 0
  %1367 = vmatpush2.bf16.msra.mxu0 0
  %1368 = vmatprep.subr.bf16.mxu0 0
  %1369 = vmatpush2.bf16.msra.mxu0 0
  %1370 = vmatprep.subr.bf16.mxu0 0
  %1371 = vmatpush2.bf16.msra.mxu0 0
  %1372 = vmatprep.subr.bf16.mxu0 0
  %1373 = vmatpush2.bf16.msra.mxu0 0
  %1374 = vmatprep.subr.bf16.mxu0 0
  %1375 = vmatpush2.bf16.msra.mxu0 0
  %1376 = vmatprep.mubr.bf16.mxu0 0
  %1377 = vmatmul.mubr.bf16.gmra.mxu0 %v1339
  %v1378 = vpop.f32.mrf.mxu0
  %v1379 = vadd.f32 0.0, %v1378
  %v1380 = vpop.f32.mrf.mxu0
  %v1381 = vpop.f32.mrf.mxu0
  %v1382 = vadd.f32 0.0, %v1381
  %v1383 = vpop.f32.mrf.mxu0
  %1384 = vmatprep.mubr.bf16.mxu0 0
  %1385 = vmatmul.mubr.bf16.gmra.mxu0 %v1342
  %v1386 = vpop.f32.mrf.mxu0
  %v1387 = vadd.f32 0.0, %v1386
  %v1388 = vpop.f32.mrf.mxu0
  %v1389 = vpop.f32.mrf.mxu0
  %v1390 = vadd.f32 0.0, %v1389
  %v1391 = vpop.f32.mrf.mxu0
  %1392 = vdwg.mxu0
  %v1393 = vadd.f32 %v1299, %v1379
  %v1394 = vadd.f32 %v1300, %v1382
  %v1395 = vadd.f32 %v1301, %v1387
  %v1396 = vadd.f32 %v1302, %v1390
  %vm1397 = vcmask 261120
  %1398 = vst.msk [vmem:[%s6] sm:$0xff] %vm1397, %v1393
  %1399 = vst.msk [vmem:[%s6 + $0x8] sm:$0xff] %vm1397, %v1394
  %1400 = vst.msk [vmem:[%s6 + $0x10] sm:$0xff] %vm1397, %v1395
  %1401 = vst.msk [vmem:[%s6 + $0x18] sm:$0xff] %vm1397, %v1396
  // Predicated region
  $region26: #{lvvit_teacher_forward.6} parent=0 // pred_check
    _
  $region27: #{lvvit_teacher_forward.6} parent=0 // pred_check_branch
    %1403 = sbr.rel (0) target = $region29
  $region28: #{lvvit_teacher_forward.6} parent=0 // pred_region
    _
  $region29: #{lvvit_teacher_forward.6} parent=0 // pred_fallthru
    _
  // Predicated region
  $region30: #{lvvit_teacher_forward.6} parent=0 // pred_check
    _
  $region31: #{lvvit_teacher_forward.6} parent=0 // pred_check_branch
    %1405 = sbr.rel (0) target = $region33
  $region32: #{lvvit_teacher_forward.6} parent=0 // pred_region
    _
  $region33: #{lvvit_teacher_forward.6} parent=0 // pred_fallthru
    _

// kernel: lvvit_teacher_forward.7
$region0: #{lvvit_teacher_forward.7}
  #allocation0 [shape = 'u32[]', space=smem, size = 0x4, offset = 0x4, fixed_abs, tag = 'smem constant byte address 0x4 - core index']
  #allocation1 [shape = 'u32[144,128]{1,0:T(1,128)}', space=vmem, size = 0x12000, scoped, tag = 'internal scratch']
  #allocation2 [shape = 'f32[24,32]{1,0:T(8,128)}', space=vmem, size = 0x3000, scoped, tag = 'scratch operand']
  %s0 = inlined_call_operand.vmem [shape: f32[2,16,32], index: 0, kind: input, shape index: {}]
  %s1 = inlined_call_operand.vmem [shape: f32[1,32], index: 1, kind: input, shape index: {}]
  %s2 = inlined_call_operand.vmem [shape: f32[16,32], index: 2, kind: input, shape index: {}]
  %s3 = inlined_call_operand.vmem [shape: f32[2,1,32], index: 3, kind: input, shape index: {}]
  %s4 = inlined_call_operand.vmem [shape: f32[2,1,32], index: 4, kind: input, shape index: {}]
  %s5 = inlined_call_operand.vmem [shape: f32[2,32,96], index: 5, kind: input, shape index: {}]
  %s6 = inlined_call_operand.vmem [shape: f32[2,32,32], index: 6, kind: input, shape index: {}]
  %s7 = inlined_call_operand.vmem [shape: f32[2,1,32], index: 7, kind: input, shape index: {}]
  %s8 = inlined_call_operand.vmem [shape: f32[2,1,32], index: 8, kind: input, shape index: {}]
  %s9 = inlined_call_operand.vmem [shape: f32[2,1,32], index: 9, kind: input, shape index: {}]
  %s10 = inlined_call_operand.vmem [shape: f32[2,32,128], index: 10, kind: input, shape index: {}]
  %s11 = inlined_call_operand.vmem [shape: f32[2,1,128], index: 11, kind: input, shape index: {}]
  %s12 = inlined_call_operand.vmem [shape: f32[2,128,32], index: 12, kind: input, shape index: {}]
  %s13 = inlined_call_operand.vmem [shape: f32[2,1,32], index: 13, kind: input, shape index: {}]
  %s14 = inlined_call_operand.vmem [shape: f32[1,32], index: 14, kind: input, shape index: {}]
  %s15 = inlined_call_operand.vmem [shape: f32[1,32], index: 15, kind: input, shape index: {}]
  %s16 = inlined_call_operand.vmem [shape: f32[32,128], index: 16, kind: input, shape index: {}]
  %s17 = inlined_call_operand.vmem [shape: f32[1,128], index: 17, kind: input, shape index: {}]
  %s18 = inlined_call_operand.vmem [shape: f32[2,24,128], index: 18, kind: output, shape index: {}]
  %s19 = sld [smem:[#allocation0]]
  $region105: #{lvvit_teacher_forward.7} parent=0
    _
  %s21 = ssub.s32 1, %s19
  %s22 = scalar_select 0, %s21, %s19
  loop: start=0, step=1, limit=4
  $region2: #{lvvit_teacher_forward.7} parent=0 // loop_pre_header
    _
  $region3: #{lvvit_teacher_forward.7} parent=0 // loop_header
    %s24 = sphi 0, %s28
    %p25 = scmp.ge.s32.totalorder %s24, 4
    %s34 = sphi 0, %s36
    %s37 = sphi 0, %s34
    %s38 = sphi 0, %s37
    %s54 = sphi 0, %s38
    %s58 = sphi 0, %s58
    %s60 = sphi 0, %s58
    %s61 = sphi 0, %s60
    %s75 = sphi 0, %s61
    %s79 = sphi 0, %s79
    %s81 = sphi 0, %s79
    %s82 = sphi 0, %s81
    %s96 = sphi 0, %s82
    %s100 = sphi 0, %s100
    %s102 = sphi 0, %s100
    %s103 = sphi 0, %s102
    %s117 = sphi 0, %s103
    %s121 = sphi 0, %s121
    %s123 = sphi 0, %s121
    %s124 = sphi 0, %s123
    %s138 = sphi 0, %s124
    %s142 = sphi 0, %s142
    %s144 = sphi 0, %s142
    %s145 = sphi 0, %s144
    %s159 = sphi 0, %s145
    %s163 = sphi 0, %s163
    %s165 = sphi 0, %s163
    %s166 = sphi 0, %s165
    %s180 = sphi 0, %s166
    %s184 = sphi 0, %s184
    %s186 = sphi 0, %s184
    %s187 = sphi 0, %s186
    %s201 = sphi 0, %s187
    %s205 = sphi 0, %s205
    %s207 = sphi 0, %s205
    %s208 = sphi 0, %s207
    %s222 = sphi 0, %s208
    %s226 = sphi 0, %s226
    %s228 = sphi 0, %s226
    %s229 = sphi 0, %s228
    %s243 = sphi 0, %s229
    %s247 = sphi 0, %s247
    %s249 = sphi 0, %s247
    %s250 = sphi 0, %s249
    %s264 = sphi 0, %s250
    %s268 = sphi 0, %s268
    %s270 = sphi 0, %s268
    %s271 = sphi 0, %s270
    %s285 = sphi 0, %s271
    %s289 = sphi 0, %s289
    %s291 = sphi 0, %s289
    %s292 = sphi 0, %s291
    %s306 = sphi 0, %s292
    %s310 = sphi 0, %s310
    %s312 = sphi 0, %s310
    %s313 = sphi 0, %s312
    %s327 = sphi 0, %s313
    %s331 = sphi 0, %s331
    %s333 = sphi 0, %s331
    %s334 = sphi 0, %s333
    %s348 = sphi 0, %s334
    %s352 = sphi 0, %s352
    %s354 = sphi 0, %s352
    %s355 = sphi 0, %s354
    %s369 = sphi 0, %s355
    %s373 = sphi 0, %s373
    %s375 = sphi 0, %s373
    %s376 = sphi 0, %s375
    %s390 = sphi 0, %s376
    %s394 = sphi 0, %s394
    %s396 = sphi 0, %s394
    %s397 = sphi 0, %s396
    %s411 = sphi 0, %s397
    %s417 = sphi 0, %s419
    %s420 = sphi 0, %s417
    %s421 = sphi 0, %s420
    %s437 = sphi 0, %s421
  $region4: #{lvvit_teacher_forward.7} parent=0 // loop_header_branch
    %27 = sbr.rel (%p25) target = $region8
  $region5: #{lvvit_teacher_forward.7} parent=0 // loop_body
    %s29 = ssub.s32 %s24, 1
    %s30 = ssub.s32 %s24, 2
    %s31 = sadd.s32 %s24, 1
    %s32 = ssub.s32 %s24, %s31
    %p33 = scmp.eq.s32.totalorder %s32, 0
    %s35 = sadd.s32 %s34, 1
    %s36 = scalar_select %p33, %s34, %s35
    %p39 = pneg %p33
    %p40 = scmp.eq.s32.totalorder %s24, 1
    %p41 = por %p39, %p40
    %p42 = scmp.ne.s32.totalorder %s34, %s37
    %p43 = scmp.eq.s32.totalorder %s24, 0
    %p44 = por %p42, %p43
    %p45 = scmp.ne.s32.totalorder %s34, %s37
    %p46 = scmp.eq.s32.totalorder %s29, 1
    %p47 = por %p45, %p46
    %p48 = scmp.ne.s32.totalorder %s37, %s38
    %p49 = scmp.eq.s32.totalorder %s29, 0
    %p50 = por %p48, %p49
    %p51 = scmp.ne.s32.totalorder %s37, %s38
    %p52 = scmp.eq.s32.totalorder %s30, 1
    %p53 = por %p51, %p52
    %p55 = scmp.ne.s32.totalorder %s38, %s54
    %p56 = scmp.eq.s32.totalorder %s30, 0
    %p57 = por %p55, %p56
    %s59 = sadd.s32 %s58, 1
    %p62 = scmp.eq.s32.totalorder %s24, 1
    %p63 = scmp.ne.s32.totalorder %s58, %s60
    %p64 = scmp.eq.s32.totalorder %s24, 0
    %p65 = por %p63, %p64
    %p66 = scmp.ne.s32.totalorder %s58, %s60
    %p67 = scmp.eq.s32.totalorder %s29, 1
    %p68 = por %p66, %p67
    %p69 = scmp.ne.s32.totalorder %s60, %s61
    %p70 = scmp.eq.s32.totalorder %s29, 0
    %p71 = por %p69, %p70
    %p72 = scmp.ne.s32.totalorder %s60, %s61
    %p73 = scmp.eq.s32.totalorder %s30, 1
    %p74 = por %p72, %p73
    %p76 = scmp.ne.s32.totalorder %s61, %s75
    %p77 = scmp.eq.s32.totalorder %s30, 0
    %p78 = por %p76, %p77
    %s80 = sadd.s32 %s79, 1
    %p83 = scmp.eq.s32.totalorder %s24, 1
    %p84 = scmp.ne.s32.totalorder %s79, %s81
    %p85 = scmp.eq.s32.totalorder %s24, 0
    %p86 = por %p84, %p85
    %p87 = scmp.ne.s32.totalorder %s79, %s81
    %p88 = scmp.eq.s32.totalorder %s29, 1
    %p89 = por %p87, %p88
    %p90 = scmp.ne.s32.totalorder %s81, %s82
    %p91 = scmp.eq.s32.totalorder %s29, 0
    %p92 = por %p90, %p91
    %p93 = scmp.ne.s32.totalorder %s81, %s82
    %p94 = scmp.eq.s32.totalorder %s30, 1
    %p95 = por %p93, %p94
    %p97 = scmp.ne.s32.totalorder %s82, %s96
    %p98 = scmp.eq.s32.totalorder %s30, 0
    %p99 = por %p97, %p98
    %s101 = sadd.s32 %s100, 1
    %p104 = scmp.eq.s32.totalorder %s24, 1
    %p105 = scmp.ne.s32.totalorder %s100, %s102
    %p106 = scmp.eq.s32.totalorder %s24, 0
    %p107 = por %p105, %p106
    %p108 = scmp.ne.s32.totalorder %s100, %s102
    %p109 = scmp.eq.s32.totalorder %s29, 1
    %p110 = por %p108, %p109
    %p111 = scmp.ne.s32.totalorder %s102, %s103
    %p112 = scmp.eq.s32.totalorder %s29, 0
    %p113 = por %p111, %p112
    %p114 = scmp.ne.s32.totalorder %s102, %s103
    %p115 = scmp.eq.s32.totalorder %s30, 1
    %p116 = por %p114, %p115
    %p118 = scmp.ne.s32.totalorder %s103, %s117
    %p119 = scmp.eq.s32.totalorder %s30, 0
    %p120 = por %p118, %p119
    %s122 = sadd.s32 %s121, 1
    %p125 = scmp.eq.s32.totalorder %s24, 1
    %p126 = scmp.ne.s32.totalorder %s121, %s123
    %p127 = scmp.eq.s32.totalorder %s24, 0
    %p128 = por %p126, %p127
    %p129 = scmp.ne.s32.totalorder %s121, %s123
    %p130 = scmp.eq.s32.totalorder %s29, 1
    %p131 = por %p129, %p130
    %p132 = scmp.ne.s32.totalorder %s123, %s124
    %p133 = scmp.eq.s32.totalorder %s29, 0
    %p134 = por %p132, %p133
    %p135 = scmp.ne.s32.totalorder %s123, %s124
    %p136 = scmp.eq.s32.totalorder %s30, 1
    %p137 = por %p135, %p136
    %p139 = scmp.ne.s32.totalorder %s124, %s138
    %p140 = scmp.eq.s32.totalorder %s30, 0
    %p141 = por %p139, %p140
    %s143 = sadd.s32 %s142, 1
    %p146 = scmp.eq.s32.totalorder %s24, 1
    %p147 = scmp.ne.s32.totalorder %s142, %s144
    %p148 = scmp.eq.s32.totalorder %s24, 0
    %p149 = por %p147, %p148
    %p150 = scmp.ne.s32.totalorder %s142, %s144
    %p151 = scmp.eq.s32.totalorder %s29, 1
    %p152 = por %p150, %p151
    %p153 = scmp.ne.s32.totalorder %s144, %s145
    %p154 = scmp.eq.s32.totalorder %s29, 0
    %p155 = por %p153, %p154
    %p156 = scmp.ne.s32.totalorder %s144, %s145
    %p157 = scmp.eq.s32.totalorder %s30, 1
    %p158 = por %p156, %p157
    %p160 = scmp.ne.s32.totalorder %s145, %s159
    %p161 = scmp.eq.s32.totalorder %s30, 0
    %p162 = por %p160, %p161
    %s164 = sadd.s32 %s163, 1
    %p167 = scmp.eq.s32.totalorder %s24, 1
    %p168 = scmp.ne.s32.totalorder %s163, %s165
    %p169 = scmp.eq.s32.totalorder %s24, 0
    %p170 = por %p168, %p169
    %p171 = scmp.ne.s32.totalorder %s163, %s165
    %p172 = scmp.eq.s32.totalorder %s29, 1
    %p173 = por %p171, %p172
    %p174 = scmp.ne.s32.totalorder %s165, %s166
    %p175 = scmp.eq.s32.totalorder %s29, 0
    %p176 = por %p174, %p175
    %p177 = scmp.ne.s32.totalorder %s165, %s166
    %p178 = scmp.eq.s32.totalorder %s30, 1
    %p179 = por %p177, %p178
    %p181 = scmp.ne.s32.totalorder %s166, %s180
    %p182 = scmp.eq.s32.totalorder %s30, 0
    %p183 = por %p181, %p182
    %s185 = sadd.s32 %s184, 1
    %p188 = scmp.eq.s32.totalorder %s24, 1
    %p189 = scmp.ne.s32.totalorder %s184, %s186
    %p190 = scmp.eq.s32.totalorder %s24, 0
    %p191 = por %p189, %p190
    %p192 = scmp.ne.s32.totalorder %s184, %s186
    %p193 = scmp.eq.s32.totalorder %s29, 1
    %p194 = por %p192, %p193
    %p195 = scmp.ne.s32.totalorder %s186, %s187
    %p196 = scmp.eq.s32.totalorder %s29, 0
    %p197 = por %p195, %p196
    %p198 = scmp.ne.s32.totalorder %s186, %s187
    %p199 = scmp.eq.s32.totalorder %s30, 1
    %p200 = por %p198, %p199
    %p202 = scmp.ne.s32.totalorder %s187, %s201
    %p203 = scmp.eq.s32.totalorder %s30, 0
    %p204 = por %p202, %p203
    %s206 = sadd.s32 %s205, 1
    %p209 = scmp.eq.s32.totalorder %s24, 1
    %p210 = scmp.ne.s32.totalorder %s205, %s207
    %p211 = scmp.eq.s32.totalorder %s24, 0
    %p212 = por %p210, %p211
    %p213 = scmp.ne.s32.totalorder %s205, %s207
    %p214 = scmp.eq.s32.totalorder %s29, 1
    %p215 = por %p213, %p214
    %p216 = scmp.ne.s32.totalorder %s207, %s208
    %p217 = scmp.eq.s32.totalorder %s29, 0
    %p218 = por %p216, %p217
    %p219 = scmp.ne.s32.totalorder %s207, %s208
    %p220 = scmp.eq.s32.totalorder %s30, 1
    %p221 = por %p219, %p220
    %p223 = scmp.ne.s32.totalorder %s208, %s222
    %p224 = scmp.eq.s32.totalorder %s30, 0
    %p225 = por %p223, %p224
    %s227 = sadd.s32 %s226, 1
    %p230 = scmp.eq.s32.totalorder %s24, 1
    %p231 = scmp.ne.s32.totalorder %s226, %s228
    %p232 = scmp.eq.s32.totalorder %s24, 0
    %p233 = por %p231, %p232
    %p234 = scmp.ne.s32.totalorder %s226, %s228
    %p235 = scmp.eq.s32.totalorder %s29, 1
    %p236 = por %p234, %p235
    %p237 = scmp.ne.s32.totalorder %s228, %s229
    %p238 = scmp.eq.s32.totalorder %s29, 0
    %p239 = por %p237, %p238
    %p240 = scmp.ne.s32.totalorder %s228, %s229
    %p241 = scmp.eq.s32.totalorder %s30, 1
    %p242 = por %p240, %p241
    %p244 = scmp.ne.s32.totalorder %s229, %s243
    %p245 = scmp.eq.s32.totalorder %s30, 0
    %p246 = por %p244, %p245
    %s248 = sadd.s32 %s247, 1
    %p251 = scmp.eq.s32.totalorder %s24, 1
    %p252 = scmp.ne.s32.totalorder %s247, %s249
    %p253 = scmp.eq.s32.totalorder %s24, 0
    %p254 = por %p252, %p253
    %p255 = scmp.ne.s32.totalorder %s247, %s249
    %p256 = scmp.eq.s32.totalorder %s29, 1
    %p257 = por %p255, %p256
    %p258 = scmp.ne.s32.totalorder %s249, %s250
    %p259 = scmp.eq.s32.totalorder %s29, 0
    %p260 = por %p258, %p259
    %p261 = scmp.ne.s32.totalorder %s249, %s250
    %p262 = scmp.eq.s32.totalorder %s30, 1
    %p263 = por %p261, %p262
    %p265 = scmp.ne.s32.totalorder %s250, %s264
    %p266 = scmp.eq.s32.totalorder %s30, 0
    %p267 = por %p265, %p266
    %s269 = sadd.s32 %s268, 1
    %p272 = scmp.eq.s32.totalorder %s24, 1
    %p273 = scmp.ne.s32.totalorder %s268, %s270
    %p274 = scmp.eq.s32.totalorder %s24, 0
    %p275 = por %p273, %p274
    %p276 = scmp.ne.s32.totalorder %s268, %s270
    %p277 = scmp.eq.s32.totalorder %s29, 1
    %p278 = por %p276, %p277
    %p279 = scmp.ne.s32.totalorder %s270, %s271
    %p280 = scmp.eq.s32.totalorder %s29, 0
    %p281 = por %p279, %p280
    %p282 = scmp.ne.s32.totalorder %s270, %s271
    %p283 = scmp.eq.s32.totalorder %s30, 1
    %p284 = por %p282, %p283
    %p286 = scmp.ne.s32.totalorder %s271, %s285
    %p287 = scmp.eq.s32.totalorder %s30, 0
    %p288 = por %p286, %p287
    %s290 = sadd.s32 %s289, 1
    %p293 = scmp.eq.s32.totalorder %s24, 1
    %p294 = scmp.ne.s32.totalorder %s289, %s291
    %p295 = scmp.eq.s32.totalorder %s24, 0
    %p296 = por %p294, %p295
    %p297 = scmp.ne.s32.totalorder %s289, %s291
    %p298 = scmp.eq.s32.totalorder %s29, 1
    %p299 = por %p297, %p298
    %p300 = scmp.ne.s32.totalorder %s291, %s292
    %p301 = scmp.eq.s32.totalorder %s29, 0
    %p302 = por %p300, %p301
    %p303 = scmp.ne.s32.totalorder %s291, %s292
    %p304 = scmp.eq.s32.totalorder %s30, 1
    %p305 = por %p303, %p304
    %p307 = scmp.ne.s32.totalorder %s292, %s306
    %p308 = scmp.eq.s32.totalorder %s30, 0
    %p309 = por %p307, %p308
    %s311 = sadd.s32 %s310, 1
    %p314 = scmp.eq.s32.totalorder %s24, 1
    %p315 = scmp.ne.s32.totalorder %s310, %s312
    %p316 = scmp.eq.s32.totalorder %s24, 0
    %p317 = por %p315, %p316
    %p318 = scmp.ne.s32.totalorder %s310, %s312
    %p319 = scmp.eq.s32.totalorder %s29, 1
    %p320 = por %p318, %p319
    %p321 = scmp.ne.s32.totalorder %s312, %s313
    %p322 = scmp.eq.s32.totalorder %s29, 0
    %p323 = por %p321, %p322
    %p324 = scmp.ne.s32.totalorder %s312, %s313
    %p325 = scmp.eq.s32.totalorder %s30, 1
    %p326 = por %p324, %p325
    %p328 = scmp.ne.s32.totalorder %s313, %s327
    %p329 = scmp.eq.s32.totalorder %s30, 0
    %p330 = por %p328, %p329
    %s332 = sadd.s32 %s331, 1
    %p335 = scmp.eq.s32.totalorder %s24, 1
    %p336 = scmp.ne.s32.totalorder %s331, %s333
    %p337 = scmp.eq.s32.totalorder %s24, 0
    %p338 = por %p336, %p337
    %p339 = scmp.ne.s32.totalorder %s331, %s333
    %p340 = scmp.eq.s32.totalorder %s29, 1
    %p341 = por %p339, %p340
    %p342 = scmp.ne.s32.totalorder %s333, %s334
    %p343 = scmp.eq.s32.totalorder %s29, 0
    %p344 = por %p342, %p343
    %p345 = scmp.ne.s32.totalorder %s333, %s334
    %p346 = scmp.eq.s32.totalorder %s30, 1
    %p347 = por %p345, %p346
    %p349 = scmp.ne.s32.totalorder %s334, %s348
    %p350 = scmp.eq.s32.totalorder %s30, 0
    %p351 = por %p349, %p350
    %s353 = sadd.s32 %s352, 1
    %p356 = scmp.eq.s32.totalorder %s24, 1
    %p357 = scmp.ne.s32.totalorder %s352, %s354
    %p358 = scmp.eq.s32.totalorder %s24, 0
    %p359 = por %p357, %p358
    %p360 = scmp.ne.s32.totalorder %s352, %s354
    %p361 = scmp.eq.s32.totalorder %s29, 1
    %p362 = por %p360, %p361
    %p363 = scmp.ne.s32.totalorder %s354, %s355
    %p364 = scmp.eq.s32.totalorder %s29, 0
    %p365 = por %p363, %p364
    %p366 = scmp.ne.s32.totalorder %s354, %s355
    %p367 = scmp.eq.s32.totalorder %s30, 1
    %p368 = por %p366, %p367
    %p370 = scmp.ne.s32.totalorder %s355, %s369
    %p371 = scmp.eq.s32.totalorder %s30, 0
    %p372 = por %p370, %p371
    %s374 = sadd.s32 %s373, 1
    %p377 = scmp.eq.s32.totalorder %s24, 1
    %p378 = scmp.ne.s32.totalorder %s373, %s375
    %p379 = scmp.eq.s32.totalorder %s24, 0
    %p380 = por %p378, %p379
    %p381 = scmp.ne.s32.totalorder %s373, %s375
    %p382 = scmp.eq.s32.totalorder %s29, 1
    %p383 = por %p381, %p382
    %p384 = scmp.ne.s32.totalorder %s375, %s376
    %p385 = scmp.eq.s32.totalorder %s29, 0
    %p386 = por %p384, %p385
    %p387 = scmp.ne.s32.totalorder %s375, %s376
    %p388 = scmp.eq.s32.totalorder %s30, 1
    %p389 = por %p387, %p388
    %p391 = scmp.ne.s32.totalorder %s376, %s390
    %p392 = scmp.eq.s32.totalorder %s30, 0
    %p393 = por %p391, %p392
    %s395 = sadd.s32 %s394, 1
    %p398 = scmp.eq.s32.totalorder %s24, 1
    %p399 = scmp.ne.s32.totalorder %s394, %s396
    %p400 = scmp.eq.s32.totalorder %s24, 0
    %p401 = por %p399, %p400
    %p402 = scmp.ne.s32.totalorder %s394, %s396
    %p403 = scmp.eq.s32.totalorder %s29, 1
    %p404 = por %p402, %p403
    %p405 = scmp.ne.s32.totalorder %s396, %s397
    %p406 = scmp.eq.s32.totalorder %s29, 0
    %p407 = por %p405, %p406
    %p408 = scmp.ne.s32.totalorder %s396, %s397
    %p409 = scmp.eq.s32.totalorder %s30, 1
    %p410 = por %p408, %p409
    %p412 = scmp.ne.s32.totalorder %s397, %s411
    %p413 = scmp.eq.s32.totalorder %s30, 0
    %p414 = por %p412, %p413
    %s415 = ssub.s32 %s24, %s31
    %p416 = scmp.eq.s32.totalorder %s415, 0
    %s418 = sadd.s32 %s417, 1
    %s419 = scalar_select %p416, %s417, %s418
    %p422 = pneg %p416
    %p423 = scmp.eq.s32.totalorder %s24, 1
    %p424 = por %p422, %p423
    %p425 = scmp.ne.s32.totalorder %s417, %s420
    %p426 = scmp.eq.s32.totalorder %s24, 0
    %p427 = por %p425, %p426
    %p428 = scmp.ne.s32.totalorder %s417, %s420
    %p429 = scmp.eq.s32.totalorder %s29, 1
    %p430 = por %p428, %p429
    %p431 = scmp.ne.s32.totalorder %s420, %s421
    %p432 = scmp.eq.s32.totalorder %s29, 0
    %p433 = por %p431, %p432
    %p434 = scmp.ne.s32.totalorder %s420, %s421
    %p435 = scmp.eq.s32.totalorder %s30, 1
    %p436 = por %p434, %p435
    %p438 = scmp.ne.s32.totalorder %s421, %s437
    %p439 = scmp.eq.s32.totalorder %s30, 0
    %p440 = por %p438, %p439
    %p441 = scmp.le.s32.totalorder 1, %s24
    %p442 = scmp.lt.s32.totalorder %s24, 3
    %p443 = pnand %p441, %p442
    %p444 = pneg %p443
    // Predicated region
    $region9: #{lvvit_teacher_forward.7} parent=5 // pred_check
      _
    $region10: #{lvvit_teacher_forward.7} parent=5 // pred_check_branch
      %446 = sbr.rel (%p443) target = $region12
    $region11: #{lvvit_teacher_forward.7} parent=5 // pred_region
      %s447 = ssub.s32 %s24, 1
      // Predicated region
      $region13: #{lvvit_teacher_forward.7} parent=11 // pred_check
        %p448 = pneg %p71
      $region14: #{lvvit_teacher_forward.7} parent=11 // pred_check_branch
        %450 = sbr.rel (%p448) target = $region16
      $region15: #{lvvit_teacher_forward.7} parent=11 // pred_region
        _
      $region16: #{lvvit_teacher_forward.7} parent=11 // pred_fallthru
        _
      // Predicated region
      $region17: #{lvvit_teacher_forward.7} parent=11 // pred_check
        %p451 = pneg %p92
      $region18: #{lvvit_teacher_forward.7} parent=11 // pred_check_branch
        %453 = sbr.rel (%p451) target = $region20
      $region19: #{lvvit_teacher_forward.7} parent=11 // pred_region
        _
      $region20: #{lvvit_teacher_forward.7} parent=11 // pred_fallthru
        _
      // Predicated region
      $region21: #{lvvit_teacher_forward.7} parent=11 // pred_check
        %p454 = pneg %p113
      $region22: #{lvvit_teacher_forward.7} parent=11 // pred_check_branch
        %456 = sbr.rel (%p454) target = $region24
      $region23: #{lvvit_teacher_forward.7} parent=11 // pred_region
        _
      $region24: #{lvvit_teacher_forward.7} parent=11 // pred_fallthru
        _
      // Predicated region
      $region25: #{lvvit_teacher_forward.7} parent=11 // pred_check
        %p457 = pneg %p134
      $region26: #{lvvit_teacher_forward.7} parent=11 // pred_check_branch
        %459 = sbr.rel (%p457) target = $region28
      $region27: #{lvvit_teacher_forward.7} parent=11 // pred_region
        _
      $region28: #{lvvit_teacher_forward.7} parent=11 // pred_fallthru
        _
      // Predicated region
      $region29: #{lvvit_teacher_forward.7} parent=11 // pred_check
        %p460 = pneg %p155
      $region30: #{lvvit_teacher_forward.7} parent=11 // pred_check_branch
        %462 = sbr.rel (%p460) target = $region32
      $region31: #{lvvit_teacher_forward.7} parent=11 // pred_region
        _
      $region32: #{lvvit_teacher_forward.7} parent=11 // pred_fallthru
        _
      // Predicated region
      $region33: #{lvvit_teacher_forward.7} parent=11 // pred_check
        %p463 = pneg %p176
      $region34: #{lvvit_teacher_forward.7} parent=11 // pred_check_branch
        %465 = sbr.rel (%p463) target = $region36
      $region35: #{lvvit_teacher_forward.7} parent=11 // pred_region
        _
      $region36: #{lvvit_teacher_forward.7} parent=11 // pred_fallthru
        _
      // Predicated region
      $region37: #{lvvit_teacher_forward.7} parent=11 // pred_check
        %p466 = pneg %p197
      $region38: #{lvvit_teacher_forward.7} parent=11 // pred_check_branch
        %468 = sbr.rel (%p466) target = $region40
      $region39: #{lvvit_teacher_forward.7} parent=11 // pred_region
        _
      $region40: #{lvvit_teacher_forward.7} parent=11 // pred_fallthru
        _
      // Predicated region
      $region41: #{lvvit_teacher_forward.7} parent=11 // pred_check
        %p469 = pneg %p218
      $region42: #{lvvit_teacher_forward.7} parent=11 // pred_check_branch
        %471 = sbr.rel (%p469) target = $region44
      $region43: #{lvvit_teacher_forward.7} parent=11 // pred_region
        _
      $region44: #{lvvit_teacher_forward.7} parent=11 // pred_fallthru
        _
      // Predicated region
      $region45: #{lvvit_teacher_forward.7} parent=11 // pred_check
        %p472 = pneg %p239
      $region46: #{lvvit_teacher_forward.7} parent=11 // pred_check_branch
        %474 = sbr.rel (%p472) target = $region48
      $region47: #{lvvit_teacher_forward.7} parent=11 // pred_region
        _
      $region48: #{lvvit_teacher_forward.7} parent=11 // pred_fallthru
        _
      // Predicated region
      $region49: #{lvvit_teacher_forward.7} parent=11 // pred_check
        %p475 = pneg %p260
      $region50: #{lvvit_teacher_forward.7} parent=11 // pred_check_branch
        %477 = sbr.rel (%p475) target = $region52
      $region51: #{lvvit_teacher_forward.7} parent=11 // pred_region
        _
      $region52: #{lvvit_teacher_forward.7} parent=11 // pred_fallthru
        _
      // Predicated region
      $region53: #{lvvit_teacher_forward.7} parent=11 // pred_check
        %p478 = pneg %p281
      $region54: #{lvvit_teacher_forward.7} parent=11 // pred_check_branch
        %480 = sbr.rel (%p478) target = $region56
      $region55: #{lvvit_teacher_forward.7} parent=11 // pred_region
        _
      $region56: #{lvvit_teacher_forward.7} parent=11 // pred_fallthru
        _
      // Predicated region
      $region57: #{lvvit_teacher_forward.7} parent=11 // pred_check
        %p481 = pneg %p302
      $region58: #{lvvit_teacher_forward.7} parent=11 // pred_check_branch
        %483 = sbr.rel (%p481) target = $region60
      $region59: #{lvvit_teacher_forward.7} parent=11 // pred_region
        _
      $region60: #{lvvit_teacher_forward.7} parent=11 // pred_fallthru
        _
      // Predicated region
      $region61: #{lvvit_teacher_forward.7} parent=11 // pred_check
        %p484 = pneg %p323
      $region62: #{lvvit_teacher_forward.7} parent=11 // pred_check_branch
        %486 = sbr.rel (%p484) target = $region64
      $region63: #{lvvit_teacher_forward.7} parent=11 // pred_region
        _
      $region64: #{lvvit_teacher_forward.7} parent=11 // pred_fallthru
        _
      // Predicated region
      $region65: #{lvvit_teacher_forward.7} parent=11 // pred_check
        %p487 = pneg %p344
      $region66: #{lvvit_teacher_forward.7} parent=11 // pred_check_branch
        %489 = sbr.rel (%p487) target = $region68
      $region67: #{lvvit_teacher_forward.7} parent=11 // pred_region
        _
      $region68: #{lvvit_teacher_forward.7} parent=11 // pred_fallthru
        _
      // Predicated region
      $region69: #{lvvit_teacher_forward.7} parent=11 // pred_check
        %p490 = pneg %p365
      $region70: #{lvvit_teacher_forward.7} parent=11 // pred_check_branch
        %492 = sbr.rel (%p490) target = $region72
      $region71: #{lvvit_teacher_forward.7} parent=11 // pred_region
        _
      $region72: #{lvvit_teacher_forward.7} parent=11 // pred_fallthru
        _
      // Predicated region
      $region73: #{lvvit_teacher_forward.7} parent=11 // pred_check
        %p493 = pneg %p386
      $region74: #{lvvit_teacher_forward.7} parent=11 // pred_check_branch
        %495 = sbr.rel (%p493) target = $region76
      $region75: #{lvvit_teacher_forward.7} parent=11 // pred_region
        _
      $region76: #{lvvit_teacher_forward.7} parent=11 // pred_fallthru
        _
      // Predicated region
      $region77: #{lvvit_teacher_forward.7} parent=11 // pred_check
        %p496 = pneg %p407
      $region78: #{lvvit_teacher_forward.7} parent=11 // pred_check_branch
        %498 = sbr.rel (%p496) target = $region80
      $region79: #{lvvit_teacher_forward.7} parent=11 // pred_region
        _
      $region80: #{lvvit_teacher_forward.7} parent=11 // pred_fallthru
        _
    $region12: #{lvvit_teacher_forward.7} parent=5 // pred_fallthru
      _
    %p499 = scmp.lt.s32.totalorder %s24, 2
    // Predicated region
    $region81: #{lvvit_teacher_forward.7} parent=5 // pred_check
      %p500 = pneg %p499
    $region82: #{lvvit_teacher_forward.7} parent=5 // pred_check_branch
      %502 = sbr.rel (%p500) target = $region84
    $region83: #{lvvit_teacher_forward.7} parent=5 // pred_region
      // Predicated region
      $region85: #{lvvit_teacher_forward.7} parent=83 // pred_check
        %p503 = pneg %p44
      $region86: #{lvvit_teacher_forward.7} parent=83 // pred_check_branch
        %505 = sbr.rel (%p503) target = $region88
      $region87: #{lvvit_teacher_forward.7} parent=83 // pred_region
        %p506 = scmp.lt.s32.totalorder %s24, 1
        %s507 = scalar_select %p506, %s24, 1
        %s508 = smul.addr %s507, 2
        %s509 = smul.addr %s508, 8
        %s510 = scalar_lea.vmem %s0, %s509
      $region88: #{lvvit_teacher_forward.7} parent=83 // pred_fallthru
        _
    $region84: #{lvvit_teacher_forward.7} parent=5 // pred_fallthru
      _
    %p511 = scmp.le.s32.totalorder 1, %s24
    %p512 = scmp.lt.s32.totalorder %s24, 3
    %p513 = pnand %p511, %p512
    %p514 = pneg %p513
    // Predicated region
    $region89: #{lvvit_teacher_forward.7} parent=5 // pred_check
      _
    $region90: #{lvvit_teacher_forward.7} parent=5 // pred_check_branch
      %516 = sbr.rel (%p513) target = $region92
    $region91: #{lvvit_teacher_forward.7} parent=5 // pred_region
      %s517 = ssub.s32 %s24, 1
      %p518 = scmp.lt.s32.totalorder %s29, 1
      %s519 = scalar_select %p518, %s29, 1
      %s520 = smul.addr %s519, 2
      %s521 = smul.addr %s520, 8
      %s522 = scalar_lea.vmem %s0, %s521
      %p523 = pneg %p50
      %p524 = pneg %p47
      %p525 = pneg %p71
      %p526 = pneg %p68
      %p527 = pneg %p92
      %p528 = pneg %p89
      %p529 = pneg %p113
      %p530 = pneg %p110
      %p531 = pneg %p134
      %p532 = pneg %p131
      %p533 = pneg %p155
      %p534 = pneg %p152
      %p535 = pneg %p176
      %p536 = pneg %p173
      %p537 = pneg %p197
      %p538 = pneg %p194
      %p539 = pneg %p218
      %p540 = pneg %p215
      %p541 = pneg %p239
      %p542 = pneg %p236
      %p543 = pneg %p260
      %p544 = pneg %p257
      %p545 = pneg %p281
      %p546 = pneg %p278
      %p547 = pneg %p302
      %p548 = pneg %p299
      %p549 = pneg %p323
      %p550 = pneg %p320
      %p551 = pneg %p344
      %p552 = pneg %p341
      %p553 = pneg %p365
      %p554 = pneg %p362
      %p555 = pneg %p386
      %p556 = pneg %p383
      %p557 = pneg %p407
      %p558 = pneg %p404
      %p559 = pneg %p433
      %p560 = pneg %p430
      %p561 = scmp.lt.s32.totalorder %s29, 1
      %s562 = scalar_select %p561, %s29, 1
      %s563 = smul.addr %s562, 3
      %s564 = smul.addr %s563, 8
      %s565 = scalar_lea.vmem %s18, %s564
      %p566 = scmp.lt.s32.totalorder %s29, 1
      %s567 = scalar_select %p566, %s29, 1
      %s568 = smul.addr %s567, 2
      %s569 = smul.addr %s568, 8
      %s570 = scalar_lea.vmem %s0, %s569
      %p571 = scmp.lt.s32.totalorder %s29, 1
      %s572 = scalar_select %p571, %s29, 1
      %s573 = smul.addr %s572, 3
      %s574 = smul.addr %s573, 8
      %s575 = scalar_lea.vmem %s18, %s574
      %v577 = vld [vmem:[%s1] sm:$0x1]
      %vm578 = vcmask 253952
      %579 = vst.msk [vmem:[#allocation2] sm:$0x1] %vm578, %v577
      %v580 = vld [vmem:[%s570] sm:$0xff]
      %v581 = vld [vmem:[%s570 + $0x8] sm:$0xff]
      %v582 = vld [vmem:[%s2] sm:$0xff]
      %v583 = vld [vmem:[%s2 + $0x8] sm:$0xff]
      %v584 = vadd.f32 %v580, %v582
      %v585 = vadd.f32 %v581, %v583
      %vm586 = vcmask 261120
      %587 = vst.msk [vmem:[#allocation2 + $0x1] sm:$0xff] %vm586, %v584
      %588 = vst.msk [vmem:[#allocation2 + $0x9] sm:$0xff] %vm586, %v585
      %vm589 = vcmask 260096
      %590 = vst.msk [vmem:[#allocation2 + $0x11] sm:$0x7f] %vm589, 0.0
      %v591 = vld [vmem:[#allocation2] sm:$0xff]
      %v592 = vld [vmem:[#allocation2 + $0x8] sm:$0xff]
      %v593 = vld [vmem:[#allocation2 + $0x10] sm:$0xff]
      %v594 = vlaneseq
      %v595 = vand.u32 %v594, 127
      %vm596 = vcmp.lt.s32.totalorder %v595, 17
      %v597 = vsel %vm596, 0.0, -1e+30
      %v598 = vld [vmem:[%s3] sm:$0x1]
      %v599 = vld [vmem:[%s4] sm:$0x1]
      %v600 = vsel %vm586, %v591, 0.0
      %601 = vadd.xlane.f32.xlu0 %v600
      %v602 = vpop.xlane.xlu0 %601
      %v603 = vsel %vm586, %v592, 0.0
      %604 = vadd.xlane.f32.xlu0 %v603
      %v605 = vpop.xlane.xlu0 %604
      %v606 = vsel %vm586, %v593, 0.0
      %607 = vadd.xlane.f32.xlu0 %v606
      %v608 = vpop.xlane.xlu0 %607
      %v609 = vrcp.pop 32.0
      %v610 = vmul.f32 %v602, %v609
      %v611 = vmul.f32 %v605, %v609
      %v612 = vmul.f32 %v608, %v609
      %v613 = vsub.f32 %v591, %v610
      %v614 = vsub.f32 %v592, %v611
      %v615 = vsub.f32 %v593, %v612
      %v616 = vmul.f32 %v613, %v613
      %v617 = vmul.f32 %v614, %v614
      %v618 = vmul.f32 %v615, %v615
      %v619 = vsel %vm586, %v616, 0.0
      %620 = vadd.xlane.f32.xlu0 %v619
      %v621 = vpop.xlane.xlu0 %620
      %v622 = vsel %vm586, %v617, 0.0
      %623 = vadd.xlane.f32.xlu0 %v622
      %v624 = vpop.xlane.xlu0 %623
      %v625 = vsel %vm586, %v618, 0.0
      %626 = vadd.xlane.f32.xlu0 %v625
      %v627 = vpop.xlane.xlu0 %626
      %v628 = vmul.f32 %v621, %v609
      %v629 = vmul.f32 %v624, %v609
      %v630 = vmul.f32 %v627, %v609
      %v631 = vadd.f32 %v628, 1e-05
      %v632 = vadd.f32 %v629, 1e-05
      %v633 = vadd.f32 %v630, 1e-05
      %v634 = vrsqrt.pop %v631
      %v635 = vrsqrt.pop %v632
      %v636 = vrsqrt.pop %v633
      %v637 = vmul.f32 %v613, %v634
      %v638 = vmul.f32 %v614, %v635
      %v639 = vmul.f32 %v615, %v636
      %v641 = vlaneseq
      %v642 = vshrl.u32 %v641, 7
      %v643 = vsub.s32 0, %v642
      %v644 = vrot.slane %v598, %v643
      %v646 = vmul.f32 %v637, %v644
      %v647 = vmul.f32 %v638, %v644
      %v648 = vmul.f32 %v639, %v644
      %v650 = vlaneseq
      %v651 = vshrl.u32 %v650, 7
      %v652 = vsub.s32 0, %v651
      %v653 = vrot.slane %v599, %v652
      %v655 = vadd.f32 %v646, %v653
      %v656 = vadd.f32 %v647, %v653
      %v657 = vadd.f32 %v648, %v653
      %v658 = vld [vmem:[%s5] sm:$0xff]
      %v659 = vld [vmem:[%s5 + $0x8] sm:$0xff]
      %v660 = vld [vmem:[%s5 + $0x10] sm:$0xff]
      %v661 = vld [vmem:[%s5 + $0x18] sm:$0xff]
      %v662 = vpack.c.bf16 %v656, %v655
      %v663 = vpack.c.bf16 %v657, %v657
      %v664 = vpack.c.bf16 %v659, %v658
      %v665 = vpack.c.bf16 %v661, %v660
      %v667 = vsel %vm586, %v662, 0
      %v670 = vsel %vm586, %v663, 0
      %672 = vmatprep.subr.bf16.mxu0 0
      %673 = vmatpush1.bf16.msra.mxu0 0
      %674 = vmatprep.subr.bf16.mxu0 0
      %675 = vmatpush1.bf16.msra.mxu0 0
      %676 = vmatprep.subr.bf16.mxu0 0
      %677 = vmatpush1.bf16.msra.mxu0 0
      %678 = vmatprep.subr.bf16.mxu0 0
      %679 = vmatpush1.bf16.msra.mxu0 0
      %680 = vmatprep.subr.bf16.mxu0 0
      %681 = vmatpush1.bf16.msra.mxu0 0
      %682 = vmatprep.subr.bf16.mxu0 0
      %683 = vmatpush1.bf16.msra.mxu0 0
      %684 = vmatprep.subr.bf16.mxu0 0
      %685 = vmatpush1.bf16.msra.mxu0 %v665
      %686 = vmatprep.subr.bf16.mxu0 0
      %687 = vmatpush1.bf16.msra.mxu0 %v664
      %688 = vmatprep.subr.bf16.mxu0 0
      %689 = vmatpush2.bf16.msra.mxu0 0
      %690 = vmatprep.subr.bf16.mxu0 0
      %691 = vmatpush2.bf16.msra.mxu0 0
      %692 = vmatprep.subr.bf16.mxu0 0
      %693 = vmatpush2.bf16.msra.mxu0 0
      %694 = vmatprep.subr.bf16.mxu0 0
      %695 = vmatpush2.bf16.msra.mxu0 0
      %696 = vmatprep.subr.bf16.mxu0 0
      %697 = vmatpush2.bf16.msra.mxu0 0
      %698 = vmatprep.subr.bf16.mxu0 0
      %699 = vmatpush2.bf16.msra.mxu0 0
      %700 = vmatprep.subr.bf16.mxu0 0
      %701 = vmatpush2.bf16.msra.mxu0 0
      %702 = vmatprep.subr.bf16.mxu0 0
      %703 = vmatpush2.bf16.msra.mxu0 0
      %704 = vmatprep.mubr.bf16.mxu0 0
      %705 = vmatmul.mubr.bf16.gmra.mxu0 %v667
      %v706 = vpop.f32.mrf.mxu0
      %v707 = vadd.f32 0.0, %v706
      %v708 = vpop.f32.mrf.mxu0
      %v709 = vpop.f32.mrf.mxu0
      %v710 = vadd.f32 0.0, %v709
      %v711 = vpop.f32.mrf.mxu0
      %712 = vmatprep.mubr.bf16.mxu0 0
      %713 = vmatmul.mubr.bf16.gmra.mxu0 %v670
      %v714 = vpop.f32.mrf.mxu0
      %v715 = vadd.f32 0.0, %v714
      %v716 = vpop.f32.mrf.mxu0
      %v717 = vpop.f32.mrf.mxu0
      %v718 = vpop.f32.mrf.mxu0
      %719 = vdwg.mxu0
      %v720 = vpack.c.bf16 %v710, %v707
      %v721 = vpack.c.bf16 %v715, %v715
      %724 = vrot.lane.b32.xlu0 %v720, 96
      %v725 = vpop.permute.xlu0 %724
      %726 = vrot.lane.b32.xlu0 %v721, 96
      %v727 = vpop.permute.xlu0 %726
      %vm728 = vcmask 64512
      %v730 = vsel %vm728, %v720, 0
      %v733 = vsel %vm728, %v721, 0
      %v736 = vsel %vm728, %v725, 0
      %v739 = vsel %vm728, %v727, 0
      %741 = vmatprep.subr.bf16.mxu0 0
      %742 = vmatpush1.bf16.xpose.msra.mxu0 0
      %743 = vmatprep.subr.bf16.mxu0 0
      %744 = vmatpush1.bf16.xpose.msra.mxu0 0
      %745 = vmatprep.subr.bf16.mxu0 0
      %746 = vmatpush1.bf16.xpose.msra.mxu0 0
      %747 = vmatprep.subr.bf16.mxu0 0
      %748 = vmatpush1.bf16.xpose.msra.mxu0 0
      %749 = vmatprep.subr.bf16.mxu0 0
      %750 = vmatpush1.bf16.xpose.msra.mxu0 0
      %751 = vmatprep.subr.bf16.mxu0 0
      %752 = vmatpush1.bf16.xpose.msra.mxu0 0
      %753 = vmatprep.subr.bf16.mxu0 0
      %754 = vmatpush1.bf16.xpose.msra.mxu0 %v739
      %755 = vmatprep.subr.bf16.mxu0 0
      %756 = vmatpush1.bf16.xpose.msra.mxu0 %v736
      %757 = vmatprep.subr.bf16.mxu0 0
      %758 = vmatpush2.bf16.xpose.msra.mxu0 0
      %759 = vmatprep.subr.bf16.mxu0 0
      %760 = vmatpush2.bf16.xpose.msra.mxu0 0
      %761 = vmatprep.subr.bf16.mxu0 0
      %762 = vmatpush2.bf16.xpose.msra.mxu0 0
      %763 = vmatprep.subr.bf16.mxu0 0
      %764 = vmatpush2.bf16.xpose.msra.mxu0 0
      %765 = vmatprep.subr.bf16.mxu0 0
      %766 = vmatpush2.bf16.xpose.msra.mxu0 0
      %767 = vmatprep.subr.bf16.mxu0 0
      %768 = vmatpush2.bf16.xpose.msra.mxu0 0
      %769 = vmatprep.subr.bf16.mxu0 0
      %770 = vmatpush2.bf16.xpose.msra.mxu0 0
      %771 = vmatprep.subr.bf16.mxu0 0
      %772 = vmatpush2.bf16.xpose.msra.mxu0 0
      %773 = vmatprep.mubr.bf16.mxu0 0
      %774 = vmatmul.mubr.bf16.gmra.mxu0 %v730
      %v775 = vpop.f32.mrf.mxu0
      %v776 = vadd.f32 %v597, %v775
      %v777 = vpop.f32.mrf.mxu0
      %v778 = vpop.f32.mrf.mxu0
      %v779 = vadd.f32 %v597, %v778
      %v780 = vpop.f32.mrf.mxu0
      %781 = vmatprep.mubr.bf16.mxu0 0
      %782 = vmatmul.mubr.bf16.gmra.mxu0 %v733
      %v783 = vpop.f32.mrf.mxu0
      %v784 = vadd.f32 %v597, %v783
      %v785 = vpop.f32.mrf.mxu0
      %v786 = vpop.f32.mrf.mxu0
      %v787 = vpop.f32.mrf.mxu0
      %788 = vdwg.mxu0
      %vm789 = vcmask 195584
      %v790 = vsel %vm789, %v776, -inf
      %791 = vmax.xlane.f32.xlu0 %v790
      %v792 = vpop.xlane.xlu0 %791
      %v793 = vsel %vm789, %v779, -inf
      %794 = vmax.xlane.f32.xlu0 %v793
      %v795 = vpop.xlane.xlu0 %794
      %v796 = vsel %vm789, %v784, -inf
      %797 = vmax.xlane.f32.xlu0 %v796
      %v798 = vpop.xlane.xlu0 %797
      %v799 = vsub.f32 %v776, %v792
      %v800 = vsub.f32 %v779, %v795
      %v801 = vsub.f32 %v784, %v798
      %v802 = vmul.f32 %v799, 1.442695
      %v803 = vpow.pop %v802
      %v804 = vmul.f32 %v800, 1.442695
      %v805 = vpow.pop %v804
      %v806 = vmul.f32 %v801, 1.442695
      %v807 = vpow.pop %v806
      %v808 = vsel %vm789, %v803, 0.0
      %809 = vadd.xlane.f32.xlu0 %v808
      %v810 = vpop.xlane.xlu0 %809
      %v811 = vsel %vm789, %v805, 0.0
      %812 = vadd.xlane.f32.xlu0 %v811
      %v813 = vpop.xlane.xlu0 %812
      %v814 = vsel %vm789, %v807, 0.0
      %815 = vadd.xlane.f32.xlu0 %v814
      %v816 = vpop.xlane.xlu0 %815
      %v817 = vrcp.pop %v810
      %v818 = vrcp.pop %v813
      %v819 = vrcp.pop %v816
      %v820 = vmul.f32 %v803, %v817
      %v821 = vmul.f32 %v805, %v818
      %v822 = vmul.f32 %v807, %v819
      %v823 = vpack.c.bf16 %v821, %v820
      %v824 = vpack.c.bf16 %v822, %v822
      %825 = vrot.lane.b32.xlu0 %v720, 64
      %v826 = vpop.permute.xlu0 %825
      %827 = vrot.lane.b32.xlu0 %v721, 64
      %v828 = vpop.permute.xlu0 %827
      %v831 = vsel %vm789, %v823, 0
      %v834 = vsel %vm789, %v824, 0
      %vm836 = vcmask 1043456
      %v838 = vsel %vm836, %v828, 0
      %840 = vmatprep.subr.bf16.mxu0 0
      %841 = vmatpush1.bf16.msra.mxu0 0
      %842 = vmatprep.subr.bf16.mxu0 0
      %843 = vmatpush1.bf16.msra.mxu0 0
      %844 = vmatprep.subr.bf16.mxu0 0
      %845 = vmatpush1.bf16.msra.mxu0 0
      %846 = vmatprep.subr.bf16.mxu0 0
      %847 = vmatpush1.bf16.msra.mxu0 0
      %848 = vmatprep.subr.bf16.mxu0 0
      %849 = vmatpush1.bf16.msra.mxu0 0
      %850 = vmatprep.subr.bf16.mxu0 0
      %851 = vmatpush1.bf16.msra.mxu0 0
      %852 = vmatprep.subr.bf16.mxu0 0
      %853 = vmatpush1.bf16.msra.mxu0 %v838
      %854 = vmatprep.subr.bf16.mxu0 0
      %855 = vmatpush1.bf16.msra.mxu0 %v826
      %856 = vmatprep.subr.bf16.mxu0 0
      %857 = vmatpush2.bf16.msra.mxu0 0
      %858 = vmatprep.subr.bf16.mxu0 0
      %859 = vmatpush2.bf16.msra.mxu0 0
      %860 = vmatprep.subr.bf16.mxu0 0
      %861 = vmatpush2.bf16.msra.mxu0 0
      %862 = vmatprep.subr.bf16.mxu0 0
      %863 = vmatpush2.bf16.msra.mxu0 0
      %864 = vmatprep.subr.bf16.mxu0 0
      %865 = vmatpush2.bf16.msra.mxu0 0
      %866 = vmatprep.subr.bf16.mxu0 0
      %867 = vmatpush2.bf16.msra.mxu0 0
      %868 = vmatprep.subr.bf16.mxu0 0
      %869 = vmatpush2.bf16.msra.mxu0 0
      %870 = vmatprep.subr.bf16.mxu0 0
      %871 = vmatpush2.bf16.msra.mxu0 0
      %872 = vmatprep.mubr.bf16.mxu0 0
      %873 = vmatmul.mubr.bf16.gmra.mxu0 %v831
      %v874 = vpop.f32.mrf.mxu0
      %v875 = vadd.f32 0.0, %v874
      %v876 = vpop.f32.mrf.mxu0
      %v877 = vpop.f32.mrf.mxu0
      %v878 = vadd.f32 0.0, %v877
      %v879 = vpop.f32.mrf.mxu0
      %880 = vmatprep.mubr.bf16.mxu0 0
      %881 = vmatmul.mubr.bf16.gmra.mxu0 %v834
      %v882 = vpop.f32.mrf.mxu0
      %v883 = vadd.f32 0.0, %v882
      %v884 = vpop.f32.mrf.mxu0
      %v885 = vpop.f32.mrf.mxu0
      %v886 = vpop.f32.mrf.mxu0
      %887 = vdwg.mxu0
      %888 = vrot.lane.b32.xlu0 %v720, 120
      %v889 = vpop.permute.xlu0 %888
      %890 = vrot.lane.b32.xlu0 %v721, 120
      %v891 = vpop.permute.xlu0 %890
      %892 = vrot.lane.b32.xlu0 %v720, 88
      %v893 = vpop.permute.xlu0 %892
      %894 = vrot.lane.b32.xlu0 %v721, 88
      %v895 = vpop.permute.xlu0 %894
      %v897 = vsel %vm728, %v889, 0
      %v900 = vsel %vm728, %v891, 0
      %v903 = vsel %vm728, %v893, 0
      %v906 = vsel %vm728, %v895, 0
      %908 = vmatprep.subr.bf16.mxu0 0
      %909 = vmatpush1.bf16.xpose.msra.mxu0 0
      %910 = vmatprep.subr.bf16.mxu0 0
      %911 = vmatpush1.bf16.xpose.msra.mxu0 0
      %912 = vmatprep.subr.bf16.mxu0 0
      %913 = vmatpush1.bf16.xpose.msra.mxu0 0
      %914 = vmatprep.subr.bf16.mxu0 0
      %915 = vmatpush1.bf16.xpose.msra.mxu0 0
      %916 = vmatprep.subr.bf16.mxu0 0
      %917 = vmatpush1.bf16.xpose.msra.mxu0 0
      %918 = vmatprep.subr.bf16.mxu0 0
      %919 = vmatpush1.bf16.xpose.msra.mxu0 0
      %920 = vmatprep.subr.bf16.mxu0 0
      %921 = vmatpush1.bf16.xpose.msra.mxu0 %v906
      %922 = vmatprep.subr.bf16.mxu0 0
      %923 = vmatpush1.bf16.xpose.msra.mxu0 %v903
      %924 = vmatprep.subr.bf16.mxu0 0
      %925 = vmatpush2.bf16.xpose.msra.mxu0 0
      %926 = vmatprep.subr.bf16.mxu0 0
      %927 = vmatpush2.bf16.xpose.msra.mxu0 0
      %928 = vmatprep.subr.bf16.mxu0 0
      %929 = vmatpush2.bf16.xpose.msra.mxu0 0
      %930 = vmatprep.subr.bf16.mxu0 0
      %931 = vmatpush2.bf16.xpose.msra.mxu0 0
      %932 = vmatprep.subr.bf16.mxu0 0
      %933 = vmatpush2.bf16.xpose.msra.mxu0 0
      %934 = vmatprep.subr.bf16.mxu0 0
      %935 = vmatpush2.bf16.xpose.msra.mxu0 0
      %936 = vmatprep.subr.bf16.mxu0 0
      %937 = vmatpush2.bf16.xpose.msra.mxu0 0
      %938 = vmatprep.subr.bf16.mxu0 0
      %939 = vmatpush2.bf16.xpose.msra.mxu0 0
      %940 = vmatprep.mubr.bf16.mxu0 0
      %941 = vmatmul.mubr.bf16.gmra.mxu0 %v897
      %v942 = vpop.f32.mrf.mxu0
      %v943 = vadd.f32 %v597, %v942
      %v944 = vpop.f32.mrf.mxu0
      %v945 = vpop.f32.mrf.mxu0
      %v946 = vadd.f32 %v597, %v945
      %v947 = vpop.f32.mrf.mxu0
      %948 = vmatprep.mubr.bf16.mxu0 0
      %949 = vmatmul.mubr.bf16.gmra.mxu0 %v900
      %v950 = vpop.f32.mrf.mxu0
      %v951 = vadd.f32 %v597, %v950
      %v952 = vpop.f32.mrf.mxu0
      %v953 = vpop.f32.mrf.mxu0
      %v954 = vpop.f32.mrf.mxu0
      %955 = vdwg.mxu0
      %v956 = vsel %vm789, %v943, -inf
      %957 = vmax.xlane.f32.xlu0 %v956
      %v958 = vpop.xlane.xlu0 %957
      %v959 = vsel %vm789, %v946, -inf
      %960 = vmax.xlane.f32.xlu0 %v959
      %v961 = vpop.xlane.xlu0 %960
      %v962 = vsel %vm789, %v951, -inf
      %963 = vmax.xlane.f32.xlu0 %v962
      %v964 = vpop.xlane.xlu0 %963
      %v965 = vsub.f32 %v943, %v958
      %v966 = vsub.f32 %v946, %v961
      %v967 = vsub.f32 %v951, %v964
      %v968 = vmul.f32 %v965, 1.442695
      %v969 = vpow.pop %v968
      %v970 = vmul.f32 %v966, 1.442695
      %v971 = vpow.pop %v970
      %v972 = vmul.f32 %v967, 1.442695
      %v973 = vpow.pop %v972
      %v974 = vsel %vm789, %v969, 0.0
      %975 = vadd.xlane.f32.xlu0 %v974
      %v976 = vpop.xlane.xlu0 %975
      %v977 = vsel %vm789, %v971, 0.0
      %978 = vadd.xlane.f32.xlu0 %v977
      %v979 = vpop.xlane.xlu0 %978
      %v980 = vsel %vm789, %v973, 0.0
      %981 = vadd.xlane.f32.xlu0 %v980
      %v982 = vpop.xlane.xlu0 %981
      %v983 = vrcp.pop %v976
      %v984 = vrcp.pop %v979
      %v985 = vrcp.pop %v982
      %v986 = vmul.f32 %v969, %v983
      %v987 = vmul.f32 %v971, %v984
      %v988 = vmul.f32 %v973, %v985
      %v989 = vpack.c.bf16 %v987, %v986
      %v990 = vpack.c.bf16 %v988, %v988
      %991 = vrot.lane.b32.xlu0 %v720, 56
      %v992 = vpop.permute.xlu0 %991
      %993 = vrot.lane.b32.xlu0 %v721, 56
      %v994 = vpop.permute.xlu0 %993
      %v997 = vsel %vm789, %v989, 0
      %v1000 = vsel %vm789, %v990, 0
      %v1003 = vsel %vm836, %v994, 0
      %1005 = vmatprep.subr.bf16.mxu0 0
      %1006 = vmatpush1.bf16.msra.mxu0 0
      %1007 = vmatprep.subr.bf16.mxu0 0
      %1008 = vmatpush1.bf16.msra.mxu0 0
      %1009 = vmatprep.subr.bf16.mxu0 0
      %1010 = vmatpush1.bf16.msra.mxu0 0
      %1011 = vmatprep.subr.bf16.mxu0 0
      %1012 = vmatpush1.bf16.msra.mxu0 0
      %1013 = vmatprep.subr.bf16.mxu0 0
      %1014 = vmatpush1.bf16.msra.mxu0 0
      %1015 = vmatprep.subr.bf16.mxu0 0
      %1016 = vmatpush1.bf16.msra.mxu0 0
      %1017 = vmatprep.subr.bf16.mxu0 0
      %1018 = vmatpush1.bf16.msra.mxu0 %v1003
      %1019 = vmatprep.subr.bf16.mxu0 0
      %1020 = vmatpush1.bf16.msra.mxu0 %v992
      %1021 = vmatprep.subr.bf16.mxu0 0
      %1022 = vmatpush2.bf16.msra.mxu0 0
      %1023 = vmatprep.subr.bf16.mxu0 0
      %1024 = vmatpush2.bf16.msra.mxu0 0
      %1025 = vmatprep.subr.bf16.mxu0 0
      %1026 = vmatpush2.bf16.msra.mxu0 0
      %1027 = vmatprep.subr.bf16.mxu0 0
      %1028 = vmatpush2.bf16.msra.mxu0 0
      %1029 = vmatprep.subr.bf16.mxu0 0
      %1030 = vmatpush2.bf16.msra.mxu0 0
      %1031 = vmatprep.subr.bf16.mxu0 0
      %1032 = vmatpush2.bf16.msra.mxu0 0
      %1033 = vmatprep.subr.bf16.mxu0 0
      %1034 = vmatpush2.bf16.msra.mxu0 0
      %1035 = vmatprep.subr.bf16.mxu0 0
      %1036 = vmatpush2.bf16.msra.mxu0 0
      %1037 = vmatprep.mubr.bf16.mxu0 0
      %1038 = vmatmul.mubr.bf16.gmra.mxu0 %v997
      %v1039 = vpop.f32.mrf.mxu0
      %v1040 = vadd.f32 0.0, %v1039
      %v1041 = vpop.f32.mrf.mxu0
      %v1042 = vpop.f32.mrf.mxu0
      %v1043 = vadd.f32 0.0, %v1042
      %v1044 = vpop.f32.mrf.mxu0
      %1045 = vmatprep.mubr.bf16.mxu0 0
      %1046 = vmatmul.mubr.bf16.gmra.mxu0 %v1000
      %v1047 = vpop.f32.mrf.mxu0
      %v1048 = vadd.f32 0.0, %v1047
      %v1049 = vpop.f32.mrf.mxu0
      %v1050 = vpop.f32.mrf.mxu0
      %v1051 = vpop.f32.mrf.mxu0
      %1052 = vdwg.mxu0
      %1053 = vrot.lane.b32.xlu0 %v720, 112
      %v1054 = vpop.permute.xlu0 %1053
      %1055 = vrot.lane.b32.xlu0 %v721, 112
      %v1056 = vpop.permute.xlu0 %1055
      %1057 = vrot.lane.b32.xlu0 %v720, 80
      %v1058 = vpop.permute.xlu0 %1057
      %1059 = vrot.lane.b32.xlu0 %v721, 80
      %v1060 = vpop.permute.xlu0 %1059
      %v1062 = vsel %vm728, %v1054, 0
      %v1065 = vsel %vm728, %v1056, 0
      %v1068 = vsel %vm728, %v1058, 0
      %v1071 = vsel %vm728, %v1060, 0
      %1073 = vmatprep.subr.bf16.mxu0 0
      %1074 = vmatpush1.bf16.xpose.msra.mxu0 0
      %1075 = vmatprep.subr.bf16.mxu0 0
      %1076 = vmatpush1.bf16.xpose.msra.mxu0 0
      %1077 = vmatprep.subr.bf16.mxu0 0
      %1078 = vmatpush1.bf16.xpose.msra.mxu0 0
      %1079 = vmatprep.subr.bf16.mxu0 0
      %1080 = vmatpush1.bf16.xpose.msra.mxu0 0
      %1081 = vmatprep.subr.bf16.mxu0 0
      %1082 = vmatpush1.bf16.xpose.msra.mxu0 0
      %1083 = vmatprep.subr.bf16.mxu0 0
      %1084 = vmatpush1.bf16.xpose.msra.mxu0 0
      %1085 = vmatprep.subr.bf16.mxu0 0
      %1086 = vmatpush1.bf16.xpose.msra.mxu0 %v1071
      %1087 = vmatprep.subr.bf16.mxu0 0
      %1088 = vmatpush1.bf16.xpose.msra.mxu0 %v1068
      %1089 = vmatprep.subr.bf16.mxu0 0
      %1090 = vmatpush2.bf16.xpose.msra.mxu0 0
      %1091 = vmatprep.subr.bf16.mxu0 0
      %1092 = vmatpush2.bf16.xpose.msra.mxu0 0
      %1093 = vmatprep.subr.bf16.mxu0 0
      %1094 = vmatpush2.bf16.xpose.msra.mxu0 0
      %1095 = vmatprep.subr.bf16.mxu0 0
      %1096 = vmatpush2.bf16.xpose.msra.mxu0 0
      %1097 = vmatprep.subr.bf16.mxu0 0
      %1098 = vmatpush2.bf16.xpose.msra.mxu0 0
      %1099 = vmatprep.subr.bf16.mxu0 0
      %1100 = vmatpush2.bf16.xpose.msra.mxu0 0
      %1101 = vmatprep.subr.bf16.mxu0 0
      %1102 = vmatpush2.bf16.xpose.msra.mxu0 0
      %1103 = vmatprep.subr.bf16.mxu0 0
      %1104 = vmatpush2.bf16.xpose.msra.mxu0 0
      %1105 = vmatprep.mubr.bf16.mxu0 0
      %1106 = vmatmul.mubr.bf16.gmra.mxu0 %v1062
      %v1107 = vpop.f32.mrf.mxu0
      %v1108 = vadd.f32 %v597, %v1107
      %v1109 = vpop.f32.mrf.mxu0
      %v1110 = vpop.f32.mrf.mxu0
      %v1111 = vadd.f32 %v597, %v1110
      %v1112 = vpop.f32.mrf.mxu0
      %1113 = vmatprep.mubr.bf16.mxu0 0
      %1114 = vmatmul.mubr.bf16.gmra.mxu0 %v1065
      %v1115 = vpop.f32.mrf.mxu0
      %v1116 = vadd.f32 %v597, %v1115
      %v1117 = vpop.f32.mrf.mxu0
      %v1118 = vpop.f32.mrf.mxu0
      %v1119 = vpop.f32.mrf.mxu0
      %1120 = vdwg.mxu0
      %v1121 = vsel %vm789, %v1108, -inf
      %1122 = vmax.xlane.f32.xlu0 %v1121
      %v1123 = vpop.xlane.xlu0 %1122
      %v1124 = vsel %vm789, %v1111, -inf
      %1125 = vmax.xlane.f32.xlu0 %v1124
      %v1126 = vpop.xlane.xlu0 %1125
      %v1127 = vsel %vm789, %v1116, -inf
      %1128 = vmax.xlane.f32.xlu0 %v1127
      %v1129 = vpop.xlane.xlu0 %1128
      %v1130 = vsub.f32 %v1108, %v1123
      %v1131 = vsub.f32 %v1111, %v1126
      %v1132 = vsub.f32 %v1116, %v1129
      %v1133 = vmul.f32 %v1130, 1.442695
      %v1134 = vpow.pop %v1133
      %v1135 = vmul.f32 %v1131, 1.442695
      %v1136 = vpow.pop %v1135
      %v1137 = vmul.f32 %v1132, 1.442695
      %v1138 = vpow.pop %v1137
      %v1139 = vsel %vm789, %v1134, 0.0
      %1140 = vadd.xlane.f32.xlu0 %v1139
      %v1141 = vpop.xlane.xlu0 %1140
      %v1142 = vsel %vm789, %v1136, 0.0
      %1143 = vadd.xlane.f32.xlu0 %v1142
      %v1144 = vpop.xlane.xlu0 %1143
      %v1145 = vsel %vm789, %v1138, 0.0
      %1146 = vadd.xlane.f32.xlu0 %v1145
      %v1147 = vpop.xlane.xlu0 %1146
      %v1148 = vrcp.pop %v1141
      %v1149 = vrcp.pop %v1144
      %v1150 = vrcp.pop %v1147
      %v1151 = vmul.f32 %v1134, %v1148
      %v1152 = vmul.f32 %v1136, %v1149
      %v1153 = vmul.f32 %v1138, %v1150
      %v1154 = vpack.c.bf16 %v1152, %v1151
      %v1155 = vpack.c.bf16 %v1153, %v1153
      %1156 = vrot.lane.b32.xlu0 %v720, 48
      %v1157 = vpop.permute.xlu0 %1156
      %1158 = vrot.lane.b32.xlu0 %v721, 48
      %v1159 = vpop.permute.xlu0 %1158
      %v1162 = vsel %vm789, %v1154, 0
      %v1165 = vsel %vm789, %v1155, 0
      %v1168 = vsel %vm836, %v1159, 0
      %1170 = vmatprep.subr.bf16.mxu0 0
      %1171 = vmatpush1.bf16.msra.mxu0 0
      %1172 = vmatprep.subr.bf16.mxu0 0
      %1173 = vmatpush1.bf16.msra.mxu0 0
      %1174 = vmatprep.subr.bf16.mxu0 0
      %1175 = vmatpush1.bf16.msra.mxu0 0
      %1176 = vmatprep.subr.bf16.mxu0 0
      %1177 = vmatpush1.bf16.msra.mxu0 0
      %1178 = vmatprep.subr.bf16.mxu0 0
      %1179 = vmatpush1.bf16.msra.mxu0 0
      %1180 = vmatprep.subr.bf16.mxu0 0
      %1181 = vmatpush1.bf16.msra.mxu0 0
      %1182 = vmatprep.subr.bf16.mxu0 0
      %1183 = vmatpush1.bf16.msra.mxu0 %v1168
      %1184 = vmatprep.subr.bf16.mxu0 0
      %1185 = vmatpush1.bf16.msra.mxu0 %v1157
      %1186 = vmatprep.subr.bf16.mxu0 0
      %1187 = vmatpush2.bf16.msra.mxu0 0
      %1188 = vmatprep.subr.bf16.mxu0 0
      %1189 = vmatpush2.bf16.msra.mxu0 0
      %1190 = vmatprep.subr.bf16.mxu0 0
      %1191 = vmatpush2.bf16.msra.mxu0 0
      %1192 = vmatprep.subr.bf16.mxu0 0
      %1193 = vmatpush2.bf16.msra.mxu0 0
      %1194 = vmatprep.subr.bf16.mxu0 0
      %1195 = vmatpush2.bf16.msra.mxu0 0
      %1196 = vmatprep.subr.bf16.mxu0 0
      %1197 = vmatpush2.bf16.msra.mxu0 0
      %1198 = vmatprep.subr.bf16.mxu0 0
      %1199 = vmatpush2.bf16.msra.mxu0 0
      %1200 = vmatprep.subr.bf16.mxu0 0
      %1201 = vmatpush2.bf16.msra.mxu0 0
      %1202 = vmatprep.mubr.bf16.mxu0 0
      %1203 = vmatmul.mubr.bf16.gmra.mxu0 %v1162
      %v1204 = vpop.f32.mrf.mxu0
      %v1205 = vadd.f32 0.0, %v1204
      %v1206 = vpop.f32.mrf.mxu0
      %v1207 = vpop.f32.mrf.mxu0
      %v1208 = vadd.f32 0.0, %v1207
      %v1209 = vpop.f32.mrf.mxu0
      %1210 = vmatprep.mubr.bf16.mxu0 0
      %1211 = vmatmul.mubr.bf16.gmra.mxu0 %v1165
      %v1212 = vpop.f32.mrf.mxu0
      %v1213 = vadd.f32 0.0, %v1212
      %v1214 = vpop.f32.mrf.mxu0
      %v1215 = vpop.f32.mrf.mxu0
      %v1216 = vpop.f32.mrf.mxu0
      %1217 = vdwg.mxu0
      %1218 = vrot.lane.b32.xlu0 %v720, 104
      %v1219 = vpop.permute.xlu0 %1218
      %1220 = vrot.lane.b32.xlu0 %v721, 104
      %v1221 = vpop.permute.xlu0 %1220
      %1222 = vrot.lane.b32.xlu0 %v720, 72
      %v1223 = vpop.permute.xlu0 %1222
      %1224 = vrot.lane.b32.xlu0 %v721, 72
      %v1225 = vpop.permute.xlu0 %1224
      %v1227 = vsel %vm728, %v1219, 0
      %v1230 = vsel %vm728, %v1221, 0
      %v1233 = vsel %vm728, %v1223, 0
      %v1236 = vsel %vm728, %v1225, 0
      %1238 = vmatprep.subr.bf16.mxu0 0
      %1239 = vmatpush1.bf16.xpose.msra.mxu0 0
      %1240 = vmatprep.subr.bf16.mxu0 0
      %1241 = vmatpush1.bf16.xpose.msra.mxu0 0
      %1242 = vmatprep.subr.bf16.mxu0 0
      %1243 = vmatpush1.bf16.xpose.msra.mxu0 0
      %1244 = vmatprep.subr.bf16.mxu0 0
      %1245 = vmatpush1.bf16.xpose.msra.mxu0 0
      %1246 = vmatprep.subr.bf16.mxu0 0
      %1247 = vmatpush1.bf16.xpose.msra.mxu0 0
      %1248 = vmatprep.subr.bf16.mxu0 0
      %1249 = vmatpush1.bf16.xpose.msra.mxu0 0
      %1250 = vmatprep.subr.bf16.mxu0 0
      %1251 = vmatpush1.bf16.xpose.msra.mxu0 %v1236
      %1252 = vmatprep.subr.bf16.mxu0 0
      %1253 = vmatpush1.bf16.xpose.msra.mxu0 %v1233
      %1254 = vmatprep.subr.bf16.mxu0 0
      %1255 = vmatpush2.bf16.xpose.msra.mxu0 0
      %1256 = vmatprep.subr.bf16.mxu0 0
      %1257 = vmatpush2.bf16.xpose.msra.mxu0 0
      %1258 = vmatprep.subr.bf16.mxu0 0
      %1259 = vmatpush2.bf16.xpose.msra.mxu0 0
      %1260 = vmatprep.subr.bf16.mxu0 0
      %1261 = vmatpush2.bf16.xpose.msra.mxu0 0
      %1262 = vmatprep.subr.bf16.mxu0 0
      %1263 = vmatpush2.bf16.xpose.msra.mxu0 0
      %1264 = vmatprep.subr.bf16.mxu0 0
      %1265 = vmatpush2.bf16.xpose.msra.mxu0 0
      %1266 = vmatprep.subr.bf16.mxu0 0
      %1267 = vmatpush2.bf16.xpose.msra.mxu0 0
      %1268 = vmatprep.subr.bf16.mxu0 0
      %1269 = vmatpush2.bf16.xpose.msra.mxu0 0
      %1270 = vmatprep.mubr.bf16.mxu0 0
      %1271 = vmatmul.mubr.bf16.gmra.mxu0 %v1227
      %v1272 = vpop.f32.mrf.mxu0
      %v1273 = vadd.f32 %v597, %v1272
      %v1274 = vpop.f32.mrf.mxu0
      %v1275 = vpop.f32.mrf.mxu0
      %v1276 = vadd.f32 %v597, %v1275
      %v1277 = vpop.f32.mrf.mxu0
      %1278 = vmatprep.mubr.bf16.mxu0 0
      %1279 = vmatmul.mubr.bf16.gmra.mxu0 %v1230
      %v1280 = vpop.f32.mrf.mxu0
      %v1281 = vadd.f32 %v597, %v1280
      %v1282 = vpop.f32.mrf.mxu0
      %v1283 = vpop.f32.mrf.mxu0
      %v1284 = vpop.f32.mrf.mxu0
      %1285 = vdwg.mxu0
      %v1286 = vsel %vm789, %v1273, -inf
      %1287 = vmax.xlane.f32.xlu0 %v1286
      %v1288 = vpop.xlane.xlu0 %1287
      %v1289 = vsel %vm789, %v1276, -inf
      %1290 = vmax.xlane.f32.xlu0 %v1289
      %v1291 = vpop.xlane.xlu0 %1290
      %v1292 = vsel %vm789, %v1281, -inf
      %1293 = vmax.xlane.f32.xlu0 %v1292
      %v1294 = vpop.xlane.xlu0 %1293
      %v1295 = vsub.f32 %v1273, %v1288
      %v1296 = vsub.f32 %v1276, %v1291
      %v1297 = vsub.f32 %v1281, %v1294
      %v1298 = vmul.f32 %v1295, 1.442695
      %v1299 = vpow.pop %v1298
      %v1300 = vmul.f32 %v1296, 1.442695
      %v1301 = vpow.pop %v1300
      %v1302 = vmul.f32 %v1297, 1.442695
      %v1303 = vpow.pop %v1302
      %v1304 = vsel %vm789, %v1299, 0.0
      %1305 = vadd.xlane.f32.xlu0 %v1304
      %v1306 = vpop.xlane.xlu0 %1305
      %v1307 = vsel %vm789, %v1301, 0.0
      %1308 = vadd.xlane.f32.xlu0 %v1307
      %v1309 = vpop.xlane.xlu0 %1308
      %v1310 = vsel %vm789, %v1303, 0.0
      %1311 = vadd.xlane.f32.xlu0 %v1310
      %v1312 = vpop.xlane.xlu0 %1311
      %v1313 = vrcp.pop %v1306
      %v1314 = vrcp.pop %v1309
      %v1315 = vrcp.pop %v1312
      %v1316 = vmul.f32 %v1299, %v1313
      %v1317 = vmul.f32 %v1301, %v1314
      %v1318 = vmul.f32 %v1303, %v1315
      %v1319 = vpack.c.bf16 %v1317, %v1316
      %v1320 = vpack.c.bf16 %v1318, %v1318
      %1321 = vrot.lane.b32.xlu0 %v720, 40
      %v1322 = vpop.permute.xlu0 %1321
      %1323 = vrot.lane.b32.xlu0 %v721, 40
      %v1324 = vpop.permute.xlu0 %1323
      %v1327 = vsel %vm789, %v1319, 0
      %v1330 = vsel %vm789, %v1320, 0
      %v1333 = vsel %vm836, %v1324, 0
      %1335 = vmatprep.subr.bf16.mxu0 0
      %1336 = vmatpush1.bf16.msra.mxu0 0
      %1337 = vmatprep.subr.bf16.mxu0 0
      %1338 = vmatpush1.bf16.msra.mxu0 0
      %1339 = vmatprep.subr.bf16.mxu0 0
      %1340 = vmatpush1.bf16.msra.mxu0 0
      %1341 = vmatprep.subr.bf16.mxu0 0
      %1342 = vmatpush1.bf16.msra.mxu0 0
      %1343 = vmatprep.subr.bf16.mxu0 0
      %1344 = vmatpush1.bf16.msra.mxu0 0
      %1345 = vmatprep.subr.bf16.mxu0 0
      %1346 = vmatpush1.bf16.msra.mxu0 0
      %1347 = vmatprep.subr.bf16.mxu0 0
      %1348 = vmatpush1.bf16.msra.mxu0 %v1333
      %1349 = vmatprep.subr.bf16.mxu0 0
      %1350 = vmatpush1.bf16.msra.mxu0 %v1322
      %1351 = vmatprep.subr.bf16.mxu0 0
      %1352 = vmatpush2.bf16.msra.mxu0 0
      %1353 = vmatprep.subr.bf16.mxu0 0
      %1354 = vmatpush2.bf16.msra.mxu0 0
      %1355 = vmatprep.subr.bf16.mxu0 0
      %1356 = vmatpush2.bf16.msra.mxu0 0
      %1357 = vmatprep.subr.bf16.mxu0 0
      %1358 = vmatpush2.bf16.msra.mxu0 0
      %1359 = vmatprep.subr.bf16.mxu0 0
      %1360 = vmatpush2.bf16.msra.mxu0 0
      %1361 = vmatprep.subr.bf16.mxu0 0
      %1362 = vmatpush2.bf16.msra.mxu0 0
      %1363 = vmatprep.subr.bf16.mxu0 0
      %1364 = vmatpush2.bf16.msra.mxu0 0
      %1365 = vmatprep.subr.bf16.mxu0 0
      %1366 = vmatpush2.bf16.msra.mxu0 0
      %1367 = vmatprep.mubr.bf16.mxu0 0
      %1368 = vmatmul.mubr.bf16.gmra.mxu0 %v1327
      %v1369 = vpop.f32.mrf.mxu0
      %v1370 = vadd.f32 0.0, %v1369
      %v1371 = vpop.f32.mrf.mxu0
      %v1372 = vpop.f32.mrf.mxu0
      %v1373 = vadd.f32 0.0, %v1372
      %v1374 = vpop.f32.mrf.mxu0
      %1375 = vmatprep.mubr.bf16.mxu0 0
      %1376 = vmatmul.mubr.bf16.gmra.mxu0 %v1330
      %v1377 = vpop.f32.mrf.mxu0
      %v1378 = vadd.f32 0.0, %v1377
      %v1379 = vpop.f32.mrf.mxu0
      %v1380 = vpop.f32.mrf.mxu0
      %v1381 = vpop.f32.mrf.mxu0
      %1382 = vdwg.mxu0
      %1386 = vrot.lane.b32.xlu0 %v1040, 8
      %v1387 = vpop.permute.xlu0 %1386
      %1388 = vrot.lane.b32.xlu0 %v1043, 8
      %v1389 = vpop.permute.xlu0 %1388
      %1390 = vrot.lane.b32.xlu0 %v1048, 8
      %v1391 = vpop.permute.xlu0 %1390
      %1398 = vrot.lane.b32.xlu0 %v1205, 16
      %v1399 = vpop.permute.xlu0 %1398
      %1400 = vrot.lane.b32.xlu0 %v1208, 16
      %v1401 = vpop.permute.xlu0 %1400
      %1402 = vrot.lane.b32.xlu0 %v1213, 16
      %v1403 = vpop.permute.xlu0 %1402
      %1410 = vrot.lane.b32.xlu0 %v1370, 24
      %v1411 = vpop.permute.xlu0 %1410
      %1412 = vrot.lane.b32.xlu0 %v1373, 24
      %v1413 = vpop.permute.xlu0 %1412
      %1414 = vrot.lane.b32.xlu0 %v1378, 24
      %v1415 = vpop.permute.xlu0 %1414
      %v1419 = vsel %vm728, %v875, %v1387
      %v1420 = vsel %vm728, %v878, %v1389
      %v1421 = vsel %vm728, %v883, %v1391
      %vm1422 = vcmask 130048
      %v1423 = vsel %vm1422, %v1419, %v1399
      %v1424 = vsel %vm1422, %v1420, %v1401
      %v1425 = vsel %vm1422, %v1421, %v1403
      %v1426 = vsel %vm789, %v1423, %v1411
      %v1427 = vsel %vm789, %v1424, %v1413
      %v1428 = vsel %vm789, %v1425, %v1415
      %v1429 = vld [vmem:[%s6] sm:$0xff]
      %v1430 = vld [vmem:[%s6 + $0x8] sm:$0xff]
      %v1431 = vld [vmem:[%s6 + $0x10] sm:$0xff]
      %v1432 = vld [vmem:[%s6 + $0x18] sm:$0xff]
      %v1433 = vpack.c.bf16 %v1427, %v1426
      %v1434 = vpack.c.bf16 %v1428, %v1428
      %v1435 = vpack.c.bf16 %v1430, %v1429
      %v1436 = vpack.c.bf16 %v1432, %v1431
      %v1438 = vsel %vm586, %v1433, 0
      %v1441 = vsel %vm586, %v1434, 0
      %1443 = vmatprep.subr.bf16.mxu0 0
      %1444 = vmatpush1.bf16.msra.mxu0 0
      %1445 = vmatprep.subr.bf16.mxu0 0
      %1446 = vmatpush1.bf16.msra.mxu0 0
      %1447 = vmatprep.subr.bf16.mxu0 0
      %1448 = vmatpush1.bf16.msra.mxu0 0
      %1449 = vmatprep.subr.bf16.mxu0 0
      %1450 = vmatpush1.bf16.msra.mxu0 0
      %1451 = vmatprep.subr.bf16.mxu0 0
      %1452 = vmatpush1.bf16.msra.mxu0 0
      %1453 = vmatprep.subr.bf16.mxu0 0
      %1454 = vmatpush1.bf16.msra.mxu0 0
      %1455 = vmatprep.subr.bf16.mxu0 0
      %1456 = vmatpush1.bf16.msra.mxu0 %v1436
      %1457 = vmatprep.subr.bf16.mxu0 0
      %1458 = vmatpush1.bf16.msra.mxu0 %v1435
      %1459 = vmatprep.subr.bf16.mxu0 0
      %1460 = vmatpush2.bf16.msra.mxu0 0
      %1461 = vmatprep.subr.bf16.mxu0 0
      %1462 = vmatpush2.bf16.msra.mxu0 0
      %1463 = vmatprep.subr.bf16.mxu0 0
      %1464 = vmatpush2.bf16.msra.mxu0 0
      %1465 = vmatprep.subr.bf16.mxu0 0
      %1466 = vmatpush2.bf16.msra.mxu0 0
      %1467 = vmatprep.subr.bf16.mxu0 0
      %1468 = vmatpush2.bf16.msra.mxu0 0
      %1469 = vmatprep.subr.bf16.mxu0 0
      %1470 = vmatpush2.bf16.msra.mxu0 0
      %1471 = vmatprep.subr.bf16.mxu0 0
      %1472 = vmatpush2.bf16.msra.mxu0 0
      %1473 = vmatprep.subr.bf16.mxu0 0
      %1474 = vmatpush2.bf16.msra.mxu0 0
      %1475 = vmatprep.mubr.bf16.mxu0 0
      %1476 = vmatmul.mubr.bf16.gmra.mxu0 %v1438
      %v1477 = vpop.f32.mrf.mxu0
      %v1478 = vadd.f32 0.0, %v1477
      %v1479 = vpop.f32.mrf.mxu0
      %v1480 = vpop.f32.mrf.mxu0
      %v1481 = vadd.f32 0.0, %v1480
      %v1482 = vpop.f32.mrf.mxu0
      %1483 = vmatprep.mubr.bf16.mxu0 0
      %1484 = vmatmul.mubr.bf16.gmra.mxu0 %v1441
      %v1485 = vpop.f32.mrf.mxu0
      %v1486 = vadd.f32 0.0, %v1485
      %v1487 = vpop.f32.mrf.mxu0
      %v1488 = vpop.f32.mrf.mxu0
      %v1489 = vpop.f32.mrf.mxu0
      %1490 = vdwg.mxu0
      %v1491 = vadd.f32 %v591, %v1478
      %v1492 = vadd.f32 %v592, %v1481
      %v1493 = vadd.f32 %v593, %v1486
      %v1494 = vld [vmem:[%s7] sm:$0x1]
      %v1496 = vlaneseq
      %v1497 = vshrl.u32 %v1496, 7
      %v1498 = vsub.s32 0, %v1497
      %v1499 = vrot.slane %v1494, %v1498
      %v1501 = vadd.f32 %v1491, %v1499
      %v1502 = vadd.f32 %v1492, %v1499
      %v1503 = vadd.f32 %v1493, %v1499
      %v1504 = vld [vmem:[%s8] sm:$0x1]
      %v1505 = vld [vmem:[%s9] sm:$0x1]
      %v1506 = vsel %vm586, %v1501, 0.0
      %1507 = vadd.xlane.f32.xlu0 %v1506
      %v1508 = vpop.xlane.xlu0 %1507
      %v1509 = vsel %vm586, %v1502, 0.0
      %1510 = vadd.xlane.f32.xlu0 %v1509
      %v1511 = vpop.xlane.xlu0 %1510
      %v1512 = vsel %vm586, %v1503, 0.0
      %1513 = vadd.xlane.f32.xlu0 %v1512
      %v1514 = vpop.xlane.xlu0 %1513
      %v1515 = vmul.f32 %v1508, %v609
      %v1516 = vmul.f32 %v1511, %v609
      %v1517 = vmul.f32 %v1514, %v609
      %v1518 = vsub.f32 %v1501, %v1515
      %v1519 = vsub.f32 %v1502, %v1516
      %v1520 = vsub.f32 %v1503, %v1517
      %v1521 = vmul.f32 %v1518, %v1518
      %v1522 = vmul.f32 %v1519, %v1519
      %v1523 = vmul.f32 %v1520, %v1520
      %v1524 = vsel %vm586, %v1521, 0.0
      %1525 = vadd.xlane.f32.xlu0 %v1524
      %v1526 = vpop.xlane.xlu0 %1525
      %v1527 = vsel %vm586, %v1522, 0.0
      %1528 = vadd.xlane.f32.xlu0 %v1527
      %v1529 = vpop.xlane.xlu0 %1528
      %v1530 = vsel %vm586, %v1523, 0.0
      %1531 = vadd.xlane.f32.xlu0 %v1530
      %v1532 = vpop.xlane.xlu0 %1531
      %v1533 = vmul.f32 %v1526, %v609
      %v1534 = vmul.f32 %v1529, %v609
      %v1535 = vmul.f32 %v1532, %v609
      %v1536 = vadd.f32 %v1533, 1e-05
      %v1537 = vadd.f32 %v1534, 1e-05
      %v1538 = vadd.f32 %v1535, 1e-05
      %v1539 = vrsqrt.pop %v1536
      %v1540 = vrsqrt.pop %v1537
      %v1541 = vrsqrt.pop %v1538
      %v1542 = vmul.f32 %v1518, %v1539
      %v1543 = vmul.f32 %v1519, %v1540
      %v1544 = vmul.f32 %v1520, %v1541
      %v1546 = vlaneseq
      %v1547 = vshrl.u32 %v1546, 7
      %v1548 = vsub.s32 0, %v1547
      %v1549 = vrot.slane %v1504, %v1548
      %v1551 = vmul.f32 %v1542, %v1549
      %v1552 = vmul.f32 %v1543, %v1549
      %v1553 = vmul.f32 %v1544, %v1549
      %v1555 = vlaneseq
      %v1556 = vshrl.u32 %v1555, 7
      %v1557 = vsub.s32 0, %v1556
      %v1558 = vrot.slane %v1505, %v1557
      %v1560 = vadd.f32 %v1551, %v1558
      %v1561 = vadd.f32 %v1552, %v1558
      %v1562 = vadd.f32 %v1553, %v1558
      %v1563 = vld [vmem:[%s10] sm:$0xff]
      %v1564 = vld [vmem:[%s10 + $0x8] sm:$0xff]
      %v1565 = vld [vmem:[%s10 + $0x10] sm:$0xff]
      %v1566 = vld [vmem:[%s10 + $0x18] sm:$0xff]
      %v1567 = vpack.c.bf16 %v1561, %v1560
      %v1568 = vpack.c.bf16 %v1562, %v1562
      %v1569 = vpack.c.bf16 %v1564, %v1563
      %v1570 = vpack.c.bf16 %v1566, %v1565
      %v1571 = vld [vmem:[%s11] sm:$0x1]
      %v1573 = vlaneseq
      %v1574 = vshrl.u32 %v1573, 7
      %v1575 = vsub.s32 0, %v1574
      %v1576 = vrot.slane %v1571, %v1575
      %v1579 = vsel %vm586, %v1567, 0
      %v1582 = vsel %vm586, %v1568, 0
      %1584 = vmatprep.subr.bf16.mxu0 0
      %1585 = vmatpush1.bf16.msra.mxu0 0
      %1586 = vmatprep.subr.bf16.mxu0 0
      %1587 = vmatpush1.bf16.msra.mxu0 0
      %1588 = vmatprep.subr.bf16.mxu0 0
      %1589 = vmatpush1.bf16.msra.mxu0 0
      %1590 = vmatprep.subr.bf16.mxu0 0
      %1591 = vmatpush1.bf16.msra.mxu0 0
      %1592 = vmatprep.subr.bf16.mxu0 0
      %1593 = vmatpush1.bf16.msra.mxu0 0
      %1594 = vmatprep.subr.bf16.mxu0 0
      %1595 = vmatpush1.bf16.msra.mxu0 0
      %1596 = vmatprep.subr.bf16.mxu0 0
      %1597 = vmatpush1.bf16.msra.mxu0 %v1570
      %1598 = vmatprep.subr.bf16.mxu0 0
      %1599 = vmatpush1.bf16.msra.mxu0 %v1569
      %1600 = vmatprep.subr.bf16.mxu0 0
      %1601 = vmatpush2.bf16.msra.mxu0 0
      %1602 = vmatprep.subr.bf16.mxu0 0
      %1603 = vmatpush2.bf16.msra.mxu0 0
      %1604 = vmatprep.subr.bf16.mxu0 0
      %1605 = vmatpush2.bf16.msra.mxu0 0
      %1606 = vmatprep.subr.bf16.mxu0 0
      %1607 = vmatpush2.bf16.msra.mxu0 0
      %1608 = vmatprep.subr.bf16.mxu0 0
      %1609 = vmatpush2.bf16.msra.mxu0 0
      %1610 = vmatprep.subr.bf16.mxu0 0
      %1611 = vmatpush2.bf16.msra.mxu0 0
      %1612 = vmatprep.subr.bf16.mxu0 0
      %1613 = vmatpush2.bf16.msra.mxu0 0
      %1614 = vmatprep.subr.bf16.mxu0 0
      %1615 = vmatpush2.bf16.msra.mxu0 0
      %1616 = vmatprep.mubr.bf16.mxu0 0
      %1617 = vmatmul.mubr.bf16.gmra.mxu0 %v1579
      %v1618 = vpop.f32.mrf.mxu0
      %v1619 = vadd.f32 %v1576, %v1618
      %v1620 = vpop.f32.mrf.mxu0
      %v1621 = vpop.f32.mrf.mxu0
      %v1622 = vadd.f32 %v1576, %v1621
      %v1623 = vpop.f32.mrf.mxu0
      %1624 = vmatprep.mubr.bf16.mxu0 0
      %1625 = vmatmul.mubr.bf16.gmra.mxu0 %v1582
      %v1626 = vpop.f32.mrf.mxu0
      %v1627 = vadd.f32 %v1576, %v1626
      %v1628 = vpop.f32.mrf.mxu0
      %v1629 = vpop.f32.mrf.mxu0
      %v1630 = vpop.f32.mrf.mxu0
      %1631 = vdwg.mxu0
      %v1632 = vmul.f32 %v1619, 0.5
      %v1633 = vmul.f32 %v1622, 0.5
      %v1634 = vmul.f32 %v1627, 0.5
      %v1635 = vmul.f32 %v1619, 0.70710677
      %v1636 = vmul.f32 %v1622, 0.70710677
      %v1637 = vmul.f32 %v1627, 0.70710677
      %vm1638 = vcmp.ge.f32.partialorder %v1635, 0.0
      %vm1639 = vcmp.ge.f32.partialorder %v1636, 0.0
      %vm1640 = vcmp.ge.f32.partialorder %v1637, 0.0
      %v1641 = vsel %vm1638, 1.0, -1.0
      %v1642 = vsel %vm1639, 1.0, -1.0
      %v1643 = vsel %vm1640, 1.0, -1.0
      %v1644 = vand.u32 2147483647, %v1635
      %v1645 = vand.u32 2147483647, %v1636
      %v1646 = vand.u32 2147483647, %v1637
      %v1647 = vmul.f32 %v1644, 0.3275911
      %v1648 = vmul.f32 %v1645, 0.3275911
      %v1649 = vmul.f32 %v1646, 0.3275911
      %v1650 = vadd.f32 %v1647, 1.0
      %v1651 = vadd.f32 %v1648, 1.0
      %v1652 = vadd.f32 %v1649, 1.0
      %v1653 = vrcp.pop %v1650
      %v1654 = vmul.f32 1.0, %v1653
      %v1655 = vrcp.pop %v1651
      %v1656 = vmul.f32 1.0, %v1655
      %v1657 = vrcp.pop %v1652
      %v1658 = vmul.f32 1.0, %v1657
      %v1659 = vmul.f32 %v1654, 1.0614054
      %v1660 = vmul.f32 %v1656, 1.0614054
      %v1661 = vmul.f32 %v1658, 1.0614054
      %v1662 = vsub.f32 %v1659, 1.4531521
      %v1663 = vsub.f32 %v1660, 1.4531521
      %v1664 = vsub.f32 %v1661, 1.4531521
      %v1665 = vmul.f32 %v1662, %v1654
      %v1666 = vmul.f32 %v1663, %v1656
      %v1667 = vmul.f32 %v1664, %v1658
      %v1668 = vadd.f32 %v1665, 1.4214138
      %v1669 = vadd.f32 %v1666, 1.4214138
      %v1670 = vadd.f32 %v1667, 1.4214138
      %v1671 = vmul.f32 %v1668, %v1654
      %v1672 = vmul.f32 %v1669, %v1656
      %v1673 = vmul.f32 %v1670, %v1658
      %v1674 = vsub.f32 %v1671, 0.28449672
      %v1675 = vsub.f32 %v1672, 0.28449672
      %v1676 = vsub.f32 %v1673, 0.28449672
      %v1677 = vmul.f32 %v1674, %v1654
      %v1678 = vmul.f32 %v1675, %v1656
      %v1679 = vmul.f32 %v1676, %v1658
      %v1680 = vadd.f32 %v1677, 0.2548296
      %v1681 = vadd.f32 %v1678, 0.2548296
      %v1682 = vadd.f32 %v1679, 0.2548296
      %v1683 = vmul.f32 %v1680, %v1654
      %v1684 = vmul.f32 %v1681, %v1656
      %v1685 = vmul.f32 %v1682, %v1658
      %v1686 = vsub.f32 0.0, %v1644
      %v1687 = vsub.f32 0.0, %v1645
      %v1688 = vsub.f32 0.0, %v1646
      %v1689 = vmul.f32 %v1686, %v1644
      %v1690 = vmul.f32 %v1687, %v1645
      %v1691 = vmul.f32 %v1688, %v1646
      %v1692 = vmul.f32 %v1689, 1.442695
      %v1693 = vpow.pop %v1692
      %v1694 = vmul.f32 %v1690, 1.442695
      %v1695 = vpow.pop %v1694
      %v1696 = vmul.f32 %v1691, 1.442695
      %v1697 = vpow.pop %v1696
      %v1698 = vmul.f32 %v1683, %v1693
      %v1699 = vmul.f32 %v1684, %v1695
      %v1700 = vmul.f32 %v1685, %v1697
      %v1701 = vsub.f32 1.0, %v1698
      %v1702 = vsub.f32 1.0, %v1699
      %v1703 = vsub.f32 1.0, %v1700
      %v1704 = vmul.f32 %v1641, %v1701
      %v1705 = vmul.f32 %v1642, %v1702
      %v1706 = vmul.f32 %v1643, %v1703
      %v1707 = vadd.f32 %v1704, 1.0
      %v1708 = vadd.f32 %v1705, 1.0
      %v1709 = vadd.f32 %v1706, 1.0
      %v1710 = vmul.f32 %v1632, %v1707
      %v1711 = vmul.f32 %v1633, %v1708
      %v1712 = vmul.f32 %v1634, %v1709
      %v1713 = vld [vmem:[%s12] sm:$0xff]
      %v1714 = vld [vmem:[%s12 + $0x8] sm:$0xff]
      %v1715 = vld [vmem:[%s12 + $0x10] sm:$0xff]
      %v1716 = vld [vmem:[%s12 + $0x18] sm:$0xff]
      %v1717 = vld [vmem:[%s12 + $0x20] sm:$0xff]
      %v1718 = vld [vmem:[%s12 + $0x28] sm:$0xff]
      %v1719 = vld [vmem:[%s12 + $0x30] sm:$0xff]
      %v1720 = vld [vmem:[%s12 + $0x38] sm:$0xff]
      %v1721 = vld [vmem:[%s12 + $0x40] sm:$0xff]
      %v1722 = vld [vmem:[%s12 + $0x48] sm:$0xff]
      %v1723 = vld [vmem:[%s12 + $0x50] sm:$0xff]
      %v1724 = vld [vmem:[%s12 + $0x58] sm:$0xff]
      %v1725 = vld [vmem:[%s12 + $0x60] sm:$0xff]
      %v1726 = vld [vmem:[%s12 + $0x68] sm:$0xff]
      %v1727 = vld [vmem:[%s12 + $0x70] sm:$0xff]
      %v1728 = vld [vmem:[%s12 + $0x78] sm:$0xff]
      %v1729 = vpack.c.bf16 %v1711, %v1710
      %v1730 = vpack.c.bf16 %v1712, %v1712
      %v1731 = vpack.c.bf16 %v1714, %v1713
      %v1732 = vpack.c.bf16 %v1716, %v1715
      %v1733 = vpack.c.bf16 %v1718, %v1717
      %v1734 = vpack.c.bf16 %v1720, %v1719
      %v1735 = vpack.c.bf16 %v1722, %v1721
      %v1736 = vpack.c.bf16 %v1724, %v1723
      %v1737 = vpack.c.bf16 %v1726, %v1725
      %v1738 = vpack.c.bf16 %v1728, %v1727
      %1739 = vmatprep.subr.bf16.mxu0 0
      %1740 = vmatpush1.bf16.msra.mxu0 %v1738
      %1741 = vmatprep.subr.bf16.mxu0 0
      %1742 = vmatpush1.bf16.msra.mxu0 %v1737
      %1743 = vmatprep.subr.bf16.mxu0 0
      %1744 = vmatpush1.bf16.msra.mxu0 %v1736
      %1745 = vmatprep.subr.bf16.mxu0 0
      %1746 = vmatpush1.bf16.msra.mxu0 %v1735
      %1747 = vmatprep.subr.bf16.mxu0 0
      %1748 = vmatpush1.bf16.msra.mxu0 %v1734
      %1749 = vmatprep.subr.bf16.mxu0 0
      %1750 = vmatpush1.bf16.msra.mxu0 %v1733
      %1751 = vmatprep.subr.bf16.mxu0 0
      %1752 = vmatpush1.bf16.msra.mxu0 %v1732
      %1753 = vmatprep.subr.bf16.mxu0 0
      %1754 = vmatpush1.bf16.msra.mxu0 %v1731
      %1755 = vmatprep.subr.bf16.mxu0 0
      %1756 = vmatpush2.bf16.msra.mxu0 0
      %1757 = vmatprep.subr.bf16.mxu0 0
      %1758 = vmatpush2.bf16.msra.mxu0 0
      %1759 = vmatprep.subr.bf16.mxu0 0
      %1760 = vmatpush2.bf16.msra.mxu0 0
      %1761 = vmatprep.subr.bf16.mxu0 0
      %1762 = vmatpush2.bf16.msra.mxu0 0
      %1763 = vmatprep.subr.bf16.mxu0 0
      %1764 = vmatpush2.bf16.msra.mxu0 0
      %1765 = vmatprep.subr.bf16.mxu0 0
      %1766 = vmatpush2.bf16.msra.mxu0 0
      %1767 = vmatprep.subr.bf16.mxu0 0
      %1768 = vmatpush2.bf16.msra.mxu0 0
      %1769 = vmatprep.subr.bf16.mxu0 0
      %1770 = vmatpush2.bf16.msra.mxu0 0
      %1771 = vmatprep.mubr.bf16.mxu0 0
      %1772 = vmatmul.mubr.bf16.gmra.mxu0 %v1729
      %v1773 = vpop.f32.mrf.mxu0
      %v1774 = vadd.f32 0.0, %v1773
      %v1775 = vpop.f32.mrf.mxu0
      %v1776 = vpop.f32.mrf.mxu0
      %v1777 = vadd.f32 0.0, %v1776
      %v1778 = vpop.f32.mrf.mxu0
      %1779 = vmatprep.mubr.bf16.mxu0 0
      %1780 = vmatmul.mubr.bf16.gmra.mxu0 %v1730
      %v1781 = vpop.f32.mrf.mxu0
      %v1782 = vadd.f32 0.0, %v1781
      %v1783 = vpop.f32.mrf.mxu0
      %v1784 = vpop.f32.mrf.mxu0
      %v1785 = vpop.f32.mrf.mxu0
      %1786 = vdwg.mxu0
      %v1787 = vadd.f32 %v1501, %v1774
      %v1788 = vadd.f32 %v1502, %v1777
      %v1789 = vadd.f32 %v1503, %v1782
      %v1790 = vld [vmem:[%s13] sm:$0x1]
      %v1792 = vlaneseq
      %v1793 = vshrl.u32 %v1792, 7
      %v1794 = vsub.s32 0, %v1793
      %v1795 = vrot.slane %v1790, %v1794
      %v1797 = vadd.f32 %v1787, %v1795
      %v1798 = vadd.f32 %v1788, %v1795
      %v1799 = vadd.f32 %v1789, %v1795
      %s1800 = scalar_lea.vmem %s3, 1
      %v1801 = vld [vmem:[%s1800] sm:$0x1]
      %s1802 = scalar_lea.vmem %s4, 1
      %v1803 = vld [vmem:[%s1802] sm:$0x1]
      %v1804 = vsel %vm586, %v1797, 0.0
      %1805 = vadd.xlane.f32.xlu0 %v1804
      %v1806 = vpop.xlane.xlu0 %1805
      %v1807 = vsel %vm586, %v1798, 0.0
      %1808 = vadd.xlane.f32.xlu0 %v1807
      %v1809 = vpop.xlane.xlu0 %1808
      %v1810 = vsel %vm586, %v1799, 0.0
      %1811 = vadd.xlane.f32.xlu0 %v1810
      %v1812 = vpop.xlane.xlu0 %1811
      %v1813 = vmul.f32 %v1806, %v609
      %v1814 = vmul.f32 %v1809, %v609
      %v1815 = vmul.f32 %v1812, %v609
      %v1816 = vsub.f32 %v1797, %v1813
      %v1817 = vsub.f32 %v1798, %v1814
      %v1818 = vsub.f32 %v1799, %v1815
      %v1819 = vmul.f32 %v1816, %v1816
      %v1820 = vmul.f32 %v1817, %v1817
      %v1821 = vmul.f32 %v1818, %v1818
      %v1822 = vsel %vm586, %v1819, 0.0
      %1823 = vadd.xlane.f32.xlu0 %v1822
      %v1824 = vpop.xlane.xlu0 %1823
      %v1825 = vsel %vm586, %v1820, 0.0
      %1826 = vadd.xlane.f32.xlu0 %v1825
      %v1827 = vpop.xlane.xlu0 %1826
      %v1828 = vsel %vm586, %v1821, 0.0
      %1829 = vadd.xlane.f32.xlu0 %v1828
      %v1830 = vpop.xlane.xlu0 %1829
      %v1831 = vmul.f32 %v1824, %v609
      %v1832 = vmul.f32 %v1827, %v609
      %v1833 = vmul.f32 %v1830, %v609
      %v1834 = vadd.f32 %v1831, 1e-05
      %v1835 = vadd.f32 %v1832, 1e-05
      %v1836 = vadd.f32 %v1833, 1e-05
      %v1837 = vrsqrt.pop %v1834
      %v1838 = vrsqrt.pop %v1835
      %v1839 = vrsqrt.pop %v1836
      %v1840 = vmul.f32 %v1816, %v1837
      %v1841 = vmul.f32 %v1817, %v1838
      %v1842 = vmul.f32 %v1818, %v1839
      %v1844 = vlaneseq
      %v1845 = vshrl.u32 %v1844, 7
      %v1846 = vsub.s32 0, %v1845
      %v1847 = vrot.slane %v1801, %v1846
      %v1849 = vmul.f32 %v1840, %v1847
      %v1850 = vmul.f32 %v1841, %v1847
      %v1851 = vmul.f32 %v1842, %v1847
      %v1853 = vlaneseq
      %v1854 = vshrl.u32 %v1853, 7
      %v1855 = vsub.s32 0, %v1854
      %v1856 = vrot.slane %v1803, %v1855
      %v1858 = vadd.f32 %v1849, %v1856
      %v1859 = vadd.f32 %v1850, %v1856
      %v1860 = vadd.f32 %v1851, %v1856
      %s1861 = scalar_lea.vmem %s5, 32
      %v1862 = vld [vmem:[%s1861] sm:$0xff]
      %v1863 = vld [vmem:[%s1861 + $0x8] sm:$0xff]
      %v1864 = vld [vmem:[%s1861 + $0x10] sm:$0xff]
      %v1865 = vld [vmem:[%s1861 + $0x18] sm:$0xff]
      %v1866 = vpack.c.bf16 %v1859, %v1858
      %v1867 = vpack.c.bf16 %v1860, %v1860
      %v1868 = vpack.c.bf16 %v1863, %v1862
      %v1869 = vpack.c.bf16 %v1865, %v1864
      %v1871 = vsel %vm586, %v1866, 0
      %v1874 = vsel %vm586, %v1867, 0
      %1876 = vmatprep.subr.bf16.mxu0 0
      %1877 = vmatpush1.bf16.msra.mxu0 0
      %1878 = vmatprep.subr.bf16.mxu0 0
      %1879 = vmatpush1.bf16.msra.mxu0 0
      %1880 = vmatprep.subr.bf16.mxu0 0
      %1881 = vmatpush1.bf16.msra.mxu0 0
      %1882 = vmatprep.subr.bf16.mxu0 0
      %1883 = vmatpush1.bf16.msra.mxu0 0
      %1884 = vmatprep.subr.bf16.mxu0 0
      %1885 = vmatpush1.bf16.msra.mxu0 0
      %1886 = vmatprep.subr.bf16.mxu0 0
      %1887 = vmatpush1.bf16.msra.mxu0 0
      %1888 = vmatprep.subr.bf16.mxu0 0
      %1889 = vmatpush1.bf16.msra.mxu0 %v1869
      %1890 = vmatprep.subr.bf16.mxu0 0
      %1891 = vmatpush1.bf16.msra.mxu0 %v1868
      %1892 = vmatprep.subr.bf16.mxu0 0
      %1893 = vmatpush2.bf16.msra.mxu0 0
      %1894 = vmatprep.subr.bf16.mxu0 0
      %1895 = vmatpush2.bf16.msra.mxu0 0
      %1896 = vmatprep.subr.bf16.mxu0 0
      %1897 = vmatpush2.bf16.msra.mxu0 0
      %1898 = vmatprep.subr.bf16.mxu0 0
      %1899 = vmatpush2.bf16.msra.mxu0 0
      %1900 = vmatprep.subr.bf16.mxu0 0
      %1901 = vmatpush2.bf16.msra.mxu0 0
      %1902 = vmatprep.subr.bf16.mxu0 0
      %1903 = vmatpush2.bf16.msra.mxu0 0
      %1904 = vmatprep.subr.bf16.mxu0 0
      %1905 = vmatpush2.bf16.msra.mxu0 0
      %1906 = vmatprep.subr.bf16.mxu0 0
      %1907 = vmatpush2.bf16.msra.mxu0 0
      %1908 = vmatprep.mubr.bf16.mxu0 0
      %1909 = vmatmul.mubr.bf16.gmra.mxu0 %v1871
      %v1910 = vpop.f32.mrf.mxu0
      %v1911 = vadd.f32 0.0, %v1910
      %v1912 = vpop.f32.mrf.mxu0
      %v1913 = vpop.f32.mrf.mxu0
      %v1914 = vadd.f32 0.0, %v1913
      %v1915 = vpop.f32.mrf.mxu0
      %1916 = vmatprep.mubr.bf16.mxu0 0
      %1917 = vmatmul.mubr.bf16.gmra.mxu0 %v1874
      %v1918 = vpop.f32.mrf.mxu0
      %v1919 = vadd.f32 0.0, %v1918
      %v1920 = vpop.f32.mrf.mxu0
      %v1921 = vpop.f32.mrf.mxu0
      %v1922 = vpop.f32.mrf.mxu0
      %1923 = vdwg.mxu0
      %v1924 = vpack.c.bf16 %v1914, %v1911
      %v1925 = vpack.c.bf16 %v1919, %v1919
      %1928 = vrot.lane.b32.xlu0 %v1924, 96
      %v1929 = vpop.permute.xlu0 %1928
      %1930 = vrot.lane.b32.xlu0 %v1925, 96
      %v1931 = vpop.permute.xlu0 %1930
      %v1933 = vsel %vm728, %v1924, 0
      %v1936 = vsel %vm728, %v1925, 0
      %v1939 = vsel %vm728, %v1929, 0
      %v1942 = vsel %vm728, %v1931, 0
      %1944 = vmatprep.subr.bf16.mxu0 0
      %1945 = vmatpush1.bf16.xpose.msra.mxu0 0
      %1946 = vmatprep.subr.bf16.mxu0 0
      %1947 = vmatpush1.bf16.xpose.msra.mxu0 0
      %1948 = vmatprep.subr.bf16.mxu0 0
      %1949 = vmatpush1.bf16.xpose.msra.mxu0 0
      %1950 = vmatprep.subr.bf16.mxu0 0
      %1951 = vmatpush1.bf16.xpose.msra.mxu0 0
      %1952 = vmatprep.subr.bf16.mxu0 0
      %1953 = vmatpush1.bf16.xpose.msra.mxu0 0
      %1954 = vmatprep.subr.bf16.mxu0 0
      %1955 = vmatpush1.bf16.xpose.msra.mxu0 0
      %1956 = vmatprep.subr.bf16.mxu0 0
      %1957 = vmatpush1.bf16.xpose.msra.mxu0 %v1942
      %1958 = vmatprep.subr.bf16.mxu0 0
      %1959 = vmatpush1.bf16.xpose.msra.mxu0 %v1939
      %1960 = vmatprep.subr.bf16.mxu0 0
      %1961 = vmatpush2.bf16.xpose.msra.mxu0 0
      %1962 = vmatprep.subr.bf16.mxu0 0
      %1963 = vmatpush2.bf16.xpose.msra.mxu0 0
      %1964 = vmatprep.subr.bf16.mxu0 0
      %1965 = vmatpush2.bf16.xpose.msra.mxu0 0
      %1966 = vmatprep.subr.bf16.mxu0 0
      %1967 = vmatpush2.bf16.xpose.msra.mxu0 0
      %1968 = vmatprep.subr.bf16.mxu0 0
      %1969 = vmatpush2.bf16.xpose.msra.mxu0 0
      %1970 = vmatprep.subr.bf16.mxu0 0
      %1971 = vmatpush2.bf16.xpose.msra.mxu0 0
      %1972 = vmatprep.subr.bf16.mxu0 0
      %1973 = vmatpush2.bf16.xpose.msra.mxu0 0
      %1974 = vmatprep.subr.bf16.mxu0 0
      %1975 = vmatpush2.bf16.xpose.msra.mxu0 0
      %1976 = vmatprep.mubr.bf16.mxu0 0
      %1977 = vmatmul.mubr.bf16.gmra.mxu0 %v1933
      %v1978 = vpop.f32.mrf.mxu0
      %v1979 = vadd.f32 %v597, %v1978
      %v1980 = vpop.f32.mrf.mxu0
      %v1981 = vpop.f32.mrf.mxu0
      %v1982 = vadd.f32 %v597, %v1981
      %v1983 = vpop.f32.mrf.mxu0
      %1984 = vmatprep.mubr.bf16.mxu0 0
      %1985 = vmatmul.mubr.bf16.gmra.mxu0 %v1936
      %v1986 = vpop.f32.mrf.mxu0
      %v1987 = vadd.f32 %v597, %v1986
      %v1988 = vpop.f32.mrf.mxu0
      %v1989 = vpop.f32.mrf.mxu0
      %v1990 = vpop.f32.mrf.mxu0
      %1991 = vdwg.mxu0
      %v1992 = vsel %vm789, %v1979, -inf
      %1993 = vmax.xlane.f32.xlu0 %v1992
      %v1994 = vpop.xlane.xlu0 %1993
      %v1995 = vsel %vm789, %v1982, -inf
      %1996 = vmax.xlane.f32.xlu0 %v1995
      %v1997 = vpop.xlane.xlu0 %1996
      %v1998 = vsel %vm789, %v1987, -inf
      %1999 = vmax.xlane.f32.xlu0 %v1998
      %v2000 = vpop.xlane.xlu0 %1999
      %v2001 = vsub.f32 %v1979, %v1994
      %v2002 = vsub.f32 %v1982, %v1997
      %v2003 = vsub.f32 %v1987, %v2000
      %v2004 = vmul.f32 %v2001, 1.442695
      %v2005 = vpow.pop %v2004
      %v2006 = vmul.f32 %v2002, 1.442695
      %v2007 = vpow.pop %v2006
      %v2008 = vmul.f32 %v2003, 1.442695
      %v2009 = vpow.pop %v2008
      %v2010 = vsel %vm789, %v2005, 0.0
      %2011 = vadd.xlane.f32.xlu0 %v2010
      %v2012 = vpop.xlane.xlu0 %2011
      %v2013 = vsel %vm789, %v2007, 0.0
      %2014 = vadd.xlane.f32.xlu0 %v2013
      %v2015 = vpop.xlane.xlu0 %2014
      %v2016 = vsel %vm789, %v2009, 0.0
      %2017 = vadd.xlane.f32.xlu0 %v2016
      %v2018 = vpop.xlane.xlu0 %2017
      %v2019 = vrcp.pop %v2012
      %v2020 = vrcp.pop %v2015
      %v2021 = vrcp.pop %v2018
      %v2022 = vmul.f32 %v2005, %v2019
      %v2023 = vmul.f32 %v2007, %v2020
      %v2024 = vmul.f32 %v2009, %v2021
      %v2025 = vpack.c.bf16 %v2023, %v2022
      %v2026 = vpack.c.bf16 %v2024, %v2024
      %2027 = vrot.lane.b32.xlu0 %v1924, 64
      %v2028 = vpop.permute.xlu0 %2027
      %2029 = vrot.lane.b32.xlu0 %v1925, 64
      %v2030 = vpop.permute.xlu0 %2029
      %v2033 = vsel %vm789, %v2025, 0
      %v2036 = vsel %vm789, %v2026, 0
      %v2039 = vsel %vm836, %v2030, 0
      %2041 = vmatprep.subr.bf16.mxu0 0
      %2042 = vmatpush1.bf16.msra.mxu0 0
      %2043 = vmatprep.subr.bf16.mxu0 0
      %2044 = vmatpush1.bf16.msra.mxu0 0
      %2045 = vmatprep.subr.bf16.mxu0 0
      %2046 = vmatpush1.bf16.msra.mxu0 0
      %2047 = vmatprep.subr.bf16.mxu0 0
      %2048 = vmatpush1.bf16.msra.mxu0 0
      %2049 = vmatprep.subr.bf16.mxu0 0
      %2050 = vmatpush1.bf16.msra.mxu0 0
      %2051 = vmatprep.subr.bf16.mxu0 0
      %2052 = vmatpush1.bf16.msra.mxu0 0
      %2053 = vmatprep.subr.bf16.mxu0 0
      %2054 = vmatpush1.bf16.msra.mxu0 %v2039
      %2055 = vmatprep.subr.bf16.mxu0 0
      %2056 = vmatpush1.bf16.msra.mxu0 %v2028
      %2057 = vmatprep.subr.bf16.mxu0 0
      %2058 = vmatpush2.bf16.msra.mxu0 0
      %2059 = vmatprep.subr.bf16.mxu0 0
      %2060 = vmatpush2.bf16.msra.mxu0 0
      %2061 = vmatprep.subr.bf16.mxu0 0
      %2062 = vmatpush2.bf16.msra.mxu0 0
      %2063 = vmatprep.subr.bf16.mxu0 0
      %2064 = vmatpush2.bf16.msra.mxu0 0
      %2065 = vmatprep.subr.bf16.mxu0 0
      %2066 = vmatpush2.bf16.msra.mxu0 0
      %2067 = vmatprep.subr.bf16.mxu0 0
      %2068 = vmatpush2.bf16.msra.mxu0 0
      %2069 = vmatprep.subr.bf16.mxu0 0
      %2070 = vmatpush2.bf16.msra.mxu0 0
      %2071 = vmatprep.subr.bf16.mxu0 0
      %2072 = vmatpush2.bf16.msra.mxu0 0
      %2073 = vmatprep.mubr.bf16.mxu0 0
      %2074 = vmatmul.mubr.bf16.gmra.mxu0 %v2033
      %v2075 = vpop.f32.mrf.mxu0
      %v2076 = vadd.f32 0.0, %v2075
      %v2077 = vpop.f32.mrf.mxu0
      %v2078 = vpop.f32.mrf.mxu0
      %v2079 = vadd.f32 0.0, %v2078
      %v2080 = vpop.f32.mrf.mxu0
      %2081 = vmatprep.mubr.bf16.mxu0 0
      %2082 = vmatmul.mubr.bf16.gmra.mxu0 %v2036
      %v2083 = vpop.f32.mrf.mxu0
      %v2084 = vadd.f32 0.0, %v2083
      %v2085 = vpop.f32.mrf.mxu0
      %v2086 = vpop.f32.mrf.mxu0
      %v2087 = vpop.f32.mrf.mxu0
      %2088 = vdwg.mxu0
      %2089 = vrot.lane.b32.xlu0 %v1924, 120
      %v2090 = vpop.permute.xlu0 %2089
      %2091 = vrot.lane.b32.xlu0 %v1925, 120
      %v2092 = vpop.permute.xlu0 %2091
      %2093 = vrot.lane.b32.xlu0 %v1924, 88
      %v2094 = vpop.permute.xlu0 %2093
      %2095 = vrot.lane.b32.xlu0 %v1925, 88
      %v2096 = vpop.permute.xlu0 %2095
      %v2098 = vsel %vm728, %v2090, 0
      %v2101 = vsel %vm728, %v2092, 0
      %v2104 = vsel %vm728, %v2094, 0
      %v2107 = vsel %vm728, %v2096, 0
      %2109 = vmatprep.subr.bf16.mxu0 0
      %2110 = vmatpush1.bf16.xpose.msra.mxu0 0
      %2111 = vmatprep.subr.bf16.mxu0 0
      %2112 = vmatpush1.bf16.xpose.msra.mxu0 0
      %2113 = vmatprep.subr.bf16.mxu0 0
      %2114 = vmatpush1.bf16.xpose.msra.mxu0 0
      %2115 = vmatprep.subr.bf16.mxu0 0
      %2116 = vmatpush1.bf16.xpose.msra.mxu0 0
      %2117 = vmatprep.subr.bf16.mxu0 0
      %2118 = vmatpush1.bf16.xpose.msra.mxu0 0
      %2119 = vmatprep.subr.bf16.mxu0 0
      %2120 = vmatpush1.bf16.xpose.msra.mxu0 0
      %2121 = vmatprep.subr.bf16.mxu0 0
      %2122 = vmatpush1.bf16.xpose.msra.mxu0 %v2107
      %2123 = vmatprep.subr.bf16.mxu0 0
      %2124 = vmatpush1.bf16.xpose.msra.mxu0 %v2104
      %2125 = vmatprep.subr.bf16.mxu0 0
      %2126 = vmatpush2.bf16.xpose.msra.mxu0 0
      %2127 = vmatprep.subr.bf16.mxu0 0
      %2128 = vmatpush2.bf16.xpose.msra.mxu0 0
      %2129 = vmatprep.subr.bf16.mxu0 0
      %2130 = vmatpush2.bf16.xpose.msra.mxu0 0
      %2131 = vmatprep.subr.bf16.mxu0 0
      %2132 = vmatpush2.bf16.xpose.msra.mxu0 0
      %2133 = vmatprep.subr.bf16.mxu0 0
      %2134 = vmatpush2.bf16.xpose.msra.mxu0 0
      %2135 = vmatprep.subr.bf16.mxu0 0
      %2136 = vmatpush2.bf16.xpose.msra.mxu0 0
      %2137 = vmatprep.subr.bf16.mxu0 0
      %2138 = vmatpush2.bf16.xpose.msra.mxu0 0
      %2139 = vmatprep.subr.bf16.mxu0 0
      %2140 = vmatpush2.bf16.xpose.msra.mxu0 0
      %2141 = vmatprep.mubr.bf16.mxu0 0
      %2142 = vmatmul.mubr.bf16.gmra.mxu0 %v2098
      %v2143 = vpop.f32.mrf.mxu0
      %v2144 = vadd.f32 %v597, %v2143
      %v2145 = vpop.f32.mrf.mxu0
      %v2146 = vpop.f32.mrf.mxu0
      %v2147 = vadd.f32 %v597, %v2146
      %v2148 = vpop.f32.mrf.mxu0
      %2149 = vmatprep.mubr.bf16.mxu0 0
      %2150 = vmatmul.mubr.bf16.gmra.mxu0 %v2101
      %v2151 = vpop.f32.mrf.mxu0
      %v2152 = vadd.f32 %v597, %v2151
      %v2153 = vpop.f32.mrf.mxu0
      %v2154 = vpop.f32.mrf.mxu0
      %v2155 = vpop.f32.mrf.mxu0
      %2156 = vdwg.mxu0
      %v2157 = vsel %vm789, %v2144, -inf
      %2158 = vmax.xlane.f32.xlu0 %v2157
      %v2159 = vpop.xlane.xlu0 %2158
      %v2160 = vsel %vm789, %v2147, -inf
      %2161 = vmax.xlane.f32.xlu0 %v2160
      %v2162 = vpop.xlane.xlu0 %2161
      %v2163 = vsel %vm789, %v2152, -inf
      %2164 = vmax.xlane.f32.xlu0 %v2163
      %v2165 = vpop.xlane.xlu0 %2164
      %v2166 = vsub.f32 %v2144, %v2159
      %v2167 = vsub.f32 %v2147, %v2162
      %v2168 = vsub.f32 %v2152, %v2165
      %v2169 = vmul.f32 %v2166, 1.442695
      %v2170 = vpow.pop %v2169
      %v2171 = vmul.f32 %v2167, 1.442695
      %v2172 = vpow.pop %v2171
      %v2173 = vmul.f32 %v2168, 1.442695
      %v2174 = vpow.pop %v2173
      %v2175 = vsel %vm789, %v2170, 0.0
      %2176 = vadd.xlane.f32.xlu0 %v2175
      %v2177 = vpop.xlane.xlu0 %2176
      %v2178 = vsel %vm789, %v2172, 0.0
      %2179 = vadd.xlane.f32.xlu0 %v2178
      %v2180 = vpop.xlane.xlu0 %2179
      %v2181 = vsel %vm789, %v2174, 0.0
      %2182 = vadd.xlane.f32.xlu0 %v2181
      %v2183 = vpop.xlane.xlu0 %2182
      %v2184 = vrcp.pop %v2177
      %v2185 = vrcp.pop %v2180
      %v2186 = vrcp.pop %v2183
      %v2187 = vmul.f32 %v2170, %v2184
      %v2188 = vmul.f32 %v2172, %v2185
      %v2189 = vmul.f32 %v2174, %v2186
      %v2190 = vpack.c.bf16 %v2188, %v2187
      %v2191 = vpack.c.bf16 %v2189, %v2189
      %2192 = vrot.lane.b32.xlu0 %v1924, 56
      %v2193 = vpop.permute.xlu0 %2192
      %2194 = vrot.lane.b32.xlu0 %v1925, 56
      %v2195 = vpop.permute.xlu0 %2194
      %v2198 = vsel %vm789, %v2190, 0
      %v2201 = vsel %vm789, %v2191, 0
      %v2204 = vsel %vm836, %v2195, 0
      %2206 = vmatprep.subr.bf16.mxu0 0
      %2207 = vmatpush1.bf16.msra.mxu0 0
      %2208 = vmatprep.subr.bf16.mxu0 0
      %2209 = vmatpush1.bf16.msra.mxu0 0
      %2210 = vmatprep.subr.bf16.mxu0 0
      %2211 = vmatpush1.bf16.msra.mxu0 0
      %2212 = vmatprep.subr.bf16.mxu0 0
      %2213 = vmatpush1.bf16.msra.mxu0 0
      %2214 = vmatprep.subr.bf16.mxu0 0
      %2215 = vmatpush1.bf16.msra.mxu0 0
      %2216 = vmatprep.subr.bf16.mxu0 0
      %2217 = vmatpush1.bf16.msra.mxu0 0
      %2218 = vmatprep.subr.bf16.mxu0 0
      %2219 = vmatpush1.bf16.msra.mxu0 %v2204
      %2220 = vmatprep.subr.bf16.mxu0 0
      %2221 = vmatpush1.bf16.msra.mxu0 %v2193
      %2222 = vmatprep.subr.bf16.mxu0 0
      %2223 = vmatpush2.bf16.msra.mxu0 0
      %2224 = vmatprep.subr.bf16.mxu0 0
      %2225 = vmatpush2.bf16.msra.mxu0 0
      %2226 = vmatprep.subr.bf16.mxu0 0
      %2227 = vmatpush2.bf16.msra.mxu0 0
      %2228 = vmatprep.subr.bf16.mxu0 0
      %2229 = vmatpush2.bf16.msra.mxu0 0
      %2230 = vmatprep.subr.bf16.mxu0 0
      %2231 = vmatpush2.bf16.msra.mxu0 0
      %2232 = vmatprep.subr.bf16.mxu0 0
      %2233 = vmatpush2.bf16.msra.mxu0 0
      %2234 = vmatprep.subr.bf16.mxu0 0
      %2235 = vmatpush2.bf16.msra.mxu0 0
      %2236 = vmatprep.subr.bf16.mxu0 0
      %2237 = vmatpush2.bf16.msra.mxu0 0
      %2238 = vmatprep.mubr.bf16.mxu0 0
      %2239 = vmatmul.mubr.bf16.gmra.mxu0 %v2198
      %v2240 = vpop.f32.mrf.mxu0
      %v2241 = vadd.f32 0.0, %v2240
      %v2242 = vpop.f32.mrf.mxu0
      %v2243 = vpop.f32.mrf.mxu0
      %v2244 = vadd.f32 0.0, %v2243
      %v2245 = vpop.f32.mrf.mxu0
      %2246 = vmatprep.mubr.bf16.mxu0 0
      %2247 = vmatmul.mubr.bf16.gmra.mxu0 %v2201
      %v2248 = vpop.f32.mrf.mxu0
      %v2249 = vadd.f32 0.0, %v2248
      %v2250 = vpop.f32.mrf.mxu0
      %v2251 = vpop.f32.mrf.mxu0
      %v2252 = vpop.f32.mrf.mxu0
      %2253 = vdwg.mxu0
      %2254 = vrot.lane.b32.xlu0 %v1924, 112
      %v2255 = vpop.permute.xlu0 %2254
      %2256 = vrot.lane.b32.xlu0 %v1925, 112
      %v2257 = vpop.permute.xlu0 %2256
      %2258 = vrot.lane.b32.xlu0 %v1924, 80
      %v2259 = vpop.permute.xlu0 %2258
      %2260 = vrot.lane.b32.xlu0 %v1925, 80
      %v2261 = vpop.permute.xlu0 %2260
      %v2263 = vsel %vm728, %v2255, 0
      %v2266 = vsel %vm728, %v2257, 0
      %v2269 = vsel %vm728, %v2259, 0
      %v2272 = vsel %vm728, %v2261, 0
      %2274 = vmatprep.subr.bf16.mxu0 0
      %2275 = vmatpush1.bf16.xpose.msra.mxu0 0
      %2276 = vmatprep.subr.bf16.mxu0 0
      %2277 = vmatpush1.bf16.xpose.msra.mxu0 0
      %2278 = vmatprep.subr.bf16.mxu0 0
      %2279 = vmatpush1.bf16.xpose.msra.mxu0 0
      %2280 = vmatprep.subr.bf16.mxu0 0
      %2281 = vmatpush1.bf16.xpose.msra.mxu0 0
      %2282 = vmatprep.subr.bf16.mxu0 0
      %2283 = vmatpush1.bf16.xpose.msra.mxu0 0
      %2284 = vmatprep.subr.bf16.mxu0 0
      %2285 = vmatpush1.bf16.xpose.msra.mxu0 0
      %2286 = vmatprep.subr.bf16.mxu0 0
      %2287 = vmatpush1.bf16.xpose.msra.mxu0 %v2272
      %2288 = vmatprep.subr.bf16.mxu0 0
      %2289 = vmatpush1.bf16.xpose.msra.mxu0 %v2269
      %2290 = vmatprep.subr.bf16.mxu0 0
      %2291 = vmatpush2.bf16.xpose.msra.mxu0 0
      %2292 = vmatprep.subr.bf16.mxu0 0
      %2293 = vmatpush2.bf16.xpose.msra.mxu0 0
      %2294 = vmatprep.subr.bf16.mxu0 0
      %2295 = vmatpush2.bf16.xpose.msra.mxu0 0
      %2296 = vmatprep.subr.bf16.mxu0 0
      %2297 = vmatpush2.bf16.xpose.msra.mxu0 0
      %2298 = vmatprep.subr.bf16.mxu0 0
      %2299 = vmatpush2.bf16.xpose.msra.mxu0 0
      %2300 = vmatprep.subr.bf16.mxu0 0
      %2301 = vmatpush2.bf16.xpose.msra.mxu0 0
      %2302 = vmatprep.subr.bf16.mxu0 0
      %2303 = vmatpush2.bf16.xpose.msra.mxu0 0
      %2304 = vmatprep.subr.bf16.mxu0 0
      %2305 = vmatpush2.bf16.xpose.msra.mxu0 0
      %2306 = vmatprep.mubr.bf16.mxu0 0
      %2307 = vmatmul.mubr.bf16.gmra.mxu0 %v2263
      %v2308 = vpop.f32.mrf.mxu0
      %v2309 = vadd.f32 %v597, %v2308
      %v2310 = vpop.f32.mrf.mxu0
      %v2311 = vpop.f32.mrf.mxu0
      %v2312 = vadd.f32 %v597, %v2311
      %v2313 = vpop.f32.mrf.mxu0
      %2314 = vmatprep.mubr.bf16.mxu0 0
      %2315 = vmatmul.mubr.bf16.gmra.mxu0 %v2266
      %v2316 = vpop.f32.mrf.mxu0
      %v2317 = vadd.f32 %v597, %v2316
      %v2318 = vpop.f32.mrf.mxu0
      %v2319 = vpop.f32.mrf.mxu0
      %v2320 = vpop.f32.mrf.mxu0
      %2321 = vdwg.mxu0
      %v2322 = vsel %vm789, %v2309, -inf
      %2323 = vmax.xlane.f32.xlu0 %v2322
      %v2324 = vpop.xlane.xlu0 %2323
      %v2325 = vsel %vm789, %v2312, -inf
      %2326 = vmax.xlane.f32.xlu0 %v2325
      %v2327 = vpop.xlane.xlu0 %2326
      %v2328 = vsel %vm789, %v2317, -inf
      %2329 = vmax.xlane.f32.xlu0 %v2328
      %v2330 = vpop.xlane.xlu0 %2329
      %v2331 = vsub.f32 %v2309, %v2324
      %v2332 = vsub.f32 %v2312, %v2327
      %v2333 = vsub.f32 %v2317, %v2330
      %v2334 = vmul.f32 %v2331, 1.442695
      %v2335 = vpow.pop %v2334
      %v2336 = vmul.f32 %v2332, 1.442695
      %v2337 = vpow.pop %v2336
      %v2338 = vmul.f32 %v2333, 1.442695
      %v2339 = vpow.pop %v2338
      %v2340 = vsel %vm789, %v2335, 0.0
      %2341 = vadd.xlane.f32.xlu0 %v2340
      %v2342 = vpop.xlane.xlu0 %2341
      %v2343 = vsel %vm789, %v2337, 0.0
      %2344 = vadd.xlane.f32.xlu0 %v2343
      %v2345 = vpop.xlane.xlu0 %2344
      %v2346 = vsel %vm789, %v2339, 0.0
      %2347 = vadd.xlane.f32.xlu0 %v2346
      %v2348 = vpop.xlane.xlu0 %2347
      %v2349 = vrcp.pop %v2342
      %v2350 = vrcp.pop %v2345
      %v2351 = vrcp.pop %v2348
      %v2352 = vmul.f32 %v2335, %v2349
      %v2353 = vmul.f32 %v2337, %v2350
      %v2354 = vmul.f32 %v2339, %v2351
      %v2355 = vpack.c.bf16 %v2353, %v2352
      %v2356 = vpack.c.bf16 %v2354, %v2354
      %2357 = vrot.lane.b32.xlu0 %v1924, 48
      %v2358 = vpop.permute.xlu0 %2357
      %2359 = vrot.lane.b32.xlu0 %v1925, 48
      %v2360 = vpop.permute.xlu0 %2359
      %v2363 = vsel %vm789, %v2355, 0
      %v2366 = vsel %vm789, %v2356, 0
      %v2369 = vsel %vm836, %v2360, 0
      %2371 = vmatprep.subr.bf16.mxu0 0
      %2372 = vmatpush1.bf16.msra.mxu0 0
      %2373 = vmatprep.subr.bf16.mxu0 0
      %2374 = vmatpush1.bf16.msra.mxu0 0
      %2375 = vmatprep.subr.bf16.mxu0 0
      %2376 = vmatpush1.bf16.msra.mxu0 0
      %2377 = vmatprep.subr.bf16.mxu0 0
      %2378 = vmatpush1.bf16.msra.mxu0 0
      %2379 = vmatprep.subr.bf16.mxu0 0
      %2380 = vmatpush1.bf16.msra.mxu0 0
      %2381 = vmatprep.subr.bf16.mxu0 0
      %2382 = vmatpush1.bf16.msra.mxu0 0
      %2383 = vmatprep.subr.bf16.mxu0 0
      %2384 = vmatpush1.bf16.msra.mxu0 %v2369
      %2385 = vmatprep.subr.bf16.mxu0 0
      %2386 = vmatpush1.bf16.msra.mxu0 %v2358
      %2387 = vmatprep.subr.bf16.mxu0 0
      %2388 = vmatpush2.bf16.msra.mxu0 0
      %2389 = vmatprep.subr.bf16.mxu0 0
      %2390 = vmatpush2.bf16.msra.mxu0 0
      %2391 = vmatprep.subr.bf16.mxu0 0
      %2392 = vmatpush2.bf16.msra.mxu0 0
      %2393 = vmatprep.subr.bf16.mxu0 0
      %2394 = vmatpush2.bf16.msra.mxu0 0
      %2395 = vmatprep.subr.bf16.mxu0 0
      %2396 = vmatpush2.bf16.msra.mxu0 0
      %2397 = vmatprep.subr.bf16.mxu0 0
      %2398 = vmatpush2.bf16.msra.mxu0 0
      %2399 = vmatprep.subr.bf16.mxu0 0
      %2400 = vmatpush2.bf16.msra.mxu0 0
      %2401 = vmatprep.subr.bf16.mxu0 0
      %2402 = vmatpush2.bf16.msra.mxu0 0
      %2403 = vmatprep.mubr.bf16.mxu0 0
      %2404 = vmatmul.mubr.bf16.gmra.mxu0 %v2363
      %v2405 = vpop.f32.mrf.mxu0
      %v2406 = vadd.f32 0.0, %v2405
      %v2407 = vpop.f32.mrf.mxu0
      %v2408 = vpop.f32.mrf.mxu0
      %v2409 = vadd.f32 0.0, %v2408
      %v2410 = vpop.f32.mrf.mxu0
      %2411 = vmatprep.mubr.bf16.mxu0 0
      %2412 = vmatmul.mubr.bf16.gmra.mxu0 %v2366
      %v2413 = vpop.f32.mrf.mxu0
      %v2414 = vadd.f32 0.0, %v2413
      %v2415 = vpop.f32.mrf.mxu0
      %v2416 = vpop.f32.mrf.mxu0
      %v2417 = vpop.f32.mrf.mxu0
      %2418 = vdwg.mxu0
      %2419 = vrot.lane.b32.xlu0 %v1924, 104
      %v2420 = vpop.permute.xlu0 %2419
      %2421 = vrot.lane.b32.xlu0 %v1925, 104
      %v2422 = vpop.permute.xlu0 %2421
      %2423 = vrot.lane.b32.xlu0 %v1924, 72
      %v2424 = vpop.permute.xlu0 %2423
      %2425 = vrot.lane.b32.xlu0 %v1925, 72
      %v2426 = vpop.permute.xlu0 %2425
      %v2428 = vsel %vm728, %v2420, 0
      %v2431 = vsel %vm728, %v2422, 0
      %v2434 = vsel %vm728, %v2424, 0
      %v2437 = vsel %vm728, %v2426, 0
      %2439 = vmatprep.subr.bf16.mxu0 0
      %2440 = vmatpush1.bf16.xpose.msra.mxu0 0
      %2441 = vmatprep.subr.bf16.mxu0 0
      %2442 = vmatpush1.bf16.xpose.msra.mxu0 0
      %2443 = vmatprep.subr.bf16.mxu0 0
      %2444 = vmatpush1.bf16.xpose.msra.mxu0 0
      %2445 = vmatprep.subr.bf16.mxu0 0
      %2446 = vmatpush1.bf16.xpose.msra.mxu0 0
      %2447 = vmatprep.subr.bf16.mxu0 0
      %2448 = vmatpush1.bf16.xpose.msra.mxu0 0
      %2449 = vmatprep.subr.bf16.mxu0 0
      %2450 = vmatpush1.bf16.xpose.msra.mxu0 0
      %2451 = vmatprep.subr.bf16.mxu0 0
      %2452 = vmatpush1.bf16.xpose.msra.mxu0 %v2437
      %2453 = vmatprep.subr.bf16.mxu0 0
      %2454 = vmatpush1.bf16.xpose.msra.mxu0 %v2434
      %2455 = vmatprep.subr.bf16.mxu0 0
      %2456 = vmatpush2.bf16.xpose.msra.mxu0 0
      %2457 = vmatprep.subr.bf16.mxu0 0
      %2458 = vmatpush2.bf16.xpose.msra.mxu0 0
      %2459 = vmatprep.subr.bf16.mxu0 0
      %2460 = vmatpush2.bf16.xpose.msra.mxu0 0
      %2461 = vmatprep.subr.bf16.mxu0 0
      %2462 = vmatpush2.bf16.xpose.msra.mxu0 0
      %2463 = vmatprep.subr.bf16.mxu0 0
      %2464 = vmatpush2.bf16.xpose.msra.mxu0 0
      %2465 = vmatprep.subr.bf16.mxu0 0
      %2466 = vmatpush2.bf16.xpose.msra.mxu0 0
      %2467 = vmatprep.subr.bf16.mxu0 0
      %2468 = vmatpush2.bf16.xpose.msra.mxu0 0
      %2469 = vmatprep.subr.bf16.mxu0 0
      %2470 = vmatpush2.bf16.xpose.msra.mxu0 0
      %2471 = vmatprep.mubr.bf16.mxu0 0
      %2472 = vmatmul.mubr.bf16.gmra.mxu0 %v2428
      %v2473 = vpop.f32.mrf.mxu0
      %v2474 = vadd.f32 %v597, %v2473
      %v2475 = vpop.f32.mrf.mxu0
      %v2476 = vpop.f32.mrf.mxu0
      %v2477 = vadd.f32 %v597, %v2476
      %v2478 = vpop.f32.mrf.mxu0
      %2479 = vmatprep.mubr.bf16.mxu0 0
      %2480 = vmatmul.mubr.bf16.gmra.mxu0 %v2431
      %v2481 = vpop.f32.mrf.mxu0
      %v2482 = vadd.f32 %v597, %v2481
      %v2483 = vpop.f32.mrf.mxu0
      %v2484 = vpop.f32.mrf.mxu0
      %v2485 = vpop.f32.mrf.mxu0
      %2486 = vdwg.mxu0
      %v2487 = vsel %vm789, %v2474, -inf
      %2488 = vmax.xlane.f32.xlu0 %v2487
      %v2489 = vpop.xlane.xlu0 %2488
      %v2490 = vsel %vm789, %v2477, -inf
      %2491 = vmax.xlane.f32.xlu0 %v2490
      %v2492 = vpop.xlane.xlu0 %2491
      %v2493 = vsel %vm789, %v2482, -inf
      %2494 = vmax.xlane.f32.xlu0 %v2493
      %v2495 = vpop.xlane.xlu0 %2494
      %v2496 = vsub.f32 %v2474, %v2489
      %v2497 = vsub.f32 %v2477, %v2492
      %v2498 = vsub.f32 %v2482, %v2495
      %v2499 = vmul.f32 %v2496, 1.442695
      %v2500 = vpow.pop %v2499
      %v2501 = vmul.f32 %v2497, 1.442695
      %v2502 = vpow.pop %v2501
      %v2503 = vmul.f32 %v2498, 1.442695
      %v2504 = vpow.pop %v2503
      %v2505 = vsel %vm789, %v2500, 0.0
      %2506 = vadd.xlane.f32.xlu0 %v2505
      %v2507 = vpop.xlane.xlu0 %2506
      %v2508 = vsel %vm789, %v2502, 0.0
      %2509 = vadd.xlane.f32.xlu0 %v2508
      %v2510 = vpop.xlane.xlu0 %2509
      %v2511 = vsel %vm789, %v2504, 0.0
      %2512 = vadd.xlane.f32.xlu0 %v2511
      %v2513 = vpop.xlane.xlu0 %2512
      %v2514 = vrcp.pop %v2507
      %v2515 = vrcp.pop %v2510
      %v2516 = vrcp.pop %v2513
      %v2517 = vmul.f32 %v2500, %v2514
      %v2518 = vmul.f32 %v2502, %v2515
      %v2519 = vmul.f32 %v2504, %v2516
      %v2520 = vpack.c.bf16 %v2518, %v2517
      %v2521 = vpack.c.bf16 %v2519, %v2519
      %2522 = vrot.lane.b32.xlu0 %v1924, 40
      %v2523 = vpop.permute.xlu0 %2522
      %2524 = vrot.lane.b32.xlu0 %v1925, 40
      %v2525 = vpop.permute.xlu0 %2524
      %v2528 = vsel %vm789, %v2520, 0
      %v2531 = vsel %vm789, %v2521, 0
      %v2534 = vsel %vm836, %v2525, 0
      %2536 = vmatprep.subr.bf16.mxu0 0
      %2537 = vmatpush1.bf16.msra.mxu0 0
      %2538 = vmatprep.subr.bf16.mxu0 0
      %2539 = vmatpush1.bf16.msra.mxu0 0
      %2540 = vmatprep.subr.bf16.mxu0 0
      %2541 = vmatpush1.bf16.msra.mxu0 0
      %2542 = vmatprep.subr.bf16.mxu0 0
      %2543 = vmatpush1.bf16.msra.mxu0 0
      %2544 = vmatprep.subr.bf16.mxu0 0
      %2545 = vmatpush1.bf16.msra.mxu0 0
      %2546 = vmatprep.subr.bf16.mxu0 0
      %2547 = vmatpush1.bf16.msra.mxu0 0
      %2548 = vmatprep.subr.bf16.mxu0 0
      %2549 = vmatpush1.bf16.msra.mxu0 %v2534
      %2550 = vmatprep.subr.bf16.mxu0 0
      %2551 = vmatpush1.bf16.msra.mxu0 %v2523
      %2552 = vmatprep.subr.bf16.mxu0 0
      %2553 = vmatpush2.bf16.msra.mxu0 0
      %2554 = vmatprep.subr.bf16.mxu0 0
      %2555 = vmatpush2.bf16.msra.mxu0 0
      %2556 = vmatprep.subr.bf16.mxu0 0
      %2557 = vmatpush2.bf16.msra.mxu0 0
      %2558 = vmatprep.subr.bf16.mxu0 0
      %2559 = vmatpush2.bf16.msra.mxu0 0
      %2560 = vmatprep.subr.bf16.mxu0 0
      %2561 = vmatpush2.bf16.msra.mxu0 0
      %2562 = vmatprep.subr.bf16.mxu0 0
      %2563 = vmatpush2.bf16.msra.mxu0 0
      %2564 = vmatprep.subr.bf16.mxu0 0
      %2565 = vmatpush2.bf16.msra.mxu0 0
      %2566 = vmatprep.subr.bf16.mxu0 0
      %2567 = vmatpush2.bf16.msra.mxu0 0
      %2568 = vmatprep.mubr.bf16.mxu0 0
      %2569 = vmatmul.mubr.bf16.gmra.mxu0 %v2528
      %v2570 = vpop.f32.mrf.mxu0
      %v2571 = vadd.f32 0.0, %v2570
      %v2572 = vpop.f32.mrf.mxu0
      %v2573 = vpop.f32.mrf.mxu0
      %v2574 = vadd.f32 0.0, %v2573
      %v2575 = vpop.f32.mrf.mxu0
      %2576 = vmatprep.mubr.bf16.mxu0 0
      %2577 = vmatmul.mubr.bf16.gmra.mxu0 %v2531
      %v2578 = vpop.f32.mrf.mxu0
      %v2579 = vadd.f32 0.0, %v2578
      %v2580 = vpop.f32.mrf.mxu0
      %v2581 = vpop.f32.mrf.mxu0
      %v2582 = vpop.f32.mrf.mxu0
      %2583 = vdwg.mxu0
      %2587 = vrot.lane.b32.xlu0 %v2241, 8
      %v2588 = vpop.permute.xlu0 %2587
      %2589 = vrot.lane.b32.xlu0 %v2244, 8
      %v2590 = vpop.permute.xlu0 %2589
      %2591 = vrot.lane.b32.xlu0 %v2249, 8
      %v2592 = vpop.permute.xlu0 %2591
      %2599 = vrot.lane.b32.xlu0 %v2406, 16
      %v2600 = vpop.permute.xlu0 %2599
      %2601 = vrot.lane.b32.xlu0 %v2409, 16
      %v2602 = vpop.permute.xlu0 %2601
      %2603 = vrot.lane.b32.xlu0 %v2414, 16
      %v2604 = vpop.permute.xlu0 %2603
      %2611 = vrot.lane.b32.xlu0 %v2571, 24
      %v2612 = vpop.permute.xlu0 %2611
      %2613 = vrot.lane.b32.xlu0 %v2574, 24
      %v2614 = vpop.permute.xlu0 %2613
      %2615 = vrot.lane.b32.xlu0 %v2579, 24
      %v2616 = vpop.permute.xlu0 %2615
      %v2620 = vsel %vm728, %v2076, %v2588
      %v2621 = vsel %vm728, %v2079, %v2590
      %v2622 = vsel %vm728, %v2084, %v2592
      %v2623 = vsel %vm1422, %v2620, %v2600
      %v2624 = vsel %vm1422, %v2621, %v2602
      %v2625 = vsel %vm1422, %v2622, %v2604
      %v2626 = vsel %vm789, %v2623, %v2612
      %v2627 = vsel %vm789, %v2624, %v2614
      %v2628 = vsel %vm789, %v2625, %v2616
      %s2629 = scalar_lea.vmem %s6, 32
      %v2630 = vld [vmem:[%s2629] sm:$0xff]
      %v2631 = vld [vmem:[%s2629 + $0x8] sm:$0xff]
      %v2632 = vld [vmem:[%s2629 + $0x10] sm:$0xff]
      %v2633 = vld [vmem:[%s2629 + $0x18] sm:$0xff]
      %v2634 = vpack.c.bf16 %v2627, %v2626
      %v2635 = vpack.c.bf16 %v2628, %v2628
      %v2636 = vpack.c.bf16 %v2631, %v2630
      %v2637 = vpack.c.bf16 %v2633, %v2632
      %v2639 = vsel %vm586, %v2634, 0
      %v2642 = vsel %vm586, %v2635, 0
      %2644 = vmatprep.subr.bf16.mxu0 0
      %2645 = vmatpush1.bf16.msra.mxu0 0
      %2646 = vmatprep.subr.bf16.mxu0 0
      %2647 = vmatpush1.bf16.msra.mxu0 0
      %2648 = vmatprep.subr.bf16.mxu0 0
      %2649 = vmatpush1.bf16.msra.mxu0 0
      %2650 = vmatprep.subr.bf16.mxu0 0
      %2651 = vmatpush1.bf16.msra.mxu0 0
      %2652 = vmatprep.subr.bf16.mxu0 0
      %2653 = vmatpush1.bf16.msra.mxu0 0
      %2654 = vmatprep.subr.bf16.mxu0 0
      %2655 = vmatpush1.bf16.msra.mxu0 0
      %2656 = vmatprep.subr.bf16.mxu0 0
      %2657 = vmatpush1.bf16.msra.mxu0 %v2637
      %2658 = vmatprep.subr.bf16.mxu0 0
      %2659 = vmatpush1.bf16.msra.mxu0 %v2636
      %2660 = vmatprep.subr.bf16.mxu0 0
      %2661 = vmatpush2.bf16.msra.mxu0 0
      %2662 = vmatprep.subr.bf16.mxu0 0
      %2663 = vmatpush2.bf16.msra.mxu0 0
      %2664 = vmatprep.subr.bf16.mxu0 0
      %2665 = vmatpush2.bf16.msra.mxu0 0
      %2666 = vmatprep.subr.bf16.mxu0 0
      %2667 = vmatpush2.bf16.msra.mxu0 0
      %2668 = vmatprep.subr.bf16.mxu0 0
      %2669 = vmatpush2.bf16.msra.mxu0 0
      %2670 = vmatprep.subr.bf16.mxu0 0
      %2671 = vmatpush2.bf16.msra.mxu0 0
      %2672 = vmatprep.subr.bf16.mxu0 0
      %2673 = vmatpush2.bf16.msra.mxu0 0
      %2674 = vmatprep.subr.bf16.mxu0 0
      %2675 = vmatpush2.bf16.msra.mxu0 0
      %2676 = vmatprep.mubr.bf16.mxu0 0
      %2677 = vmatmul.mubr.bf16.gmra.mxu0 %v2639
      %v2678 = vpop.f32.mrf.mxu0
      %v2679 = vadd.f32 0.0, %v2678
      %v2680 = vpop.f32.mrf.mxu0
      %v2681 = vpop.f32.mrf.mxu0
      %v2682 = vadd.f32 0.0, %v2681
      %v2683 = vpop.f32.mrf.mxu0
      %2684 = vmatprep.mubr.bf16.mxu0 0
      %2685 = vmatmul.mubr.bf16.gmra.mxu0 %v2642
      %v2686 = vpop.f32.mrf.mxu0
      %v2687 = vadd.f32 0.0, %v2686
      %v2688 = vpop.f32.mrf.mxu0
      %v2689 = vpop.f32.mrf.mxu0
      %v2690 = vpop.f32.mrf.mxu0
      %2691 = vdwg.mxu0
      %v2692 = vadd.f32 %v1797, %v2679
      %v2693 = vadd.f32 %v1798, %v2682
      %v2694 = vadd.f32 %v1799, %v2687
      %s2695 = scalar_lea.vmem %s7, 1
      %v2696 = vld [vmem:[%s2695] sm:$0x1]
      %v2698 = vlaneseq
      %v2699 = vshrl.u32 %v2698, 7
      %v2700 = vsub.s32 0, %v2699
      %v2701 = vrot.slane %v2696, %v2700
      %v2703 = vadd.f32 %v2692, %v2701
      %v2704 = vadd.f32 %v2693, %v2701
      %v2705 = vadd.f32 %v2694, %v2701
      %s2706 = scalar_lea.vmem %s8, 1
      %v2707 = vld [vmem:[%s2706] sm:$0x1]
      %s2708 = scalar_lea.vmem %s9, 1
      %v2709 = vld [vmem:[%s2708] sm:$0x1]
      %v2710 = vsel %vm586, %v2703, 0.0
      %2711 = vadd.xlane.f32.xlu0 %v2710
      %v2712 = vpop.xlane.xlu0 %2711
      %v2713 = vsel %vm586, %v2704, 0.0
      %2714 = vadd.xlane.f32.xlu0 %v2713
      %v2715 = vpop.xlane.xlu0 %2714
      %v2716 = vsel %vm586, %v2705, 0.0
      %2717 = vadd.xlane.f32.xlu0 %v2716
      %v2718 = vpop.xlane.xlu0 %2717
      %v2719 = vmul.f32 %v2712, %v609
      %v2720 = vmul.f32 %v2715, %v609
      %v2721 = vmul.f32 %v2718, %v609
      %v2722 = vsub.f32 %v2703, %v2719
      %v2723 = vsub.f32 %v2704, %v2720
      %v2724 = vsub.f32 %v2705, %v2721
      %v2725 = vmul.f32 %v2722, %v2722
      %v2726 = vmul.f32 %v2723, %v2723
      %v2727 = vmul.f32 %v2724, %v2724
      %v2728 = vsel %vm586, %v2725, 0.0
      %2729 = vadd.xlane.f32.xlu0 %v2728
      %v2730 = vpop.xlane.xlu0 %2729
      %v2731 = vsel %vm586, %v2726, 0.0
      %2732 = vadd.xlane.f32.xlu0 %v2731
      %v2733 = vpop.xlane.xlu0 %2732
      %v2734 = vsel %vm586, %v2727, 0.0
      %2735 = vadd.xlane.f32.xlu0 %v2734
      %v2736 = vpop.xlane.xlu0 %2735
      %v2737 = vmul.f32 %v2730, %v609
      %v2738 = vmul.f32 %v2733, %v609
      %v2739 = vmul.f32 %v2736, %v609
      %v2740 = vadd.f32 %v2737, 1e-05
      %v2741 = vadd.f32 %v2738, 1e-05
      %v2742 = vadd.f32 %v2739, 1e-05
      %v2743 = vrsqrt.pop %v2740
      %v2744 = vrsqrt.pop %v2741
      %v2745 = vrsqrt.pop %v2742
      %v2746 = vmul.f32 %v2722, %v2743
      %v2747 = vmul.f32 %v2723, %v2744
      %v2748 = vmul.f32 %v2724, %v2745
      %v2750 = vlaneseq
      %v2751 = vshrl.u32 %v2750, 7
      %v2752 = vsub.s32 0, %v2751
      %v2753 = vrot.slane %v2707, %v2752
      %v2755 = vmul.f32 %v2746, %v2753
      %v2756 = vmul.f32 %v2747, %v2753
      %v2757 = vmul.f32 %v2748, %v2753
      %v2759 = vlaneseq
      %v2760 = vshrl.u32 %v2759, 7
      %v2761 = vsub.s32 0, %v2760
      %v2762 = vrot.slane %v2709, %v2761
      %v2764 = vadd.f32 %v2755, %v2762
      %v2765 = vadd.f32 %v2756, %v2762
      %v2766 = vadd.f32 %v2757, %v2762
      %s2767 = scalar_lea.vmem %s10, 32
      %v2768 = vld [vmem:[%s2767] sm:$0xff]
      %v2769 = vld [vmem:[%s2767 + $0x8] sm:$0xff]
      %v2770 = vld [vmem:[%s2767 + $0x10] sm:$0xff]
      %v2771 = vld [vmem:[%s2767 + $0x18] sm:$0xff]
      %v2772 = vpack.c.bf16 %v2765, %v2764
      %v2773 = vpack.c.bf16 %v2766, %v2766
      %v2774 = vpack.c.bf16 %v2769, %v2768
      %v2775 = vpack.c.bf16 %v2771, %v2770
      %s2776 = scalar_lea.vmem %s11, 1
      %v2777 = vld [vmem:[%s2776] sm:$0x1]
      %v2779 = vlaneseq
      %v2780 = vshrl.u32 %v2779, 7
      %v2781 = vsub.s32 0, %v2780
      %v2782 = vrot.slane %v2777, %v2781
      %v2785 = vsel %vm586, %v2772, 0
      %v2788 = vsel %vm586, %v2773, 0
      %2790 = vmatprep.subr.bf16.mxu0 0
      %2791 = vmatpush1.bf16.msra.mxu0 0
      %2792 = vmatprep.subr.bf16.mxu0 0
      %2793 = vmatpush1.bf16.msra.mxu0 0
      %2794 = vmatprep.subr.bf16.mxu0 0
      %2795 = vmatpush1.bf16.msra.mxu0 0
      %2796 = vmatprep.subr.bf16.mxu0 0
      %2797 = vmatpush1.bf16.msra.mxu0 0
      %2798 = vmatprep.subr.bf16.mxu0 0
      %2799 = vmatpush1.bf16.msra.mxu0 0
      %2800 = vmatprep.subr.bf16.mxu0 0
      %2801 = vmatpush1.bf16.msra.mxu0 0
      %2802 = vmatprep.subr.bf16.mxu0 0
      %2803 = vmatpush1.bf16.msra.mxu0 %v2775
      %2804 = vmatprep.subr.bf16.mxu0 0
      %2805 = vmatpush1.bf16.msra.mxu0 %v2774
      %2806 = vmatprep.subr.bf16.mxu0 0
      %2807 = vmatpush2.bf16.msra.mxu0 0
      %2808 = vmatprep.subr.bf16.mxu0 0
      %2809 = vmatpush2.bf16.msra.mxu0 0
      %2810 = vmatprep.subr.bf16.mxu0 0
      %2811 = vmatpush2.bf16.msra.mxu0 0
      %2812 = vmatprep.subr.bf16.mxu0 0
      %2813 = vmatpush2.bf16.msra.mxu0 0
      %2814 = vmatprep.subr.bf16.mxu0 0
      %2815 = vmatpush2.bf16.msra.mxu0 0
      %2816 = vmatprep.subr.bf16.mxu0 0
      %2817 = vmatpush2.bf16.msra.mxu0 0
      %2818 = vmatprep.subr.bf16.mxu0 0
      %2819 = vmatpush2.bf16.msra.mxu0 0
      %2820 = vmatprep.subr.bf16.mxu0 0
      %2821 = vmatpush2.bf16.msra.mxu0 0
      %2822 = vmatprep.mubr.bf16.mxu0 0
      %2823 = vmatmul.mubr.bf16.gmra.mxu0 %v2785
      %v2824 = vpop.f32.mrf.mxu0
      %v2825 = vadd.f32 %v2782, %v2824
      %v2826 = vpop.f32.mrf.mxu0
      %v2827 = vpop.f32.mrf.mxu0
      %v2828 = vadd.f32 %v2782, %v2827
      %v2829 = vpop.f32.mrf.mxu0
      %2830 = vmatprep.mubr.bf16.mxu0 0
      %2831 = vmatmul.mubr.bf16.gmra.mxu0 %v2788
      %v2832 = vpop.f32.mrf.mxu0
      %v2833 = vadd.f32 %v2782, %v2832
      %v2834 = vpop.f32.mrf.mxu0
      %v2835 = vpop.f32.mrf.mxu0
      %v2836 = vpop.f32.mrf.mxu0
      %2837 = vdwg.mxu0
      %v2838 = vmul.f32 %v2825, 0.5
      %v2839 = vmul.f32 %v2828, 0.5
      %v2840 = vmul.f32 %v2833, 0.5
      %v2841 = vmul.f32 %v2825, 0.70710677
      %v2842 = vmul.f32 %v2828, 0.70710677
      %v2843 = vmul.f32 %v2833, 0.70710677
      %vm2844 = vcmp.ge.f32.partialorder %v2841, 0.0
      %vm2845 = vcmp.ge.f32.partialorder %v2842, 0.0
      %vm2846 = vcmp.ge.f32.partialorder %v2843, 0.0
      %v2847 = vsel %vm2844, 1.0, -1.0
      %v2848 = vsel %vm2845, 1.0, -1.0
      %v2849 = vsel %vm2846, 1.0, -1.0
      %v2850 = vand.u32 2147483647, %v2841
      %v2851 = vand.u32 2147483647, %v2842
      %v2852 = vand.u32 2147483647, %v2843
      %v2853 = vmul.f32 %v2850, 0.3275911
      %v2854 = vmul.f32 %v2851, 0.3275911
      %v2855 = vmul.f32 %v2852, 0.3275911
      %v2856 = vadd.f32 %v2853, 1.0
      %v2857 = vadd.f32 %v2854, 1.0
      %v2858 = vadd.f32 %v2855, 1.0
      %v2859 = vrcp.pop %v2856
      %v2860 = vmul.f32 1.0, %v2859
      %v2861 = vrcp.pop %v2857
      %v2862 = vmul.f32 1.0, %v2861
      %v2863 = vrcp.pop %v2858
      %v2864 = vmul.f32 1.0, %v2863
      %v2865 = vmul.f32 %v2860, 1.0614054
      %v2866 = vmul.f32 %v2862, 1.0614054
      %v2867 = vmul.f32 %v2864, 1.0614054
      %v2868 = vsub.f32 %v2865, 1.4531521
      %v2869 = vsub.f32 %v2866, 1.4531521
      %v2870 = vsub.f32 %v2867, 1.4531521
      %v2871 = vmul.f32 %v2868, %v2860
      %v2872 = vmul.f32 %v2869, %v2862
      %v2873 = vmul.f32 %v2870, %v2864
      %v2874 = vadd.f32 %v2871, 1.4214138
      %v2875 = vadd.f32 %v2872, 1.4214138
      %v2876 = vadd.f32 %v2873, 1.4214138
      %v2877 = vmul.f32 %v2874, %v2860
      %v2878 = vmul.f32 %v2875, %v2862
      %v2879 = vmul.f32 %v2876, %v2864
      %v2880 = vsub.f32 %v2877, 0.28449672
      %v2881 = vsub.f32 %v2878, 0.28449672
      %v2882 = vsub.f32 %v2879, 0.28449672
      %v2883 = vmul.f32 %v2880, %v2860
      %v2884 = vmul.f32 %v2881, %v2862
      %v2885 = vmul.f32 %v2882, %v2864
      %v2886 = vadd.f32 %v2883, 0.2548296
      %v2887 = vadd.f32 %v2884, 0.2548296
      %v2888 = vadd.f32 %v2885, 0.2548296
      %v2889 = vmul.f32 %v2886, %v2860
      %v2890 = vmul.f32 %v2887, %v2862
      %v2891 = vmul.f32 %v2888, %v2864
      %v2892 = vsub.f32 0.0, %v2850
      %v2893 = vsub.f32 0.0, %v2851
      %v2894 = vsub.f32 0.0, %v2852
      %v2895 = vmul.f32 %v2892, %v2850
      %v2896 = vmul.f32 %v2893, %v2851
      %v2897 = vmul.f32 %v2894, %v2852
      %v2898 = vmul.f32 %v2895, 1.442695
      %v2899 = vpow.pop %v2898
      %v2900 = vmul.f32 %v2896, 1.442695
      %v2901 = vpow.pop %v2900
      %v2902 = vmul.f32 %v2897, 1.442695
      %v2903 = vpow.pop %v2902
      %v2904 = vmul.f32 %v2889, %v2899
      %v2905 = vmul.f32 %v2890, %v2901
      %v2906 = vmul.f32 %v2891, %v2903
      %v2907 = vsub.f32 1.0, %v2904
      %v2908 = vsub.f32 1.0, %v2905
      %v2909 = vsub.f32 1.0, %v2906
      %v2910 = vmul.f32 %v2847, %v2907
      %v2911 = vmul.f32 %v2848, %v2908
      %v2912 = vmul.f32 %v2849, %v2909
      %v2913 = vadd.f32 %v2910, 1.0
      %v2914 = vadd.f32 %v2911, 1.0
      %v2915 = vadd.f32 %v2912, 1.0
      %v2916 = vmul.f32 %v2838, %v2913
      %v2917 = vmul.f32 %v2839, %v2914
      %v2918 = vmul.f32 %v2840, %v2915
      %s2919 = scalar_lea.vmem %s12, 128
      %v2920 = vld [vmem:[%s2919] sm:$0xff]
      %v2921 = vld [vmem:[%s2919 + $0x8] sm:$0xff]
      %v2922 = vld [vmem:[%s2919 + $0x10] sm:$0xff]
      %v2923 = vld [vmem:[%s2919 + $0x18] sm:$0xff]
      %v2924 = vld [vmem:[%s2919 + $0x20] sm:$0xff]
      %v2925 = vld [vmem:[%s2919 + $0x28] sm:$0xff]
      %v2926 = vld [vmem:[%s2919 + $0x30] sm:$0xff]
      %v2927 = vld [vmem:[%s2919 + $0x38] sm:$0xff]
      %v2928 = vld [vmem:[%s2919 + $0x40] sm:$0xff]
      %v2929 = vld [vmem:[%s2919 + $0x48] sm:$0xff]
      %v2930 = vld [vmem:[%s2919 + $0x50] sm:$0xff]
      %v2931 = vld [vmem:[%s2919 + $0x58] sm:$0xff]
      %v2932 = vld [vmem:[%s2919 + $0x60] sm:$0xff]
      %v2933 = vld [vmem:[%s2919 + $0x68] sm:$0xff]
      %v2934 = vld [vmem:[%s2919 + $0x70] sm:$0xff]
      %v2935 = vld [vmem:[%s2919 + $0x78] sm:$0xff]
      %v2936 = vpack.c.bf16 %v2917, %v2916
      %v2937 = vpack.c.bf16 %v2918, %v2918
      %v2938 = vpack.c.bf16 %v2921, %v2920
      %v2939 = vpack.c.bf16 %v2923, %v2922
      %v2940 = vpack.c.bf16 %v2925, %v2924
      %v2941 = vpack.c.bf16 %v2927, %v2926
      %v2942 = vpack.c.bf16 %v2929, %v2928
      %v2943 = vpack.c.bf16 %v2931, %v2930
      %v2944 = vpack.c.bf16 %v2933, %v2932
      %v2945 = vpack.c.bf16 %v2935, %v2934
      %2946 = vmatprep.subr.bf16.mxu0 0
      %2947 = vmatpush1.bf16.msra.mxu0 %v2945
      %2948 = vmatprep.subr.bf16.mxu0 0
      %2949 = vmatpush1.bf16.msra.mxu0 %v2944
      %2950 = vmatprep.subr.bf16.mxu0 0
      %2951 = vmatpush1.bf16.msra.mxu0 %v2943
      %2952 = vmatprep.subr.bf16.mxu0 0
      %2953 = vmatpush1.bf16.msra.mxu0 %v2942
      %2954 = vmatprep.subr.bf16.mxu0 0
      %2955 = vmatpush1.bf16.msra.mxu0 %v2941
      %2956 = vmatprep.subr.bf16.mxu0 0
      %2957 = vmatpush1.bf16.msra.mxu0 %v2940
      %2958 = vmatprep.subr.bf16.mxu0 0
      %2959 = vmatpush1.bf16.msra.mxu0 %v2939
      %2960 = vmatprep.subr.bf16.mxu0 0
      %2961 = vmatpush1.bf16.msra.mxu0 %v2938
      %2962 = vmatprep.subr.bf16.mxu0 0
      %2963 = vmatpush2.bf16.msra.mxu0 0
      %2964 = vmatprep.subr.bf16.mxu0 0
      %2965 = vmatpush2.bf16.msra.mxu0 0
      %2966 = vmatprep.subr.bf16.mxu0 0
      %2967 = vmatpush2.bf16.msra.mxu0 0
      %2968 = vmatprep.subr.bf16.mxu0 0
      %2969 = vmatpush2.bf16.msra.mxu0 0
      %2970 = vmatprep.subr.bf16.mxu0 0
      %2971 = vmatpush2.bf16.msra.mxu0 0
      %2972 = vmatprep.subr.bf16.mxu0 0
      %2973 = vmatpush2.bf16.msra.mxu0 0
      %2974 = vmatprep.subr.bf16.mxu0 0
      %2975 = vmatpush2.bf16.msra.mxu0 0
      %2976 = vmatprep.subr.bf16.mxu0 0
      %2977 = vmatpush2.bf16.msra.mxu0 0
      %2978 = vmatprep.mubr.bf16.mxu0 0
      %2979 = vmatmul.mubr.bf16.gmra.mxu0 %v2936
      %v2980 = vpop.f32.mrf.mxu0
      %v2981 = vadd.f32 0.0, %v2980
      %v2982 = vpop.f32.mrf.mxu0
      %v2983 = vpop.f32.mrf.mxu0
      %v2984 = vadd.f32 0.0, %v2983
      %v2985 = vpop.f32.mrf.mxu0
      %2986 = vmatprep.mubr.bf16.mxu0 0
      %2987 = vmatmul.mubr.bf16.gmra.mxu0 %v2937
      %v2988 = vpop.f32.mrf.mxu0
      %v2989 = vadd.f32 0.0, %v2988
      %v2990 = vpop.f32.mrf.mxu0
      %v2991 = vpop.f32.mrf.mxu0
      %v2992 = vpop.f32.mrf.mxu0
      %2993 = vdwg.mxu0
      %v2994 = vadd.f32 %v2703, %v2981
      %v2995 = vadd.f32 %v2704, %v2984
      %v2996 = vadd.f32 %v2705, %v2989
      %s2997 = scalar_lea.vmem %s13, 1
      %v2998 = vld [vmem:[%s2997] sm:$0x1]
      %v3000 = vlaneseq
      %v3001 = vshrl.u32 %v3000, 7
      %v3002 = vsub.s32 0, %v3001
      %v3003 = vrot.slane %v2998, %v3002
      %v3005 = vadd.f32 %v2994, %v3003
      %v3006 = vadd.f32 %v2995, %v3003
      %v3007 = vadd.f32 %v2996, %v3003
      %v3008 = vld [vmem:[%s14] sm:$0x1]
      %v3009 = vld [vmem:[%s15] sm:$0x1]
      %v3010 = vsel %vm586, %v3005, 0.0
      %3011 = vadd.xlane.f32.xlu0 %v3010
      %v3012 = vpop.xlane.xlu0 %3011
      %v3013 = vsel %vm586, %v3006, 0.0
      %3014 = vadd.xlane.f32.xlu0 %v3013
      %v3015 = vpop.xlane.xlu0 %3014
      %v3016 = vsel %vm586, %v3007, 0.0
      %3017 = vadd.xlane.f32.xlu0 %v3016
      %v3018 = vpop.xlane.xlu0 %3017
      %v3019 = vmul.f32 %v3012, %v609
      %v3020 = vmul.f32 %v3015, %v609
      %v3021 = vmul.f32 %v3018, %v609
      %v3022 = vsub.f32 %v3005, %v3019
      %v3023 = vsub.f32 %v3006, %v3020
      %v3024 = vsub.f32 %v3007, %v3021
      %v3025 = vmul.f32 %v3022, %v3022
      %v3026 = vmul.f32 %v3023, %v3023
      %v3027 = vmul.f32 %v3024, %v3024
      %v3028 = vsel %vm586, %v3025, 0.0
      %3029 = vadd.xlane.f32.xlu0 %v3028
      %v3030 = vpop.xlane.xlu0 %3029
      %v3031 = vsel %vm586, %v3026, 0.0
      %3032 = vadd.xlane.f32.xlu0 %v3031
      %v3033 = vpop.xlane.xlu0 %3032
      %v3034 = vsel %vm586, %v3027, 0.0
      %3035 = vadd.xlane.f32.xlu0 %v3034
      %v3036 = vpop.xlane.xlu0 %3035
      %v3037 = vmul.f32 %v3030, %v609
      %v3038 = vmul.f32 %v3033, %v609
      %v3039 = vmul.f32 %v3036, %v609
      %v3040 = vadd.f32 %v3037, 1e-05
      %v3041 = vadd.f32 %v3038, 1e-05
      %v3042 = vadd.f32 %v3039, 1e-05
      %v3043 = vrsqrt.pop %v3040
      %v3044 = vrsqrt.pop %v3041
      %v3045 = vrsqrt.pop %v3042
      %v3046 = vmul.f32 %v3022, %v3043
      %v3047 = vmul.f32 %v3023, %v3044
      %v3048 = vmul.f32 %v3024, %v3045
      %v3050 = vlaneseq
      %v3051 = vshrl.u32 %v3050, 7
      %v3052 = vsub.s32 0, %v3051
      %v3053 = vrot.slane %v3008, %v3052
      %v3055 = vmul.f32 %v3046, %v3053
      %v3056 = vmul.f32 %v3047, %v3053
      %v3057 = vmul.f32 %v3048, %v3053
      %v3059 = vlaneseq
      %v3060 = vshrl.u32 %v3059, 7
      %v3061 = vsub.s32 0, %v3060
      %v3062 = vrot.slane %v3009, %v3061
      %v3064 = vadd.f32 %v3055, %v3062
      %v3065 = vadd.f32 %v3056, %v3062
      %v3066 = vadd.f32 %v3057, %v3062
      %v3067 = vld [vmem:[%s16] sm:$0xff]
      %v3068 = vld [vmem:[%s16 + $0x8] sm:$0xff]
      %v3069 = vld [vmem:[%s16 + $0x10] sm:$0xff]
      %v3070 = vld [vmem:[%s16 + $0x18] sm:$0xff]
      %v3071 = vpack.c.bf16 %v3065, %v3064
      %v3072 = vpack.c.bf16 %v3066, %v3066
      %v3073 = vpack.c.bf16 %v3068, %v3067
      %v3074 = vpack.c.bf16 %v3070, %v3069
      %v3075 = vld [vmem:[%s17] sm:$0x1]
      %v3077 = vlaneseq
      %v3078 = vshrl.u32 %v3077, 7
      %v3079 = vsub.s32 0, %v3078
      %v3080 = vrot.slane %v3075, %v3079
      %v3083 = vsel %vm586, %v3071, 0
      %v3086 = vsel %vm586, %v3072, 0
      %3088 = vmatprep.subr.bf16.mxu0 0
      %3089 = vmatpush1.bf16.msra.mxu0 0
      %3090 = vmatprep.subr.bf16.mxu0 0
      %3091 = vmatpush1.bf16.msra.mxu0 0
      %3092 = vmatprep.subr.bf16.mxu0 0
      %3093 = vmatpush1.bf16.msra.mxu0 0
      %3094 = vmatprep.subr.bf16.mxu0 0
      %3095 = vmatpush1.bf16.msra.mxu0 0
      %3096 = vmatprep.subr.bf16.mxu0 0
      %3097 = vmatpush1.bf16.msra.mxu0 0
      %3098 = vmatprep.subr.bf16.mxu0 0
      %3099 = vmatpush1.bf16.msra.mxu0 0
      %3100 = vmatprep.subr.bf16.mxu0 0
      %3101 = vmatpush1.bf16.msra.mxu0 %v3074
      %3102 = vmatprep.subr.bf16.mxu0 0
      %3103 = vmatpush1.bf16.msra.mxu0 %v3073
      %3104 = vmatprep.subr.bf16.mxu0 0
      %3105 = vmatpush2.bf16.msra.mxu0 0
      %3106 = vmatprep.subr.bf16.mxu0 0
      %3107 = vmatpush2.bf16.msra.mxu0 0
      %3108 = vmatprep.subr.bf16.mxu0 0
      %3109 = vmatpush2.bf16.msra.mxu0 0
      %3110 = vmatprep.subr.bf16.mxu0 0
      %3111 = vmatpush2.bf16.msra.mxu0 0
      %3112 = vmatprep.subr.bf16.mxu0 0
      %3113 = vmatpush2.bf16.msra.mxu0 0
      %3114 = vmatprep.subr.bf16.mxu0 0
      %3115 = vmatpush2.bf16.msra.mxu0 0
      %3116 = vmatprep.subr.bf16.mxu0 0
      %3117 = vmatpush2.bf16.msra.mxu0 0
      %3118 = vmatprep.subr.bf16.mxu0 0
      %3119 = vmatpush2.bf16.msra.mxu0 0
      %3120 = vmatprep.mubr.bf16.mxu0 0
      %3121 = vmatmul.mubr.bf16.gmra.mxu0 %v3083
      %v3122 = vpop.f32.mrf.mxu0
      %v3123 = vadd.f32 %v3080, %v3122
      %v3124 = vpop.f32.mrf.mxu0
      %v3125 = vpop.f32.mrf.mxu0
      %v3126 = vadd.f32 %v3080, %v3125
      %v3127 = vpop.f32.mrf.mxu0
      %3128 = vmatprep.mubr.bf16.mxu0 0
      %3129 = vmatmul.mubr.bf16.gmra.mxu0 %v3086
      %v3130 = vpop.f32.mrf.mxu0
      %v3131 = vadd.f32 %v3080, %v3130
      %v3132 = vpop.f32.mrf.mxu0
      %v3133 = vpop.f32.mrf.mxu0
      %v3134 = vpop.f32.mrf.mxu0
      %3135 = vdwg.mxu0
      %3136 = vst [vmem:[%s575] sm:$0xff] %v3123
      %3137 = vst [vmem:[%s575 + $0x8] sm:$0xff] %v3126
      %3138 = vst [vmem:[%s575 + $0x10] sm:$0xff] %v3131
      %p3139 = scmp.lt.s32.totalorder %s29, 1
      %s3140 = scalar_select %p3139, %s29, 1
      %s3141 = smul.addr %s3140, 3
      %s3142 = smul.addr %s3141, 8
      %s3143 = scalar_lea.vmem %s18, %s3142
      // Predicated region
      $region93: #{lvvit_teacher_forward.7} parent=91 // pred_check
        %p3144 = pneg %p430
      $region94: #{lvvit_teacher_forward.7} parent=91 // pred_check_branch
        %3146 = sbr.rel (%p3144) target = $region96
      $region95: #{lvvit_teacher_forward.7} parent=91 // pred_region
        _
      $region96: #{lvvit_teacher_forward.7} parent=91 // pred_fallthru
        _
    $region92: #{lvvit_teacher_forward.7} parent=5 // pred_fallthru
      _
    %p3147 = scmp.le.s32.totalorder 2, %s24
    // Predicated region
    $region97: #{lvvit_teacher_forward.7} parent=5 // pred_check
      %p3148 = pneg %p3147
    $region98: #{lvvit_teacher_forward.7} parent=5 // pred_check_branch
      %3150 = sbr.rel (%p3148) target = $region100
    $region99: #{lvvit_teacher_forward.7} parent=5 // pred_region
      %s3151 = ssub.s32 %s24, 2
      // Predicated region
      $region101: #{lvvit_teacher_forward.7} parent=99 // pred_check
        %p3152 = pneg %p436
      $region102: #{lvvit_teacher_forward.7} parent=99 // pred_check_branch
        %3154 = sbr.rel (%p3152) target = $region104
      $region103: #{lvvit_teacher_forward.7} parent=99 // pred_region
        %p3155 = scmp.lt.s32.totalorder %s30, 1
        %s3156 = scalar_select %p3155, %s30, 1
        %s3157 = smul.addr %s3156, 3
        %s3158 = smul.addr %s3157, 8
        %s3159 = scalar_lea.vmem %s18, %s3158
      $region104: #{lvvit_teacher_forward.7} parent=99 // pred_fallthru
        _
    $region100: #{lvvit_teacher_forward.7} parent=5 // pred_fallthru
      _
  $region6: #{lvvit_teacher_forward.7} parent=0 // loop_footer
    %s28 = sadd.s32 1, %s24
  $region7: #{lvvit_teacher_forward.7} parent=0 // loop_footer_branch
    %23 = sbr.rel target = $region3
  $region8: #{lvvit_teacher_forward.7} parent=0 // loop_exit
    _

</llo_original>
